<compile_context>
chip_gen: v7x
topology: tpu7x:2x2x1
jax: 0.10.0
libtpu: 0.0.40
codegen_flags: <defaults>
</compile_context>

<pallas_src>
import math
import numpy as np
import jax
import jax.numpy as jnp
from jax.experimental import pallas as pl
from jax.experimental.pallas import tpu as pltpu

# ----------------------------- configuration (small-scale analog) -----------
B_SIZE = 2               # batch
C_IMG = 3                # RGB
H_IMG = W_IMG = 16       # frame size (analog of 224)
PATCH = 4                # backbone stride stand-in
GRID = H_IMG // PATCH    # low-res grid (4x4 -> 16 tokens / frame)
FEAT = 126               # backbone channels (analog of 2048)
D_TOKEN = FEAT + 2       # 128 (analog of 2050) -> lane dense
FFN_DIM = 128            # transformer FFN dim (analog of 2048)
BOUNDARY_NUM = 8         # analog of 80
REFINE_NUM = 3
MAX_SEQ = 1024
SEQ_ENC = 3 * GRID * GRID        # 48 encoder tokens / batch element
SEQ_DEC = 3 * BOUNDARY_NUM       # 24 decoder tokens / batch element
HW = H_IMG * W_IMG               # 256
PATCH_DIM = C_IMG * PATCH * PATCH   # 48
PATCH_PAD = 128                  # patch feature dim padded to lane width

# ----------------------------- packed-parameter row indices ------------------
# encoder weight stack (each block D_TOKEN rows tall)
EW_BB, EW_FC, EW_WO, EW_L1, EW_L2 = range(5)
# encoder bias/gamma stack rows
(EV_BB_B, EV_FC_B, EV_FCLN_G, EV_FCLN_B, EV_LN_G, EV_LN_B,
 EV_BQ, EV_BK, EV_BV, EV_BO, EV_B1, EV_B2,
 EV_N1G, EV_N1B, EV_N2G, EV_N2B, EV_BK_CA, EV_BV_CA) = range(18)
EV_ROWS = 24
# decoder weight stack
DW_WO_SA, DW_WQ_CA, DW_WO_CA, DW_L1, DW_L2, DW_XY1, DW_XY2 = range(7)
# decoder bias/gamma stack rows
(DV_BQ, DV_BK, DV_BV, DV_BO, DV_BQ_CA, DV_BO_CA, DV_B1, DV_B2,
 DV_N1G, DV_N1B, DV_N2G, DV_N2B, DV_N3G, DV_N3B,
 DV_XY1B, DV_XY2B, DV_LN_G, DV_LN_B) = range(18)
DV_ROWS = 24


# ----------------------------- in-kernel helpers ------------------------------
def _bf(x):
    return x.astype(jnp.bfloat16)


def _mm(a, w):
    """MXU matmul: bf16 operands, f32 accumulation (w already bf16)."""
    return jnp.dot(_bf(a), w, preferred_element_type=jnp.float32)


def _layernorm(x, g, b, eps=1e-5):
    mean = jnp.mean(x, axis=-1, keepdims=True)
    c = x - mean
    var = jnp.mean(c * c, axis=-1, keepdims=True)
    return c * jax.lax.rsqrt(var + eps) * g + b


def _softmax_last(s):
    s = s - jnp.max(s, axis=-1, keepdims=True)
    p = jnp.exp(s)
    return p * pl.reciprocal(jnp.sum(p, axis=-1, keepdims=True), approx=True)


def _attend(q, k, v, scale):
    # scores = q @ k^T (contraction over features), softmax, p @ v
    s = jax.lax.dot_general(_bf(q), _bf(k), (((1,), (1,)), ((), ())),
                            preferred_element_type=jnp.float32) * scale
    p = _softmax_last(s)
    return jnp.dot(_bf(p), _bf(v), preferred_element_type=jnp.float32)


def _attend_kt(q, k_t, v, scale):
    # K is pre-transposed (D, Sk): plain MXU feed, no per-iteration transpose
    s = jnp.dot(_bf(q), _bf(k_t), preferred_element_type=jnp.float32) * scale
    p = _softmax_last(s)
    return jnp.dot(_bf(p), _bf(v), preferred_element_type=jnp.float32)


# ----------------------------- Pallas kernels --------------------------------
def _make_encoder_kernel(nb):
    """Backbone proj + img_token_fc + LN + PE + encoder layer + cross KV proj."""

    def kernel(x_ref, pe_ref, wstk_ref, wqkv_ref, wkv_ref, vec_ref,
               tok_ref, kv_ref):
        vecs = vec_ref[...]

        def vr(i):
            return vecs[i:i + 1, :]

        def wm(i):
            return wstk_ref[i * D_TOKEN:(i + 1) * D_TOKEN, :]

        scale = 1.0 / math.sqrt(D_TOKEN)

        # backbone projection (patch features zero-padded to 128 lanes)
        tok = _mm(x_ref[...], wm(EW_BB)) + vr(EV_BB_B)
        tok_ref[...] = tok

        # img_token_fc (Linear + LayerNorm) -> self.layernorm -> + PE
        y = _mm(tok, wm(EW_FC)) + vr(EV_FC_B)
        y = _layernorm(y, vr(EV_FCLN_G), vr(EV_FCLN_B))
        y = _layernorm(y, vr(EV_LN_G), vr(EV_LN_B))
        y = y + pe_ref[...]

        # TransformerEncoderLayer (post-norm, relu, dropout=id, nhead=1)
        qkv = _mm(y, wqkv_ref[...])                    # (nb*S, 3D), batch folded
        q = qkv[:, :D_TOKEN] + vr(EV_BQ)
        k = qkv[:, D_TOKEN:2 * D_TOKEN] + vr(EV_BK)
        v = qkv[:, 2 * D_TOKEN:] + vr(EV_BV)
        parts = []
        for bi in range(nb):                           # attention per batch element
            lo = bi * SEQ_ENC
            hi = lo + SEQ_ENC
            parts.append(_attend(q[lo:hi], k[lo:hi], v[lo:hi], scale))
        att = jnp.concatenate(parts, axis=0)
        y = _layernorm(y + _mm(att, wm(EW_WO)) + vr(EV_BO),
                       vr(EV_N1G), vr(EV_N1B))
        h = jnp.maximum(_mm(y, wm(EW_L1)) + vr(EV_B1), 0.0)
        mem = _layernorm(y + _mm(h, wm(EW_L2)) + vr(EV_B2),
                         vr(EV_N2G), vr(EV_N2B))

        # cross-attention K/V projection of memory (loop-invariant) -> bf16
        kv = _mm(mem, wkv_ref[...])
        kv = kv + jnp.concatenate([vr(EV_BK_CA), vr(EV_BV_CA)], axis=1)
        kv_ref[...] = kv.astype(jnp.bfloat16)

    return kernel


def _decoder_refine_kernel(pre_ref, first_ref, feat_ref, kt_ref, v_ref, b0_ref,
                           pe_ref, wqkv_ref, wstk_ref, vec_ref, out_ref):
    """Whole refinement loop for one batch element: gather + LN/PE + decoder
    layer (self-attn, cross-attn, FFN) + xy head + boundary update, x3."""
    n = BOUNDARY_NUM
    vecs = vec_ref[...]

    def vr(i):
        return vecs[i:i + 1, :]

    def wm(i):
        return wstk_ref[i * D_TOKEN:(i + 1) * D_TOKEN, :]

    scale = 1.0 / math.sqrt(D_TOKEN)
    ln_g, ln_b = vr(DV_LN_G), vr(DV_LN_B)
    pe = pe_ref[...]

    # loop-invariant pre/first chunks: LayerNorm + positional encoding (once)
    pre = _layernorm(pre_ref[...], ln_g, ln_b) + pe[0:n]
    first = _layernorm(first_ref[...], ln_g, ln_b) + pe[2 * n:3 * n]
    pe_cur = pe[n:2 * n]

    feats = feat_ref[...]        # (HW, D) bf16, VMEM-resident for all iters
    k_t = kt_ref[...]            # (D, S_enc) bf16, pre-transposed K
    v_mem = v_ref[...]           # (S_enc, D) bf16

    lane = jax.lax.broadcasted_iota(jnp.int32, (n, D_TOKEN), 1)
    hw_iota = jax.lax.broadcasted_iota(jnp.int32, (n, HW), 1)

    b0 = b0_ref[...]             # (n, 128) slab; lane 0 = row, lane 1 = col
    row_f = jnp.sum(jnp.where(lane == 0, b0, 0.0), axis=-1, keepdims=True)
    col_f = jnp.sum(jnp.where(lane == 1, b0, 0.0), axis=-1, keepdims=True)

    for it in range(REFINE_NUM):
        row_f = jnp.clip(row_f, 0.0, float(H_IMG - 1))
        col_f = jnp.clip(col_f, 0.0, float(W_IMG - 1))
        # boundary gather as a one-hot MXU matmul (no dynamic VMEM gather)
        flat = row_f.astype(jnp.int32) * W_IMG + col_f.astype(jnp.int32)
        onehot = (hw_iota == flat).astype(jnp.bfloat16)          # (n, HW)
        g = jnp.dot(onehot, feats, preferred_element_type=jnp.float32)
        tok = jnp.where(lane < FEAT, g, 0.0)
        tok = tok + jnp.where(lane == FEAT, row_f, 0.0)
        tok = tok + jnp.where(lane == FEAT + 1, col_f, 0.0)
        cur = _layernorm(tok, ln_g, ln_b) + pe_cur
        x = jnp.concatenate([pre, cur, first], axis=0)           # (3n, D)

        # decoder self-attention block (post-norm)
        qkv = _mm(x, wqkv_ref[...])
        q = qkv[:, :D_TOKEN] + vr(DV_BQ)
        k = qkv[:, D_TOKEN:2 * D_TOKEN] + vr(DV_BK)
        v = qkv[:, 2 * D_TOKEN:] + vr(DV_BV)
        a = _attend(q, k, v, scale)
        x = _layernorm(x + _mm(a, wm(DW_WO_SA)) + vr(DV_BO),
                       vr(DV_N1G), vr(DV_N1B))

        # cross-attention block (K pre-transposed, V resident)
        qc = _mm(x, wm(DW_WQ_CA)) + vr(DV_BQ_CA)
        a2 = _attend_kt(qc, k_t, v_mem, scale)
        x = _layernorm(x + _mm(a2, wm(DW_WO_CA)) + vr(DV_BO_CA),
                       vr(DV_N2G), vr(DV_N2B))

        # FFN block
        h = jnp.maximum(_mm(x, wm(DW_L1)) + vr(DV_B1), 0.0)
        x = _layernorm(x + _mm(h, wm(DW_L2)) + vr(DV_B2),
                       vr(DV_N3G), vr(DV_N3B))

        # xy offset head on the `cur` chunk, boundary update
        bou = x[n:2 * n]
        h2 = jnp.maximum(_mm(bou, wm(DW_XY1)) + vr(DV_XY1B), 0.0)
        off = _mm(h2, wm(DW_XY2)) + vr(DV_XY2B)                  # lanes 0,1 valid
        row_f = row_f + jnp.sum(jnp.where(lane == 0, off, 0.0),
                                axis=-1, keepdims=True)
        col_f = col_f + jnp.sum(jnp.where(lane == 1, off, 0.0),
                                axis=-1, keepdims=True)
        slab = (jnp.where(lane == 0, row_f, 0.0)
                + jnp.where(lane == 1, col_f, 0.0))
        out_ref[it * n:(it + 1) * n, :] = slab


# ----------------------------- pallas_call wrappers ---------------------------
def encoder_call(kp, patches):
    m = patches.shape[0]
    nb = m // SEQ_ENC

    def full(a):
        return pl.BlockSpec(a.shape, lambda i: (0,) * a.ndim)

    return pl.pallas_call(
        _make_encoder_kernel(nb),
        grid=(1,),
        in_specs=[full(patches), full(kp['pe_enc']), full(kp['enc_wstk']),
                  full(kp['enc_wqkv']), full(kp['enc_wkv']), full(kp['enc_vecs'])],
        out_specs=(pl.BlockSpec((m, D_TOKEN), lambda i: (0, 0)),
                   pl.BlockSpec((m, 2 * D_TOKEN), lambda i: (0, 0))),
        out_shape=(jax.ShapeDtypeStruct((m, D_TOKEN), jnp.float32),
                   jax.ShapeDtypeStruct((m, 2 * D_TOKEN), jnp.bfloat16)),
        compiler_params=pltpu.CompilerParams(dimension_semantics=("arbitrary",)),
    )(patches, kp['pe_enc'], kp['enc_wstk'], kp['enc_wqkv'], kp['enc_wkv'],
      kp['enc_vecs'])


def decoder_refine_call(kp, pre_tok, first_tok, cur_feats, kt_mem, v_mem, b0_slab):
    b = pre_tok.shape[0]
    n = BOUNDARY_NUM

    def per_batch(a):
        return pl.BlockSpec((None,) + a.shape[1:], lambda i: (i, 0, 0))

    def const(a):
        return pl.BlockSpec(a.shape, lambda i: (0,) * a.ndim)

    return pl.pallas_call(
        _decoder_refine_kernel,
        grid=(b,),
        in_specs=[per_batch(pre_tok), per_batch(first_tok), per_batch(cur_feats),
                  per_batch(kt_mem), per_batch(v_mem), per_batch(b0_slab),
                  const(kp['pe_dec']), const(kp['dec_wqkv']),
                  const(kp['dec_wstk']), const(kp['dec_vecs'])],
        out_specs=pl.BlockSpec((None, REFINE_NUM * n, D_TOKEN),
                               lambda i: (i, 0, 0)),
        out_shape=jax.ShapeDtypeStruct((b, REFINE_NUM * n, D_TOKEN), jnp.float32),
        compiler_params=pltpu.CompilerParams(dimension_semantics=("parallel",)),
    )(pre_tok, first_tok, cur_feats, kt_mem, v_mem, b0_slab,
      kp['pe_dec'], kp['dec_wqkv'], kp['dec_wstk'], kp['dec_vecs'])


# ----------------------------- model glue (plain JAX) -------------------------
def find_best_shift(prev_b, first_b):
    n = prev_b.shape[1]

    def per_batch(p, f):
        rolled = jnp.stack([jnp.roll(f, s, axis=0) for s in range(n)])   # (n,n,2)
        d = jnp.sum(jnp.abs(p[None].astype(jnp.int32) - rolled.astype(jnp.int32)),
                    axis=(1, 2))
        return jnp.argmin(d)   # first minimum -> matches torch tie rule

    return jax.vmap(per_batch)(prev_b, first_b)


def roll_boundaries(x, shifts):
    n = x.shape[1]

    def per_batch(xi, s):
        idx = (jnp.arange(n) - s) % n
        return xi[idx]

    return jax.vmap(per_batch)(x, shifts)


def get_bou_features(img_features, boundary):
    # img_features (B, C, H, W), boundary (B, N, 2) int -> (B, C, N)
    def per_batch(f, bd):
        return f[:, bd[:, 0], bd[:, 1]]

    return jax.vmap(per_batch)(img_features, boundary)


def boundary_tokens(img_features, boundary_idx, boundary_float):
    feats = get_bou_features(img_features, boundary_idx).transpose(0, 2, 1)
    return jnp.concatenate([feats[..., :FEAT], boundary_float], axis=-1)


def patchify_frames(frames):
    # frames (B, F, C, H, W) -> (B*F*GRID*GRID, C*PATCH*PATCH), row-major tokens
    b, f, c, _, _ = frames.shape
    x = frames.reshape(b, f, c, GRID, PATCH, GRID, PATCH)
    x = x.transpose(0, 1, 3, 5, 2, 4, 6)
    return x.reshape(b * f * GRID * GRID, c * PATCH * PATCH)


def highres_from_tokens(tok):
    # Stand-in for self.backbone(frame): low-res tokens bilinearly upsampled.
    b = tok.shape[0]
    f = tok.reshape(b, GRID, GRID, D_TOKEN).transpose(0, 3, 1, 2)
    return jax.image.resize(f, (b, D_TOKEN, H_IMG, W_IMG), method='bilinear')


# ----------------------------- deterministic parameter init -------------------
def _dense(key, fan_in, fan_out, scale=0.05):
    kw, kb = jax.random.split(key)
    w = scale * jax.random.normal(kw, (fan_in, fan_out), jnp.float32)
    b = scale * jax.random.normal(kb, (fan_out,), jnp.float32)
    return w, b


def _init_attn(key, d):
    ks = jax.random.split(key, 4)
    wq, bq = _dense(ks[0], d, d)
    wk, bk = _dense(ks[1], d, d)
    wv, bv = _dense(ks[2], d, d)
    wo, bo = _dense(ks[3], d, d)
    return dict(wq=wq, bq=bq, wk=wk, bk=bk, wv=wv, bv=bv, wo=wo, bo=bo)


def _init_encoder_layer(key):
    ks = jax.random.split(key, 3)
    p = dict(self_attn=_init_attn(ks[0], D_TOKEN))
    p['lin1_w'], p['lin1_b'] = _dense(ks[1], D_TOKEN, FFN_DIM)
    p['lin2_w'], p['lin2_b'] = _dense(ks[2], FFN_DIM, D_TOKEN)
    for nname in ('norm1', 'norm2'):
        p[nname + '_g'] = jnp.ones((D_TOKEN,), jnp.float32)
        p[nname + '_b'] = jnp.zeros((D_TOKEN,), jnp.float32)
    return p


def _init_decoder_layer(key):
    ks = jax.random.split(key, 4)
    p = dict(self_attn=_init_attn(ks[0], D_TOKEN),
             cross_attn=_init_attn(ks[1], D_TOKEN))
    p['lin1_w'], p['lin1_b'] = _dense(ks[2], D_TOKEN, FFN_DIM)
    p['lin2_w'], p['lin2_b'] = _dense(ks[3], FFN_DIM, D_TOKEN)
    for nname in ('norm1', 'norm2', 'norm3'):
        p[nname + '_g'] = jnp.ones((D_TOKEN,), jnp.float32)
        p[nname + '_b'] = jnp.zeros((D_TOKEN,), jnp.float32)
    return p


def _make_pe(max_len, d):
    position = np.arange(max_len, dtype=np.float32)[:, None]
    div_term = np.exp(np.arange(0, d, 2, dtype=np.float32) * (-np.log(10000.0) / d))
    pe = np.zeros((max_len, d), np.float32)
    pe[:, 0::2] = np.sin(position * div_term)
    pe[:, 1::2] = np.cos(position * div_term)
    return jnp.asarray(pe)


def init_params(key):
    keys = jax.random.split(key, 6)
    p = {}
    p['bb_w'], p['bb_b'] = _dense(keys[0], PATCH_DIM, FEAT)
    p['fc_w'], p['fc_b'] = _dense(keys[1], FEAT, D_TOKEN)
    p['fc_ln_g'] = jnp.ones((D_TOKEN,), jnp.float32)
    p['fc_ln_b'] = jnp.zeros((D_TOKEN,), jnp.float32)
    p['ln_g'] = jnp.ones((D_TOKEN,), jnp.float32)
    p['ln_b'] = jnp.zeros((D_TOKEN,), jnp.float32)
    p['pe'] = _make_pe(MAX_SEQ, D_TOKEN)
    p['enc'] = _init_encoder_layer(keys[2])
    p['dec'] = _init_decoder_layer(keys[3])
    p['xy1_w'], p['xy1_b'] = _dense(keys[4], D_TOKEN, D_TOKEN)
    p['xy2_w'], p['xy2_b'] = _dense(keys[5], D_TOKEN, 2)
    return p


def prepare_params(p, batch):
    """One-time kernel-ready layout: bf16 weight stacks, fused QKV/KV, f32
    bias/gamma stacks, lane padding, pre-broadcast positional encodings."""
    f32, bf16 = jnp.float32, jnp.bfloat16

    def vrow(v):
        v = jnp.asarray(v, f32).reshape(-1)
        return jnp.pad(v, (0, D_TOKEN - v.shape[0])).reshape(1, D_TOKEN)

    def vstack(rows, total):
        x = jnp.concatenate(rows, axis=0)
        return jnp.pad(x, ((0, total - x.shape[0]), (0, 0)))

    kp = {}
    bb_w = jnp.pad(p['bb_w'], ((0, PATCH_PAD - PATCH_DIM), (0, D_TOKEN - FEAT)))
    fc_w = jnp.pad(p['fc_w'], ((0, D_TOKEN - FEAT), (0, 0)))
    enc, dec = p['enc'], p['dec']
    ea, da, ca = enc['self_attn'], dec['self_attn'], dec['cross_attn']

    # ---- encoder mega-kernel parameters
    kp['enc_wstk'] = jnp.concatenate(
        [bb_w, fc_w, ea['wo'], enc['lin1_w'], enc['lin2_w']], axis=0).astype(bf16)
    kp['enc_wqkv'] = jnp.concatenate([ea['wq'], ea['wk'], ea['wv']],
                                     axis=1).astype(bf16)
    kp['enc_wkv'] = jnp.concatenate([ca['wk'], ca['wv']], axis=1).astype(bf16)
    kp['enc_vecs'] = vstack([
        vrow(p['bb_b']), vrow(p['fc_b']), vrow(p['fc_ln_g']), vrow(p['fc_ln_b']),
        vrow(p['ln_g']), vrow(p['ln_b']),
        vrow(ea['bq']), vrow(ea['bk']), vrow(ea['bv']), vrow(ea['bo']),
        vrow(enc['lin1_b']), vrow(enc['lin2_b']),
        vrow(enc['norm1_g']), vrow(enc['norm1_b']),
        vrow(enc['norm2_g']), vrow(enc['norm2_b']),
        vrow(ca['bk']), vrow(ca['bv'])], EV_ROWS)

    # ---- decoder refine-loop kernel parameters
    xy2_w = jnp.pad(p['xy2_w'], ((0, 0), (0, D_TOKEN - 2)))
    kp['dec_wstk'] = jnp.concatenate(
        [da['wo'], ca['wq'], ca['wo'], dec['lin1_w'], dec['lin2_w'],
         p['xy1_w'], xy2_w], axis=0).astype(bf16)
    kp['dec_wqkv'] = jnp.concatenate([da['wq'], da['wk'], da['wv']],
                                     axis=1).astype(bf16)
    kp['dec_vecs'] = vstack([
        vrow(da['bq']), vrow(da['bk']), vrow(da['bv']), vrow(da['bo']),
        vrow(ca['bq']), vrow(ca['bo']),
        vrow(dec['lin1_b']), vrow(dec['lin2_b']),
        vrow(dec['norm1_g']), vrow(dec['norm1_b']),
        vrow(dec['norm2_g']), vrow(dec['norm2_b']),
        vrow(dec['norm3_g']), vrow(dec['norm3_b']),
        vrow(p['xy1_b']), vrow(p['xy2_b']),
        vrow(p['ln_g']), vrow(p['ln_b'])], DV_ROWS)

    pe = p['pe'].astype(f32)
    kp['pe_enc'] = jnp.broadcast_to(pe[None, :SEQ_ENC],
                                    (batch, SEQ_ENC, D_TOKEN)
                                    ).reshape(batch * SEQ_ENC, D_TOKEN)
    kp['pe_dec'] = pe[:SEQ_DEC]
    return kp


# ----------------------------- forward pass -----------------------------------
def forward(kp, first_frame, first_boundary, previous_frame, current_frame,
            previous_boundary):
    b = first_frame.shape[0]
    n = BOUNDARY_NUM
    d = D_TOKEN

    # 1) align first_boundary to previous_boundary
    shifts = find_best_shift(previous_boundary, first_boundary)
    first_boundary = roll_boundaries(first_boundary, shifts)

    # 2) ONE fused encoder kernel: backbone proj (3 frames), img_token_fc +
    #    LayerNorms + PE, encoder layer, cross-attn K/V projection.
    frames = jnp.stack([previous_frame, current_frame, first_frame], axis=1)
    patches = patchify_frames(frames)                           # (B*3*16, 48)
    patches = jnp.pad(patches, ((0, 0), (0, PATCH_PAD - PATCH_DIM)))
    tok, kv = encoder_call(kp, patches)                         # f32 / bf16
    tok = tok.reshape(b, 3, GRID * GRID, d)
    pre_tok, cur_tok, first_tok = tok[:, 0], tok[:, 1], tok[:, 2]
    k_mem = kv[:, :d].reshape(b, SEQ_ENC, d)
    v_mem = kv[:, d:].reshape(b, SEQ_ENC, d)
    kt_mem = jnp.transpose(k_mem, (0, 2, 1))                    # (B, D, S) bf16

    # 3) high-res stand-in features; loop-invariant pre/first boundary tokens
    pre_feats = highres_from_tokens(pre_tok)
    cur_feats = highres_from_tokens(cur_tok)
    first_feats = highres_from_tokens(first_tok)
    pre_tokens = boundary_tokens(pre_feats, previous_boundary,
                                 previous_boundary.astype(jnp.float32))
    first_tokens = boundary_tokens(first_feats, first_boundary,
                                   first_boundary.astype(jnp.float32))
    cur_feats_hw = cur_feats.transpose(0, 2, 3, 1).reshape(b, HW, d
                                                           ).astype(jnp.bfloat16)
    b0_slab = jnp.pad(previous_boundary.astype(jnp.float32),
                      ((0, 0), (0, 0), (0, d - 2)))             # lane-dense init

    # 4) the WHOLE refinement loop is ONE pallas_call (grid over batch)
    res = decoder_refine_call(kp, pre_tokens, first_tokens, cur_feats_hw,
                              kt_mem, v_mem, b0_slab)
    res = res[..., :2].reshape(b, REFINE_NUM, n, 2)
    return [res[:, i] for i in range(REFINE_NUM)]


forward_jit = jax.jit(forward)


# ----------------------------- main -------------------------------------------
if __name__ == "__main__":
    root = jax.random.PRNGKey(0)
    kp_key, kf, kpr, kc, kb1, kb2 = jax.random.split(root, 6)

    params = init_params(kp_key)
    kparams = prepare_params(params, B_SIZE)   # kernel-ready layout, done once

    first_frame = jax.random.normal(kf, (B_SIZE, C_IMG, H_IMG, W_IMG), jnp.float32)
    previous_frame = jax.random.normal(kpr, (B_SIZE, C_IMG, H_IMG, W_IMG), jnp.float32)
    current_frame = jax.random.normal(kc, (B_SIZE, C_IMG, H_IMG, W_IMG), jnp.float32)
    first_boundary = jax.random.randint(kb1, (B_SIZE, BOUNDARY_NUM, 2), 0, H_IMG,
                                        dtype=jnp.int32)
    previous_boundary = jax.random.randint(kb2, (B_SIZE, BOUNDARY_NUM, 2), 0, H_IMG,
                                           dtype=jnp.int32)

    results = forward_jit(kparams, first_frame, first_boundary,
                          previous_frame, current_frame, previous_boundary)
    jax.block_until_ready(results)

    assert len(results) == REFINE_NUM
    assert all(r.shape == (B_SIZE, BOUNDARY_NUM, 2) for r in results)
    assert all(bool(jnp.all(jnp.isfinite(r))) for r in results)
    print("KERNEL_OK")
</pallas_src>

<mosaic_0001>
module attributes {stable_mosaic.version = 11 : i64} {
  func.func @kernel(%arg0: i32, %arg1: memref<96x128xf32, #tpu.memory_space<vmem>>, %arg2: memref<96x128xf32, #tpu.memory_space<vmem>>, %arg3: memref<640x128xbf16, #tpu.memory_space<vmem>>, %arg4: memref<128x384xbf16, #tpu.memory_space<vmem>>, %arg5: memref<128x256xbf16, #tpu.memory_space<vmem>>, %arg6: memref<24x128xf32, #tpu.memory_space<vmem>>, %arg7: memref<96x128xf32, #tpu.memory_space<vmem>>, %arg8: memref<96x256xbf16, #tpu.memory_space<vmem>>) attributes {dimension_semantics = [#tpu.dimension_semantics<arbitrary>], iteration_bounds = array<i64: 1>, scalar_prefetch = 0 : i64, scratch_operands = 0 : i64, tpu.core_type = #tpu.core_type<tc>, window_params = [{pipeline_mode = #tpu.pipeline_mode<synchronous>, transform_indices = @transform_0, window_bounds = array<i64: 96, 128>}, {pipeline_mode = #tpu.pipeline_mode<synchronous>, transform_indices = @transform_1, window_bounds = array<i64: 96, 128>}, {pipeline_mode = #tpu.pipeline_mode<synchronous>, transform_indices = @transform_2, window_bounds = array<i64: 640, 128>}, {pipeline_mode = #tpu.pipeline_mode<synchronous>, transform_indices = @transform_3, window_bounds = array<i64: 128, 384>}, {pipeline_mode = #tpu.pipeline_mode<synchronous>, transform_indices = @transform_4, window_bounds = array<i64: 128, 256>}, {pipeline_mode = #tpu.pipeline_mode<synchronous>, transform_indices = @transform_5, window_bounds = array<i64: 24, 128>}, {pipeline_mode = #tpu.pipeline_mode<synchronous>, transform_indices = @transform_6, window_bounds = array<i64: 96, 128>}, {pipeline_mode = #tpu.pipeline_mode<synchronous>, transform_indices = @transform_7, window_bounds = array<i64: 96, 256>}]} {
    %c0 = arith.constant 0 : index
    %c0_0 = arith.constant 0 : index
    %0 = vector.load %arg6[%c0, %c0_0] : memref<24x128xf32, #tpu.memory_space<vmem>>, vector<24x128xf32>
    %c0_1 = arith.constant 0 : index
    %c0_2 = arith.constant 0 : index
    %1 = vector.load %arg1[%c0_1, %c0_2] : memref<96x128xf32, #tpu.memory_space<vmem>>, vector<96x128xf32>
    %c0_3 = arith.constant 0 : index
    %c0_4 = arith.constant 0 : index
    %2 = vector.load %arg3[%c0_3, %c0_4] : memref<640x128xbf16, #tpu.memory_space<vmem>>, vector<128x128xbf16>
    %3 = arith.truncf %1 : vector<96x128xf32> to vector<96x128xbf16>
    %cst = arith.constant dense<0.000000e+00> : vector<96x128xf32>
    %4 = tpu.matmul %3, %2, %cst {dimension_numbers = #tpu.dot_dimension_numbers<[1], [0], [0], [1], [0, 0, 1, 1], [], []>} : vector<96x128xbf16>, vector<128x128xbf16>, vector<96x128xf32> -> vector<96x128xf32>
    %5 = vector.extract_strided_slice %0 {offsets = [0, 0], sizes = [1, 128], strides = [1, 1]} : vector<24x128xf32> to vector<1x128xf32>
    %6 = vector.broadcast %5 : vector<1x128xf32> to vector<96x128xf32>
    %7 = arith.addf %4, %6 : vector<96x128xf32>
    %c0_5 = arith.constant 0 : index
    %c0_6 = arith.constant 0 : index
    %8 = vector.load %arg7[%c0_5, %c0_6] : memref<96x128xf32, #tpu.memory_space<vmem>>, vector<96x128xf32>
    tpu.vector_store %arg7[%c0_5, %c0_6], %7 {strides = array<i32>} : memref<96x128xf32, #tpu.memory_space<vmem>>, vector<96x128xf32>,
    %c128 = arith.constant 128 : index
    %c0_7 = arith.constant 0 : index
    %9 = vector.load %arg3[%c128, %c0_7] : memref<640x128xbf16, #tpu.memory_space<vmem>>, vector<128x128xbf16>
    %10 = arith.truncf %7 : vector<96x128xf32> to vector<96x128xbf16>
    %cst_8 = arith.constant dense<0.000000e+00> : vector<96x128xf32>
    %11 = tpu.matmul %10, %9, %cst_8 {dimension_numbers = #tpu.dot_dimension_numbers<[1], [0], [0], [1], [0, 0, 1, 1], [], []>} : vector<96x128xbf16>, vector<128x128xbf16>, vector<96x128xf32> -> vector<96x128xf32>
    %12 = vector.extract_strided_slice %0 {offsets = [1, 0], sizes = [1, 128], strides = [1, 1]} : vector<24x128xf32> to vector<1x128xf32>
    %13 = vector.broadcast %12 : vector<1x128xf32> to vector<96x128xf32>
    %14 = arith.addf %11, %13 : vector<96x128xf32>
    %15 = vector.extract_strided_slice %0 {offsets = [2, 0], sizes = [1, 128], strides = [1, 1]} : vector<24x128xf32> to vector<1x128xf32>
    %16 = vector.extract_strided_slice %0 {offsets = [3, 0], sizes = [1, 128], strides = [1, 1]} : vector<24x128xf32> to vector<1x128xf32>
    %cst_9 = arith.constant dense<0.000000e+00> : vector<96xf32>
    %17 = vector.multi_reduction <add>, %14, %cst_9 [1] : vector<96x128xf32> to vector<96xf32>
    %18 = vector.shape_cast %17 : vector<96xf32> to vector<96x1xf32>
    %cst_10 = arith.constant 1.280000e+02 : f32
    %19 = vector.broadcast %cst_10 : f32 to vector<96x1xf32>
    %20 = arith.divf %18, %19 : vector<96x1xf32>
    %21 = vector.broadcast %20 : vector<96x1xf32> to vector<96x128xf32>
    %22 = arith.subf %14, %21 : vector<96x128xf32>
    %23 = arith.mulf %22, %22 : vector<96x128xf32>
    %cst_11 = arith.constant dense<0.000000e+00> : vector<96xf32>
    %24 = vector.multi_reduction <add>, %23, %cst_11 [1] : vector<96x128xf32> to vector<96xf32>
    %25 = vector.shape_cast %24 : vector<96xf32> to vector<96x1xf32>
    %cst_12 = arith.constant 1.280000e+02 : f32
    %26 = vector.broadcast %cst_12 : f32 to vector<96x1xf32>
    %27 = arith.divf %25, %26 : vector<96x1xf32>
    %cst_13 = arith.constant 9.99999974E-6 : f32
    %28 = vector.broadcast %cst_13 : f32 to vector<96x1xf32>
    %29 = arith.addf %27, %28 : vector<96x1xf32>
    %30 = math.rsqrt %29 : vector<96x1xf32>
    %31 = vector.broadcast %30 : vector<96x1xf32> to vector<96x128xf32>
    %32 = arith.mulf %22, %31 : vector<96x128xf32>
    %33 = vector.broadcast %15 : vector<1x128xf32> to vector<96x128xf32>
    %34 = arith.mulf %32, %33 : vector<96x128xf32>
    %35 = vector.broadcast %16 : vector<1x128xf32> to vector<96x128xf32>
    %36 = arith.addf %34, %35 : vector<96x128xf32>
    %37 = vector.extract_strided_slice %0 {offsets = [4, 0], sizes = [1, 128], strides = [1, 1]} : vector<24x128xf32> to vector<1x128xf32>
    %38 = vector.extract_strided_slice %0 {offsets = [5, 0], sizes = [1, 128], strides = [1, 1]} : vector<24x128xf32> to vector<1x128xf32>
    %cst_14 = arith.constant dense<0.000000e+00> : vector<96xf32>
    %39 = vector.multi_reduction <add>, %36, %cst_14 [1] : vector<96x128xf32> to vector<96xf32>
    %40 = vector.shape_cast %39 : vector<96xf32> to vector<96x1xf32>
    %cst_15 = arith.constant 1.280000e+02 : f32
    %41 = vector.broadcast %cst_15 : f32 to vector<96x1xf32>
    %42 = arith.divf %40, %41 : vector<96x1xf32>
    %43 = vector.broadcast %42 : vector<96x1xf32> to vector<96x128xf32>
    %44 = arith.subf %36, %43 : vector<96x128xf32>
    %45 = arith.mulf %44, %44 : vector<96x128xf32>
    %cst_16 = arith.constant dense<0.000000e+00> : vector<96xf32>
    %46 = vector.multi_reduction <add>, %45, %cst_16 [1] : vector<96x128xf32> to vector<96xf32>
    %47 = vector.shape_cast %46 : vector<96xf32> to vector<96x1xf32>
    %cst_17 = arith.constant 1.280000e+02 : f32
    %48 = vector.broadcast %cst_17 : f32 to vector<96x1xf32>
    %49 = arith.divf %47, %48 : vector<96x1xf32>
    %cst_18 = arith.constant 9.99999974E-6 : f32
    %50 = vector.broadcast %cst_18 : f32 to vector<96x1xf32>
    %51 = arith.addf %49, %50 : vector<96x1xf32>
    %52 = math.rsqrt %51 : vector<96x1xf32>
    %53 = vector.broadcast %52 : vector<96x1xf32> to vector<96x128xf32>
    %54 = arith.mulf %44, %53 : vector<96x128xf32>
    %55 = vector.broadcast %37 : vector<1x128xf32> to vector<96x128xf32>
    %56 = arith.mulf %54, %55 : vector<96x128xf32>
    %57 = vector.broadcast %38 : vector<1x128xf32> to vector<96x128xf32>
    %58 = arith.addf %56, %57 : vector<96x128xf32>
    %c0_19 = arith.constant 0 : index
    %c0_20 = arith.constant 0 : index
    %59 = vector.load %arg2[%c0_19, %c0_20] : memref<96x128xf32, #tpu.memory_space<vmem>>, vector<96x128xf32>
    %60 = arith.addf %58, %59 : vector<96x128xf32>
    %c0_21 = arith.constant 0 : index
    %c0_22 = arith.constant 0 : index
    %61 = vector.load %arg4[%c0_21, %c0_22] : memref<128x384xbf16, #tpu.memory_space<vmem>>, vector<128x384xbf16>
    %62 = arith.truncf %60 : vector<96x128xf32> to vector<96x128xbf16>
    %cst_23 = arith.constant dense<0.000000e+00> : vector<96x384xf32>
    %63 = tpu.matmul %62, %61, %cst_23 {dimension_numbers = #tpu.dot_dimension_numbers<[1], [0], [0], [1], [0, 0, 1, 1], [], []>} : vector<96x128xbf16>, vector<128x384xbf16>, vector<96x384xf32> -> vector<96x384xf32>
    %64 = vector.extract_strided_slice %63 {offsets = [0, 0], sizes = [96, 128], strides = [1, 1]} : vector<96x384xf32> to vector<96x128xf32>
    %65 = vector.extract_strided_slice %0 {offsets = [6, 0], sizes = [1, 128], strides = [1, 1]} : vector<24x128xf32> to vector<1x128xf32>
    %66 = vector.broadcast %65 : vector<1x128xf32> to vector<96x128xf32>
    %67 = arith.addf %64, %66 : vector<96x128xf32>
    %68 = vector.extract_strided_slice %63 {offsets = [0, 128], sizes = [96, 128], strides = [1, 1]} : vector<96x384xf32> to vector<96x128xf32>
    %69 = vector.extract_strided_slice %0 {offsets = [7, 0], sizes = [1, 128], strides = [1, 1]} : vector<24x128xf32> to vector<1x128xf32>
    %70 = vector.broadcast %69 : vector<1x128xf32> to vector<96x128xf32>
    %71 = arith.addf %68, %70 : vector<96x128xf32>
    %72 = vector.extract_strided_slice %63 {offsets = [0, 256], sizes = [96, 128], strides = [1, 1]} : vector<96x384xf32> to vector<96x128xf32>
    %73 = vector.extract_strided_slice %0 {offsets = [8, 0], sizes = [1, 128], strides = [1, 1]} : vector<24x128xf32> to vector<1x128xf32>
    %74 = vector.broadcast %73 : vector<1x128xf32> to vector<96x128xf32>
    %75 = arith.addf %72, %74 : vector<96x128xf32>
    %76 = vector.extract_strided_slice %67 {offsets = [0, 0], sizes = [48, 128], strides = [1, 1]} : vector<96x128xf32> to vector<48x128xf32>
    %77 = vector.extract_strided_slice %71 {offsets = [0, 0], sizes = [48, 128], strides = [1, 1]} : vector<96x128xf32> to vector<48x128xf32>
    %78 = vector.extract_strided_slice %75 {offsets = [0, 0], sizes = [48, 128], strides = [1, 1]} : vector<96x128xf32> to vector<48x128xf32>
    %79 = arith.truncf %76 : vector<48x128xf32> to vector<48x128xbf16>
    %80 = arith.truncf %77 : vector<48x128xf32> to vector<48x128xbf16>
    %cst_24 = arith.constant dense<0.000000e+00> : vector<48x48xf32>
    %81 = tpu.matmul %79, %80, %cst_24 {dimension_numbers = #tpu.dot_dimension_numbers<[1], [1], [0], [0], [0, 0, 1, 0], [], []>} : vector<48x128xbf16>, vector<48x128xbf16>, vector<48x48xf32> -> vector<48x48xf32>
    %cst_25 = arith.constant 0.0883883461 : f32
    %82 = vector.broadcast %cst_25 : f32 to vector<48x48xf32>
    %83 = arith.mulf %81, %82 : vector<48x48xf32>
    %cst_26 = arith.constant dense<0xFF800000> : vector<48xf32>
    %84 = vector.multi_reduction <maximumf>, %83, %cst_26 [1] : vector<48x48xf32> to vector<48xf32>
    %85 = vector.shape_cast %84 : vector<48xf32> to vector<48x1xf32>
    %86 = vector.broadcast %85 : vector<48x1xf32> to vector<48x48xf32>
    %87 = arith.subf %83, %86 : vector<48x48xf32>
    %88 = math.exp %87 : vector<48x48xf32>
    %cst_27 = arith.constant dense<0.000000e+00> : vector<48xf32>
    %89 = vector.multi_reduction <add>, %88, %cst_27 [1] : vector<48x48xf32> to vector<48xf32>
    %90 = vector.shape_cast %89 : vector<48xf32> to vector<48x1xf32>
    %91 = tpu.reciprocal %90 {approx = true} : vector<48x1xf32> -> vector<48x1xf32>
    %92 = vector.broadcast %91 : vector<48x1xf32> to vector<48x48xf32>
    %93 = arith.mulf %88, %92 : vector<48x48xf32>
    %94 = arith.truncf %93 : vector<48x48xf32> to vector<48x48xbf16>
    %95 = arith.truncf %78 : vector<48x128xf32> to vector<48x128xbf16>
    %cst_28 = arith.constant dense<0.000000e+00> : vector<48x128xf32>
    %96 = tpu.matmul %94, %95, %cst_28 {dimension_numbers = #tpu.dot_dimension_numbers<[1], [0], [0], [1], [0, 0, 1, 1], [], []>} : vector<48x48xbf16>, vector<48x128xbf16>, vector<48x128xf32> -> vector<48x128xf32>
    %97 = vector.extract_strided_slice %67 {offsets = [48, 0], sizes = [48, 128], strides = [1, 1]} : vector<96x128xf32> to vector<48x128xf32>
    %98 = vector.extract_strided_slice %71 {offsets = [48, 0], sizes = [48, 128], strides = [1, 1]} : vector<96x128xf32> to vector<48x128xf32>
    %99 = vector.extract_strided_slice %75 {offsets = [48, 0], sizes = [48, 128], strides = [1, 1]} : vector<96x128xf32> to vector<48x128xf32>
    %100 = arith.truncf %97 : vector<48x128xf32> to vector<48x128xbf16>
    %101 = arith.truncf %98 : vector<48x128xf32> to vector<48x128xbf16>
    %cst_29 = arith.constant dense<0.000000e+00> : vector<48x48xf32>
    %102 = tpu.matmul %100, %101, %cst_29 {dimension_numbers = #tpu.dot_dimension_numbers<[1], [1], [0], [0], [0, 0, 1, 0], [], []>} : vector<48x128xbf16>, vector<48x128xbf16>, vector<48x48xf32> -> vector<48x48xf32>
    %cst_30 = arith.constant 0.0883883461 : f32
    %103 = vector.broadcast %cst_30 : f32 to vector<48x48xf32>
    %104 = arith.mulf %102, %103 : vector<48x48xf32>
    %cst_31 = arith.constant dense<0xFF800000> : vector<48xf32>
    %105 = vector.multi_reduction <maximumf>, %104, %cst_31 [1] : vector<48x48xf32> to vector<48xf32>
    %106 = vector.shape_cast %105 : vector<48xf32> to vector<48x1xf32>
    %107 = vector.broadcast %106 : vector<48x1xf32> to vector<48x48xf32>
    %108 = arith.subf %104, %107 : vector<48x48xf32>
    %109 = math.exp %108 : vector<48x48xf32>
    %cst_32 = arith.constant dense<0.000000e+00> : vector<48xf32>
    %110 = vector.multi_reduction <add>, %109, %cst_32 [1] : vector<48x48xf32> to vector<48xf32>
    %111 = vector.shape_cast %110 : vector<48xf32> to vector<48x1xf32>
    %112 = tpu.reciprocal %111 {approx = true} : vector<48x1xf32> -> vector<48x1xf32>
    %113 = vector.broadcast %112 : vector<48x1xf32> to vector<48x48xf32>
    %114 = arith.mulf %109, %113 : vector<48x48xf32>
    %115 = arith.truncf %114 : vector<48x48xf32> to vector<48x48xbf16>
    %116 = arith.truncf %99 : vector<48x128xf32> to vector<48x128xbf16>
    %cst_33 = arith.constant dense<0.000000e+00> : vector<48x128xf32>
    %117 = tpu.matmul %115, %116, %cst_33 {dimension_numbers = #tpu.dot_dimension_numbers<[1], [0], [0], [1], [0, 0, 1, 1], [], []>} : vector<48x48xbf16>, vector<48x128xbf16>, vector<48x128xf32> -> vector<48x128xf32>
    %118 = tpu.concatenate %96, %117 in 0 : vector<48x128xf32>, vector<48x128xf32> -> vector<96x128xf32>
    %c256 = arith.constant 256 : index
    %c0_34 = arith.constant 0 : index
    %119 = vector.load %arg3[%c256, %c0_34] : memref<640x128xbf16, #tpu.memory_space<vmem>>, vector<128x128xbf16>
    %120 = arith.truncf %118 : vector<96x128xf32> to vector<96x128xbf16>
    %cst_35 = arith.constant dense<0.000000e+00> : vector<96x128xf32>
    %121 = tpu.matmul %120, %119, %cst_35 {dimension_numbers = #tpu.dot_dimension_numbers<[1], [0], [0], [1], [0, 0, 1, 1], [], []>} : vector<96x128xbf16>, vector<128x128xbf16>, vector<96x128xf32> -> vector<96x128xf32>
    %122 = arith.addf %60, %121 : vector<96x128xf32>
    %123 = vector.extract_strided_slice %0 {offsets = [9, 0], sizes = [1, 128], strides = [1, 1]} : vector<24x128xf32> to vector<1x128xf32>
    %124 = vector.broadcast %123 : vector<1x128xf32> to vector<96x128xf32>
    %125 = arith.addf %122, %124 : vector<96x128xf32>
    %126 = vector.extract_strided_slice %0 {offsets = [12, 0], sizes = [1, 128], strides = [1, 1]} : vector<24x128xf32> to vector<1x128xf32>
    %127 = vector.extract_strided_slice %0 {offsets = [13, 0], sizes = [1, 128], strides = [1, 1]} : vector<24x128xf32> to vector<1x128xf32>
    %cst_36 = arith.constant dense<0.000000e+00> : vector<96xf32>
    %128 = vector.multi_reduction <add>, %125, %cst_36 [1] : vector<96x128xf32> to vector<96xf32>
    %129 = vector.shape_cast %128 : vector<96xf32> to vector<96x1xf32>
    %cst_37 = arith.constant 1.280000e+02 : f32
    %130 = vector.broadcast %cst_37 : f32 to vector<96x1xf32>
    %131 = arith.divf %129, %130 : vector<96x1xf32>
    %132 = vector.broadcast %131 : vector<96x1xf32> to vector<96x128xf32>
    %133 = arith.subf %125, %132 : vector<96x128xf32>
    %134 = arith.mulf %133, %133 : vector<96x128xf32>
    %cst_38 = arith.constant dense<0.000000e+00> : vector<96xf32>
    %135 = vector.multi_reduction <add>, %134, %cst_38 [1] : vector<96x128xf32> to vector<96xf32>
    %136 = vector.shape_cast %135 : vector<96xf32> to vector<96x1xf32>
    %cst_39 = arith.constant 1.280000e+02 : f32
    %137 = vector.broadcast %cst_39 : f32 to vector<96x1xf32>
    %138 = arith.divf %136, %137 : vector<96x1xf32>
    %cst_40 = arith.constant 9.99999974E-6 : f32
    %139 = vector.broadcast %cst_40 : f32 to vector<96x1xf32>
    %140 = arith.addf %138, %139 : vector<96x1xf32>
    %141 = math.rsqrt %140 : vector<96x1xf32>
    %142 = vector.broadcast %141 : vector<96x1xf32> to vector<96x128xf32>
    %143 = arith.mulf %133, %142 : vector<96x128xf32>
    %144 = vector.broadcast %126 : vector<1x128xf32> to vector<96x128xf32>
    %145 = arith.mulf %143, %144 : vector<96x128xf32>
    %146 = vector.broadcast %127 : vector<1x128xf32> to vector<96x128xf32>
    %147 = arith.addf %145, %146 : vector<96x128xf32>
    %c384 = arith.constant 384 : index
    %c0_41 = arith.constant 0 : index
    %148 = vector.load %arg3[%c384, %c0_41] : memref<640x128xbf16, #tpu.memory_space<vmem>>, vector<128x128xbf16>
    %149 = arith.truncf %147 : vector<96x128xf32> to vector<96x128xbf16>
    %cst_42 = arith.constant dense<0.000000e+00> : vector<96x128xf32>
    %150 = tpu.matmul %149, %148, %cst_42 {dimension_numbers = #tpu.dot_dimension_numbers<[1], [0], [0], [1], [0, 0, 1, 1], [], []>} : vector<96x128xbf16>, vector<128x128xbf16>, vector<96x128xf32> -> vector<96x128xf32>
    %151 = vector.extract_strided_slice %0 {offsets = [10, 0], sizes = [1, 128], strides = [1, 1]} : vector<24x128xf32> to vector<1x128xf32>
    %152 = vector.broadcast %151 : vector<1x128xf32> to vector<96x128xf32>
    %153 = arith.addf %150, %152 : vector<96x128xf32>
    %cst_43 = arith.constant 0.000000e+00 : f32
    %154 = vector.broadcast %cst_43 : f32 to vector<96x128xf32>
    %155 = arith.maximumf %153, %154 : vector<96x128xf32>
    %c512 = arith.constant 512 : index
    %c0_44 = arith.constant 0 : index
    %156 = vector.load %arg3[%c512, %c0_44] : memref<640x128xbf16, #tpu.memory_space<vmem>>, vector<128x128xbf16>
    %157 = arith.truncf %155 : vector<96x128xf32> to vector<96x128xbf16>
    %cst_45 = arith.constant dense<0.000000e+00> : vector<96x128xf32>
    %158 = tpu.matmul %157, %156, %cst_45 {dimension_numbers = #tpu.dot_dimension_numbers<[1], [0], [0], [1], [0, 0, 1, 1], [], []>} : vector<96x128xbf16>, vector<128x128xbf16>, vector<96x128xf32> -> vector<96x128xf32>
    %159 = arith.addf %147, %158 : vector<96x128xf32>
    %160 = vector.extract_strided_slice %0 {offsets = [11, 0], sizes = [1, 128], strides = [1, 1]} : vector<24x128xf32> to vector<1x128xf32>
    %161 = vector.broadcast %160 : vector<1x128xf32> to vector<96x128xf32>
    %162 = arith.addf %159, %161 : vector<96x128xf32>
    %163 = vector.extract_strided_slice %0 {offsets = [14, 0], sizes = [1, 128], strides = [1, 1]} : vector<24x128xf32> to vector<1x128xf32>
    %164 = vector.extract_strided_slice %0 {offsets = [15, 0], sizes = [1, 128], strides = [1, 1]} : vector<24x128xf32> to vector<1x128xf32>
    %cst_46 = arith.constant dense<0.000000e+00> : vector<96xf32>
    %165 = vector.multi_reduction <add>, %162, %cst_46 [1] : vector<96x128xf32> to vector<96xf32>
    %166 = vector.shape_cast %165 : vector<96xf32> to vector<96x1xf32>
    %cst_47 = arith.constant 1.280000e+02 : f32
    %167 = vector.broadcast %cst_47 : f32 to vector<96x1xf32>
    %168 = arith.divf %166, %167 : vector<96x1xf32>
    %169 = vector.broadcast %168 : vector<96x1xf32> to vector<96x128xf32>
    %170 = arith.subf %162, %169 : vector<96x128xf32>
    %171 = arith.mulf %170, %170 : vector<96x128xf32>
    %cst_48 = arith.constant dense<0.000000e+00> : vector<96xf32>
    %172 = vector.multi_reduction <add>, %171, %cst_48 [1] : vector<96x128xf32> to vector<96xf32>
    %173 = vector.shape_cast %172 : vector<96xf32> to vector<96x1xf32>
    %cst_49 = arith.constant 1.280000e+02 : f32
    %174 = vector.broadcast %cst_49 : f32 to vector<96x1xf32>
    %175 = arith.divf %173, %174 : vector<96x1xf32>
    %cst_50 = arith.constant 9.99999974E-6 : f32
    %176 = vector.broadcast %cst_50 : f32 to vector<96x1xf32>
    %177 = arith.addf %175, %176 : vector<96x1xf32>
    %178 = math.rsqrt %177 : vector<96x1xf32>
    %179 = vector.broadcast %178 : vector<96x1xf32> to vector<96x128xf32>
    %180 = arith.mulf %170, %179 : vector<96x128xf32>
    %181 = vector.broadcast %163 : vector<1x128xf32> to vector<96x128xf32>
    %182 = arith.mulf %180, %181 : vector<96x128xf32>
    %183 = vector.broadcast %164 : vector<1x128xf32> to vector<96x128xf32>
    %184 = arith.addf %182, %183 : vector<96x128xf32>
    %c0_51 = arith.constant 0 : index
    %c0_52 = arith.constant 0 : index
    %185 = vector.load %arg5[%c0_51, %c0_52] : memref<128x256xbf16, #tpu.memory_space<vmem>>, vector<128x256xbf16>
    %186 = arith.truncf %184 : vector<96x128xf32> to vector<96x128xbf16>
    %cst_53 = arith.constant dense<0.000000e+00> : vector<96x256xf32>
    %187 = tpu.matmul %186, %185, %cst_53 {dimension_numbers = #tpu.dot_dimension_numbers<[1], [0], [0], [1], [0, 0, 1, 1], [], []>} : vector<96x128xbf16>, vector<128x256xbf16>, vector<96x256xf32> -> vector<96x256xf32>
    %188 = vector.extract_strided_slice %0 {offsets = [16, 0], sizes = [1, 128], strides = [1, 1]} : vector<24x128xf32> to vector<1x128xf32>
    %189 = vector.extract_strided_slice %0 {offsets = [17, 0], sizes = [1, 128], strides = [1, 1]} : vector<24x128xf32> to vector<1x128xf32>
    %190 = tpu.concatenate %188, %189 in 1 : vector<1x128xf32>, vector<1x128xf32> -> vector<1x256xf32>
    %191 = vector.broadcast %190 : vector<1x256xf32> to vector<96x256xf32>
    %192 = arith.addf %187, %191 : vector<96x256xf32>
    %193 = arith.truncf %192 : vector<96x256xf32> to vector<96x256xbf16>
    %c0_54 = arith.constant 0 : index
    %c0_55 = arith.constant 0 : index
    %194 = vector.load %arg8[%c0_54, %c0_55] : memref<96x256xbf16, #tpu.memory_space<vmem>>, vector<96x256xbf16>
    tpu.vector_store %arg8[%c0_54, %c0_55], %193 {strides = array<i32>} : memref<96x256xbf16, #tpu.memory_space<vmem>>, vector<96x256xbf16>,
    return
  }
  func.func @transform_0(%arg0: i32) -> (i32, i32) {
    %c0_i32 = arith.constant 0 : i32
    %c0_i32_0 = arith.constant 0 : i32
    %c0_i32_1 = arith.constant 0 : i32
    return %c0_i32, %c0_i32_0 : i32, i32
  }
  func.func @transform_1(%arg0: i32) -> (i32, i32) {
    %c0_i32 = arith.constant 0 : i32
    %c0_i32_0 = arith.constant 0 : i32
    %c0_i32_1 = arith.constant 0 : i32
    return %c0_i32, %c0_i32_0 : i32, i32
  }
  func.func @transform_2(%arg0: i32) -> (i32, i32) {
    %c0_i32 = arith.constant 0 : i32
    %c0_i32_0 = arith.constant 0 : i32
    %c0_i32_1 = arith.constant 0 : i32
    return %c0_i32, %c0_i32_0 : i32, i32
  }
  func.func @transform_3(%arg0: i32) -> (i32, i32) {
    %c0_i32 = arith.constant 0 : i32
    %c0_i32_0 = arith.constant 0 : i32
    %c0_i32_1 = arith.constant 0 : i32
    return %c0_i32, %c0_i32_0 : i32, i32
  }
  func.func @transform_4(%arg0: i32) -> (i32, i32) {
    %c0_i32 = arith.constant 0 : i32
    %c0_i32_0 = arith.constant 0 : i32
    %c0_i32_1 = arith.constant 0 : i32
    return %c0_i32, %c0_i32_0 : i32, i32
  }
  func.func @transform_5(%arg0: i32) -> (i32, i32) {
    %c0_i32 = arith.constant 0 : i32
    %c0_i32_0 = arith.constant 0 : i32
    %c0_i32_1 = arith.constant 0 : i32
    return %c0_i32, %c0_i32_0 : i32, i32
  }
  func.func @transform_6(%arg0: i32) -> (i32, i32) {
    %c0_i32 = arith.constant 0 : i32
    %c0_i32_0 = arith.constant 0 : i32
    %c0_i32_1 = arith.constant 0 : i32
    return %c0_i32, %c0_i32_0 : i32, i32
  }
  func.func @transform_7(%arg0: i32) -> (i32, i32) {
    %c0_i32 = arith.constant 0 : i32
    %c0_i32_0 = arith.constant 0 : i32
    %c0_i32_1 = arith.constant 0 : i32
    return %c0_i32, %c0_i32_0 : i32, i32
  }
}

module attributes {stable_mosaic.version = 11 : i64} {
  func.func @_decoder_refine_kernel(%arg0: i32, %arg1: memref<1x8x128xf32, #tpu.memory_space<vmem>>, %arg2: memref<1x8x128xf32, #tpu.memory_space<vmem>>, %arg3: memref<1x256x128xbf16, #tpu.memory_space<vmem>>, %arg4: memref<1x128x48xbf16, #tpu.memory_space<vmem>>, %arg5: memref<1x48x128xbf16, #tpu.memory_space<vmem>>, %arg6: memref<1x8x128xf32, #tpu.memory_space<vmem>>, %arg7: memref<24x128xf32, #tpu.memory_space<vmem>>, %arg8: memref<128x384xbf16, #tpu.memory_space<vmem>>, %arg9: memref<896x128xbf16, #tpu.memory_space<vmem>>, %arg10: memref<24x128xf32, #tpu.memory_space<vmem>>, %arg11: memref<1x24x128xf32, #tpu.memory_space<vmem>>) attributes {dimension_semantics = [#tpu.dimension_semantics<parallel>], iteration_bounds = array<i64: 2>, scalar_prefetch = 0 : i64, scratch_operands = 0 : i64, tpu.core_type = #tpu.core_type<tc>, window_params = [{transform_indices = @transform_0, window_bounds = array<i64: 1, 8, 128>}, {transform_indices = @transform_1, window_bounds = array<i64: 1, 8, 128>}, {transform_indices = @transform_2, window_bounds = array<i64: 1, 256, 128>}, {transform_indices = @transform_3, window_bounds = array<i64: 1, 128, 48>}, {transform_indices = @transform_4, window_bounds = array<i64: 1, 48, 128>}, {transform_indices = @transform_5, window_bounds = array<i64: 1, 8, 128>}, {pipeline_mode = #tpu.pipeline_mode<synchronous>, transform_indices = @transform_6, window_bounds = array<i64: 24, 128>}, {pipeline_mode = #tpu.pipeline_mode<synchronous>, transform_indices = @transform_7, window_bounds = array<i64: 128, 384>}, {pipeline_mode = #tpu.pipeline_mode<synchronous>, transform_indices = @transform_8, window_bounds = array<i64: 896, 128>}, {pipeline_mode = #tpu.pipeline_mode<synchronous>, transform_indices = @transform_9, window_bounds = array<i64: 24, 128>}, {transform_indices = @transform_10, window_bounds = array<i64: 1, 24, 128>}]} {
    %c0 = arith.constant 0 : index
    %c0_0 = arith.constant 0 : index
    %0 = vector.load %arg10[%c0, %c0_0] : memref<24x128xf32, #tpu.memory_space<vmem>>, vector<24x128xf32>
    %1 = vector.extract_strided_slice %0 {offsets = [16, 0], sizes = [1, 128], strides = [1, 1]} : vector<24x128xf32> to vector<1x128xf32>
    %2 = vector.extract_strided_slice %0 {offsets = [17, 0], sizes = [1, 128], strides = [1, 1]} : vector<24x128xf32> to vector<1x128xf32>
    %c0_1 = arith.constant 0 : index
    %c0_2 = arith.constant 0 : index
    %3 = vector.load %arg7[%c0_1, %c0_2] : memref<24x128xf32, #tpu.memory_space<vmem>>, vector<24x128xf32>
    %c0_3 = arith.constant 0 : index
    %c0_4 = arith.constant 0 : index
    %c0_5 = arith.constant 0 : index
    %4 = vector.load %arg1[%c0_3, %c0_4, %c0_5] : memref<1x8x128xf32, #tpu.memory_space<vmem>>, vector<1x8x128xf32>
    %5 = vector.shape_cast %4 : vector<1x8x128xf32> to vector<8x128xf32>
    %cst = arith.constant dense<0.000000e+00> : vector<8xf32>
    %6 = vector.multi_reduction <add>, %5, %cst [1] : vector<8x128xf32> to vector<8xf32>
    %7 = vector.shape_cast %6 : vector<8xf32> to vector<8x1xf32>
    %cst_6 = arith.constant 1.280000e+02 : f32
    %8 = vector.broadcast %cst_6 : f32 to vector<8x1xf32>
    %9 = arith.divf %7, %8 : vector<8x1xf32>
    %10 = vector.broadcast %9 : vector<8x1xf32> to vector<8x128xf32>
    %11 = arith.subf %5, %10 : vector<8x128xf32>
    %12 = arith.mulf %11, %11 : vector<8x128xf32>
    %cst_7 = arith.constant dense<0.000000e+00> : vector<8xf32>
    %13 = vector.multi_reduction <add>, %12, %cst_7 [1] : vector<8x128xf32> to vector<8xf32>
    %14 = vector.shape_cast %13 : vector<8xf32> to vector<8x1xf32>
    %cst_8 = arith.constant 1.280000e+02 : f32
    %15 = vector.broadcast %cst_8 : f32 to vector<8x1xf32>
    %16 = arith.divf %14, %15 : vector<8x1xf32>
    %cst_9 = arith.constant 9.99999974E-6 : f32
    %17 = vector.broadcast %cst_9 : f32 to vector<8x1xf32>
    %18 = arith.addf %16, %17 : vector<8x1xf32>
    %19 = math.rsqrt %18 : vector<8x1xf32>
    %20 = vector.broadcast %19 : vector<8x1xf32> to vector<8x128xf32>
    %21 = arith.mulf %11, %20 : vector<8x128xf32>
    %22 = vector.broadcast %1 : vector<1x128xf32> to vector<8x128xf32>
    %23 = arith.mulf %21, %22 : vector<8x128xf32>
    %24 = vector.broadcast %2 : vector<1x128xf32> to vector<8x128xf32>
    %25 = arith.addf %23, %24 : vector<8x128xf32>
    %26 = vector.extract_strided_slice %3 {offsets = [0, 0], sizes = [8, 128], strides = [1, 1]} : vector<24x128xf32> to vector<8x128xf32>
    %27 = arith.addf %25, %26 : vector<8x128xf32>
    %c0_10 = arith.constant 0 : index
    %c0_11 = arith.constant 0 : index
    %c0_12 = arith.constant 0 : index
    %28 = vector.load %arg2[%c0_10, %c0_11, %c0_12] : memref<1x8x128xf32, #tpu.memory_space<vmem>>, vector<1x8x128xf32>
    %29 = vector.shape_cast %28 : vector<1x8x128xf32> to vector<8x128xf32>
    %cst_13 = arith.constant dense<0.000000e+00> : vector<8xf32>
    %30 = vector.multi_reduction <add>, %29, %cst_13 [1] : vector<8x128xf32> to vector<8xf32>
    %31 = vector.shape_cast %30 : vector<8xf32> to vector<8x1xf32>
    %cst_14 = arith.constant 1.280000e+02 : f32
    %32 = vector.broadcast %cst_14 : f32 to vector<8x1xf32>
    %33 = arith.divf %31, %32 : vector<8x1xf32>
    %34 = vector.broadcast %33 : vector<8x1xf32> to vector<8x128xf32>
    %35 = arith.subf %29, %34 : vector<8x128xf32>
    %36 = arith.mulf %35, %35 : vector<8x128xf32>
    %cst_15 = arith.constant dense<0.000000e+00> : vector<8xf32>
    %37 = vector.multi_reduction <add>, %36, %cst_15 [1] : vector<8x128xf32> to vector<8xf32>
    %38 = vector.shape_cast %37 : vector<8xf32> to vector<8x1xf32>
    %cst_16 = arith.constant 1.280000e+02 : f32
    %39 = vector.broadcast %cst_16 : f32 to vector<8x1xf32>
    %40 = arith.divf %38, %39 : vector<8x1xf32>
    %cst_17 = arith.constant 9.99999974E-6 : f32
    %41 = vector.broadcast %cst_17 : f32 to vector<8x1xf32>
    %42 = arith.addf %40, %41 : vector<8x1xf32>
    %43 = math.rsqrt %42 : vector<8x1xf32>
    %44 = vector.broadcast %43 : vector<8x1xf32> to vector<8x128xf32>
    %45 = arith.mulf %35, %44 : vector<8x128xf32>
    %46 = vector.broadcast %1 : vector<1x128xf32> to vector<8x128xf32>
    %47 = arith.mulf %45, %46 : vector<8x128xf32>
    %48 = vector.broadcast %2 : vector<1x128xf32> to vector<8x128xf32>
    %49 = arith.addf %47, %48 : vector<8x128xf32>
    %50 = vector.extract_strided_slice %3 {offsets = [16, 0], sizes = [8, 128], strides = [1, 1]} : vector<24x128xf32> to vector<8x128xf32>
    %51 = arith.addf %49, %50 : vector<8x128xf32>
    %52 = vector.extract_strided_slice %3 {offsets = [8, 0], sizes = [8, 128], strides = [1, 1]} : vector<24x128xf32> to vector<8x128xf32>
    %c0_18 = arith.constant 0 : index
    %c0_19 = arith.constant 0 : index
    %c0_20 = arith.constant 0 : index
    %53 = vector.load %arg3[%c0_18, %c0_19, %c0_20] : memref<1x256x128xbf16, #tpu.memory_space<vmem>>, vector<1x256x128xbf16>
    %54 = vector.shape_cast %53 : vector<1x256x128xbf16> to vector<256x128xbf16>
    %c0_21 = arith.constant 0 : index
    %c0_22 = arith.constant 0 : index
    %c0_23 = arith.constant 0 : index
    %55 = vector.load %arg4[%c0_21, %c0_22, %c0_23] : memref<1x128x48xbf16, #tpu.memory_space<vmem>>, vector<1x128x48xbf16>
    %56 = vector.shape_cast %55 : vector<1x128x48xbf16> to vector<128x48xbf16>
    %c0_24 = arith.constant 0 : index
    %c0_25 = arith.constant 0 : index
    %c0_26 = arith.constant 0 : index
    %57 = vector.load %arg5[%c0_24, %c0_25, %c0_26] : memref<1x48x128xbf16, #tpu.memory_space<vmem>>, vector<1x48x128xbf16>
    %58 = vector.shape_cast %57 : vector<1x48x128xbf16> to vector<48x128xbf16>
    %59 = tpu.iota {dimensions = array<i32: 1>} : vector<8x128xi32>
    %60 = tpu.iota {dimensions = array<i32: 1>} : vector<8x256xi32>
    %c0_27 = arith.constant 0 : index
    %c0_28 = arith.constant 0 : index
    %c0_29 = arith.constant 0 : index
    %61 = vector.load %arg6[%c0_27, %c0_28, %c0_29] : memref<1x8x128xf32, #tpu.memory_space<vmem>>, vector<1x8x128xf32>
    %62 = vector.shape_cast %61 : vector<1x8x128xf32> to vector<8x128xf32>
    %c0_i32 = arith.constant 0 : i32
    %63 = vector.broadcast %c0_i32 : i32 to vector<8x128xi32>
    %64 = arith.cmpi eq, %59, %63 : vector<8x128xi32>
    %cst_30 = arith.constant 0.000000e+00 : f32
    %65 = vector.broadcast %cst_30 : f32 to vector<8x128xf32>
    %66 = arith.select %64, %62, %65 : vector<8x128xi1>, vector<8x128xf32>
    %cst_31 = arith.constant dense<0.000000e+00> : vector<8xf32>
    %67 = vector.multi_reduction <add>, %66, %cst_31 [1] : vector<8x128xf32> to vector<8xf32>
    %68 = vector.shape_cast %67 : vector<8xf32> to vector<8x1xf32>
    %c1_i32 = arith.constant 1 : i32
    %69 = vector.broadcast %c1_i32 : i32 to vector<8x128xi32>
    %70 = arith.cmpi eq, %59, %69 : vector<8x128xi32>
    %cst_32 = arith.constant 0.000000e+00 : f32
    %71 = vector.broadcast %cst_32 : f32 to vector<8x128xf32>
    %72 = arith.select %70, %62, %71 : vector<8x128xi1>, vector<8x128xf32>
    %cst_33 = arith.constant dense<0.000000e+00> : vector<8xf32>
    %73 = vector.multi_reduction <add>, %72, %cst_33 [1] : vector<8x128xf32> to vector<8xf32>
    %74 = vector.shape_cast %73 : vector<8xf32> to vector<8x1xf32>
    %cst_34 = arith.constant 0.000000e+00 : f32
    %cst_35 = arith.constant 1.500000e+01 : f32
    %75 = vector.broadcast %cst_34 : f32 to vector<8x1xf32>
    %76 = arith.maximumf %75, %68 : vector<8x1xf32>
    %77 = vector.broadcast %cst_35 : f32 to vector<8x1xf32>
    %78 = arith.minimumf %77, %76 : vector<8x1xf32>
    %cst_36 = arith.constant 0.000000e+00 : f32
    %cst_37 = arith.constant 1.500000e+01 : f32
    %79 = vector.broadcast %cst_36 : f32 to vector<8x1xf32>
    %80 = arith.maximumf %79, %74 : vector<8x1xf32>
    %81 = vector.broadcast %cst_37 : f32 to vector<8x1xf32>
    %82 = arith.minimumf %81, %80 : vector<8x1xf32>
    %83 = arith.fptosi %78 : vector<8x1xf32> to vector<8x1xi32>
    %c16_i32 = arith.constant 16 : i32
    %84 = vector.broadcast %c16_i32 : i32 to vector<8x1xi32>
    %85 = arith.muli %83, %84 : vector<8x1xi32>
    %86 = arith.fptosi %82 : vector<8x1xf32> to vector<8x1xi32>
    %87 = arith.addi %85, %86 : vector<8x1xi32>
    %88 = vector.broadcast %87 : vector<8x1xi32> to vector<8x256xi32>
    %89 = arith.cmpi eq, %60, %88 : vector<8x256xi32>
    %90 = arith.extui %89 : vector<8x256xi1> to vector<8x256xi32>
    %91 = arith.sitofp %90 : vector<8x256xi32> to vector<8x256xf32>
    %92 = arith.truncf %91 : vector<8x256xf32> to vector<8x256xbf16>
    %cst_38 = arith.constant dense<0.000000e+00> : vector<8x128xf32>
    %93 = tpu.matmul %92, %54, %cst_38 {dimension_numbers = #tpu.dot_dimension_numbers<[1], [0], [0], [1], [0, 0, 1, 1], [], []>} : vector<8x256xbf16>, vector<256x128xbf16>, vector<8x128xf32> -> vector<8x128xf32>
    %c126_i32 = arith.constant 126 : i32
    %94 = vector.broadcast %c126_i32 : i32 to vector<8x128xi32>
    %95 = arith.cmpi slt, %59, %94 : vector<8x128xi32>
    %cst_39 = arith.constant 0.000000e+00 : f32
    %96 = vector.broadcast %cst_39 : f32 to vector<8x128xf32>
    %97 = arith.select %95, %93, %96 : vector<8x128xi1>, vector<8x128xf32>
    %c126_i32_40 = arith.constant 126 : i32
    %98 = vector.broadcast %c126_i32_40 : i32 to vector<8x128xi32>
    %99 = arith.cmpi eq, %59, %98 : vector<8x128xi32>
    %cst_41 = arith.constant 0.000000e+00 : f32
    %100 = vector.shape_cast %78 : vector<8x1xf32> to vector<8x1xf32>
    %101 = vector.broadcast %100 : vector<8x1xf32> to vector<8x128xf32>
    %102 = vector.broadcast %cst_41 : f32 to vector<8x128xf32>
    %103 = arith.select %99, %101, %102 : vector<8x128xi1>, vector<8x128xf32>
    %104 = arith.addf %97, %103 : vector<8x128xf32>
    %c127_i32 = arith.constant 127 : i32
    %105 = vector.broadcast %c127_i32 : i32 to vector<8x128xi32>
    %106 = arith.cmpi eq, %59, %105 : vector<8x128xi32>
    %cst_42 = arith.constant 0.000000e+00 : f32
    %107 = vector.shape_cast %82 : vector<8x1xf32> to vector<8x1xf32>
    %108 = vector.broadcast %107 : vector<8x1xf32> to vector<8x128xf32>
    %109 = vector.broadcast %cst_42 : f32 to vector<8x128xf32>
    %110 = arith.select %106, %108, %109 : vector<8x128xi1>, vector<8x128xf32>
    %111 = arith.addf %104, %110 : vector<8x128xf32>
    %cst_43 = arith.constant dense<0.000000e+00> : vector<8xf32>
    %112 = vector.multi_reduction <add>, %111, %cst_43 [1] : vector<8x128xf32> to vector<8xf32>
    %113 = vector.shape_cast %112 : vector<8xf32> to vector<8x1xf32>
    %cst_44 = arith.constant 1.280000e+02 : f32
    %114 = vector.broadcast %cst_44 : f32 to vector<8x1xf32>
    %115 = arith.divf %113, %114 : vector<8x1xf32>
    %116 = vector.broadcast %115 : vector<8x1xf32> to vector<8x128xf32>
    %117 = arith.subf %111, %116 : vector<8x128xf32>
    %118 = arith.mulf %117, %117 : vector<8x128xf32>
    %cst_45 = arith.constant dense<0.000000e+00> : vector<8xf32>
    %119 = vector.multi_reduction <add>, %118, %cst_45 [1] : vector<8x128xf32> to vector<8xf32>
    %120 = vector.shape_cast %119 : vector<8xf32> to vector<8x1xf32>
    %cst_46 = arith.constant 1.280000e+02 : f32
    %121 = vector.broadcast %cst_46 : f32 to vector<8x1xf32>
    %122 = arith.divf %120, %121 : vector<8x1xf32>
    %cst_47 = arith.constant 9.99999974E-6 : f32
    %123 = vector.broadcast %cst_47 : f32 to vector<8x1xf32>
    %124 = arith.addf %122, %123 : vector<8x1xf32>
    %125 = math.rsqrt %124 : vector<8x1xf32>
    %126 = vector.broadcast %125 : vector<8x1xf32> to vector<8x128xf32>
    %127 = arith.mulf %117, %126 : vector<8x128xf32>
    %128 = vector.broadcast %1 : vector<1x128xf32> to vector<8x128xf32>
    %129 = arith.mulf %127, %128 : vector<8x128xf32>
    %130 = vector.broadcast %2 : vector<1x128xf32> to vector<8x128xf32>
    %131 = arith.addf %129, %130 : vector<8x128xf32>
    %132 = arith.addf %131, %52 : vector<8x128xf32>
    %133 = tpu.concatenate %27, %132, %51 in 0 : vector<8x128xf32>, vector<8x128xf32>, vector<8x128xf32> -> vector<24x128xf32>
    %c0_48 = arith.constant 0 : index
    %c0_49 = arith.constant 0 : index
    %134 = vector.load %arg8[%c0_48, %c0_49] : memref<128x384xbf16, #tpu.memory_space<vmem>>, vector<128x384xbf16>
    %135 = arith.truncf %133 : vector<24x128xf32> to vector<24x128xbf16>
    %cst_50 = arith.constant dense<0.000000e+00> : vector<24x384xf32>
    %136 = tpu.matmul %135, %134, %cst_50 {dimension_numbers = #tpu.dot_dimension_numbers<[1], [0], [0], [1], [0, 0, 1, 1], [], []>} : vector<24x128xbf16>, vector<128x384xbf16>, vector<24x384xf32> -> vector<24x384xf32>
    %137 = vector.extract_strided_slice %136 {offsets = [0, 0], sizes = [24, 128], strides = [1, 1]} : vector<24x384xf32> to vector<24x128xf32>
    %138 = vector.extract_strided_slice %0 {offsets = [0, 0], sizes = [1, 128], strides = [1, 1]} : vector<24x128xf32> to vector<1x128xf32>
    %139 = vector.broadcast %138 : vector<1x128xf32> to vector<24x128xf32>
    %140 = arith.addf %137, %139 : vector<24x128xf32>
    %141 = vector.extract_strided_slice %136 {offsets = [0, 128], sizes = [24, 128], strides = [1, 1]} : vector<24x384xf32> to vector<24x128xf32>
    %142 = vector.extract_strided_slice %0 {offsets = [1, 0], sizes = [1, 128], strides = [1, 1]} : vector<24x128xf32> to vector<1x128xf32>
    %143 = vector.broadcast %142 : vector<1x128xf32> to vector<24x128xf32>
    %144 = arith.addf %141, %143 : vector<24x128xf32>
    %145 = vector.extract_strided_slice %136 {offsets = [0, 256], sizes = [24, 128], strides = [1, 1]} : vector<24x384xf32> to vector<24x128xf32>
    %146 = vector.extract_strided_slice %0 {offsets = [2, 0], sizes = [1, 128], strides = [1, 1]} : vector<24x128xf32> to vector<1x128xf32>
    %147 = vector.broadcast %146 : vector<1x128xf32> to vector<24x128xf32>
    %148 = arith.addf %145, %147 : vector<24x128xf32>
    %149 = arith.truncf %140 : vector<24x128xf32> to vector<24x128xbf16>
    %150 = arith.truncf %144 : vector<24x128xf32> to vector<24x128xbf16>
    %cst_51 = arith.constant dense<0.000000e+00> : vector<24x24xf32>
    %151 = tpu.matmul %149, %150, %cst_51 {dimension_numbers = #tpu.dot_dimension_numbers<[1], [1], [0], [0], [0, 0, 1, 0], [], []>} : vector<24x128xbf16>, vector<24x128xbf16>, vector<24x24xf32> -> vector<24x24xf32>
    %cst_52 = arith.constant 0.0883883461 : f32
    %152 = vector.broadcast %cst_52 : f32 to vector<24x24xf32>
    %153 = arith.mulf %151, %152 : vector<24x24xf32>
    %cst_53 = arith.constant dense<0xFF800000> : vector<24xf32>
    %154 = vector.multi_reduction <maximumf>, %153, %cst_53 [1] : vector<24x24xf32> to vector<24xf32>
    %155 = vector.shape_cast %154 : vector<24xf32> to vector<24x1xf32>
    %156 = vector.broadcast %155 : vector<24x1xf32> to vector<24x24xf32>
    %157 = arith.subf %153, %156 : vector<24x24xf32>
    %158 = math.exp %157 : vector<24x24xf32>
    %cst_54 = arith.constant dense<0.000000e+00> : vector<24xf32>
    %159 = vector.multi_reduction <add>, %158, %cst_54 [1] : vector<24x24xf32> to vector<24xf32>
    %160 = vector.shape_cast %159 : vector<24xf32> to vector<24x1xf32>
    %161 = tpu.reciprocal %160 {approx = true} : vector<24x1xf32> -> vector<24x1xf32>
    %162 = vector.broadcast %161 : vector<24x1xf32> to vector<24x24xf32>
    %163 = arith.mulf %158, %162 : vector<24x24xf32>
    %164 = arith.truncf %163 : vector<24x24xf32> to vector<24x24xbf16>
    %165 = arith.truncf %148 : vector<24x128xf32> to vector<24x128xbf16>
    %cst_55 = arith.constant dense<0.000000e+00> : vector<24x128xf32>
    %166 = tpu.matmul %164, %165, %cst_55 {dimension_numbers = #tpu.dot_dimension_numbers<[1], [0], [0], [1], [0, 0, 1, 1], [], []>} : vector<24x24xbf16>, vector<24x128xbf16>, vector<24x128xf32> -> vector<24x128xf32>
    %c0_56 = arith.constant 0 : index
    %c0_57 = arith.constant 0 : index
    %167 = vector.load %arg9[%c0_56, %c0_57] : memref<896x128xbf16, #tpu.memory_space<vmem>>, vector<128x128xbf16>
    %168 = arith.truncf %166 : vector<24x128xf32> to vector<24x128xbf16>
    %cst_58 = arith.constant dense<0.000000e+00> : vector<24x128xf32>
    %169 = tpu.matmul %168, %167, %cst_58 {dimension_numbers = #tpu.dot_dimension_numbers<[1], [0], [0], [1], [0, 0, 1, 1], [], []>} : vector<24x128xbf16>, vector<128x128xbf16>, vector<24x128xf32> -> vector<24x128xf32>
    %170 = arith.addf %133, %169 : vector<24x128xf32>
    %171 = vector.extract_strided_slice %0 {offsets = [3, 0], sizes = [1, 128], strides = [1, 1]} : vector<24x128xf32> to vector<1x128xf32>
    %172 = vector.broadcast %171 : vector<1x128xf32> to vector<24x128xf32>
    %173 = arith.addf %170, %172 : vector<24x128xf32>
    %174 = vector.extract_strided_slice %0 {offsets = [8, 0], sizes = [1, 128], strides = [1, 1]} : vector<24x128xf32> to vector<1x128xf32>
    %175 = vector.extract_strided_slice %0 {offsets = [9, 0], sizes = [1, 128], strides = [1, 1]} : vector<24x128xf32> to vector<1x128xf32>
    %cst_59 = arith.constant dense<0.000000e+00> : vector<24xf32>
    %176 = vector.multi_reduction <add>, %173, %cst_59 [1] : vector<24x128xf32> to vector<24xf32>
    %177 = vector.shape_cast %176 : vector<24xf32> to vector<24x1xf32>
    %cst_60 = arith.constant 1.280000e+02 : f32
    %178 = vector.broadcast %cst_60 : f32 to vector<24x1xf32>
    %179 = arith.divf %177, %178 : vector<24x1xf32>
    %180 = vector.broadcast %179 : vector<24x1xf32> to vector<24x128xf32>
    %181 = arith.subf %173, %180 : vector<24x128xf32>
    %182 = arith.mulf %181, %181 : vector<24x128xf32>
    %cst_61 = arith.constant dense<0.000000e+00> : vector<24xf32>
    %183 = vector.multi_reduction <add>, %182, %cst_61 [1] : vector<24x128xf32> to vector<24xf32>
    %184 = vector.shape_cast %183 : vector<24xf32> to vector<24x1xf32>
    %cst_62 = arith.constant 1.280000e+02 : f32
    %185 = vector.broadcast %cst_62 : f32 to vector<24x1xf32>
    %186 = arith.divf %184, %185 : vector<24x1xf32>
    %cst_63 = arith.constant 9.99999974E-6 : f32
    %187 = vector.broadcast %cst_63 : f32 to vector<24x1xf32>
    %188 = arith.addf %186, %187 : vector<24x1xf32>
    %189 = math.rsqrt %188 : vector<24x1xf32>
    %190 = vector.broadcast %189 : vector<24x1xf32> to vector<24x128xf32>
    %191 = arith.mulf %181, %190 : vector<24x128xf32>
    %192 = vector.broadcast %174 : vector<1x128xf32> to vector<24x128xf32>
    %193 = arith.mulf %191, %192 : vector<24x128xf32>
    %194 = vector.broadcast %175 : vector<1x128xf32> to vector<24x128xf32>
    %195 = arith.addf %193, %194 : vector<24x128xf32>
    %c128 = arith.constant 128 : index
    %c0_64 = arith.constant 0 : index
    %196 = vector.load %arg9[%c128, %c0_64] : memref<896x128xbf16, #tpu.memory_space<vmem>>, vector<128x128xbf16>
    %197 = arith.truncf %195 : vector<24x128xf32> to vector<24x128xbf16>
    %cst_65 = arith.constant dense<0.000000e+00> : vector<24x128xf32>
    %198 = tpu.matmul %197, %196, %cst_65 {dimension_numbers = #tpu.dot_dimension_numbers<[1], [0], [0], [1], [0, 0, 1, 1], [], []>} : vector<24x128xbf16>, vector<128x128xbf16>, vector<24x128xf32> -> vector<24x128xf32>
    %199 = vector.extract_strided_slice %0 {offsets = [4, 0], sizes = [1, 128], strides = [1, 1]} : vector<24x128xf32> to vector<1x128xf32>
    %200 = vector.broadcast %199 : vector<1x128xf32> to vector<24x128xf32>
    %201 = arith.addf %198, %200 : vector<24x128xf32>
    %202 = arith.truncf %201 : vector<24x128xf32> to vector<24x128xbf16>
    %cst_66 = arith.constant dense<0.000000e+00> : vector<24x48xf32>
    %203 = tpu.matmul %202, %56, %cst_66 {dimension_numbers = #tpu.dot_dimension_numbers<[1], [0], [0], [1], [0, 0, 1, 1], [], []>} : vector<24x128xbf16>, vector<128x48xbf16>, vector<24x48xf32> -> vector<24x48xf32>
    %cst_67 = arith.constant 0.0883883461 : f32
    %204 = vector.broadcast %cst_67 : f32 to vector<24x48xf32>
    %205 = arith.mulf %203, %204 : vector<24x48xf32>
    %cst_68 = arith.constant dense<0xFF800000> : vector<24xf32>
    %206 = vector.multi_reduction <maximumf>, %205, %cst_68 [1] : vector<24x48xf32> to vector<24xf32>
    %207 = vector.shape_cast %206 : vector<24xf32> to vector<24x1xf32>
    %208 = vector.broadcast %207 : vector<24x1xf32> to vector<24x48xf32>
    %209 = arith.subf %205, %208 : vector<24x48xf32>
    %210 = math.exp %209 : vector<24x48xf32>
    %cst_69 = arith.constant dense<0.000000e+00> : vector<24xf32>
    %211 = vector.multi_reduction <add>, %210, %cst_69 [1] : vector<24x48xf32> to vector<24xf32>
    %212 = vector.shape_cast %211 : vector<24xf32> to vector<24x1xf32>
    %213 = tpu.reciprocal %212 {approx = true} : vector<24x1xf32> -> vector<24x1xf32>
    %214 = vector.broadcast %213 : vector<24x1xf32> to vector<24x48xf32>
    %215 = arith.mulf %210, %214 : vector<24x48xf32>
    %216 = arith.truncf %215 : vector<24x48xf32> to vector<24x48xbf16>
    %cst_70 = arith.constant dense<0.000000e+00> : vector<24x128xf32>
    %217 = tpu.matmul %216, %58, %cst_70 {dimension_numbers = #tpu.dot_dimension_numbers<[1], [0], [0], [1], [0, 0, 1, 1], [], []>} : vector<24x48xbf16>, vector<48x128xbf16>, vector<24x128xf32> -> vector<24x128xf32>
    %c256 = arith.constant 256 : index
    %c0_71 = arith.constant 0 : index
    %218 = vector.load %arg9[%c256, %c0_71] : memref<896x128xbf16, #tpu.memory_space<vmem>>, vector<128x128xbf16>
    %219 = arith.truncf %217 : vector<24x128xf32> to vector<24x128xbf16>
    %cst_72 = arith.constant dense<0.000000e+00> : vector<24x128xf32>
    %220 = tpu.matmul %219, %218, %cst_72 {dimension_numbers = #tpu.dot_dimension_numbers<[1], [0], [0], [1], [0, 0, 1, 1], [], []>} : vector<24x128xbf16>, vector<128x128xbf16>, vector<24x128xf32> -> vector<24x128xf32>
    %221 = arith.addf %195, %220 : vector<24x128xf32>
    %222 = vector.extract_strided_slice %0 {offsets = [5, 0], sizes = [1, 128], strides = [1, 1]} : vector<24x128xf32> to vector<1x128xf32>
    %223 = vector.broadcast %222 : vector<1x128xf32> to vector<24x128xf32>
    %224 = arith.addf %221, %223 : vector<24x128xf32>
    %225 = vector.extract_strided_slice %0 {offsets = [10, 0], sizes = [1, 128], strides = [1, 1]} : vector<24x128xf32> to vector<1x128xf32>
    %226 = vector.extract_strided_slice %0 {offsets = [11, 0], sizes = [1, 128], strides = [1, 1]} : vector<24x128xf32> to vector<1x128xf32>
    %cst_73 = arith.constant dense<0.000000e+00> : vector<24xf32>
    %227 = vector.multi_reduction <add>, %224, %cst_73 [1] : vector<24x128xf32> to vector<24xf32>
    %228 = vector.shape_cast %227 : vector<24xf32> to vector<24x1xf32>
    %cst_74 = arith.constant 1.280000e+02 : f32
    %229 = vector.broadcast %cst_74 : f32 to vector<24x1xf32>
    %230 = arith.divf %228, %229 : vector<24x1xf32>
    %231 = vector.broadcast %230 : vector<24x1xf32> to vector<24x128xf32>
    %232 = arith.subf %224, %231 : vector<24x128xf32>
    %233 = arith.mulf %232, %232 : vector<24x128xf32>
    %cst_75 = arith.constant dense<0.000000e+00> : vector<24xf32>
    %234 = vector.multi_reduction <add>, %233, %cst_75 [1] : vector<24x128xf32> to vector<24xf32>
    %235 = vector.shape_cast %234 : vector<24xf32> to vector<24x1xf32>
    %cst_76 = arith.constant 1.280000e+02 : f32
    %236 = vector.broadcast %cst_76 : f32 to vector<24x1xf32>
    %237 = arith.divf %235, %236 : vector<24x1xf32>
    %cst_77 = arith.constant 9.99999974E-6 : f32
    %238 = vector.broadcast %cst_77 : f32 to vector<24x1xf32>
    %239 = arith.addf %237, %238 : vector<24x1xf32>
    %240 = math.rsqrt %239 : vector<24x1xf32>
    %241 = vector.broadcast %240 : vector<24x1xf32> to vector<24x128xf32>
    %242 = arith.mulf %232, %241 : vector<24x128xf32>
    %243 = vector.broadcast %225 : vector<1x128xf32> to vector<24x128xf32>
    %244 = arith.mulf %242, %243 : vector<24x128xf32>
    %245 = vector.broadcast %226 : vector<1x128xf32> to vector<24x128xf32>
    %246 = arith.addf %244, %245 : vector<24x128xf32>
    %c384 = arith.constant 384 : index
    %c0_78 = arith.constant 0 : index
    %247 = vector.load %arg9[%c384, %c0_78] : memref<896x128xbf16, #tpu.memory_space<vmem>>, vector<128x128xbf16>
    %248 = arith.truncf %246 : vector<24x128xf32> to vector<24x128xbf16>
    %cst_79 = arith.constant dense<0.000000e+00> : vector<24x128xf32>
    %249 = tpu.matmul %248, %247, %cst_79 {dimension_numbers = #tpu.dot_dimension_numbers<[1], [0], [0], [1], [0, 0, 1, 1], [], []>} : vector<24x128xbf16>, vector<128x128xbf16>, vector<24x128xf32> -> vector<24x128xf32>
    %250 = vector.extract_strided_slice %0 {offsets = [6, 0], sizes = [1, 128], strides = [1, 1]} : vector<24x128xf32> to vector<1x128xf32>
    %251 = vector.broadcast %250 : vector<1x128xf32> to vector<24x128xf32>
    %252 = arith.addf %249, %251 : vector<24x128xf32>
    %cst_80 = arith.constant 0.000000e+00 : f32
    %253 = vector.broadcast %cst_80 : f32 to vector<24x128xf32>
    %254 = arith.maximumf %252, %253 : vector<24x128xf32>
    %c512 = arith.constant 512 : index
    %c0_81 = arith.constant 0 : index
    %255 = vector.load %arg9[%c512, %c0_81] : memref<896x128xbf16, #tpu.memory_space<vmem>>, vector<128x128xbf16>
    %256 = arith.truncf %254 : vector<24x128xf32> to vector<24x128xbf16>
    %cst_82 = arith.constant dense<0.000000e+00> : vector<24x128xf32>
    %257 = tpu.matmul %256, %255, %cst_82 {dimension_numbers = #tpu.dot_dimension_numbers<[1], [0], [0], [1], [0, 0, 1, 1], [], []>} : vector<24x128xbf16>, vector<128x128xbf16>, vector<24x128xf32> -> vector<24x128xf32>
    %258 = arith.addf %246, %257 : vector<24x128xf32>
    %259 = vector.extract_strided_slice %0 {offsets = [7, 0], sizes = [1, 128], strides = [1, 1]} : vector<24x128xf32> to vector<1x128xf32>
    %260 = vector.broadcast %259 : vector<1x128xf32> to vector<24x128xf32>
    %261 = arith.addf %258, %260 : vector<24x128xf32>
    %262 = vector.extract_strided_slice %0 {offsets = [12, 0], sizes = [1, 128], strides = [1, 1]} : vector<24x128xf32> to vector<1x128xf32>
    %263 = vector.extract_strided_slice %0 {offsets = [13, 0], sizes = [1, 128], strides = [1, 1]} : vector<24x128xf32> to vector<1x128xf32>
    %cst_83 = arith.constant dense<0.000000e+00> : vector<24xf32>
    %264 = vector.multi_reduction <add>, %261, %cst_83 [1] : vector<24x128xf32> to vector<24xf32>
    %265 = vector.shape_cast %264 : vector<24xf32> to vector<24x1xf32>
    %cst_84 = arith.constant 1.280000e+02 : f32
    %266 = vector.broadcast %cst_84 : f32 to vector<24x1xf32>
    %267 = arith.divf %265, %266 : vector<24x1xf32>
    %268 = vector.broadcast %267 : vector<24x1xf32> to vector<24x128xf32>
    %269 = arith.subf %261, %268 : vector<24x128xf32>
    %270 = arith.mulf %269, %269 : vector<24x128xf32>
    %cst_85 = arith.constant dense<0.000000e+00> : vector<24xf32>
    %271 = vector.multi_reduction <add>, %270, %cst_85 [1] : vector<24x128xf32> to vector<24xf32>
    %272 = vector.shape_cast %271 : vector<24xf32> to vector<24x1xf32>
    %cst_86 = arith.constant 1.280000e+02 : f32
    %273 = vector.broadcast %cst_86 : f32 to vector<24x1xf32>
    %274 = arith.divf %272, %273 : vector<24x1xf32>
    %cst_87 = arith.constant 9.99999974E-6 : f32
    %275 = vector.broadcast %cst_87 : f32 to vector<24x1xf32>
    %276 = arith.addf %274, %275 : vector<24x1xf32>
    %277 = math.rsqrt %276 : vector<24x1xf32>
    %278 = vector.broadcast %277 : vector<24x1xf32> to vector<24x128xf32>
    %279 = arith.mulf %269, %278 : vector<24x128xf32>
    %280 = vector.broadcast %262 : vector<1x128xf32> to vector<24x128xf32>
    %281 = arith.mulf %279, %280 : vector<24x128xf32>
    %282 = vector.broadcast %263 : vector<1x128xf32> to vector<24x128xf32>
    %283 = arith.addf %281, %282 : vector<24x128xf32>
    %284 = vector.extract_strided_slice %283 {offsets = [8, 0], sizes = [8, 128], strides = [1, 1]} : vector<24x128xf32> to vector<8x128xf32>
    %c640 = arith.constant 640 : index
    %c0_88 = arith.constant 0 : index
    %285 = vector.load %arg9[%c640, %c0_88] : memref<896x128xbf16, #tpu.memory_space<vmem>>, vector<128x128xbf16>
    %286 = arith.truncf %284 : vector<8x128xf32> to vector<8x128xbf16>
    %cst_89 = arith.constant dense<0.000000e+00> : vector<8x128xf32>
    %287 = tpu.matmul %286, %285, %cst_89 {dimension_numbers = #tpu.dot_dimension_numbers<[1], [0], [0], [1], [0, 0, 1, 1], [], []>} : vector<8x128xbf16>, vector<128x128xbf16>, vector<8x128xf32> -> vector<8x128xf32>
    %288 = vector.extract_strided_slice %0 {offsets = [14, 0], sizes = [1, 128], strides = [1, 1]} : vector<24x128xf32> to vector<1x128xf32>
    %289 = vector.broadcast %288 : vector<1x128xf32> to vector<8x128xf32>
    %290 = arith.addf %287, %289 : vector<8x128xf32>
    %cst_90 = arith.constant 0.000000e+00 : f32
    %291 = vector.broadcast %cst_90 : f32 to vector<8x128xf32>
    %292 = arith.maximumf %290, %291 : vector<8x128xf32>
    %c768 = arith.constant 768 : index
    %c0_91 = arith.constant 0 : index
    %293 = vector.load %arg9[%c768, %c0_91] : memref<896x128xbf16, #tpu.memory_space<vmem>>, vector<128x128xbf16>
    %294 = arith.truncf %292 : vector<8x128xf32> to vector<8x128xbf16>
    %cst_92 = arith.constant dense<0.000000e+00> : vector<8x128xf32>
    %295 = tpu.matmul %294, %293, %cst_92 {dimension_numbers = #tpu.dot_dimension_numbers<[1], [0], [0], [1], [0, 0, 1, 1], [], []>} : vector<8x128xbf16>, vector<128x128xbf16>, vector<8x128xf32> -> vector<8x128xf32>
    %296 = vector.extract_strided_slice %0 {offsets = [15, 0], sizes = [1, 128], strides = [1, 1]} : vector<24x128xf32> to vector<1x128xf32>
    %297 = vector.broadcast %296 : vector<1x128xf32> to vector<8x128xf32>
    %298 = arith.addf %295, %297 : vector<8x128xf32>
    %c0_i32_93 = arith.constant 0 : i32
    %299 = vector.broadcast %c0_i32_93 : i32 to vector<8x128xi32>
    %300 = arith.cmpi eq, %59, %299 : vector<8x128xi32>
    %cst_94 = arith.constant 0.000000e+00 : f32
    %301 = vector.broadcast %cst_94 : f32 to vector<8x128xf32>
    %302 = arith.select %300, %298, %301 : vector<8x128xi1>, vector<8x128xf32>
    %cst_95 = arith.constant dense<0.000000e+00> : vector<8xf32>
    %303 = vector.multi_reduction <add>, %302, %cst_95 [1] : vector<8x128xf32> to vector<8xf32>
    %304 = vector.shape_cast %303 : vector<8xf32> to vector<8x1xf32>
    %305 = arith.addf %78, %304 : vector<8x1xf32>
    %c1_i32_96 = arith.constant 1 : i32
    %306 = vector.broadcast %c1_i32_96 : i32 to vector<8x128xi32>
    %307 = arith.cmpi eq, %59, %306 : vector<8x128xi32>
    %cst_97 = arith.constant 0.000000e+00 : f32
    %308 = vector.broadcast %cst_97 : f32 to vector<8x128xf32>
    %309 = arith.select %307, %298, %308 : vector<8x128xi1>, vector<8x128xf32>
    %cst_98 = arith.constant dense<0.000000e+00> : vector<8xf32>
    %310 = vector.multi_reduction <add>, %309, %cst_98 [1] : vector<8x128xf32> to vector<8xf32>
    %311 = vector.shape_cast %310 : vector<8xf32> to vector<8x1xf32>
    %312 = arith.addf %82, %311 : vector<8x1xf32>
    %c0_i32_99 = arith.constant 0 : i32
    %313 = vector.broadcast %c0_i32_99 : i32 to vector<8x128xi32>
    %314 = arith.cmpi eq, %59, %313 : vector<8x128xi32>
    %cst_100 = arith.constant 0.000000e+00 : f32
    %315 = vector.shape_cast %305 : vector<8x1xf32> to vector<8x1xf32>
    %316 = vector.broadcast %315 : vector<8x1xf32> to vector<8x128xf32>
    %317 = vector.broadcast %cst_100 : f32 to vector<8x128xf32>
    %318 = arith.select %314, %316, %317 : vector<8x128xi1>, vector<8x128xf32>
    %c1_i32_101 = arith.constant 1 : i32
    %319 = vector.broadcast %c1_i32_101 : i32 to vector<8x128xi32>
    %320 = arith.cmpi eq, %59, %319 : vector<8x128xi32>
    %cst_102 = arith.constant 0.000000e+00 : f32
    %321 = vector.shape_cast %312 : vector<8x1xf32> to vector<8x1xf32>
    %322 = vector.broadcast %321 : vector<8x1xf32> to vector<8x128xf32>
    %323 = vector.broadcast %cst_102 : f32 to vector<8x128xf32>
    %324 = arith.select %320, %322, %323 : vector<8x128xi1>, vector<8x128xf32>
    %325 = arith.addf %318, %324 : vector<8x128xf32>
    %c0_103 = arith.constant 0 : index
    %c0_104 = arith.constant 0 : index
    %c0_105 = arith.constant 0 : index
    %326 = vector.load %arg11[%c0_103, %c0_104, %c0_105] : memref<1x24x128xf32, #tpu.memory_space<vmem>>, vector<1x8x128xf32>
    %327 = vector.shape_cast %326 : vector<1x8x128xf32> to vector<8x128xf32>
    %328 = vector.shape_cast %325 : vector<8x128xf32> to vector<1x8x128xf32>
    tpu.vector_store %arg11[%c0_103, %c0_104, %c0_105], %328 {strides = array<i32>} : memref<1x24x128xf32, #tpu.memory_space<vmem>>, vector<1x8x128xf32>,
    %cst_106 = arith.constant 0.000000e+00 : f32
    %cst_107 = arith.constant 1.500000e+01 : f32
    %329 = vector.broadcast %cst_106 : f32 to vector<8x1xf32>
    %330 = arith.maximumf %329, %305 : vector<8x1xf32>
    %331 = vector.broadcast %cst_107 : f32 to vector<8x1xf32>
    %332 = arith.minimumf %331, %330 : vector<8x1xf32>
    %cst_108 = arith.constant 0.000000e+00 : f32
    %cst_109 = arith.constant 1.500000e+01 : f32
    %333 = vector.broadcast %cst_108 : f32 to vector<8x1xf32>
    %334 = arith.maximumf %333, %312 : vector<8x1xf32>
    %335 = vector.broadcast %cst_109 : f32 to vector<8x1xf32>
    %336 = arith.minimumf %335, %334 : vector<8x1xf32>
    %337 = arith.fptosi %332 : vector<8x1xf32> to vector<8x1xi32>
    %c16_i32_110 = arith.constant 16 : i32
    %338 = vector.broadcast %c16_i32_110 : i32 to vector<8x1xi32>
    %339 = arith.muli %337, %338 : vector<8x1xi32>
    %340 = arith.fptosi %336 : vector<8x1xf32> to vector<8x1xi32>
    %341 = arith.addi %339, %340 : vector<8x1xi32>
    %342 = vector.broadcast %341 : vector<8x1xi32> to vector<8x256xi32>
    %343 = arith.cmpi eq, %60, %342 : vector<8x256xi32>
    %344 = arith.extui %343 : vector<8x256xi1> to vector<8x256xi32>
    %345 = arith.sitofp %344 : vector<8x256xi32> to vector<8x256xf32>
    %346 = arith.truncf %345 : vector<8x256xf32> to vector<8x256xbf16>
    %cst_111 = arith.constant dense<0.000000e+00> : vector<8x128xf32>
    %347 = tpu.matmul %346, %54, %cst_111 {dimension_numbers = #tpu.dot_dimension_numbers<[1], [0], [0], [1], [0, 0, 1, 1], [], []>} : vector<8x256xbf16>, vector<256x128xbf16>, vector<8x128xf32> -> vector<8x128xf32>
    %c126_i32_112 = arith.constant 126 : i32
    %348 = vector.broadcast %c126_i32_112 : i32 to vector<8x128xi32>
    %349 = arith.cmpi slt, %59, %348 : vector<8x128xi32>
    %cst_113 = arith.constant 0.000000e+00 : f32
    %350 = vector.broadcast %cst_113 : f32 to vector<8x128xf32>
    %351 = arith.select %349, %347, %350 : vector<8x128xi1>, vector<8x128xf32>
    %c126_i32_114 = arith.constant 126 : i32
    %352 = vector.broadcast %c126_i32_114 : i32 to vector<8x128xi32>
    %353 = arith.cmpi eq, %59, %352 : vector<8x128xi32>
    %cst_115 = arith.constant 0.000000e+00 : f32
    %354 = vector.shape_cast %332 : vector<8x1xf32> to vector<8x1xf32>
    %355 = vector.broadcast %354 : vector<8x1xf32> to vector<8x128xf32>
    %356 = vector.broadcast %cst_115 : f32 to vector<8x128xf32>
    %357 = arith.select %353, %355, %356 : vector<8x128xi1>, vector<8x128xf32>
    %358 = arith.addf %351, %357 : vector<8x128xf32>
    %c127_i32_116 = arith.constant 127 : i32
    %359 = vector.broadcast %c127_i32_116 : i32 to vector<8x128xi32>
    %360 = arith.cmpi eq, %59, %359 : vector<8x128xi32>
    %cst_117 = arith.constant 0.000000e+00 : f32
    %361 = vector.shape_cast %336 : vector<8x1xf32> to vector<8x1xf32>
    %362 = vector.broadcast %361 : vector<8x1xf32> to vector<8x128xf32>
    %363 = vector.broadcast %cst_117 : f32 to vector<8x128xf32>
    %364 = arith.select %360, %362, %363 : vector<8x128xi1>, vector<8x128xf32>
    %365 = arith.addf %358, %364 : vector<8x128xf32>
    %cst_118 = arith.constant dense<0.000000e+00> : vector<8xf32>
    %366 = vector.multi_reduction <add>, %365, %cst_118 [1] : vector<8x128xf32> to vector<8xf32>
    %367 = vector.shape_cast %366 : vector<8xf32> to vector<8x1xf32>
    %cst_119 = arith.constant 1.280000e+02 : f32
    %368 = vector.broadcast %cst_119 : f32 to vector<8x1xf32>
    %369 = arith.divf %367, %368 : vector<8x1xf32>
    %370 = vector.broadcast %369 : vector<8x1xf32> to vector<8x128xf32>
    %371 = arith.subf %365, %370 : vector<8x128xf32>
    %372 = arith.mulf %371, %371 : vector<8x128xf32>
    %cst_120 = arith.constant dense<0.000000e+00> : vector<8xf32>
    %373 = vector.multi_reduction <add>, %372, %cst_120 [1] : vector<8x128xf32> to vector<8xf32>
    %374 = vector.shape_cast %373 : vector<8xf32> to vector<8x1xf32>
    %cst_121 = arith.constant 1.280000e+02 : f32
    %375 = vector.broadcast %cst_121 : f32 to vector<8x1xf32>
    %376 = arith.divf %374, %375 : vector<8x1xf32>
    %cst_122 = arith.constant 9.99999974E-6 : f32
    %377 = vector.broadcast %cst_122 : f32 to vector<8x1xf32>
    %378 = arith.addf %376, %377 : vector<8x1xf32>
    %379 = math.rsqrt %378 : vector<8x1xf32>
    %380 = vector.broadcast %379 : vector<8x1xf32> to vector<8x128xf32>
    %381 = arith.mulf %371, %380 : vector<8x128xf32>
    %382 = vector.broadcast %1 : vector<1x128xf32> to vector<8x128xf32>
    %383 = arith.mulf %381, %382 : vector<8x128xf32>
    %384 = vector.broadcast %2 : vector<1x128xf32> to vector<8x128xf32>
    %385 = arith.addf %383, %384 : vector<8x128xf32>
    %386 = arith.addf %385, %52 : vector<8x128xf32>
    %387 = tpu.concatenate %27, %386, %51 in 0 : vector<8x128xf32>, vector<8x128xf32>, vector<8x128xf32> -> vector<24x128xf32>
    %c0_123 = arith.constant 0 : index
    %c0_124 = arith.constant 0 : index
    %388 = vector.load %arg8[%c0_123, %c0_124] : memref<128x384xbf16, #tpu.memory_space<vmem>>, vector<128x384xbf16>
    %389 = arith.truncf %387 : vector<24x128xf32> to vector<24x128xbf16>
    %cst_125 = arith.constant dense<0.000000e+00> : vector<24x384xf32>
    %390 = tpu.matmul %389, %388, %cst_125 {dimension_numbers = #tpu.dot_dimension_numbers<[1], [0], [0], [1], [0, 0, 1, 1], [], []>} : vector<24x128xbf16>, vector<128x384xbf16>, vector<24x384xf32> -> vector<24x384xf32>
    %391 = vector.extract_strided_slice %390 {offsets = [0, 0], sizes = [24, 128], strides = [1, 1]} : vector<24x384xf32> to vector<24x128xf32>
    %392 = vector.extract_strided_slice %0 {offsets = [0, 0], sizes = [1, 128], strides = [1, 1]} : vector<24x128xf32> to vector<1x128xf32>
    %393 = vector.broadcast %392 : vector<1x128xf32> to vector<24x128xf32>
    %394 = arith.addf %391, %393 : vector<24x128xf32>
    %395 = vector.extract_strided_slice %390 {offsets = [0, 128], sizes = [24, 128], strides = [1, 1]} : vector<24x384xf32> to vector<24x128xf32>
    %396 = vector.extract_strided_slice %0 {offsets = [1, 0], sizes = [1, 128], strides = [1, 1]} : vector<24x128xf32> to vector<1x128xf32>
    %397 = vector.broadcast %396 : vector<1x128xf32> to vector<24x128xf32>
    %398 = arith.addf %395, %397 : vector<24x128xf32>
    %399 = vector.extract_strided_slice %390 {offsets = [0, 256], sizes = [24, 128], strides = [1, 1]} : vector<24x384xf32> to vector<24x128xf32>
    %400 = vector.extract_strided_slice %0 {offsets = [2, 0], sizes = [1, 128], strides = [1, 1]} : vector<24x128xf32> to vector<1x128xf32>
    %401 = vector.broadcast %400 : vector<1x128xf32> to vector<24x128xf32>
    %402 = arith.addf %399, %401 : vector<24x128xf32>
    %403 = arith.truncf %394 : vector<24x128xf32> to vector<24x128xbf16>
    %404 = arith.truncf %398 : vector<24x128xf32> to vector<24x128xbf16>
    %cst_126 = arith.constant dense<0.000000e+00> : vector<24x24xf32>
    %405 = tpu.matmul %403, %404, %cst_126 {dimension_numbers = #tpu.dot_dimension_numbers<[1], [1], [0], [0], [0, 0, 1, 0], [], []>} : vector<24x128xbf16>, vector<24x128xbf16>, vector<24x24xf32> -> vector<24x24xf32>
    %cst_127 = arith.constant 0.0883883461 : f32
    %406 = vector.broadcast %cst_127 : f32 to vector<24x24xf32>
    %407 = arith.mulf %405, %406 : vector<24x24xf32>
    %cst_128 = arith.constant dense<0xFF800000> : vector<24xf32>
    %408 = vector.multi_reduction <maximumf>, %407, %cst_128 [1] : vector<24x24xf32> to vector<24xf32>
    %409 = vector.shape_cast %408 : vector<24xf32> to vector<24x1xf32>
    %410 = vector.broadcast %409 : vector<24x1xf32> to vector<24x24xf32>
    %411 = arith.subf %407, %410 : vector<24x24xf32>
    %412 = math.exp %411 : vector<24x24xf32>
    %cst_129 = arith.constant dense<0.000000e+00> : vector<24xf32>
    %413 = vector.multi_reduction <add>, %412, %cst_129 [1] : vector<24x24xf32> to vector<24xf32>
    %414 = vector.shape_cast %413 : vector<24xf32> to vector<24x1xf32>
    %415 = tpu.reciprocal %414 {approx = true} : vector<24x1xf32> -> vector<24x1xf32>
    %416 = vector.broadcast %415 : vector<24x1xf32> to vector<24x24xf32>
    %417 = arith.mulf %412, %416 : vector<24x24xf32>
    %418 = arith.truncf %417 : vector<24x24xf32> to vector<24x24xbf16>
    %419 = arith.truncf %402 : vector<24x128xf32> to vector<24x128xbf16>
    %cst_130 = arith.constant dense<0.000000e+00> : vector<24x128xf32>
    %420 = tpu.matmul %418, %419, %cst_130 {dimension_numbers = #tpu.dot_dimension_numbers<[1], [0], [0], [1], [0, 0, 1, 1], [], []>} : vector<24x24xbf16>, vector<24x128xbf16>, vector<24x128xf32> -> vector<24x128xf32>
    %c0_131 = arith.constant 0 : index
    %c0_132 = arith.constant 0 : index
    %421 = vector.load %arg9[%c0_131, %c0_132] : memref<896x128xbf16, #tpu.memory_space<vmem>>, vector<128x128xbf16>
    %422 = arith.truncf %420 : vector<24x128xf32> to vector<24x128xbf16>
    %cst_133 = arith.constant dense<0.000000e+00> : vector<24x128xf32>
    %423 = tpu.matmul %422, %421, %cst_133 {dimension_numbers = #tpu.dot_dimension_numbers<[1], [0], [0], [1], [0, 0, 1, 1], [], []>} : vector<24x128xbf16>, vector<128x128xbf16>, vector<24x128xf32> -> vector<24x128xf32>
    %424 = arith.addf %387, %423 : vector<24x128xf32>
    %425 = vector.extract_strided_slice %0 {offsets = [3, 0], sizes = [1, 128], strides = [1, 1]} : vector<24x128xf32> to vector<1x128xf32>
    %426 = vector.broadcast %425 : vector<1x128xf32> to vector<24x128xf32>
    %427 = arith.addf %424, %426 : vector<24x128xf32>
    %428 = vector.extract_strided_slice %0 {offsets = [8, 0], sizes = [1, 128], strides = [1, 1]} : vector<24x128xf32> to vector<1x128xf32>
    %429 = vector.extract_strided_slice %0 {offsets = [9, 0], sizes = [1, 128], strides = [1, 1]} : vector<24x128xf32> to vector<1x128xf32>
    %cst_134 = arith.constant dense<0.000000e+00> : vector<24xf32>
    %430 = vector.multi_reduction <add>, %427, %cst_134 [1] : vector<24x128xf32> to vector<24xf32>
    %431 = vector.shape_cast %430 : vector<24xf32> to vector<24x1xf32>
    %cst_135 = arith.constant 1.280000e+02 : f32
    %432 = vector.broadcast %cst_135 : f32 to vector<24x1xf32>
    %433 = arith.divf %431, %432 : vector<24x1xf32>
    %434 = vector.broadcast %433 : vector<24x1xf32> to vector<24x128xf32>
    %435 = arith.subf %427, %434 : vector<24x128xf32>
    %436 = arith.mulf %435, %435 : vector<24x128xf32>
    %cst_136 = arith.constant dense<0.000000e+00> : vector<24xf32>
    %437 = vector.multi_reduction <add>, %436, %cst_136 [1] : vector<24x128xf32> to vector<24xf32>
    %438 = vector.shape_cast %437 : vector<24xf32> to vector<24x1xf32>
    %cst_137 = arith.constant 1.280000e+02 : f32
    %439 = vector.broadcast %cst_137 : f32 to vector<24x1xf32>
    %440 = arith.divf %438, %439 : vector<24x1xf32>
    %cst_138 = arith.constant 9.99999974E-6 : f32
    %441 = vector.broadcast %cst_138 : f32 to vector<24x1xf32>
    %442 = arith.addf %440, %441 : vector<24x1xf32>
    %443 = math.rsqrt %442 : vector<24x1xf32>
    %444 = vector.broadcast %443 : vector<24x1xf32> to vector<24x128xf32>
    %445 = arith.mulf %435, %444 : vector<24x128xf32>
    %446 = vector.broadcast %428 : vector<1x128xf32> to vector<24x128xf32>
    %447 = arith.mulf %445, %446 : vector<24x128xf32>
    %448 = vector.broadcast %429 : vector<1x128xf32> to vector<24x128xf32>
    %449 = arith.addf %447, %448 : vector<24x128xf32>
    %c128_139 = arith.constant 128 : index
    %c0_140 = arith.constant 0 : index
    %450 = vector.load %arg9[%c128_139, %c0_140] : memref<896x128xbf16, #tpu.memory_space<vmem>>, vector<128x128xbf16>
    %451 = arith.truncf %449 : vector<24x128xf32> to vector<24x128xbf16>
    %cst_141 = arith.constant dense<0.000000e+00> : vector<24x128xf32>
    %452 = tpu.matmul %451, %450, %cst_141 {dimension_numbers = #tpu.dot_dimension_numbers<[1], [0], [0], [1], [0, 0, 1, 1], [], []>} : vector<24x128xbf16>, vector<128x128xbf16>, vector<24x128xf32> -> vector<24x128xf32>
    %453 = vector.extract_strided_slice %0 {offsets = [4, 0], sizes = [1, 128], strides = [1, 1]} : vector<24x128xf32> to vector<1x128xf32>
    %454 = vector.broadcast %453 : vector<1x128xf32> to vector<24x128xf32>
    %455 = arith.addf %452, %454 : vector<24x128xf32>
    %456 = arith.truncf %455 : vector<24x128xf32> to vector<24x128xbf16>
    %cst_142 = arith.constant dense<0.000000e+00> : vector<24x48xf32>
    %457 = tpu.matmul %456, %56, %cst_142 {dimension_numbers = #tpu.dot_dimension_numbers<[1], [0], [0], [1], [0, 0, 1, 1], [], []>} : vector<24x128xbf16>, vector<128x48xbf16>, vector<24x48xf32> -> vector<24x48xf32>
    %cst_143 = arith.constant 0.0883883461 : f32
    %458 = vector.broadcast %cst_143 : f32 to vector<24x48xf32>
    %459 = arith.mulf %457, %458 : vector<24x48xf32>
    %cst_144 = arith.constant dense<0xFF800000> : vector<24xf32>
    %460 = vector.multi_reduction <maximumf>, %459, %cst_144 [1] : vector<24x48xf32> to vector<24xf32>
    %461 = vector.shape_cast %460 : vector<24xf32> to vector<24x1xf32>
    %462 = vector.broadcast %461 : vector<24x1xf32> to vector<24x48xf32>
    %463 = arith.subf %459, %462 : vector<24x48xf32>
    %464 = math.exp %463 : vector<24x48xf32>
    %cst_145 = arith.constant dense<0.000000e+00> : vector<24xf32>
    %465 = vector.multi_reduction <add>, %464, %cst_145 [1] : vector<24x48xf32> to vector<24xf32>
    %466 = vector.shape_cast %465 : vector<24xf32> to vector<24x1xf32>
    %467 = tpu.reciprocal %466 {approx = true} : vector<24x1xf32> -> vector<24x1xf32>
    %468 = vector.broadcast %467 : vector<24x1xf32> to vector<24x48xf32>
    %469 = arith.mulf %464, %468 : vector<24x48xf32>
    %470 = arith.truncf %469 : vector<24x48xf32> to vector<24x48xbf16>
    %cst_146 = arith.constant dense<0.000000e+00> : vector<24x128xf32>
    %471 = tpu.matmul %470, %58, %cst_146 {dimension_numbers = #tpu.dot_dimension_numbers<[1], [0], [0], [1], [0, 0, 1, 1], [], []>} : vector<24x48xbf16>, vector<48x128xbf16>, vector<24x128xf32> -> vector<24x128xf32>
    %c256_147 = arith.constant 256 : index
    %c0_148 = arith.constant 0 : index
    %472 = vector.load %arg9[%c256_147, %c0_148] : memref<896x128xbf16, #tpu.memory_space<vmem>>, vector<128x128xbf16>
    %473 = arith.truncf %471 : vector<24x128xf32> to vector<24x128xbf16>
    %cst_149 = arith.constant dense<0.000000e+00> : vector<24x128xf32>
    %474 = tpu.matmul %473, %472, %cst_149 {dimension_numbers = #tpu.dot_dimension_numbers<[1], [0], [0], [1], [0, 0, 1, 1], [], []>} : vector<24x128xbf16>, vector<128x128xbf16>, vector<24x128xf32> -> vector<24x128xf32>
    %475 = arith.addf %449, %474 : vector<24x128xf32>
    %476 = vector.extract_strided_slice %0 {offsets = [5, 0], sizes = [1, 128], strides = [1, 1]} : vector<24x128xf32> to vector<1x128xf32>
    %477 = vector.broadcast %476 : vector<1x128xf32> to vector<24x128xf32>
    %478 = arith.addf %475, %477 : vector<24x128xf32>
    %479 = vector.extract_strided_slice %0 {offsets = [10, 0], sizes = [1, 128], strides = [1, 1]} : vector<24x128xf32> to vector<1x128xf32>
    %480 = vector.extract_strided_slice %0 {offsets = [11, 0], sizes = [1, 128], strides = [1, 1]} : vector<24x128xf32> to vector<1x128xf32>
    %cst_150 = arith.constant dense<0.000000e+00> : vector<24xf32>
    %481 = vector.multi_reduction <add>, %478, %cst_150 [1] : vector<24x128xf32> to vector<24xf32>
    %482 = vector.shape_cast %481 : vector<24xf32> to vector<24x1xf32>
    %cst_151 = arith.constant 1.280000e+02 : f32
    %483 = vector.broadcast %cst_151 : f32 to vector<24x1xf32>
    %484 = arith.divf %482, %483 : vector<24x1xf32>
    %485 = vector.broadcast %484 : vector<24x1xf32> to vector<24x128xf32>
    %486 = arith.subf %478, %485 : vector<24x128xf32>
    %487 = arith.mulf %486, %486 : vector<24x128xf32>
    %cst_152 = arith.constant dense<0.000000e+00> : vector<24xf32>
    %488 = vector.multi_reduction <add>, %487, %cst_152 [1] : vector<24x128xf32> to vector<24xf32>
    %489 = vector.shape_cast %488 : vector<24xf32> to vector<24x1xf32>
    %cst_153 = arith.constant 1.280000e+02 : f32
    %490 = vector.broadcast %cst_153 : f32 to vector<24x1xf32>
    %491 = arith.divf %489, %490 : vector<24x1xf32>
    %cst_154 = arith.constant 9.99999974E-6 : f32
    %492 = vector.broadcast %cst_154 : f32 to vector<24x1xf32>
    %493 = arith.addf %491, %492 : vector<24x1xf32>
    %494 = math.rsqrt %493 : vector<24x1xf32>
    %495 = vector.broadcast %494 : vector<24x1xf32> to vector<24x128xf32>
    %496 = arith.mulf %486, %495 : vector<24x128xf32>
    %497 = vector.broadcast %479 : vector<1x128xf32> to vector<24x128xf32>
    %498 = arith.mulf %496, %497 : vector<24x128xf32>
    %499 = vector.broadcast %480 : vector<1x128xf32> to vector<24x128xf32>
    %500 = arith.addf %498, %499 : vector<24x128xf32>
    %c384_155 = arith.constant 384 : index
    %c0_156 = arith.constant 0 : index
    %501 = vector.load %arg9[%c384_155, %c0_156] : memref<896x128xbf16, #tpu.memory_space<vmem>>, vector<128x128xbf16>
    %502 = arith.truncf %500 : vector<24x128xf32> to vector<24x128xbf16>
    %cst_157 = arith.constant dense<0.000000e+00> : vector<24x128xf32>
    %503 = tpu.matmul %502, %501, %cst_157 {dimension_numbers = #tpu.dot_dimension_numbers<[1], [0], [0], [1], [0, 0, 1, 1], [], []>} : vector<24x128xbf16>, vector<128x128xbf16>, vector<24x128xf32> -> vector<24x128xf32>
    %504 = vector.extract_strided_slice %0 {offsets = [6, 0], sizes = [1, 128], strides = [1, 1]} : vector<24x128xf32> to vector<1x128xf32>
    %505 = vector.broadcast %504 : vector<1x128xf32> to vector<24x128xf32>
    %506 = arith.addf %503, %505 : vector<24x128xf32>
    %cst_158 = arith.constant 0.000000e+00 : f32
    %507 = vector.broadcast %cst_158 : f32 to vector<24x128xf32>
    %508 = arith.maximumf %506, %507 : vector<24x128xf32>
    %c512_159 = arith.constant 512 : index
    %c0_160 = arith.constant 0 : index
    %509 = vector.load %arg9[%c512_159, %c0_160] : memref<896x128xbf16, #tpu.memory_space<vmem>>, vector<128x128xbf16>
    %510 = arith.truncf %508 : vector<24x128xf32> to vector<24x128xbf16>
    %cst_161 = arith.constant dense<0.000000e+00> : vector<24x128xf32>
    %511 = tpu.matmul %510, %509, %cst_161 {dimension_numbers = #tpu.dot_dimension_numbers<[1], [0], [0], [1], [0, 0, 1, 1], [], []>} : vector<24x128xbf16>, vector<128x128xbf16>, vector<24x128xf32> -> vector<24x128xf32>
    %512 = arith.addf %500, %511 : vector<24x128xf32>
    %513 = vector.extract_strided_slice %0 {offsets = [7, 0], sizes = [1, 128], strides = [1, 1]} : vector<24x128xf32> to vector<1x128xf32>
    %514 = vector.broadcast %513 : vector<1x128xf32> to vector<24x128xf32>
    %515 = arith.addf %512, %514 : vector<24x128xf32>
    %516 = vector.extract_strided_slice %0 {offsets = [12, 0], sizes = [1, 128], strides = [1, 1]} : vector<24x128xf32> to vector<1x128xf32>
    %517 = vector.extract_strided_slice %0 {offsets = [13, 0], sizes = [1, 128], strides = [1, 1]} : vector<24x128xf32> to vector<1x128xf32>
    %cst_162 = arith.constant dense<0.000000e+00> : vector<24xf32>
    %518 = vector.multi_reduction <add>, %515, %cst_162 [1] : vector<24x128xf32> to vector<24xf32>
    %519 = vector.shape_cast %518 : vector<24xf32> to vector<24x1xf32>
    %cst_163 = arith.constant 1.280000e+02 : f32
    %520 = vector.broadcast %cst_163 : f32 to vector<24x1xf32>
    %521 = arith.divf %519, %520 : vector<24x1xf32>
    %522 = vector.broadcast %521 : vector<24x1xf32> to vector<24x128xf32>
    %523 = arith.subf %515, %522 : vector<24x128xf32>
    %524 = arith.mulf %523, %523 : vector<24x128xf32>
    %cst_164 = arith.constant dense<0.000000e+00> : vector<24xf32>
    %525 = vector.multi_reduction <add>, %524, %cst_164 [1] : vector<24x128xf32> to vector<24xf32>
    %526 = vector.shape_cast %525 : vector<24xf32> to vector<24x1xf32>
    %cst_165 = arith.constant 1.280000e+02 : f32
    %527 = vector.broadcast %cst_165 : f32 to vector<24x1xf32>
    %528 = arith.divf %526, %527 : vector<24x1xf32>
    %cst_166 = arith.constant 9.99999974E-6 : f32
    %529 = vector.broadcast %cst_166 : f32 to vector<24x1xf32>
    %530 = arith.addf %528, %529 : vector<24x1xf32>
    %531 = math.rsqrt %530 : vector<24x1xf32>
    %532 = vector.broadcast %531 : vector<24x1xf32> to vector<24x128xf32>
    %533 = arith.mulf %523, %532 : vector<24x128xf32>
    %534 = vector.broadcast %516 : vector<1x128xf32> to vector<24x128xf32>
    %535 = arith.mulf %533, %534 : vector<24x128xf32>
    %536 = vector.broadcast %517 : vector<1x128xf32> to vector<24x128xf32>
    %537 = arith.addf %535, %536 : vector<24x128xf32>
    %538 = vector.extract_strided_slice %537 {offsets = [8, 0], sizes = [8, 128], strides = [1, 1]} : vector<24x128xf32> to vector<8x128xf32>
    %c640_167 = arith.constant 640 : index
    %c0_168 = arith.constant 0 : index
    %539 = vector.load %arg9[%c640_167, %c0_168] : memref<896x128xbf16, #tpu.memory_space<vmem>>, vector<128x128xbf16>
    %540 = arith.truncf %538 : vector<8x128xf32> to vector<8x128xbf16>
    %cst_169 = arith.constant dense<0.000000e+00> : vector<8x128xf32>
    %541 = tpu.matmul %540, %539, %cst_169 {dimension_numbers = #tpu.dot_dimension_numbers<[1], [0], [0], [1], [0, 0, 1, 1], [], []>} : vector<8x128xbf16>, vector<128x128xbf16>, vector<8x128xf32> -> vector<8x128xf32>
    %542 = vector.extract_strided_slice %0 {offsets = [14, 0], sizes = [1, 128], strides = [1, 1]} : vector<24x128xf32> to vector<1x128xf32>
    %543 = vector.broadcast %542 : vector<1x128xf32> to vector<8x128xf32>
    %544 = arith.addf %541, %543 : vector<8x128xf32>
    %cst_170 = arith.constant 0.000000e+00 : f32
    %545 = vector.broadcast %cst_170 : f32 to vector<8x128xf32>
    %546 = arith.maximumf %544, %545 : vector<8x128xf32>
    %c768_171 = arith.constant 768 : index
    %c0_172 = arith.constant 0 : index
    %547 = vector.load %arg9[%c768_171, %c0_172] : memref<896x128xbf16, #tpu.memory_space<vmem>>, vector<128x128xbf16>
    %548 = arith.truncf %546 : vector<8x128xf32> to vector<8x128xbf16>
    %cst_173 = arith.constant dense<0.000000e+00> : vector<8x128xf32>
    %549 = tpu.matmul %548, %547, %cst_173 {dimension_numbers = #tpu.dot_dimension_numbers<[1], [0], [0], [1], [0, 0, 1, 1], [], []>} : vector<8x128xbf16>, vector<128x128xbf16>, vector<8x128xf32> -> vector<8x128xf32>
    %550 = vector.extract_strided_slice %0 {offsets = [15, 0], sizes = [1, 128], strides = [1, 1]} : vector<24x128xf32> to vector<1x128xf32>
    %551 = vector.broadcast %550 : vector<1x128xf32> to vector<8x128xf32>
    %552 = arith.addf %549, %551 : vector<8x128xf32>
    %c0_i32_174 = arith.constant 0 : i32
    %553 = vector.broadcast %c0_i32_174 : i32 to vector<8x128xi32>
    %554 = arith.cmpi eq, %59, %553 : vector<8x128xi32>
    %cst_175 = arith.constant 0.000000e+00 : f32
    %555 = vector.broadcast %cst_175 : f32 to vector<8x128xf32>
    %556 = arith.select %554, %552, %555 : vector<8x128xi1>, vector<8x128xf32>
    %cst_176 = arith.constant dense<0.000000e+00> : vector<8xf32>
    %557 = vector.multi_reduction <add>, %556, %cst_176 [1] : vector<8x128xf32> to vector<8xf32>
    %558 = vector.shape_cast %557 : vector<8xf32> to vector<8x1xf32>
    %559 = arith.addf %332, %558 : vector<8x1xf32>
    %c1_i32_177 = arith.constant 1 : i32
    %560 = vector.broadcast %c1_i32_177 : i32 to vector<8x128xi32>
    %561 = arith.cmpi eq, %59, %560 : vector<8x128xi32>
    %cst_178 = arith.constant 0.000000e+00 : f32
    %562 = vector.broadcast %cst_178 : f32 to vector<8x128xf32>
    %563 = arith.select %561, %552, %562 : vector<8x128xi1>, vector<8x128xf32>
    %cst_179 = arith.constant dense<0.000000e+00> : vector<8xf32>
    %564 = vector.multi_reduction <add>, %563, %cst_179 [1] : vector<8x128xf32> to vector<8xf32>
    %565 = vector.shape_cast %564 : vector<8xf32> to vector<8x1xf32>
    %566 = arith.addf %336, %565 : vector<8x1xf32>
    %c0_i32_180 = arith.constant 0 : i32
    %567 = vector.broadcast %c0_i32_180 : i32 to vector<8x128xi32>
    %568 = arith.cmpi eq, %59, %567 : vector<8x128xi32>
    %cst_181 = arith.constant 0.000000e+00 : f32
    %569 = vector.shape_cast %559 : vector<8x1xf32> to vector<8x1xf32>
    %570 = vector.broadcast %569 : vector<8x1xf32> to vector<8x128xf32>
    %571 = vector.broadcast %cst_181 : f32 to vector<8x128xf32>
    %572 = arith.select %568, %570, %571 : vector<8x128xi1>, vector<8x128xf32>
    %c1_i32_182 = arith.constant 1 : i32
    %573 = vector.broadcast %c1_i32_182 : i32 to vector<8x128xi32>
    %574 = arith.cmpi eq, %59, %573 : vector<8x128xi32>
    %cst_183 = arith.constant 0.000000e+00 : f32
    %575 = vector.shape_cast %566 : vector<8x1xf32> to vector<8x1xf32>
    %576 = vector.broadcast %575 : vector<8x1xf32> to vector<8x128xf32>
    %577 = vector.broadcast %cst_183 : f32 to vector<8x128xf32>
    %578 = arith.select %574, %576, %577 : vector<8x128xi1>, vector<8x128xf32>
    %579 = arith.addf %572, %578 : vector<8x128xf32>
    %c0_184 = arith.constant 0 : index
    %c8 = arith.constant 8 : index
    %c0_185 = arith.constant 0 : index
    %580 = vector.load %arg11[%c0_184, %c8, %c0_185] : memref<1x24x128xf32, #tpu.memory_space<vmem>>, vector<1x8x128xf32>
    %581 = vector.shape_cast %580 : vector<1x8x128xf32> to vector<8x128xf32>
    %582 = vector.shape_cast %579 : vector<8x128xf32> to vector<1x8x128xf32>
    tpu.vector_store %arg11[%c0_184, %c8, %c0_185], %582 {strides = array<i32>} : memref<1x24x128xf32, #tpu.memory_space<vmem>>, vector<1x8x128xf32>,
    %cst_186 = arith.constant 0.000000e+00 : f32
    %cst_187 = arith.constant 1.500000e+01 : f32
    %583 = vector.broadcast %cst_186 : f32 to vector<8x1xf32>
    %584 = arith.maximumf %583, %559 : vector<8x1xf32>
    %585 = vector.broadcast %cst_187 : f32 to vector<8x1xf32>
    %586 = arith.minimumf %585, %584 : vector<8x1xf32>
    %cst_188 = arith.constant 0.000000e+00 : f32
    %cst_189 = arith.constant 1.500000e+01 : f32
    %587 = vector.broadcast %cst_188 : f32 to vector<8x1xf32>
    %588 = arith.maximumf %587, %566 : vector<8x1xf32>
    %589 = vector.broadcast %cst_189 : f32 to vector<8x1xf32>
    %590 = arith.minimumf %589, %588 : vector<8x1xf32>
    %591 = arith.fptosi %586 : vector<8x1xf32> to vector<8x1xi32>
    %c16_i32_190 = arith.constant 16 : i32
    %592 = vector.broadcast %c16_i32_190 : i32 to vector<8x1xi32>
    %593 = arith.muli %591, %592 : vector<8x1xi32>
    %594 = arith.fptosi %590 : vector<8x1xf32> to vector<8x1xi32>
    %595 = arith.addi %593, %594 : vector<8x1xi32>
    %596 = vector.broadcast %595 : vector<8x1xi32> to vector<8x256xi32>
    %597 = arith.cmpi eq, %60, %596 : vector<8x256xi32>
    %598 = arith.extui %597 : vector<8x256xi1> to vector<8x256xi32>
    %599 = arith.sitofp %598 : vector<8x256xi32> to vector<8x256xf32>
    %600 = arith.truncf %599 : vector<8x256xf32> to vector<8x256xbf16>
    %cst_191 = arith.constant dense<0.000000e+00> : vector<8x128xf32>
    %601 = tpu.matmul %600, %54, %cst_191 {dimension_numbers = #tpu.dot_dimension_numbers<[1], [0], [0], [1], [0, 0, 1, 1], [], []>} : vector<8x256xbf16>, vector<256x128xbf16>, vector<8x128xf32> -> vector<8x128xf32>
    %c126_i32_192 = arith.constant 126 : i32
    %602 = vector.broadcast %c126_i32_192 : i32 to vector<8x128xi32>
    %603 = arith.cmpi slt, %59, %602 : vector<8x128xi32>
    %cst_193 = arith.constant 0.000000e+00 : f32
    %604 = vector.broadcast %cst_193 : f32 to vector<8x128xf32>
    %605 = arith.select %603, %601, %604 : vector<8x128xi1>, vector<8x128xf32>
    %c126_i32_194 = arith.constant 126 : i32
    %606 = vector.broadcast %c126_i32_194 : i32 to vector<8x128xi32>
    %607 = arith.cmpi eq, %59, %606 : vector<8x128xi32>
    %cst_195 = arith.constant 0.000000e+00 : f32
    %608 = vector.shape_cast %586 : vector<8x1xf32> to vector<8x1xf32>
    %609 = vector.broadcast %608 : vector<8x1xf32> to vector<8x128xf32>
    %610 = vector.broadcast %cst_195 : f32 to vector<8x128xf32>
    %611 = arith.select %607, %609, %610 : vector<8x128xi1>, vector<8x128xf32>
    %612 = arith.addf %605, %611 : vector<8x128xf32>
    %c127_i32_196 = arith.constant 127 : i32
    %613 = vector.broadcast %c127_i32_196 : i32 to vector<8x128xi32>
    %614 = arith.cmpi eq, %59, %613 : vector<8x128xi32>
    %cst_197 = arith.constant 0.000000e+00 : f32
    %615 = vector.shape_cast %590 : vector<8x1xf32> to vector<8x1xf32>
    %616 = vector.broadcast %615 : vector<8x1xf32> to vector<8x128xf32>
    %617 = vector.broadcast %cst_197 : f32 to vector<8x128xf32>
    %618 = arith.select %614, %616, %617 : vector<8x128xi1>, vector<8x128xf32>
    %619 = arith.addf %612, %618 : vector<8x128xf32>
    %cst_198 = arith.constant dense<0.000000e+00> : vector<8xf32>
    %620 = vector.multi_reduction <add>, %619, %cst_198 [1] : vector<8x128xf32> to vector<8xf32>
    %621 = vector.shape_cast %620 : vector<8xf32> to vector<8x1xf32>
    %cst_199 = arith.constant 1.280000e+02 : f32
    %622 = vector.broadcast %cst_199 : f32 to vector<8x1xf32>
    %623 = arith.divf %621, %622 : vector<8x1xf32>
    %624 = vector.broadcast %623 : vector<8x1xf32> to vector<8x128xf32>
    %625 = arith.subf %619, %624 : vector<8x128xf32>
    %626 = arith.mulf %625, %625 : vector<8x128xf32>
    %cst_200 = arith.constant dense<0.000000e+00> : vector<8xf32>
    %627 = vector.multi_reduction <add>, %626, %cst_200 [1] : vector<8x128xf32> to vector<8xf32>
    %628 = vector.shape_cast %627 : vector<8xf32> to vector<8x1xf32>
    %cst_201 = arith.constant 1.280000e+02 : f32
    %629 = vector.broadcast %cst_201 : f32 to vector<8x1xf32>
    %630 = arith.divf %628, %629 : vector<8x1xf32>
    %cst_202 = arith.constant 9.99999974E-6 : f32
    %631 = vector.broadcast %cst_202 : f32 to vector<8x1xf32>
    %632 = arith.addf %630, %631 : vector<8x1xf32>
    %633 = math.rsqrt %632 : vector<8x1xf32>
    %634 = vector.broadcast %633 : vector<8x1xf32> to vector<8x128xf32>
    %635 = arith.mulf %625, %634 : vector<8x128xf32>
    %636 = vector.broadcast %1 : vector<1x128xf32> to vector<8x128xf32>
    %637 = arith.mulf %635, %636 : vector<8x128xf32>
    %638 = vector.broadcast %2 : vector<1x128xf32> to vector<8x128xf32>
    %639 = arith.addf %637, %638 : vector<8x128xf32>
    %640 = arith.addf %639, %52 : vector<8x128xf32>
    %641 = tpu.concatenate %27, %640, %51 in 0 : vector<8x128xf32>, vector<8x128xf32>, vector<8x128xf32> -> vector<24x128xf32>
    %c0_203 = arith.constant 0 : index
    %c0_204 = arith.constant 0 : index
    %642 = vector.load %arg8[%c0_203, %c0_204] : memref<128x384xbf16, #tpu.memory_space<vmem>>, vector<128x384xbf16>
    %643 = arith.truncf %641 : vector<24x128xf32> to vector<24x128xbf16>
    %cst_205 = arith.constant dense<0.000000e+00> : vector<24x384xf32>
    %644 = tpu.matmul %643, %642, %cst_205 {dimension_numbers = #tpu.dot_dimension_numbers<[1], [0], [0], [1], [0, 0, 1, 1], [], []>} : vector<24x128xbf16>, vector<128x384xbf16>, vector<24x384xf32> -> vector<24x384xf32>
    %645 = vector.extract_strided_slice %644 {offsets = [0, 0], sizes = [24, 128], strides = [1, 1]} : vector<24x384xf32> to vector<24x128xf32>
    %646 = vector.extract_strided_slice %0 {offsets = [0, 0], sizes = [1, 128], strides = [1, 1]} : vector<24x128xf32> to vector<1x128xf32>
    %647 = vector.broadcast %646 : vector<1x128xf32> to vector<24x128xf32>
    %648 = arith.addf %645, %647 : vector<24x128xf32>
    %649 = vector.extract_strided_slice %644 {offsets = [0, 128], sizes = [24, 128], strides = [1, 1]} : vector<24x384xf32> to vector<24x128xf32>
    %650 = vector.extract_strided_slice %0 {offsets = [1, 0], sizes = [1, 128], strides = [1, 1]} : vector<24x128xf32> to vector<1x128xf32>
    %651 = vector.broadcast %650 : vector<1x128xf32> to vector<24x128xf32>
    %652 = arith.addf %649, %651 : vector<24x128xf32>
    %653 = vector.extract_strided_slice %644 {offsets = [0, 256], sizes = [24, 128], strides = [1, 1]} : vector<24x384xf32> to vector<24x128xf32>
    %654 = vector.extract_strided_slice %0 {offsets = [2, 0], sizes = [1, 128], strides = [1, 1]} : vector<24x128xf32> to vector<1x128xf32>
    %655 = vector.broadcast %654 : vector<1x128xf32> to vector<24x128xf32>
    %656 = arith.addf %653, %655 : vector<24x128xf32>
    %657 = arith.truncf %648 : vector<24x128xf32> to vector<24x128xbf16>
    %658 = arith.truncf %652 : vector<24x128xf32> to vector<24x128xbf16>
    %cst_206 = arith.constant dense<0.000000e+00> : vector<24x24xf32>
    %659 = tpu.matmul %657, %658, %cst_206 {dimension_numbers = #tpu.dot_dimension_numbers<[1], [1], [0], [0], [0, 0, 1, 0], [], []>} : vector<24x128xbf16>, vector<24x128xbf16>, vector<24x24xf32> -> vector<24x24xf32>
    %cst_207 = arith.constant 0.0883883461 : f32
    %660 = vector.broadcast %cst_207 : f32 to vector<24x24xf32>
    %661 = arith.mulf %659, %660 : vector<24x24xf32>
    %cst_208 = arith.constant dense<0xFF800000> : vector<24xf32>
    %662 = vector.multi_reduction <maximumf>, %661, %cst_208 [1] : vector<24x24xf32> to vector<24xf32>
    %663 = vector.shape_cast %662 : vector<24xf32> to vector<24x1xf32>
    %664 = vector.broadcast %663 : vector<24x1xf32> to vector<24x24xf32>
    %665 = arith.subf %661, %664 : vector<24x24xf32>
    %666 = math.exp %665 : vector<24x24xf32>
    %cst_209 = arith.constant dense<0.000000e+00> : vector<24xf32>
    %667 = vector.multi_reduction <add>, %666, %cst_209 [1] : vector<24x24xf32> to vector<24xf32>
    %668 = vector.shape_cast %667 : vector<24xf32> to vector<24x1xf32>
    %669 = tpu.reciprocal %668 {approx = true} : vector<24x1xf32> -> vector<24x1xf32>
    %670 = vector.broadcast %669 : vector<24x1xf32> to vector<24x24xf32>
    %671 = arith.mulf %666, %670 : vector<24x24xf32>
    %672 = arith.truncf %671 : vector<24x24xf32> to vector<24x24xbf16>
    %673 = arith.truncf %656 : vector<24x128xf32> to vector<24x128xbf16>
    %cst_210 = arith.constant dense<0.000000e+00> : vector<24x128xf32>
    %674 = tpu.matmul %672, %673, %cst_210 {dimension_numbers = #tpu.dot_dimension_numbers<[1], [0], [0], [1], [0, 0, 1, 1], [], []>} : vector<24x24xbf16>, vector<24x128xbf16>, vector<24x128xf32> -> vector<24x128xf32>
    %c0_211 = arith.constant 0 : index
    %c0_212 = arith.constant 0 : index
    %675 = vector.load %arg9[%c0_211, %c0_212] : memref<896x128xbf16, #tpu.memory_space<vmem>>, vector<128x128xbf16>
    %676 = arith.truncf %674 : vector<24x128xf32> to vector<24x128xbf16>
    %cst_213 = arith.constant dense<0.000000e+00> : vector<24x128xf32>
    %677 = tpu.matmul %676, %675, %cst_213 {dimension_numbers = #tpu.dot_dimension_numbers<[1], [0], [0], [1], [0, 0, 1, 1], [], []>} : vector<24x128xbf16>, vector<128x128xbf16>, vector<24x128xf32> -> vector<24x128xf32>
    %678 = arith.addf %641, %677 : vector<24x128xf32>
    %679 = vector.extract_strided_slice %0 {offsets = [3, 0], sizes = [1, 128], strides = [1, 1]} : vector<24x128xf32> to vector<1x128xf32>
    %680 = vector.broadcast %679 : vector<1x128xf32> to vector<24x128xf32>
    %681 = arith.addf %678, %680 : vector<24x128xf32>
    %682 = vector.extract_strided_slice %0 {offsets = [8, 0], sizes = [1, 128], strides = [1, 1]} : vector<24x128xf32> to vector<1x128xf32>
    %683 = vector.extract_strided_slice %0 {offsets = [9, 0], sizes = [1, 128], strides = [1, 1]} : vector<24x128xf32> to vector<1x128xf32>
    %cst_214 = arith.constant dense<0.000000e+00> : vector<24xf32>
    %684 = vector.multi_reduction <add>, %681, %cst_214 [1] : vector<24x128xf32> to vector<24xf32>
    %685 = vector.shape_cast %684 : vector<24xf32> to vector<24x1xf32>
    %cst_215 = arith.constant 1.280000e+02 : f32
    %686 = vector.broadcast %cst_215 : f32 to vector<24x1xf32>
    %687 = arith.divf %685, %686 : vector<24x1xf32>
    %688 = vector.broadcast %687 : vector<24x1xf32> to vector<24x128xf32>
    %689 = arith.subf %681, %688 : vector<24x128xf32>
    %690 = arith.mulf %689, %689 : vector<24x128xf32>
    %cst_216 = arith.constant dense<0.000000e+00> : vector<24xf32>
    %691 = vector.multi_reduction <add>, %690, %cst_216 [1] : vector<24x128xf32> to vector<24xf32>
    %692 = vector.shape_cast %691 : vector<24xf32> to vector<24x1xf32>
    %cst_217 = arith.constant 1.280000e+02 : f32
    %693 = vector.broadcast %cst_217 : f32 to vector<24x1xf32>
    %694 = arith.divf %692, %693 : vector<24x1xf32>
    %cst_218 = arith.constant 9.99999974E-6 : f32
    %695 = vector.broadcast %cst_218 : f32 to vector<24x1xf32>
    %696 = arith.addf %694, %695 : vector<24x1xf32>
    %697 = math.rsqrt %696 : vector<24x1xf32>
    %698 = vector.broadcast %697 : vector<24x1xf32> to vector<24x128xf32>
    %699 = arith.mulf %689, %698 : vector<24x128xf32>
    %700 = vector.broadcast %682 : vector<1x128xf32> to vector<24x128xf32>
    %701 = arith.mulf %699, %700 : vector<24x128xf32>
    %702 = vector.broadcast %683 : vector<1x128xf32> to vector<24x128xf32>
    %703 = arith.addf %701, %702 : vector<24x128xf32>
    %c128_219 = arith.constant 128 : index
    %c0_220 = arith.constant 0 : index
    %704 = vector.load %arg9[%c128_219, %c0_220] : memref<896x128xbf16, #tpu.memory_space<vmem>>, vector<128x128xbf16>
    %705 = arith.truncf %703 : vector<24x128xf32> to vector<24x128xbf16>
    %cst_221 = arith.constant dense<0.000000e+00> : vector<24x128xf32>
    %706 = tpu.matmul %705, %704, %cst_221 {dimension_numbers = #tpu.dot_dimension_numbers<[1], [0], [0], [1], [0, 0, 1, 1], [], []>} : vector<24x128xbf16>, vector<128x128xbf16>, vector<24x128xf32> -> vector<24x128xf32>
    %707 = vector.extract_strided_slice %0 {offsets = [4, 0], sizes = [1, 128], strides = [1, 1]} : vector<24x128xf32> to vector<1x128xf32>
    %708 = vector.broadcast %707 : vector<1x128xf32> to vector<24x128xf32>
    %709 = arith.addf %706, %708 : vector<24x128xf32>
    %710 = arith.truncf %709 : vector<24x128xf32> to vector<24x128xbf16>
    %cst_222 = arith.constant dense<0.000000e+00> : vector<24x48xf32>
    %711 = tpu.matmul %710, %56, %cst_222 {dimension_numbers = #tpu.dot_dimension_numbers<[1], [0], [0], [1], [0, 0, 1, 1], [], []>} : vector<24x128xbf16>, vector<128x48xbf16>, vector<24x48xf32> -> vector<24x48xf32>
    %cst_223 = arith.constant 0.0883883461 : f32
    %712 = vector.broadcast %cst_223 : f32 to vector<24x48xf32>
    %713 = arith.mulf %711, %712 : vector<24x48xf32>
    %cst_224 = arith.constant dense<0xFF800000> : vector<24xf32>
    %714 = vector.multi_reduction <maximumf>, %713, %cst_224 [1] : vector<24x48xf32> to vector<24xf32>
    %715 = vector.shape_cast %714 : vector<24xf32> to vector<24x1xf32>
    %716 = vector.broadcast %715 : vector<24x1xf32> to vector<24x48xf32>
    %717 = arith.subf %713, %716 : vector<24x48xf32>
    %718 = math.exp %717 : vector<24x48xf32>
    %cst_225 = arith.constant dense<0.000000e+00> : vector<24xf32>
    %719 = vector.multi_reduction <add>, %718, %cst_225 [1] : vector<24x48xf32> to vector<24xf32>
    %720 = vector.shape_cast %719 : vector<24xf32> to vector<24x1xf32>
    %721 = tpu.reciprocal %720 {approx = true} : vector<24x1xf32> -> vector<24x1xf32>
    %722 = vector.broadcast %721 : vector<24x1xf32> to vector<24x48xf32>
    %723 = arith.mulf %718, %722 : vector<24x48xf32>
    %724 = arith.truncf %723 : vector<24x48xf32> to vector<24x48xbf16>
    %cst_226 = arith.constant dense<0.000000e+00> : vector<24x128xf32>
    %725 = tpu.matmul %724, %58, %cst_226 {dimension_numbers = #tpu.dot_dimension_numbers<[1], [0], [0], [1], [0, 0, 1, 1], [], []>} : vector<24x48xbf16>, vector<48x128xbf16>, vector<24x128xf32> -> vector<24x128xf32>
    %c256_227 = arith.constant 256 : index
    %c0_228 = arith.constant 0 : index
    %726 = vector.load %arg9[%c256_227, %c0_228] : memref<896x128xbf16, #tpu.memory_space<vmem>>, vector<128x128xbf16>
    %727 = arith.truncf %725 : vector<24x128xf32> to vector<24x128xbf16>
    %cst_229 = arith.constant dense<0.000000e+00> : vector<24x128xf32>
    %728 = tpu.matmul %727, %726, %cst_229 {dimension_numbers = #tpu.dot_dimension_numbers<[1], [0], [0], [1], [0, 0, 1, 1], [], []>} : vector<24x128xbf16>, vector<128x128xbf16>, vector<24x128xf32> -> vector<24x128xf32>
    %729 = arith.addf %703, %728 : vector<24x128xf32>
    %730 = vector.extract_strided_slice %0 {offsets = [5, 0], sizes = [1, 128], strides = [1, 1]} : vector<24x128xf32> to vector<1x128xf32>
    %731 = vector.broadcast %730 : vector<1x128xf32> to vector<24x128xf32>
    %732 = arith.addf %729, %731 : vector<24x128xf32>
    %733 = vector.extract_strided_slice %0 {offsets = [10, 0], sizes = [1, 128], strides = [1, 1]} : vector<24x128xf32> to vector<1x128xf32>
    %734 = vector.extract_strided_slice %0 {offsets = [11, 0], sizes = [1, 128], strides = [1, 1]} : vector<24x128xf32> to vector<1x128xf32>
    %cst_230 = arith.constant dense<0.000000e+00> : vector<24xf32>
    %735 = vector.multi_reduction <add>, %732, %cst_230 [1] : vector<24x128xf32> to vector<24xf32>
    %736 = vector.shape_cast %735 : vector<24xf32> to vector<24x1xf32>
    %cst_231 = arith.constant 1.280000e+02 : f32
    %737 = vector.broadcast %cst_231 : f32 to vector<24x1xf32>
    %738 = arith.divf %736, %737 : vector<24x1xf32>
    %739 = vector.broadcast %738 : vector<24x1xf32> to vector<24x128xf32>
    %740 = arith.subf %732, %739 : vector<24x128xf32>
    %741 = arith.mulf %740, %740 : vector<24x128xf32>
    %cst_232 = arith.constant dense<0.000000e+00> : vector<24xf32>
    %742 = vector.multi_reduction <add>, %741, %cst_232 [1] : vector<24x128xf32> to vector<24xf32>
    %743 = vector.shape_cast %742 : vector<24xf32> to vector<24x1xf32>
    %cst_233 = arith.constant 1.280000e+02 : f32
    %744 = vector.broadcast %cst_233 : f32 to vector<24x1xf32>
    %745 = arith.divf %743, %744 : vector<24x1xf32>
    %cst_234 = arith.constant 9.99999974E-6 : f32
    %746 = vector.broadcast %cst_234 : f32 to vector<24x1xf32>
    %747 = arith.addf %745, %746 : vector<24x1xf32>
    %748 = math.rsqrt %747 : vector<24x1xf32>
    %749 = vector.broadcast %748 : vector<24x1xf32> to vector<24x128xf32>
    %750 = arith.mulf %740, %749 : vector<24x128xf32>
    %751 = vector.broadcast %733 : vector<1x128xf32> to vector<24x128xf32>
    %752 = arith.mulf %750, %751 : vector<24x128xf32>
    %753 = vector.broadcast %734 : vector<1x128xf32> to vector<24x128xf32>
    %754 = arith.addf %752, %753 : vector<24x128xf32>
    %c384_235 = arith.constant 384 : index
    %c0_236 = arith.constant 0 : index
    %755 = vector.load %arg9[%c384_235, %c0_236] : memref<896x128xbf16, #tpu.memory_space<vmem>>, vector<128x128xbf16>
    %756 = arith.truncf %754 : vector<24x128xf32> to vector<24x128xbf16>
    %cst_237 = arith.constant dense<0.000000e+00> : vector<24x128xf32>
    %757 = tpu.matmul %756, %755, %cst_237 {dimension_numbers = #tpu.dot_dimension_numbers<[1], [0], [0], [1], [0, 0, 1, 1], [], []>} : vector<24x128xbf16>, vector<128x128xbf16>, vector<24x128xf32> -> vector<24x128xf32>
    %758 = vector.extract_strided_slice %0 {offsets = [6, 0], sizes = [1, 128], strides = [1, 1]} : vector<24x128xf32> to vector<1x128xf32>
    %759 = vector.broadcast %758 : vector<1x128xf32> to vector<24x128xf32>
    %760 = arith.addf %757, %759 : vector<24x128xf32>
    %cst_238 = arith.constant 0.000000e+00 : f32
    %761 = vector.broadcast %cst_238 : f32 to vector<24x128xf32>
    %762 = arith.maximumf %760, %761 : vector<24x128xf32>
    %c512_239 = arith.constant 512 : index
    %c0_240 = arith.constant 0 : index
    %763 = vector.load %arg9[%c512_239, %c0_240] : memref<896x128xbf16, #tpu.memory_space<vmem>>, vector<128x128xbf16>
    %764 = arith.truncf %762 : vector<24x128xf32> to vector<24x128xbf16>
    %cst_241 = arith.constant dense<0.000000e+00> : vector<24x128xf32>
    %765 = tpu.matmul %764, %763, %cst_241 {dimension_numbers = #tpu.dot_dimension_numbers<[1], [0], [0], [1], [0, 0, 1, 1], [], []>} : vector<24x128xbf16>, vector<128x128xbf16>, vector<24x128xf32> -> vector<24x128xf32>
    %766 = arith.addf %754, %765 : vector<24x128xf32>
    %767 = vector.extract_strided_slice %0 {offsets = [7, 0], sizes = [1, 128], strides = [1, 1]} : vector<24x128xf32> to vector<1x128xf32>
    %768 = vector.broadcast %767 : vector<1x128xf32> to vector<24x128xf32>
    %769 = arith.addf %766, %768 : vector<24x128xf32>
    %770 = vector.extract_strided_slice %0 {offsets = [12, 0], sizes = [1, 128], strides = [1, 1]} : vector<24x128xf32> to vector<1x128xf32>
    %771 = vector.extract_strided_slice %0 {offsets = [13, 0], sizes = [1, 128], strides = [1, 1]} : vector<24x128xf32> to vector<1x128xf32>
    %cst_242 = arith.constant dense<0.000000e+00> : vector<24xf32>
    %772 = vector.multi_reduction <add>, %769, %cst_242 [1] : vector<24x128xf32> to vector<24xf32>
    %773 = vector.shape_cast %772 : vector<24xf32> to vector<24x1xf32>
    %cst_243 = arith.constant 1.280000e+02 : f32
    %774 = vector.broadcast %cst_243 : f32 to vector<24x1xf32>
    %775 = arith.divf %773, %774 : vector<24x1xf32>
    %776 = vector.broadcast %775 : vector<24x1xf32> to vector<24x128xf32>
    %777 = arith.subf %769, %776 : vector<24x128xf32>
    %778 = arith.mulf %777, %777 : vector<24x128xf32>
    %cst_244 = arith.constant dense<0.000000e+00> : vector<24xf32>
    %779 = vector.multi_reduction <add>, %778, %cst_244 [1] : vector<24x128xf32> to vector<24xf32>
    %780 = vector.shape_cast %779 : vector<24xf32> to vector<24x1xf32>
    %cst_245 = arith.constant 1.280000e+02 : f32
    %781 = vector.broadcast %cst_245 : f32 to vector<24x1xf32>
    %782 = arith.divf %780, %781 : vector<24x1xf32>
    %cst_246 = arith.constant 9.99999974E-6 : f32
    %783 = vector.broadcast %cst_246 : f32 to vector<24x1xf32>
    %784 = arith.addf %782, %783 : vector<24x1xf32>
    %785 = math.rsqrt %784 : vector<24x1xf32>
    %786 = vector.broadcast %785 : vector<24x1xf32> to vector<24x128xf32>
    %787 = arith.mulf %777, %786 : vector<24x128xf32>
    %788 = vector.broadcast %770 : vector<1x128xf32> to vector<24x128xf32>
    %789 = arith.mulf %787, %788 : vector<24x128xf32>
    %790 = vector.broadcast %771 : vector<1x128xf32> to vector<24x128xf32>
    %791 = arith.addf %789, %790 : vector<24x128xf32>
    %792 = vector.extract_strided_slice %791 {offsets = [8, 0], sizes = [8, 128], strides = [1, 1]} : vector<24x128xf32> to vector<8x128xf32>
    %c640_247 = arith.constant 640 : index
    %c0_248 = arith.constant 0 : index
    %793 = vector.load %arg9[%c640_247, %c0_248] : memref<896x128xbf16, #tpu.memory_space<vmem>>, vector<128x128xbf16>
    %794 = arith.truncf %792 : vector<8x128xf32> to vector<8x128xbf16>
    %cst_249 = arith.constant dense<0.000000e+00> : vector<8x128xf32>
    %795 = tpu.matmul %794, %793, %cst_249 {dimension_numbers = #tpu.dot_dimension_numbers<[1], [0], [0], [1], [0, 0, 1, 1], [], []>} : vector<8x128xbf16>, vector<128x128xbf16>, vector<8x128xf32> -> vector<8x128xf32>
    %796 = vector.extract_strided_slice %0 {offsets = [14, 0], sizes = [1, 128], strides = [1, 1]} : vector<24x128xf32> to vector<1x128xf32>
    %797 = vector.broadcast %796 : vector<1x128xf32> to vector<8x128xf32>
    %798 = arith.addf %795, %797 : vector<8x128xf32>
    %cst_250 = arith.constant 0.000000e+00 : f32
    %799 = vector.broadcast %cst_250 : f32 to vector<8x128xf32>
    %800 = arith.maximumf %798, %799 : vector<8x128xf32>
    %c768_251 = arith.constant 768 : index
    %c0_252 = arith.constant 0 : index
    %801 = vector.load %arg9[%c768_251, %c0_252] : memref<896x128xbf16, #tpu.memory_space<vmem>>, vector<128x128xbf16>
    %802 = arith.truncf %800 : vector<8x128xf32> to vector<8x128xbf16>
    %cst_253 = arith.constant dense<0.000000e+00> : vector<8x128xf32>
    %803 = tpu.matmul %802, %801, %cst_253 {dimension_numbers = #tpu.dot_dimension_numbers<[1], [0], [0], [1], [0, 0, 1, 1], [], []>} : vector<8x128xbf16>, vector<128x128xbf16>, vector<8x128xf32> -> vector<8x128xf32>
    %804 = vector.extract_strided_slice %0 {offsets = [15, 0], sizes = [1, 128], strides = [1, 1]} : vector<24x128xf32> to vector<1x128xf32>
    %805 = vector.broadcast %804 : vector<1x128xf32> to vector<8x128xf32>
    %806 = arith.addf %803, %805 : vector<8x128xf32>
    %c0_i32_254 = arith.constant 0 : i32
    %807 = vector.broadcast %c0_i32_254 : i32 to vector<8x128xi32>
    %808 = arith.cmpi eq, %59, %807 : vector<8x128xi32>
    %cst_255 = arith.constant 0.000000e+00 : f32
    %809 = vector.broadcast %cst_255 : f32 to vector<8x128xf32>
    %810 = arith.select %808, %806, %809 : vector<8x128xi1>, vector<8x128xf32>
    %cst_256 = arith.constant dense<0.000000e+00> : vector<8xf32>
    %811 = vector.multi_reduction <add>, %810, %cst_256 [1] : vector<8x128xf32> to vector<8xf32>
    %812 = vector.shape_cast %811 : vector<8xf32> to vector<8x1xf32>
    %813 = arith.addf %586, %812 : vector<8x1xf32>
    %c1_i32_257 = arith.constant 1 : i32
    %814 = vector.broadcast %c1_i32_257 : i32 to vector<8x128xi32>
    %815 = arith.cmpi eq, %59, %814 : vector<8x128xi32>
    %cst_258 = arith.constant 0.000000e+00 : f32
    %816 = vector.broadcast %cst_258 : f32 to vector<8x128xf32>
    %817 = arith.select %815, %806, %816 : vector<8x128xi1>, vector<8x128xf32>
    %cst_259 = arith.constant dense<0.000000e+00> : vector<8xf32>
    %818 = vector.multi_reduction <add>, %817, %cst_259 [1] : vector<8x128xf32> to vector<8xf32>
    %819 = vector.shape_cast %818 : vector<8xf32> to vector<8x1xf32>
    %820 = arith.addf %590, %819 : vector<8x1xf32>
    %c0_i32_260 = arith.constant 0 : i32
    %821 = vector.broadcast %c0_i32_260 : i32 to vector<8x128xi32>
    %822 = arith.cmpi eq, %59, %821 : vector<8x128xi32>
    %cst_261 = arith.constant 0.000000e+00 : f32
    %823 = vector.shape_cast %813 : vector<8x1xf32> to vector<8x1xf32>
    %824 = vector.broadcast %823 : vector<8x1xf32> to vector<8x128xf32>
    %825 = vector.broadcast %cst_261 : f32 to vector<8x128xf32>
    %826 = arith.select %822, %824, %825 : vector<8x128xi1>, vector<8x128xf32>
    %c1_i32_262 = arith.constant 1 : i32
    %827 = vector.broadcast %c1_i32_262 : i32 to vector<8x128xi32>
    %828 = arith.cmpi eq, %59, %827 : vector<8x128xi32>
    %cst_263 = arith.constant 0.000000e+00 : f32
    %829 = vector.shape_cast %820 : vector<8x1xf32> to vector<8x1xf32>
    %830 = vector.broadcast %829 : vector<8x1xf32> to vector<8x128xf32>
    %831 = vector.broadcast %cst_263 : f32 to vector<8x128xf32>
    %832 = arith.select %828, %830, %831 : vector<8x128xi1>, vector<8x128xf32>
    %833 = arith.addf %826, %832 : vector<8x128xf32>
    %c0_264 = arith.constant 0 : index
    %c16 = arith.constant 16 : index
    %c0_265 = arith.constant 0 : index
    %834 = vector.load %arg11[%c0_264, %c16, %c0_265] : memref<1x24x128xf32, #tpu.memory_space<vmem>>, vector<1x8x128xf32>
    %835 = vector.shape_cast %834 : vector<1x8x128xf32> to vector<8x128xf32>
    %836 = vector.shape_cast %833 : vector<8x128xf32> to vector<1x8x128xf32>
    tpu.vector_store %arg11[%c0_264, %c16, %c0_265], %836 {strides = array<i32>} : memref<1x24x128xf32, #tpu.memory_space<vmem>>, vector<1x8x128xf32>,
    return
  }
  func.func @transform_0(%arg0: i32) -> (i32, i32, i32) {
    %c0_i32 = arith.constant 0 : i32
    %c0_i32_0 = arith.constant 0 : i32
    %c0_i32_1 = arith.constant 0 : i32
    return %arg0, %c0_i32, %c0_i32_0 : i32, i32, i32
  }
  func.func @transform_1(%arg0: i32) -> (i32, i32, i32) {
    %c0_i32 = arith.constant 0 : i32
    %c0_i32_0 = arith.constant 0 : i32
    %c0_i32_1 = arith.constant 0 : i32
    return %arg0, %c0_i32, %c0_i32_0 : i32, i32, i32
  }
  func.func @transform_2(%arg0: i32) -> (i32, i32, i32) {
    %c0_i32 = arith.constant 0 : i32
    %c0_i32_0 = arith.constant 0 : i32
    %c0_i32_1 = arith.constant 0 : i32
    return %arg0, %c0_i32, %c0_i32_0 : i32, i32, i32
  }
  func.func @transform_3(%arg0: i32) -> (i32, i32, i32) {
    %c0_i32 = arith.constant 0 : i32
    %c0_i32_0 = arith.constant 0 : i32
    %c0_i32_1 = arith.constant 0 : i32
    return %arg0, %c0_i32, %c0_i32_0 : i32, i32, i32
  }
  func.func @transform_4(%arg0: i32) -> (i32, i32, i32) {
    %c0_i32 = arith.constant 0 : i32
    %c0_i32_0 = arith.constant 0 : i32
    %c0_i32_1 = arith.constant 0 : i32
    return %arg0, %c0_i32, %c0_i32_0 : i32, i32, i32
  }
  func.func @transform_5(%arg0: i32) -> (i32, i32, i32) {
    %c0_i32 = arith.constant 0 : i32
    %c0_i32_0 = arith.constant 0 : i32
    %c0_i32_1 = arith.constant 0 : i32
    return %arg0, %c0_i32, %c0_i32_0 : i32, i32, i32
  }
  func.func @transform_6(%arg0: i32) -> (i32, i32) {
    %c0_i32 = arith.constant 0 : i32
    %c0_i32_0 = arith.constant 0 : i32
    %c0_i32_1 = arith.constant 0 : i32
    return %c0_i32, %c0_i32_0 : i32, i32
  }
  func.func @transform_7(%arg0: i32) -> (i32, i32) {
    %c0_i32 = arith.constant 0 : i32
    %c0_i32_0 = arith.constant 0 : i32
    %c0_i32_1 = arith.constant 0 : i32
    return %c0_i32, %c0_i32_0 : i32, i32
  }
  func.func @transform_8(%arg0: i32) -> (i32, i32) {
    %c0_i32 = arith.constant 0 : i32
    %c0_i32_0 = arith.constant 0 : i32
    %c0_i32_1 = arith.constant 0 : i32
    return %c0_i32, %c0_i32_0 : i32, i32
  }
  func.func @transform_9(%arg0: i32) -> (i32, i32) {
    %c0_i32 = arith.constant 0 : i32
    %c0_i32_0 = arith.constant 0 : i32
    %c0_i32_1 = arith.constant 0 : i32
    return %c0_i32, %c0_i32_0 : i32, i32
  }
  func.func @transform_10(%arg0: i32) -> (i32, i32, i32) {
    %c0_i32 = arith.constant 0 : i32
    %c0_i32_0 = arith.constant 0 : i32
    %c0_i32_1 = arith.constant 0 : i32
    return %arg0, %c0_i32, %c0_i32_0 : i32, i32, i32
  }
}

</mosaic_0001>

<llo_original>
// kernel: forward.2
$region0: #{forward.2}
  #allocation0 [shape = 'u32[]', space=smem, size = 0x4, offset = 0x4, fixed_abs, tag = 'smem constant byte address 0x4 - core index']
  #allocation1 [shape = 'u32[144,128]{1,0:T(1,128)}', space=vmem, size = 0x12000, scoped, tag = 'internal scratch']
  %s0 = inlined_call_operand.vmem [shape: f32[96,128], index: 0, kind: input, shape index: {}]
  %s1 = inlined_call_operand.vmem [shape: f32[96,128], index: 1, kind: input, shape index: {}]
  %s2 = inlined_call_operand.vmem [shape: bf16[640,128], index: 2, kind: input, shape index: {}]
  %s3 = inlined_call_operand.vmem [shape: bf16[128,384], index: 3, kind: input, shape index: {}]
  %s4 = inlined_call_operand.vmem [shape: bf16[128,256], index: 4, kind: input, shape index: {}]
  %s5 = inlined_call_operand.vmem [shape: f32[24,128], index: 5, kind: input, shape index: {}]
  %s6 = inlined_call_operand.vmem [shape: f32[96,128], index: 6, kind: output, shape index: {0}]
  %s7 = inlined_call_operand.vmem [shape: bf16[96,256], index: 7, kind: output, shape index: {1}]
  %8 = xla_tuple %s6, %s7
  %s9 = sld [smem:[#allocation0]]
  $region42: #{forward.2} parent=0
    _
  %s11 = ssub.s32 1, %s9
  %s12 = scalar_select 0, %s11, %s9
  // Predicated region
  $region2: #{forward.2} parent=0 // pred_check
    _
  $region3: #{forward.2} parent=0 // pred_check_branch
    %14 = sbr.rel (0) target = $region5
  $region4: #{forward.2} parent=0 // pred_region
    _
  $region5: #{forward.2} parent=0 // pred_fallthru
    _
  // Predicated region
  $region6: #{forward.2} parent=0 // pred_check
    _
  $region7: #{forward.2} parent=0 // pred_check_branch
    %16 = sbr.rel (0) target = $region9
  $region8: #{forward.2} parent=0 // pred_region
    _
  $region9: #{forward.2} parent=0 // pred_fallthru
    _
  // Predicated region
  $region10: #{forward.2} parent=0 // pred_check
    _
  $region11: #{forward.2} parent=0 // pred_check_branch
    %18 = sbr.rel (0) target = $region13
  $region12: #{forward.2} parent=0 // pred_region
    _
  $region13: #{forward.2} parent=0 // pred_fallthru
    _
  // Predicated region
  $region14: #{forward.2} parent=0 // pred_check
    _
  $region15: #{forward.2} parent=0 // pred_check_branch
    %20 = sbr.rel (0) target = $region17
  $region16: #{forward.2} parent=0 // pred_region
    _
  $region17: #{forward.2} parent=0 // pred_fallthru
    _
  // Predicated region
  $region18: #{forward.2} parent=0 // pred_check
    _
  $region19: #{forward.2} parent=0 // pred_check_branch
    %22 = sbr.rel (0) target = $region21
  $region20: #{forward.2} parent=0 // pred_region
    _
  $region21: #{forward.2} parent=0 // pred_fallthru
    _
  // Predicated region
  $region22: #{forward.2} parent=0 // pred_check
    _
  $region23: #{forward.2} parent=0 // pred_check_branch
    %24 = sbr.rel (0) target = $region25
  $region24: #{forward.2} parent=0 // pred_region
    _
  $region25: #{forward.2} parent=0 // pred_fallthru
    _
  %v26 = vld [vmem:[%s5] sm:$0xff]
  %v27 = vld [vmem:[%s5 + $0x8] sm:$0xff]
  %v28 = vld [vmem:[%s5 + $0x10] sm:$0xff]
  %v29 = vld [vmem:[%s0] sm:$0xff]
  %v30 = vld [vmem:[%s0 + $0x8] sm:$0xff]
  %v31 = vld [vmem:[%s0 + $0x10] sm:$0xff]
  %v32 = vld [vmem:[%s0 + $0x18] sm:$0xff]
  %v33 = vld [vmem:[%s0 + $0x20] sm:$0xff]
  %v34 = vld [vmem:[%s0 + $0x28] sm:$0xff]
  %v35 = vld [vmem:[%s0 + $0x30] sm:$0xff]
  %v36 = vld [vmem:[%s0 + $0x38] sm:$0xff]
  %v37 = vld [vmem:[%s0 + $0x40] sm:$0xff]
  %v38 = vld [vmem:[%s0 + $0x48] sm:$0xff]
  %v39 = vld [vmem:[%s0 + $0x50] sm:$0xff]
  %v40 = vld [vmem:[%s0 + $0x58] sm:$0xff]
  %v41 = vld [vmem:[%s2] sm:$0xf]
  %v42 = vld [vmem:[%s2 + $0x4] sm:$0xf]
  %v43 = vld [vmem:[%s2 + $0x8] sm:$0xf]
  %v44 = vld [vmem:[%s2 + $0xc] sm:$0xf]
  %v45 = vld [vmem:[%s2 + $0x10] sm:$0xf]
  %v46 = vld [vmem:[%s2 + $0x14] sm:$0xf]
  %v47 = vld [vmem:[%s2 + $0x18] sm:$0xf]
  %v48 = vld [vmem:[%s2 + $0x1c] sm:$0xf]
  %v49 = vld [vmem:[%s2 + $0x20] sm:$0xf]
  %v50 = vld [vmem:[%s2 + $0x24] sm:$0xf]
  %v51 = vld [vmem:[%s2 + $0x28] sm:$0xf]
  %v52 = vld [vmem:[%s2 + $0x2c] sm:$0xf]
  %v53 = vld [vmem:[%s2 + $0x30] sm:$0xf]
  %v54 = vld [vmem:[%s2 + $0x34] sm:$0xf]
  %v55 = vld [vmem:[%s2 + $0x38] sm:$0xf]
  %v56 = vld [vmem:[%s2 + $0x3c] sm:$0xf]
  %v57 = vpack.c.bf16 %v30, %v29
  %v58 = vpack.c.bf16 %v32, %v31
  %v59 = vpack.c.bf16 %v34, %v33
  %v60 = vpack.c.bf16 %v36, %v35
  %v61 = vpack.c.bf16 %v38, %v37
  %v62 = vpack.c.bf16 %v40, %v39
  %v63 = vlaneseq
  %v64 = vshrl.u32 %v63, 7
  %v65 = vsub.s32 0, %v64
  %v66 = vrot.slane %v26, %v65
  %v83 = vunpack.c.l.b16 %v41
  %v84 = vunpack.c.l.b16 %v42
  %v85 = vunpack.c.l.b16 %v43
  %v86 = vunpack.c.l.b16 %v44
  %v87 = vunpack.c.l.b16 %v45
  %v88 = vunpack.c.l.b16 %v46
  %v89 = vunpack.c.l.b16 %v47
  %v90 = vunpack.c.l.b16 %v48
  %v91 = vunpack.c.l.b16 %v49
  %v92 = vunpack.c.l.b16 %v50
  %v93 = vunpack.c.l.b16 %v51
  %v94 = vunpack.c.l.b16 %v52
  %v95 = vunpack.c.l.b16 %v53
  %v96 = vunpack.c.l.b16 %v54
  %v97 = vunpack.c.l.b16 %v55
  %v98 = vunpack.c.l.b16 %v56
  %v99 = vpack.c.b16 %v84, %v83
  %v100 = vpack.c.b16 %v86, %v85
  %v101 = vpack.c.b16 %v88, %v87
  %v102 = vpack.c.b16 %v90, %v89
  %v103 = vpack.c.b16 %v92, %v91
  %v104 = vpack.c.b16 %v94, %v93
  %v105 = vpack.c.b16 %v96, %v95
  %v106 = vpack.c.b16 %v98, %v97
  %115 = vmatprep.subr.bf16.mxu0 0
  %116 = vmatpush1.bf16.msra.mxu0 %v99
  %117 = vmatprep.subr.bf16.mxu0 0
  %118 = vmatpush1.bf16.msra.mxu0 %v100
  %119 = vmatprep.subr.bf16.mxu0 0
  %120 = vmatpush1.bf16.msra.mxu0 %v101
  %121 = vmatprep.subr.bf16.mxu0 0
  %122 = vmatpush1.bf16.msra.mxu0 %v102
  %123 = vmatprep.subr.bf16.mxu0 0
  %124 = vmatpush1.bf16.msra.mxu0 %v103
  %125 = vmatprep.subr.bf16.mxu0 0
  %126 = vmatpush1.bf16.msra.mxu0 %v104
  %127 = vmatprep.subr.bf16.mxu0 0
  %128 = vmatpush1.bf16.msra.mxu0 %v105
  %129 = vmatprep.subr.bf16.mxu0 0
  %130 = vmatpush1.bf16.msra.mxu0 %v106
  %131 = vmatprep.subr.bf16.mxu0 0
  %132 = vmatpush1.bf16.msra.mxu0 0
  %133 = vmatprep.subr.bf16.mxu0 0
  %134 = vmatpush1.bf16.msra.mxu0 0
  %135 = vmatprep.subr.bf16.mxu0 0
  %136 = vmatpush1.bf16.msra.mxu0 0
  %137 = vmatprep.subr.bf16.mxu0 0
  %138 = vmatpush1.bf16.msra.mxu0 0
  %139 = vmatprep.subr.bf16.mxu0 0
  %140 = vmatpush1.bf16.msra.mxu0 0
  %141 = vmatprep.subr.bf16.mxu0 0
  %142 = vmatpush1.bf16.msra.mxu0 0
  %143 = vmatprep.subr.bf16.mxu0 0
  %144 = vmatpush1.bf16.msra.mxu0 0
  %145 = vmatprep.subr.bf16.mxu0 0
  %146 = vmatpush1.bf16.msra.mxu0 0
  %147 = vmatprep.mubr.bf16.mxu0 0
  %148 = vmatmul.mubr.bf16.gmra.mrb[0].mxu0 %v57
  %v149 = vpop.f32.mrb[0].mxu0
  %v150 = vadd.f32 %v66, %v149
  %v151 = vpop.f32.mrb[0].mxu0
  %v152 = vpop.f32.mrb[0].mxu0
  %v153 = vadd.f32 %v66, %v152
  %v154 = vpop.f32.mrb[0].mxu0
  %155 = vmatprep.mubr.bf16.mxu0 0
  %156 = vmatmul.mubr.bf16.gmra.mrb[0].mxu0 %v58
  %v157 = vpop.f32.mrb[0].mxu0
  %v158 = vadd.f32 %v66, %v157
  %v159 = vpop.f32.mrb[0].mxu0
  %v160 = vpop.f32.mrb[0].mxu0
  %v161 = vadd.f32 %v66, %v160
  %v162 = vpop.f32.mrb[0].mxu0
  %163 = vmatprep.mubr.bf16.mxu0 0
  %164 = vmatmul.mubr.bf16.gmra.mrb[0].mxu0 %v59
  %v165 = vpop.f32.mrb[0].mxu0
  %v166 = vadd.f32 %v66, %v165
  %v167 = vpop.f32.mrb[0].mxu0
  %v168 = vpop.f32.mrb[0].mxu0
  %v169 = vadd.f32 %v66, %v168
  %v170 = vpop.f32.mrb[0].mxu0
  %171 = vmatprep.mubr.bf16.mxu0 0
  %172 = vmatmul.mubr.bf16.gmra.mrb[0].mxu0 %v60
  %v173 = vpop.f32.mrb[0].mxu0
  %v174 = vadd.f32 %v66, %v173
  %v175 = vpop.f32.mrb[0].mxu0
  %v176 = vpop.f32.mrb[0].mxu0
  %v177 = vadd.f32 %v66, %v176
  %v178 = vpop.f32.mrb[0].mxu0
  %179 = vmatprep.mubr.bf16.mxu0 0
  %180 = vmatmul.mubr.bf16.gmra.mrb[0].mxu0 %v61
  %v181 = vpop.f32.mrb[0].mxu0
  %v182 = vadd.f32 %v66, %v181
  %v183 = vpop.f32.mrb[0].mxu0
  %v184 = vpop.f32.mrb[0].mxu0
  %v185 = vadd.f32 %v66, %v184
  %v186 = vpop.f32.mrb[0].mxu0
  %187 = vmatprep.mubr.bf16.mxu0 0
  %188 = vmatmul.mubr.bf16.gmra.mrb[0].mxu0 %v62
  %v189 = vpop.f32.mrb[0].mxu0
  %v190 = vadd.f32 %v66, %v189
  %v191 = vpop.f32.mrb[0].mxu0
  %v192 = vpop.f32.mrb[0].mxu0
  %v193 = vadd.f32 %v66, %v192
  %v194 = vpop.f32.mrb[0].mxu0
  %195 = vdwg.mxu0
  %196 = vst [vmem:[%s6] sm:$0xff] %v150
  %197 = vst [vmem:[%s6 + $0x8] sm:$0xff] %v153
  %198 = vst [vmem:[%s6 + $0x10] sm:$0xff] %v158
  %199 = vst [vmem:[%s6 + $0x18] sm:$0xff] %v161
  %200 = vst [vmem:[%s6 + $0x20] sm:$0xff] %v166
  %201 = vst [vmem:[%s6 + $0x28] sm:$0xff] %v169
  %202 = vst [vmem:[%s6 + $0x30] sm:$0xff] %v174
  %203 = vst [vmem:[%s6 + $0x38] sm:$0xff] %v177
  %204 = vst [vmem:[%s6 + $0x40] sm:$0xff] %v182
  %205 = vst [vmem:[%s6 + $0x48] sm:$0xff] %v185
  %206 = vst [vmem:[%s6 + $0x50] sm:$0xff] %v190
  %207 = vst [vmem:[%s6 + $0x58] sm:$0xff] %v193
  %v208 = vld [vmem:[%s2 + $0x40] sm:$0xf]
  %v209 = vld [vmem:[%s2 + $0x44] sm:$0xf]
  %v210 = vld [vmem:[%s2 + $0x48] sm:$0xf]
  %v211 = vld [vmem:[%s2 + $0x4c] sm:$0xf]
  %v212 = vld [vmem:[%s2 + $0x50] sm:$0xf]
  %v213 = vld [vmem:[%s2 + $0x54] sm:$0xf]
  %v214 = vld [vmem:[%s2 + $0x58] sm:$0xf]
  %v215 = vld [vmem:[%s2 + $0x5c] sm:$0xf]
  %v216 = vld [vmem:[%s2 + $0x60] sm:$0xf]
  %v217 = vld [vmem:[%s2 + $0x64] sm:$0xf]
  %v218 = vld [vmem:[%s2 + $0x68] sm:$0xf]
  %v219 = vld [vmem:[%s2 + $0x6c] sm:$0xf]
  %v220 = vld [vmem:[%s2 + $0x70] sm:$0xf]
  %v221 = vld [vmem:[%s2 + $0x74] sm:$0xf]
  %v222 = vld [vmem:[%s2 + $0x78] sm:$0xf]
  %v223 = vld [vmem:[%s2 + $0x7c] sm:$0xf]
  %v224 = vpack.c.bf16 %v153, %v150
  %v225 = vpack.c.bf16 %v161, %v158
  %v226 = vpack.c.bf16 %v169, %v166
  %v227 = vpack.c.bf16 %v177, %v174
  %v228 = vpack.c.bf16 %v185, %v182
  %v229 = vpack.c.bf16 %v193, %v190
  %v230 = vlaneseq
  %v231 = vshrl.u32 %v230, 7
  %v232 = vsub.s32 1, %v231
  %v233 = vrot.slane %v26, %v232
  %v250 = vunpack.c.l.b16 %v208
  %v251 = vunpack.c.l.b16 %v209
  %v252 = vunpack.c.l.b16 %v210
  %v253 = vunpack.c.l.b16 %v211
  %v254 = vunpack.c.l.b16 %v212
  %v255 = vunpack.c.l.b16 %v213
  %v256 = vunpack.c.l.b16 %v214
  %v257 = vunpack.c.l.b16 %v215
  %v258 = vunpack.c.l.b16 %v216
  %v259 = vunpack.c.l.b16 %v217
  %v260 = vunpack.c.l.b16 %v218
  %v261 = vunpack.c.l.b16 %v219
  %v262 = vunpack.c.l.b16 %v220
  %v263 = vunpack.c.l.b16 %v221
  %v264 = vunpack.c.l.b16 %v222
  %v265 = vunpack.c.l.b16 %v223
  %v266 = vpack.c.b16 %v251, %v250
  %v267 = vpack.c.b16 %v253, %v252
  %v268 = vpack.c.b16 %v255, %v254
  %v269 = vpack.c.b16 %v257, %v256
  %v270 = vpack.c.b16 %v259, %v258
  %v271 = vpack.c.b16 %v261, %v260
  %v272 = vpack.c.b16 %v263, %v262
  %v273 = vpack.c.b16 %v265, %v264
  %282 = vmatprep.subr.bf16.mxu0 0
  %283 = vmatpush1.bf16.msra.mxu0 %v266
  %284 = vmatprep.subr.bf16.mxu0 0
  %285 = vmatpush1.bf16.msra.mxu0 %v267
  %286 = vmatprep.subr.bf16.mxu0 0
  %287 = vmatpush1.bf16.msra.mxu0 %v268
  %288 = vmatprep.subr.bf16.mxu0 0
  %289 = vmatpush1.bf16.msra.mxu0 %v269
  %290 = vmatprep.subr.bf16.mxu0 0
  %291 = vmatpush1.bf16.msra.mxu0 %v270
  %292 = vmatprep.subr.bf16.mxu0 0
  %293 = vmatpush1.bf16.msra.mxu0 %v271
  %294 = vmatprep.subr.bf16.mxu0 0
  %295 = vmatpush1.bf16.msra.mxu0 %v272
  %296 = vmatprep.subr.bf16.mxu0 0
  %297 = vmatpush1.bf16.msra.mxu0 %v273
  %298 = vmatprep.subr.bf16.mxu0 0
  %299 = vmatpush1.bf16.msra.mxu0 0
  %300 = vmatprep.subr.bf16.mxu0 0
  %301 = vmatpush1.bf16.msra.mxu0 0
  %302 = vmatprep.subr.bf16.mxu0 0
  %303 = vmatpush1.bf16.msra.mxu0 0
  %304 = vmatprep.subr.bf16.mxu0 0
  %305 = vmatpush1.bf16.msra.mxu0 0
  %306 = vmatprep.subr.bf16.mxu0 0
  %307 = vmatpush1.bf16.msra.mxu0 0
  %308 = vmatprep.subr.bf16.mxu0 0
  %309 = vmatpush1.bf16.msra.mxu0 0
  %310 = vmatprep.subr.bf16.mxu0 0
  %311 = vmatpush1.bf16.msra.mxu0 0
  %312 = vmatprep.subr.bf16.mxu0 0
  %313 = vmatpush1.bf16.msra.mxu0 0
  %314 = vmatprep.mubr.bf16.mxu0 0
  %315 = vmatmul.mubr.bf16.gmra.mrb[0].mxu0 %v224
  %v316 = vpop.f32.mrb[0].mxu0
  %v317 = vadd.f32 %v233, %v316
  %v318 = vpop.f32.mrb[0].mxu0
  %v319 = vpop.f32.mrb[0].mxu0
  %v320 = vadd.f32 %v233, %v319
  %v321 = vpop.f32.mrb[0].mxu0
  %322 = vmatprep.mubr.bf16.mxu0 0
  %323 = vmatmul.mubr.bf16.gmra.mrb[0].mxu0 %v225
  %v324 = vpop.f32.mrb[0].mxu0
  %v325 = vadd.f32 %v233, %v324
  %v326 = vpop.f32.mrb[0].mxu0
  %v327 = vpop.f32.mrb[0].mxu0
  %v328 = vadd.f32 %v233, %v327
  %v329 = vpop.f32.mrb[0].mxu0
  %330 = vmatprep.mubr.bf16.mxu0 0
  %331 = vmatmul.mubr.bf16.gmra.mrb[0].mxu0 %v226
  %v332 = vpop.f32.mrb[0].mxu0
  %v333 = vadd.f32 %v233, %v332
  %v334 = vpop.f32.mrb[0].mxu0
  %v335 = vpop.f32.mrb[0].mxu0
  %v336 = vadd.f32 %v233, %v335
  %v337 = vpop.f32.mrb[0].mxu0
  %338 = vmatprep.mubr.bf16.mxu0 0
  %339 = vmatmul.mubr.bf16.gmra.mrb[0].mxu0 %v227
  %v340 = vpop.f32.mrb[0].mxu0
  %v341 = vadd.f32 %v233, %v340
  %v342 = vpop.f32.mrb[0].mxu0
  %v343 = vpop.f32.mrb[0].mxu0
  %v344 = vadd.f32 %v233, %v343
  %v345 = vpop.f32.mrb[0].mxu0
  %346 = vmatprep.mubr.bf16.mxu0 0
  %347 = vmatmul.mubr.bf16.gmra.mrb[0].mxu0 %v228
  %v348 = vpop.f32.mrb[0].mxu0
  %v349 = vadd.f32 %v233, %v348
  %v350 = vpop.f32.mrb[0].mxu0
  %v351 = vpop.f32.mrb[0].mxu0
  %v352 = vadd.f32 %v233, %v351
  %v353 = vpop.f32.mrb[0].mxu0
  %354 = vmatprep.mubr.bf16.mxu0 0
  %355 = vmatmul.mubr.bf16.gmra.mrb[0].mxu0 %v229
  %v356 = vpop.f32.mrb[0].mxu0
  %v357 = vadd.f32 %v233, %v356
  %v358 = vpop.f32.mrb[0].mxu0
  %v359 = vpop.f32.mrb[0].mxu0
  %v360 = vadd.f32 %v233, %v359
  %v361 = vpop.f32.mrb[0].mxu0
  %362 = vdwg.mxu0
  %363 = vadd.xlane.f32.xlu0 %v317
  %v364 = vpop.xlane.xlu0 %363
  %365 = vadd.xlane.f32.xlu0 %v320
  %v366 = vpop.xlane.xlu0 %365
  %367 = vadd.xlane.f32.xlu0 %v325
  %v368 = vpop.xlane.xlu0 %367
  %369 = vadd.xlane.f32.xlu0 %v328
  %v370 = vpop.xlane.xlu0 %369
  %371 = vadd.xlane.f32.xlu0 %v333
  %v372 = vpop.xlane.xlu0 %371
  %373 = vadd.xlane.f32.xlu0 %v336
  %v374 = vpop.xlane.xlu0 %373
  %375 = vadd.xlane.f32.xlu0 %v341
  %v376 = vpop.xlane.xlu0 %375
  %377 = vadd.xlane.f32.xlu0 %v344
  %v378 = vpop.xlane.xlu0 %377
  %379 = vadd.xlane.f32.xlu0 %v349
  %v380 = vpop.xlane.xlu0 %379
  %381 = vadd.xlane.f32.xlu0 %v352
  %v382 = vpop.xlane.xlu0 %381
  %383 = vadd.xlane.f32.xlu0 %v357
  %v384 = vpop.xlane.xlu0 %383
  %385 = vadd.xlane.f32.xlu0 %v360
  %v386 = vpop.xlane.xlu0 %385
  %v387 = vrcp.pop 128.0
  %v388 = vmul.f32 %v364, %v387
  %v389 = vmul.f32 %v366, %v387
  %v390 = vmul.f32 %v368, %v387
  %v391 = vmul.f32 %v370, %v387
  %v392 = vmul.f32 %v372, %v387
  %v393 = vmul.f32 %v374, %v387
  %v394 = vmul.f32 %v376, %v387
  %v395 = vmul.f32 %v378, %v387
  %v396 = vmul.f32 %v380, %v387
  %v397 = vmul.f32 %v382, %v387
  %v398 = vmul.f32 %v384, %v387
  %v399 = vmul.f32 %v386, %v387
  %v400 = vsub.f32 %v317, %v388
  %v401 = vsub.f32 %v320, %v389
  %v402 = vsub.f32 %v325, %v390
  %v403 = vsub.f32 %v328, %v391
  %v404 = vsub.f32 %v333, %v392
  %v405 = vsub.f32 %v336, %v393
  %v406 = vsub.f32 %v341, %v394
  %v407 = vsub.f32 %v344, %v395
  %v408 = vsub.f32 %v349, %v396
  %v409 = vsub.f32 %v352, %v397
  %v410 = vsub.f32 %v357, %v398
  %v411 = vsub.f32 %v360, %v399
  %v412 = vmul.f32 %v400, %v400
  %v413 = vmul.f32 %v401, %v401
  %v414 = vmul.f32 %v402, %v402
  %v415 = vmul.f32 %v403, %v403
  %v416 = vmul.f32 %v404, %v404
  %v417 = vmul.f32 %v405, %v405
  %v418 = vmul.f32 %v406, %v406
  %v419 = vmul.f32 %v407, %v407
  %v420 = vmul.f32 %v408, %v408
  %v421 = vmul.f32 %v409, %v409
  %v422 = vmul.f32 %v410, %v410
  %v423 = vmul.f32 %v411, %v411
  %424 = vadd.xlane.f32.xlu0 %v412
  %v425 = vpop.xlane.xlu0 %424
  %426 = vadd.xlane.f32.xlu0 %v413
  %v427 = vpop.xlane.xlu0 %426
  %428 = vadd.xlane.f32.xlu0 %v414
  %v429 = vpop.xlane.xlu0 %428
  %430 = vadd.xlane.f32.xlu0 %v415
  %v431 = vpop.xlane.xlu0 %430
  %432 = vadd.xlane.f32.xlu0 %v416
  %v433 = vpop.xlane.xlu0 %432
  %434 = vadd.xlane.f32.xlu0 %v417
  %v435 = vpop.xlane.xlu0 %434
  %436 = vadd.xlane.f32.xlu0 %v418
  %v437 = vpop.xlane.xlu0 %436
  %438 = vadd.xlane.f32.xlu0 %v419
  %v439 = vpop.xlane.xlu0 %438
  %440 = vadd.xlane.f32.xlu0 %v420
  %v441 = vpop.xlane.xlu0 %440
  %442 = vadd.xlane.f32.xlu0 %v421
  %v443 = vpop.xlane.xlu0 %442
  %444 = vadd.xlane.f32.xlu0 %v422
  %v445 = vpop.xlane.xlu0 %444
  %446 = vadd.xlane.f32.xlu0 %v423
  %v447 = vpop.xlane.xlu0 %446
  %v448 = vmul.f32 %v425, %v387
  %v449 = vmul.f32 %v427, %v387
  %v450 = vmul.f32 %v429, %v387
  %v451 = vmul.f32 %v431, %v387
  %v452 = vmul.f32 %v433, %v387
  %v453 = vmul.f32 %v435, %v387
  %v454 = vmul.f32 %v437, %v387
  %v455 = vmul.f32 %v439, %v387
  %v456 = vmul.f32 %v441, %v387
  %v457 = vmul.f32 %v443, %v387
  %v458 = vmul.f32 %v445, %v387
  %v459 = vmul.f32 %v447, %v387
  %v460 = vadd.f32 %v448, 1e-05
  %v461 = vadd.f32 %v449, 1e-05
  %v462 = vadd.f32 %v450, 1e-05
  %v463 = vadd.f32 %v451, 1e-05
  %v464 = vadd.f32 %v452, 1e-05
  %v465 = vadd.f32 %v453, 1e-05
  %v466 = vadd.f32 %v454, 1e-05
  %v467 = vadd.f32 %v455, 1e-05
  %v468 = vadd.f32 %v456, 1e-05
  %v469 = vadd.f32 %v457, 1e-05
  %v470 = vadd.f32 %v458, 1e-05
  %v471 = vadd.f32 %v459, 1e-05
  %v472 = vrsqrt.pop %v460
  %v473 = vrsqrt.pop %v461
  %v474 = vrsqrt.pop %v462
  %v475 = vrsqrt.pop %v463
  %v476 = vrsqrt.pop %v464
  %v477 = vrsqrt.pop %v465
  %v478 = vrsqrt.pop %v466
  %v479 = vrsqrt.pop %v467
  %v480 = vrsqrt.pop %v468
  %v481 = vrsqrt.pop %v469
  %v482 = vrsqrt.pop %v470
  %v483 = vrsqrt.pop %v471
  %v484 = vmul.f32 %v400, %v472
  %v485 = vmul.f32 %v401, %v473
  %v486 = vmul.f32 %v402, %v474
  %v487 = vmul.f32 %v403, %v475
  %v488 = vmul.f32 %v404, %v476
  %v489 = vmul.f32 %v405, %v477
  %v490 = vmul.f32 %v406, %v478
  %v491 = vmul.f32 %v407, %v479
  %v492 = vmul.f32 %v408, %v480
  %v493 = vmul.f32 %v409, %v481
  %v494 = vmul.f32 %v410, %v482
  %v495 = vmul.f32 %v411, %v483
  %v496 = vlaneseq
  %v497 = vshrl.u32 %v496, 7
  %v498 = vsub.s32 2, %v497
  %v499 = vrot.slane %v26, %v498
  %v500 = vmul.f32 %v484, %v499
  %v501 = vmul.f32 %v485, %v499
  %v502 = vmul.f32 %v486, %v499
  %v503 = vmul.f32 %v487, %v499
  %v504 = vmul.f32 %v488, %v499
  %v505 = vmul.f32 %v489, %v499
  %v506 = vmul.f32 %v490, %v499
  %v507 = vmul.f32 %v491, %v499
  %v508 = vmul.f32 %v492, %v499
  %v509 = vmul.f32 %v493, %v499
  %v510 = vmul.f32 %v494, %v499
  %v511 = vmul.f32 %v495, %v499
  %v512 = vlaneseq
  %v513 = vshrl.u32 %v512, 7
  %v514 = vsub.s32 3, %v513
  %v515 = vrot.slane %v26, %v514
  %v516 = vadd.f32 %v500, %v515
  %v517 = vadd.f32 %v501, %v515
  %v518 = vadd.f32 %v502, %v515
  %v519 = vadd.f32 %v503, %v515
  %v520 = vadd.f32 %v504, %v515
  %v521 = vadd.f32 %v505, %v515
  %v522 = vadd.f32 %v506, %v515
  %v523 = vadd.f32 %v507, %v515
  %v524 = vadd.f32 %v508, %v515
  %v525 = vadd.f32 %v509, %v515
  %v526 = vadd.f32 %v510, %v515
  %v527 = vadd.f32 %v511, %v515
  %528 = vadd.xlane.f32.xlu0 %v516
  %v529 = vpop.xlane.xlu0 %528
  %530 = vadd.xlane.f32.xlu0 %v517
  %v531 = vpop.xlane.xlu0 %530
  %532 = vadd.xlane.f32.xlu0 %v518
  %v533 = vpop.xlane.xlu0 %532
  %534 = vadd.xlane.f32.xlu0 %v519
  %v535 = vpop.xlane.xlu0 %534
  %536 = vadd.xlane.f32.xlu0 %v520
  %v537 = vpop.xlane.xlu0 %536
  %538 = vadd.xlane.f32.xlu0 %v521
  %v539 = vpop.xlane.xlu0 %538
  %540 = vadd.xlane.f32.xlu0 %v522
  %v541 = vpop.xlane.xlu0 %540
  %542 = vadd.xlane.f32.xlu0 %v523
  %v543 = vpop.xlane.xlu0 %542
  %544 = vadd.xlane.f32.xlu0 %v524
  %v545 = vpop.xlane.xlu0 %544
  %546 = vadd.xlane.f32.xlu0 %v525
  %v547 = vpop.xlane.xlu0 %546
  %548 = vadd.xlane.f32.xlu0 %v526
  %v549 = vpop.xlane.xlu0 %548
  %550 = vadd.xlane.f32.xlu0 %v527
  %v551 = vpop.xlane.xlu0 %550
  %v552 = vmul.f32 %v529, %v387
  %v553 = vmul.f32 %v531, %v387
  %v554 = vmul.f32 %v533, %v387
  %v555 = vmul.f32 %v535, %v387
  %v556 = vmul.f32 %v537, %v387
  %v557 = vmul.f32 %v539, %v387
  %v558 = vmul.f32 %v541, %v387
  %v559 = vmul.f32 %v543, %v387
  %v560 = vmul.f32 %v545, %v387
  %v561 = vmul.f32 %v547, %v387
  %v562 = vmul.f32 %v549, %v387
  %v563 = vmul.f32 %v551, %v387
  %v564 = vsub.f32 %v516, %v552
  %v565 = vsub.f32 %v517, %v553
  %v566 = vsub.f32 %v518, %v554
  %v567 = vsub.f32 %v519, %v555
  %v568 = vsub.f32 %v520, %v556
  %v569 = vsub.f32 %v521, %v557
  %v570 = vsub.f32 %v522, %v558
  %v571 = vsub.f32 %v523, %v559
  %v572 = vsub.f32 %v524, %v560
  %v573 = vsub.f32 %v525, %v561
  %v574 = vsub.f32 %v526, %v562
  %v575 = vsub.f32 %v527, %v563
  %v576 = vmul.f32 %v564, %v564
  %v577 = vmul.f32 %v565, %v565
  %v578 = vmul.f32 %v566, %v566
  %v579 = vmul.f32 %v567, %v567
  %v580 = vmul.f32 %v568, %v568
  %v581 = vmul.f32 %v569, %v569
  %v582 = vmul.f32 %v570, %v570
  %v583 = vmul.f32 %v571, %v571
  %v584 = vmul.f32 %v572, %v572
  %v585 = vmul.f32 %v573, %v573
  %v586 = vmul.f32 %v574, %v574
  %v587 = vmul.f32 %v575, %v575
  %588 = vadd.xlane.f32.xlu0 %v576
  %v589 = vpop.xlane.xlu0 %588
  %590 = vadd.xlane.f32.xlu0 %v577
  %v591 = vpop.xlane.xlu0 %590
  %592 = vadd.xlane.f32.xlu0 %v578
  %v593 = vpop.xlane.xlu0 %592
  %594 = vadd.xlane.f32.xlu0 %v579
  %v595 = vpop.xlane.xlu0 %594
  %596 = vadd.xlane.f32.xlu0 %v580
  %v597 = vpop.xlane.xlu0 %596
  %598 = vadd.xlane.f32.xlu0 %v581
  %v599 = vpop.xlane.xlu0 %598
  %600 = vadd.xlane.f32.xlu0 %v582
  %v601 = vpop.xlane.xlu0 %600
  %602 = vadd.xlane.f32.xlu0 %v583
  %v603 = vpop.xlane.xlu0 %602
  %604 = vadd.xlane.f32.xlu0 %v584
  %v605 = vpop.xlane.xlu0 %604
  %606 = vadd.xlane.f32.xlu0 %v585
  %v607 = vpop.xlane.xlu0 %606
  %608 = vadd.xlane.f32.xlu0 %v586
  %v609 = vpop.xlane.xlu0 %608
  %610 = vadd.xlane.f32.xlu0 %v587
  %v611 = vpop.xlane.xlu0 %610
  %v612 = vmul.f32 %v589, %v387
  %v613 = vmul.f32 %v591, %v387
  %v614 = vmul.f32 %v593, %v387
  %v615 = vmul.f32 %v595, %v387
  %v616 = vmul.f32 %v597, %v387
  %v617 = vmul.f32 %v599, %v387
  %v618 = vmul.f32 %v601, %v387
  %v619 = vmul.f32 %v603, %v387
  %v620 = vmul.f32 %v605, %v387
  %v621 = vmul.f32 %v607, %v387
  %v622 = vmul.f32 %v609, %v387
  %v623 = vmul.f32 %v611, %v387
  %v624 = vadd.f32 %v612, 1e-05
  %v625 = vadd.f32 %v613, 1e-05
  %v626 = vadd.f32 %v614, 1e-05
  %v627 = vadd.f32 %v615, 1e-05
  %v628 = vadd.f32 %v616, 1e-05
  %v629 = vadd.f32 %v617, 1e-05
  %v630 = vadd.f32 %v618, 1e-05
  %v631 = vadd.f32 %v619, 1e-05
  %v632 = vadd.f32 %v620, 1e-05
  %v633 = vadd.f32 %v621, 1e-05
  %v634 = vadd.f32 %v622, 1e-05
  %v635 = vadd.f32 %v623, 1e-05
  %v636 = vrsqrt.pop %v624
  %v637 = vrsqrt.pop %v625
  %v638 = vrsqrt.pop %v626
  %v639 = vrsqrt.pop %v627
  %v640 = vrsqrt.pop %v628
  %v641 = vrsqrt.pop %v629
  %v642 = vrsqrt.pop %v630
  %v643 = vrsqrt.pop %v631
  %v644 = vrsqrt.pop %v632
  %v645 = vrsqrt.pop %v633
  %v646 = vrsqrt.pop %v634
  %v647 = vrsqrt.pop %v635
  %v648 = vmul.f32 %v564, %v636
  %v649 = vmul.f32 %v565, %v637
  %v650 = vmul.f32 %v566, %v638
  %v651 = vmul.f32 %v567, %v639
  %v652 = vmul.f32 %v568, %v640
  %v653 = vmul.f32 %v569, %v641
  %v654 = vmul.f32 %v570, %v642
  %v655 = vmul.f32 %v571, %v643
  %v656 = vmul.f32 %v572, %v644
  %v657 = vmul.f32 %v573, %v645
  %v658 = vmul.f32 %v574, %v646
  %v659 = vmul.f32 %v575, %v647
  %v660 = vlaneseq
  %v661 = vshrl.u32 %v660, 7
  %v662 = vsub.s32 4, %v661
  %v663 = vrot.slane %v26, %v662
  %v664 = vmul.f32 %v648, %v663
  %v665 = vmul.f32 %v649, %v663
  %v666 = vmul.f32 %v650, %v663
  %v667 = vmul.f32 %v651, %v663
  %v668 = vmul.f32 %v652, %v663
  %v669 = vmul.f32 %v653, %v663
  %v670 = vmul.f32 %v654, %v663
  %v671 = vmul.f32 %v655, %v663
  %v672 = vmul.f32 %v656, %v663
  %v673 = vmul.f32 %v657, %v663
  %v674 = vmul.f32 %v658, %v663
  %v675 = vmul.f32 %v659, %v663
  %v676 = vlaneseq
  %v677 = vshrl.u32 %v676, 7
  %v678 = vsub.s32 5, %v677
  %v679 = vrot.slane %v26, %v678
  %v680 = vadd.f32 %v664, %v679
  %v681 = vadd.f32 %v665, %v679
  %v682 = vadd.f32 %v666, %v679
  %v683 = vadd.f32 %v667, %v679
  %v684 = vadd.f32 %v668, %v679
  %v685 = vadd.f32 %v669, %v679
  %v686 = vadd.f32 %v670, %v679
  %v687 = vadd.f32 %v671, %v679
  %v688 = vadd.f32 %v672, %v679
  %v689 = vadd.f32 %v673, %v679
  %v690 = vadd.f32 %v674, %v679
  %v691 = vadd.f32 %v675, %v679
  %v692 = vld [vmem:[%s1] sm:$0xff]
  %v693 = vld [vmem:[%s1 + $0x8] sm:$0xff]
  %v694 = vld [vmem:[%s1 + $0x10] sm:$0xff]
  %v695 = vld [vmem:[%s1 + $0x18] sm:$0xff]
  %v696 = vld [vmem:[%s1 + $0x20] sm:$0xff]
  %v697 = vld [vmem:[%s1 + $0x28] sm:$0xff]
  %v698 = vld [vmem:[%s1 + $0x30] sm:$0xff]
  %v699 = vld [vmem:[%s1 + $0x38] sm:$0xff]
  %v700 = vld [vmem:[%s1 + $0x40] sm:$0xff]
  %v701 = vld [vmem:[%s1 + $0x48] sm:$0xff]
  %v702 = vld [vmem:[%s1 + $0x50] sm:$0xff]
  %v703 = vld [vmem:[%s1 + $0x58] sm:$0xff]
  %v704 = vadd.f32 %v680, %v692
  %v705 = vadd.f32 %v681, %v693
  %v706 = vadd.f32 %v682, %v694
  %v707 = vadd.f32 %v683, %v695
  %v708 = vadd.f32 %v684, %v696
  %v709 = vadd.f32 %v685, %v697
  %v710 = vadd.f32 %v686, %v698
  %v711 = vadd.f32 %v687, %v699
  %v712 = vadd.f32 %v688, %v700
  %v713 = vadd.f32 %v689, %v701
  %v714 = vadd.f32 %v690, %v702
  %v715 = vadd.f32 %v691, %v703
  %v716 = vld [vmem:[%s3] sm:$0xff]
  %v717 = vld [vmem:[%s3 + $0x8] sm:$0xf]
  %v718 = vld [vmem:[%s3 + $0xc] sm:$0xff]
  %v719 = vld [vmem:[%s3 + $0x14] sm:$0xf]
  %v720 = vld [vmem:[%s3 + $0x18] sm:$0xff]
  %v721 = vld [vmem:[%s3 + $0x20] sm:$0xf]
  %v722 = vld [vmem:[%s3 + $0x24] sm:$0xff]
  %v723 = vld [vmem:[%s3 + $0x2c] sm:$0xf]
  %v724 = vld [vmem:[%s3 + $0x30] sm:$0xff]
  %v725 = vld [vmem:[%s3 + $0x38] sm:$0xf]
  %v726 = vld [vmem:[%s3 + $0x3c] sm:$0xff]
  %v727 = vld [vmem:[%s3 + $0x44] sm:$0xf]
  %v728 = vld [vmem:[%s3 + $0x48] sm:$0xff]
  %v729 = vld [vmem:[%s3 + $0x50] sm:$0xf]
  %v730 = vld [vmem:[%s3 + $0x54] sm:$0xff]
  %v731 = vld [vmem:[%s3 + $0x5c] sm:$0xf]
  %v732 = vld [vmem:[%s3 + $0x60] sm:$0xff]
  %v733 = vld [vmem:[%s3 + $0x68] sm:$0xf]
  %v734 = vld [vmem:[%s3 + $0x6c] sm:$0xff]
  %v735 = vld [vmem:[%s3 + $0x74] sm:$0xf]
  %v736 = vld [vmem:[%s3 + $0x78] sm:$0xff]
  %v737 = vld [vmem:[%s3 + $0x80] sm:$0xf]
  %v738 = vld [vmem:[%s3 + $0x84] sm:$0xff]
  %v739 = vld [vmem:[%s3 + $0x8c] sm:$0xf]
  %v740 = vld [vmem:[%s3 + $0x90] sm:$0xff]
  %v741 = vld [vmem:[%s3 + $0x98] sm:$0xf]
  %v742 = vld [vmem:[%s3 + $0x9c] sm:$0xff]
  %v743 = vld [vmem:[%s3 + $0xa4] sm:$0xf]
  %v744 = vld [vmem:[%s3 + $0xa8] sm:$0xff]
  %v745 = vld [vmem:[%s3 + $0xb0] sm:$0xf]
  %v746 = vld [vmem:[%s3 + $0xb4] sm:$0xff]
  %v747 = vld [vmem:[%s3 + $0xbc] sm:$0xf]
  %v748 = vpack.c.bf16 %v705, %v704
  %v749 = vpack.c.bf16 %v707, %v706
  %v750 = vpack.c.bf16 %v709, %v708
  %v751 = vpack.c.bf16 %v711, %v710
  %v752 = vpack.c.bf16 %v713, %v712
  %v753 = vpack.c.bf16 %v715, %v714
  %v786 = vunpack.c.l.b16 %v716
  %v787 = vunpack.c.h.b16 %v716
  %v788 = vunpack.c.l.b16 %v717
  %v789 = vunpack.c.l.b16 %v718
  %v790 = vunpack.c.h.b16 %v718
  %v791 = vunpack.c.l.b16 %v719
  %v792 = vunpack.c.l.b16 %v720
  %v793 = vunpack.c.h.b16 %v720
  %v794 = vunpack.c.l.b16 %v721
  %v795 = vunpack.c.l.b16 %v722
  %v796 = vunpack.c.h.b16 %v722
  %v797 = vunpack.c.l.b16 %v723
  %v798 = vunpack.c.l.b16 %v724
  %v799 = vunpack.c.h.b16 %v724
  %v800 = vunpack.c.l.b16 %v725
  %v801 = vunpack.c.l.b16 %v726
  %v802 = vunpack.c.h.b16 %v726
  %v803 = vunpack.c.l.b16 %v727
  %v804 = vunpack.c.l.b16 %v728
  %v805 = vunpack.c.h.b16 %v728
  %v806 = vunpack.c.l.b16 %v729
  %v807 = vunpack.c.l.b16 %v730
  %v808 = vunpack.c.h.b16 %v730
  %v809 = vunpack.c.l.b16 %v731
  %v810 = vunpack.c.l.b16 %v732
  %v811 = vunpack.c.h.b16 %v732
  %v812 = vunpack.c.l.b16 %v733
  %v813 = vunpack.c.l.b16 %v734
  %v814 = vunpack.c.h.b16 %v734
  %v815 = vunpack.c.l.b16 %v735
  %v816 = vunpack.c.l.b16 %v736
  %v817 = vunpack.c.h.b16 %v736
  %v818 = vunpack.c.l.b16 %v737
  %v819 = vunpack.c.l.b16 %v738
  %v820 = vunpack.c.h.b16 %v738
  %v821 = vunpack.c.l.b16 %v739
  %v822 = vunpack.c.l.b16 %v740
  %v823 = vunpack.c.h.b16 %v740
  %v824 = vunpack.c.l.b16 %v741
  %v825 = vunpack.c.l.b16 %v742
  %v826 = vunpack.c.h.b16 %v742
  %v827 = vunpack.c.l.b16 %v743
  %v828 = vunpack.c.l.b16 %v744
  %v829 = vunpack.c.h.b16 %v744
  %v830 = vunpack.c.l.b16 %v745
  %v831 = vunpack.c.l.b16 %v746
  %v832 = vunpack.c.h.b16 %v746
  %v833 = vunpack.c.l.b16 %v747
  %v834 = vpack.c.b16 %v789, %v786
  %v835 = vpack.c.b16 %v790, %v787
  %v836 = vpack.c.b16 %v791, %v788
  %v837 = vpack.c.b16 %v795, %v792
  %v838 = vpack.c.b16 %v796, %v793
  %v839 = vpack.c.b16 %v797, %v794
  %v840 = vpack.c.b16 %v801, %v798
  %v841 = vpack.c.b16 %v802, %v799
  %v842 = vpack.c.b16 %v803, %v800
  %v843 = vpack.c.b16 %v807, %v804
  %v844 = vpack.c.b16 %v808, %v805
  %v845 = vpack.c.b16 %v809, %v806
  %v846 = vpack.c.b16 %v813, %v810
  %v847 = vpack.c.b16 %v814, %v811
  %v848 = vpack.c.b16 %v815, %v812
  %v849 = vpack.c.b16 %v819, %v816
  %v850 = vpack.c.b16 %v820, %v817
  %v851 = vpack.c.b16 %v821, %v818
  %v852 = vpack.c.b16 %v825, %v822
  %v853 = vpack.c.b16 %v826, %v823
  %v854 = vpack.c.b16 %v827, %v824
  %v855 = vpack.c.b16 %v831, %v828
  %v856 = vpack.c.b16 %v832, %v829
  %v857 = vpack.c.b16 %v833, %v830
  %882 = vmatprep.subr.bf16.mxu0 %v835
  %883 = vmatpush1.bf16.msra.mxu0 %v834
  %884 = vmatprep.subr.bf16.mxu0 %v838
  %885 = vmatpush1.bf16.msra.mxu0 %v837
  %886 = vmatprep.subr.bf16.mxu0 %v841
  %887 = vmatpush1.bf16.msra.mxu0 %v840
  %888 = vmatprep.subr.bf16.mxu0 %v844
  %889 = vmatpush1.bf16.msra.mxu0 %v843
  %890 = vmatprep.subr.bf16.mxu0 %v847
  %891 = vmatpush1.bf16.msra.mxu0 %v846
  %892 = vmatprep.subr.bf16.mxu0 %v850
  %893 = vmatpush1.bf16.msra.mxu0 %v849
  %894 = vmatprep.subr.bf16.mxu0 %v853
  %895 = vmatpush1.bf16.msra.mxu0 %v852
  %896 = vmatprep.subr.bf16.mxu0 %v856
  %897 = vmatpush1.bf16.msra.mxu0 %v855
  %898 = vmatprep.subr.bf16.mxu0 0
  %899 = vmatpush1.bf16.msra.mxu0 0
  %900 = vmatprep.subr.bf16.mxu0 0
  %901 = vmatpush1.bf16.msra.mxu0 0
  %902 = vmatprep.subr.bf16.mxu0 0
  %903 = vmatpush1.bf16.msra.mxu0 0
  %904 = vmatprep.subr.bf16.mxu0 0
  %905 = vmatpush1.bf16.msra.mxu0 0
  %906 = vmatprep.subr.bf16.mxu0 0
  %907 = vmatpush1.bf16.msra.mxu0 0
  %908 = vmatprep.subr.bf16.mxu0 0
  %909 = vmatpush1.bf16.msra.mxu0 0
  %910 = vmatprep.subr.bf16.mxu0 0
  %911 = vmatpush1.bf16.msra.mxu0 0
  %912 = vmatprep.subr.bf16.mxu0 0
  %913 = vmatpush1.bf16.msra.mxu0 0
  %914 = vmatprep.mubr.bf16.mxu0 0
  %915 = vmatmul.mubr.bf16.gmra.mrb[0].mxu0 %v748
  %v916 = vpop.f32.mrb[0].mxu0
  %v917 = vadd.f32 0.0, %v916
  %v918 = vpop.f32.mrb[0].mxu0
  %v919 = vadd.f32 0.0, %v918
  %v920 = vpop.f32.mrb[0].mxu0
  %v921 = vadd.f32 0.0, %v920
  %v922 = vpop.f32.mrb[0].mxu0
  %v923 = vadd.f32 0.0, %v922
  %924 = vmatprep.mubr.bf16.mxu0 0
  %925 = vmatmul.mubr.bf16.gmra.mrb[0].mxu0 %v749
  %v926 = vpop.f32.mrb[0].mxu0
  %v927 = vadd.f32 0.0, %v926
  %v928 = vpop.f32.mrb[0].mxu0
  %v929 = vadd.f32 0.0, %v928
  %v930 = vpop.f32.mrb[0].mxu0
  %v931 = vadd.f32 0.0, %v930
  %v932 = vpop.f32.mrb[0].mxu0
  %v933 = vadd.f32 0.0, %v932
  %934 = vmatprep.mubr.bf16.mxu0 0
  %935 = vmatmul.mubr.bf16.gmra.mrb[0].mxu0 %v750
  %v936 = vpop.f32.mrb[0].mxu0
  %v937 = vadd.f32 0.0, %v936
  %v938 = vpop.f32.mrb[0].mxu0
  %v939 = vadd.f32 0.0, %v938
  %v940 = vpop.f32.mrb[0].mxu0
  %v941 = vadd.f32 0.0, %v940
  %v942 = vpop.f32.mrb[0].mxu0
  %v943 = vadd.f32 0.0, %v942
  %944 = vmatprep.mubr.bf16.mxu0 0
  %945 = vmatmul.mubr.bf16.gmra.mrb[0].mxu0 %v751
  %v946 = vpop.f32.mrb[0].mxu0
  %v947 = vadd.f32 0.0, %v946
  %v948 = vpop.f32.mrb[0].mxu0
  %v949 = vadd.f32 0.0, %v948
  %v950 = vpop.f32.mrb[0].mxu0
  %v951 = vadd.f32 0.0, %v950
  %v952 = vpop.f32.mrb[0].mxu0
  %v953 = vadd.f32 0.0, %v952
  %954 = vmatprep.mubr.bf16.mxu0 0
  %955 = vmatmul.mubr.bf16.gmra.mrb[0].mxu0 %v752
  %v956 = vpop.f32.mrb[0].mxu0
  %v957 = vadd.f32 0.0, %v956
  %v958 = vpop.f32.mrb[0].mxu0
  %v959 = vadd.f32 0.0, %v958
  %v960 = vpop.f32.mrb[0].mxu0
  %v961 = vadd.f32 0.0, %v960
  %v962 = vpop.f32.mrb[0].mxu0
  %v963 = vadd.f32 0.0, %v962
  %964 = vmatprep.mubr.bf16.mxu0 0
  %965 = vmatmul.mubr.bf16.gmra.mrb[0].mxu0 %v753
  %v966 = vpop.f32.mrb[0].mxu0
  %v967 = vadd.f32 0.0, %v966
  %v968 = vpop.f32.mrb[0].mxu0
  %v969 = vadd.f32 0.0, %v968
  %v970 = vpop.f32.mrb[0].mxu0
  %v971 = vadd.f32 0.0, %v970
  %v972 = vpop.f32.mrb[0].mxu0
  %v973 = vadd.f32 0.0, %v972
  %974 = vdwg.mxu0
  %975 = vmatprep.subr.bf16.mxu0 0
  %976 = vmatpush1.bf16.msra.mxu0 %v836
  %977 = vmatprep.subr.bf16.mxu0 0
  %978 = vmatpush1.bf16.msra.mxu0 %v839
  %979 = vmatprep.subr.bf16.mxu0 0
  %980 = vmatpush1.bf16.msra.mxu0 %v842
  %981 = vmatprep.subr.bf16.mxu0 0
  %982 = vmatpush1.bf16.msra.mxu0 %v845
  %983 = vmatprep.subr.bf16.mxu0 0
  %984 = vmatpush1.bf16.msra.mxu0 %v848
  %985 = vmatprep.subr.bf16.mxu0 0
  %986 = vmatpush1.bf16.msra.mxu0 %v851
  %987 = vmatprep.subr.bf16.mxu0 0
  %988 = vmatpush1.bf16.msra.mxu0 %v854
  %989 = vmatprep.subr.bf16.mxu0 0
  %990 = vmatpush1.bf16.msra.mxu0 %v857
  %991 = vmatprep.subr.bf16.mxu0 0
  %992 = vmatpush1.bf16.msra.mxu0 0
  %993 = vmatprep.subr.bf16.mxu0 0
  %994 = vmatpush1.bf16.msra.mxu0 0
  %995 = vmatprep.subr.bf16.mxu0 0
  %996 = vmatpush1.bf16.msra.mxu0 0
  %997 = vmatprep.subr.bf16.mxu0 0
  %998 = vmatpush1.bf16.msra.mxu0 0
  %999 = vmatprep.subr.bf16.mxu0 0
  %1000 = vmatpush1.bf16.msra.mxu0 0
  %1001 = vmatprep.subr.bf16.mxu0 0
  %1002 = vmatpush1.bf16.msra.mxu0 0
  %1003 = vmatprep.subr.bf16.mxu0 0
  %1004 = vmatpush1.bf16.msra.mxu0 0
  %1005 = vmatprep.subr.bf16.mxu0 0
  %1006 = vmatpush1.bf16.msra.mxu0 0
  %1007 = vmatprep.mubr.bf16.mxu0 0
  %1008 = vmatmul.mubr.bf16.gmra.mrb[0].mxu0 %v748
  %v1009 = vpop.f32.mrb[0].mxu0
  %v1010 = vadd.f32 0.0, %v1009
  %v1011 = vpop.f32.mrb[0].mxu0
  %v1012 = vpop.f32.mrb[0].mxu0
  %v1013 = vadd.f32 0.0, %v1012
  %v1014 = vpop.f32.mrb[0].mxu0
  %1015 = vmatprep.mubr.bf16.mxu0 0
  %1016 = vmatmul.mubr.bf16.gmra.mrb[0].mxu0 %v749
  %v1017 = vpop.f32.mrb[0].mxu0
  %v1018 = vadd.f32 0.0, %v1017
  %v1019 = vpop.f32.mrb[0].mxu0
  %v1020 = vpop.f32.mrb[0].mxu0
  %v1021 = vadd.f32 0.0, %v1020
  %v1022 = vpop.f32.mrb[0].mxu0
  %1023 = vmatprep.mubr.bf16.mxu0 0
  %1024 = vmatmul.mubr.bf16.gmra.mrb[0].mxu0 %v750
  %v1025 = vpop.f32.mrb[0].mxu0
  %v1026 = vadd.f32 0.0, %v1025
  %v1027 = vpop.f32.mrb[0].mxu0
  %v1028 = vpop.f32.mrb[0].mxu0
  %v1029 = vadd.f32 0.0, %v1028
  %v1030 = vpop.f32.mrb[0].mxu0
  %1031 = vmatprep.mubr.bf16.mxu0 0
  %1032 = vmatmul.mubr.bf16.gmra.mrb[0].mxu0 %v751
  %v1033 = vpop.f32.mrb[0].mxu0
  %v1034 = vadd.f32 0.0, %v1033
  %v1035 = vpop.f32.mrb[0].mxu0
  %v1036 = vpop.f32.mrb[0].mxu0
  %v1037 = vadd.f32 0.0, %v1036
  %v1038 = vpop.f32.mrb[0].mxu0
  %1039 = vmatprep.mubr.bf16.mxu0 0
  %1040 = vmatmul.mubr.bf16.gmra.mrb[0].mxu0 %v752
  %v1041 = vpop.f32.mrb[0].mxu0
  %v1042 = vadd.f32 0.0, %v1041
  %v1043 = vpop.f32.mrb[0].mxu0
  %v1044 = vpop.f32.mrb[0].mxu0
  %v1045 = vadd.f32 0.0, %v1044
  %v1046 = vpop.f32.mrb[0].mxu0
  %1047 = vmatprep.mubr.bf16.mxu0 0
  %1048 = vmatmul.mubr.bf16.gmra.mrb[0].mxu0 %v753
  %v1049 = vpop.f32.mrb[0].mxu0
  %v1050 = vadd.f32 0.0, %v1049
  %v1051 = vpop.f32.mrb[0].mxu0
  %v1052 = vpop.f32.mrb[0].mxu0
  %v1053 = vadd.f32 0.0, %v1052
  %v1054 = vpop.f32.mrb[0].mxu0
  %1055 = vdwg.mxu0
  %v1056 = vlaneseq
  %v1057 = vshrl.u32 %v1056, 7
  %v1058 = vsub.s32 6, %v1057
  %v1059 = vrot.slane %v26, %v1058
  %v1060 = vadd.f32 %v917, %v1059
  %v1061 = vadd.f32 %v921, %v1059
  %v1062 = vadd.f32 %v927, %v1059
  %v1063 = vadd.f32 %v931, %v1059
  %v1064 = vadd.f32 %v937, %v1059
  %v1065 = vadd.f32 %v941, %v1059
  %v1066 = vadd.f32 %v947, %v1059
  %v1067 = vadd.f32 %v951, %v1059
  %v1068 = vadd.f32 %v957, %v1059
  %v1069 = vadd.f32 %v961, %v1059
  %v1070 = vadd.f32 %v967, %v1059
  %v1071 = vadd.f32 %v971, %v1059
  %v1072 = vlaneseq
  %v1073 = vshrl.u32 %v1072, 7
  %v1074 = vsub.s32 7, %v1073
  %v1075 = vrot.slane %v26, %v1074
  %v1076 = vadd.f32 %v919, %v1075
  %v1077 = vadd.f32 %v923, %v1075
  %v1078 = vadd.f32 %v929, %v1075
  %v1079 = vadd.f32 %v933, %v1075
  %v1080 = vadd.f32 %v939, %v1075
  %v1081 = vadd.f32 %v943, %v1075
  %v1082 = vadd.f32 %v949, %v1075
  %v1083 = vadd.f32 %v953, %v1075
  %v1084 = vadd.f32 %v959, %v1075
  %v1085 = vadd.f32 %v963, %v1075
  %v1086 = vadd.f32 %v969, %v1075
  %v1087 = vadd.f32 %v973, %v1075
  %v1088 = vlaneseq
  %v1089 = vshrl.u32 %v1088, 7
  %v1090 = vsub.s32 0, %v1089
  %v1091 = vrot.slane %v27, %v1090
  %v1092 = vadd.f32 %v1010, %v1091
  %v1093 = vadd.f32 %v1013, %v1091
  %v1094 = vadd.f32 %v1018, %v1091
  %v1095 = vadd.f32 %v1021, %v1091
  %v1096 = vadd.f32 %v1026, %v1091
  %v1097 = vadd.f32 %v1029, %v1091
  %v1098 = vadd.f32 %v1034, %v1091
  %v1099 = vadd.f32 %v1037, %v1091
  %v1100 = vadd.f32 %v1042, %v1091
  %v1101 = vadd.f32 %v1045, %v1091
  %v1102 = vadd.f32 %v1050, %v1091
  %v1103 = vadd.f32 %v1053, %v1091
  %v1104 = vpack.c.bf16 %v1061, %v1060
  %v1105 = vpack.c.bf16 %v1063, %v1062
  %v1106 = vpack.c.bf16 %v1065, %v1064
  %v1107 = vpack.c.bf16 %v1077, %v1076
  %v1108 = vpack.c.bf16 %v1079, %v1078
  %v1109 = vpack.c.bf16 %v1081, %v1080
  %1110 = vmatprep.subr.bf16.mxu0 0
  %1111 = vmatpush1.bf16.xpose.msra.mxu0 %v1107
  %1112 = vmatprep.subr.bf16.mxu0 0
  %1113 = vmatpush1.bf16.xpose.msra.mxu0 %v1108
  %1114 = vmatprep.subr.bf16.mxu0 0
  %1115 = vmatpush1.bf16.xpose.msra.mxu0 %v1109
  %1116 = vmatprep.subr.bf16.mxu0 0
  %1117 = vmatpush1.bf16.xpose.msra.mxu0 0
  %1118 = vmatprep.subr.bf16.mxu0 0
  %1119 = vmatpush1.bf16.xpose.msra.mxu0 0
  %1120 = vmatprep.subr.bf16.mxu0 0
  %1121 = vmatpush1.bf16.xpose.msra.mxu0 0
  %1122 = vmatprep.subr.bf16.mxu0 0
  %1123 = vmatpush1.bf16.xpose.msra.mxu0 0
  %1124 = vmatprep.subr.bf16.mxu0 0
  %1125 = vmatpush1.bf16.xpose.msra.mxu0 0
  %1126 = vmatprep.subr.bf16.mxu0 0
  %1127 = vmatpush1.bf16.xpose.msra.mxu0 0
  %1128 = vmatprep.subr.bf16.mxu0 0
  %1129 = vmatpush1.bf16.xpose.msra.mxu0 0
  %1130 = vmatprep.subr.bf16.mxu0 0
  %1131 = vmatpush1.bf16.xpose.msra.mxu0 0
  %1132 = vmatprep.subr.bf16.mxu0 0
  %1133 = vmatpush1.bf16.xpose.msra.mxu0 0
  %1134 = vmatprep.subr.bf16.mxu0 0
  %1135 = vmatpush1.bf16.xpose.msra.mxu0 0
  %1136 = vmatprep.subr.bf16.mxu0 0
  %1137 = vmatpush1.bf16.xpose.msra.mxu0 0
  %1138 = vmatprep.subr.bf16.mxu0 0
  %1139 = vmatpush1.bf16.xpose.msra.mxu0 0
  %1140 = vmatprep.subr.bf16.mxu0 0
  %1141 = vmatpush1.bf16.xpose.msra.mxu0 0
  %1142 = vmatprep.mubr.bf16.mxu0 0
  %1143 = vmatmul.mubr.bf16.gmra.mrb[0].mxu0 %v1104
  %v1144 = vpop.f32.mrb[0].mxu0
  %v1145 = vadd.f32 0.0, %v1144
  %v1146 = vpop.f32.mrb[0].mxu0
  %v1147 = vpop.f32.mrb[0].mxu0
  %v1148 = vadd.f32 0.0, %v1147
  %v1149 = vpop.f32.mrb[0].mxu0
  %1150 = vmatprep.mubr.bf16.mxu0 0
  %1151 = vmatmul.mubr.bf16.gmra.mrb[0].mxu0 %v1105
  %v1152 = vpop.f32.mrb[0].mxu0
  %v1153 = vadd.f32 0.0, %v1152
  %v1154 = vpop.f32.mrb[0].mxu0
  %v1155 = vpop.f32.mrb[0].mxu0
  %v1156 = vadd.f32 0.0, %v1155
  %v1157 = vpop.f32.mrb[0].mxu0
  %1158 = vmatprep.mubr.bf16.mxu0 0
  %1159 = vmatmul.mubr.bf16.gmra.mrb[0].mxu0 %v1106
  %v1160 = vpop.f32.mrb[0].mxu0
  %v1161 = vadd.f32 0.0, %v1160
  %v1162 = vpop.f32.mrb[0].mxu0
  %v1163 = vpop.f32.mrb[0].mxu0
  %v1164 = vadd.f32 0.0, %v1163
  %v1165 = vpop.f32.mrb[0].mxu0
  %1166 = vdwg.mxu0
  %v1167 = vmul.f32 %v1145, 0.088388346
  %v1168 = vmul.f32 %v1148, 0.088388346
  %v1169 = vmul.f32 %v1153, 0.088388346
  %v1170 = vmul.f32 %v1156, 0.088388346
  %v1171 = vmul.f32 %v1161, 0.088388346
  %v1172 = vmul.f32 %v1164, 0.088388346
  %vm1173 = vcmask 392192
  %v1174 = vsel %vm1173, %v1167, -inf
  %1175 = vmax.xlane.f32.xlu0 %v1174
  %v1176 = vpop.xlane.xlu0 %1175
  %v1177 = vsel %vm1173, %v1168, -inf
  %1178 = vmax.xlane.f32.xlu0 %v1177
  %v1179 = vpop.xlane.xlu0 %1178
  %v1180 = vsel %vm1173, %v1169, -inf
  %1181 = vmax.xlane.f32.xlu0 %v1180
  %v1182 = vpop.xlane.xlu0 %1181
  %v1183 = vsel %vm1173, %v1170, -inf
  %1184 = vmax.xlane.f32.xlu0 %v1183
  %v1185 = vpop.xlane.xlu0 %1184
  %v1186 = vsel %vm1173, %v1171, -inf
  %1187 = vmax.xlane.f32.xlu0 %v1186
  %v1188 = vpop.xlane.xlu0 %1187
  %v1189 = vsel %vm1173, %v1172, -inf
  %1190 = vmax.xlane.f32.xlu0 %v1189
  %v1191 = vpop.xlane.xlu0 %1190
  %v1192 = vsub.f32 %v1167, %v1176
  %v1193 = vsub.f32 %v1168, %v1179
  %v1194 = vsub.f32 %v1169, %v1182
  %v1195 = vsub.f32 %v1170, %v1185
  %v1196 = vsub.f32 %v1171, %v1188
  %v1197 = vsub.f32 %v1172, %v1191
  %v1198 = vmul.f32 %v1192, 1.442695
  %v1199 = vpow.pop %v1198
  %v1200 = vmul.f32 %v1193, 1.442695
  %v1201 = vpow.pop %v1200
  %v1202 = vmul.f32 %v1194, 1.442695
  %v1203 = vpow.pop %v1202
  %v1204 = vmul.f32 %v1195, 1.442695
  %v1205 = vpow.pop %v1204
  %v1206 = vmul.f32 %v1196, 1.442695
  %v1207 = vpow.pop %v1206
  %v1208 = vmul.f32 %v1197, 1.442695
  %v1209 = vpow.pop %v1208
  %v1210 = vsel %vm1173, %v1199, 0.0
  %1211 = vadd.xlane.f32.xlu0 %v1210
  %v1212 = vpop.xlane.xlu0 %1211
  %v1213 = vsel %vm1173, %v1201, 0.0
  %1214 = vadd.xlane.f32.xlu0 %v1213
  %v1215 = vpop.xlane.xlu0 %1214
  %v1216 = vsel %vm1173, %v1203, 0.0
  %1217 = vadd.xlane.f32.xlu0 %v1216
  %v1218 = vpop.xlane.xlu0 %1217
  %v1219 = vsel %vm1173, %v1205, 0.0
  %1220 = vadd.xlane.f32.xlu0 %v1219
  %v1221 = vpop.xlane.xlu0 %1220
  %v1222 = vsel %vm1173, %v1207, 0.0
  %1223 = vadd.xlane.f32.xlu0 %v1222
  %v1224 = vpop.xlane.xlu0 %1223
  %v1225 = vsel %vm1173, %v1209, 0.0
  %1226 = vadd.xlane.f32.xlu0 %v1225
  %v1227 = vpop.xlane.xlu0 %1226
  %v1228 = vrcp.pop %v1212
  %v1229 = vrcp.pop %v1215
  %v1230 = vrcp.pop %v1218
  %v1231 = vrcp.pop %v1221
  %v1232 = vrcp.pop %v1224
  %v1233 = vrcp.pop %v1227
  %v1234 = vmul.f32 %v1199, %v1228
  %v1235 = vmul.f32 %v1201, %v1229
  %v1236 = vmul.f32 %v1203, %v1230
  %v1237 = vmul.f32 %v1205, %v1231
  %v1238 = vmul.f32 %v1207, %v1232
  %v1239 = vmul.f32 %v1209, %v1233
  %v1240 = vpack.c.bf16 %v1235, %v1234
  %v1241 = vpack.c.bf16 %v1237, %v1236
  %v1242 = vpack.c.bf16 %v1239, %v1238
  %v1243 = vpack.c.bf16 %v1093, %v1092
  %v1244 = vpack.c.bf16 %v1095, %v1094
  %v1245 = vpack.c.bf16 %v1097, %v1096
  %v1247 = vsel %vm1173, %v1240, 0
  %v1250 = vsel %vm1173, %v1241, 0
  %v1253 = vsel %vm1173, %v1242, 0
  %1255 = vmatprep.subr.bf16.mxu0 0
  %1256 = vmatpush1.bf16.msra.mxu0 %v1243
  %1257 = vmatprep.subr.bf16.mxu0 0
  %1258 = vmatpush1.bf16.msra.mxu0 %v1244
  %1259 = vmatprep.subr.bf16.mxu0 0
  %1260 = vmatpush1.bf16.msra.mxu0 %v1245
  %1261 = vmatprep.subr.bf16.mxu0 0
  %1262 = vmatpush1.bf16.msra.mxu0 0
  %1263 = vmatprep.subr.bf16.mxu0 0
  %1264 = vmatpush1.bf16.msra.mxu0 0
  %1265 = vmatprep.subr.bf16.mxu0 0
  %1266 = vmatpush1.bf16.msra.mxu0 0
  %1267 = vmatprep.subr.bf16.mxu0 0
  %1268 = vmatpush1.bf16.msra.mxu0 0
  %1269 = vmatprep.subr.bf16.mxu0 0
  %1270 = vmatpush1.bf16.msra.mxu0 0
  %1271 = vmatprep.subr.bf16.mxu0 0
  %1272 = vmatpush1.bf16.msra.mxu0 0
  %1273 = vmatprep.subr.bf16.mxu0 0
  %1274 = vmatpush1.bf16.msra.mxu0 0
  %1275 = vmatprep.subr.bf16.mxu0 0
  %1276 = vmatpush1.bf16.msra.mxu0 0
  %1277 = vmatprep.subr.bf16.mxu0 0
  %1278 = vmatpush1.bf16.msra.mxu0 0
  %1279 = vmatprep.subr.bf16.mxu0 0
  %1280 = vmatpush1.bf16.msra.mxu0 0
  %1281 = vmatprep.subr.bf16.mxu0 0
  %1282 = vmatpush1.bf16.msra.mxu0 0
  %1283 = vmatprep.subr.bf16.mxu0 0
  %1284 = vmatpush1.bf16.msra.mxu0 0
  %1285 = vmatprep.subr.bf16.mxu0 0
  %1286 = vmatpush1.bf16.msra.mxu0 0
  %1287 = vmatprep.mubr.bf16.mxu0 0
  %1288 = vmatmul.mubr.bf16.gmra.mrb[0].mxu0 %v1247
  %v1289 = vpop.f32.mrb[0].mxu0
  %v1290 = vadd.f32 0.0, %v1289
  %v1291 = vpop.f32.mrb[0].mxu0
  %v1292 = vpop.f32.mrb[0].mxu0
  %v1293 = vadd.f32 0.0, %v1292
  %v1294 = vpop.f32.mrb[0].mxu0
  %1295 = vmatprep.mubr.bf16.mxu0 0
  %1296 = vmatmul.mubr.bf16.gmra.mrb[0].mxu0 %v1250
  %v1297 = vpop.f32.mrb[0].mxu0
  %v1298 = vadd.f32 0.0, %v1297
  %v1299 = vpop.f32.mrb[0].mxu0
  %v1300 = vpop.f32.mrb[0].mxu0
  %v1301 = vadd.f32 0.0, %v1300
  %v1302 = vpop.f32.mrb[0].mxu0
  %1303 = vmatprep.mubr.bf16.mxu0 0
  %1304 = vmatmul.mubr.bf16.gmra.mrb[0].mxu0 %v1253
  %v1305 = vpop.f32.mrb[0].mxu0
  %v1306 = vadd.f32 0.0, %v1305
  %v1307 = vpop.f32.mrb[0].mxu0
  %v1308 = vpop.f32.mrb[0].mxu0
  %v1309 = vadd.f32 0.0, %v1308
  %v1310 = vpop.f32.mrb[0].mxu0
  %1311 = vdwg.mxu0
  %v1312 = vpack.c.bf16 %v1067, %v1066
  %v1313 = vpack.c.bf16 %v1069, %v1068
  %v1314 = vpack.c.bf16 %v1071, %v1070
  %v1315 = vpack.c.bf16 %v1083, %v1082
  %v1316 = vpack.c.bf16 %v1085, %v1084
  %v1317 = vpack.c.bf16 %v1087, %v1086
  %1318 = vmatprep.subr.bf16.mxu0 0
  %1319 = vmatpush1.bf16.xpose.msra.mxu0 %v1315
  %1320 = vmatprep.subr.bf16.mxu0 0
  %1321 = vmatpush1.bf16.xpose.msra.mxu0 %v1316
  %1322 = vmatprep.subr.bf16.mxu0 0
  %1323 = vmatpush1.bf16.xpose.msra.mxu0 %v1317
  %1324 = vmatprep.subr.bf16.mxu0 0
  %1325 = vmatpush1.bf16.xpose.msra.mxu0 0
  %1326 = vmatprep.subr.bf16.mxu0 0
  %1327 = vmatpush1.bf16.xpose.msra.mxu0 0
  %1328 = vmatprep.subr.bf16.mxu0 0
  %1329 = vmatpush1.bf16.xpose.msra.mxu0 0
  %1330 = vmatprep.subr.bf16.mxu0 0
  %1331 = vmatpush1.bf16.xpose.msra.mxu0 0
  %1332 = vmatprep.subr.bf16.mxu0 0
  %1333 = vmatpush1.bf16.xpose.msra.mxu0 0
  %1334 = vmatprep.subr.bf16.mxu0 0
  %1335 = vmatpush1.bf16.xpose.msra.mxu0 0
  %1336 = vmatprep.subr.bf16.mxu0 0
  %1337 = vmatpush1.bf16.xpose.msra.mxu0 0
  %1338 = vmatprep.subr.bf16.mxu0 0
  %1339 = vmatpush1.bf16.xpose.msra.mxu0 0
  %1340 = vmatprep.subr.bf16.mxu0 0
  %1341 = vmatpush1.bf16.xpose.msra.mxu0 0
  %1342 = vmatprep.subr.bf16.mxu0 0
  %1343 = vmatpush1.bf16.xpose.msra.mxu0 0
  %1344 = vmatprep.subr.bf16.mxu0 0
  %1345 = vmatpush1.bf16.xpose.msra.mxu0 0
  %1346 = vmatprep.subr.bf16.mxu0 0
  %1347 = vmatpush1.bf16.xpose.msra.mxu0 0
  %1348 = vmatprep.subr.bf16.mxu0 0
  %1349 = vmatpush1.bf16.xpose.msra.mxu0 0
  %1350 = vmatprep.mubr.bf16.mxu0 0
  %1351 = vmatmul.mubr.bf16.gmra.mrb[0].mxu0 %v1312
  %v1352 = vpop.f32.mrb[0].mxu0
  %v1353 = vadd.f32 0.0, %v1352
  %v1354 = vpop.f32.mrb[0].mxu0
  %v1355 = vpop.f32.mrb[0].mxu0
  %v1356 = vadd.f32 0.0, %v1355
  %v1357 = vpop.f32.mrb[0].mxu0
  %1358 = vmatprep.mubr.bf16.mxu0 0
  %1359 = vmatmul.mubr.bf16.gmra.mrb[0].mxu0 %v1313
  %v1360 = vpop.f32.mrb[0].mxu0
  %v1361 = vadd.f32 0.0, %v1360
  %v1362 = vpop.f32.mrb[0].mxu0
  %v1363 = vpop.f32.mrb[0].mxu0
  %v1364 = vadd.f32 0.0, %v1363
  %v1365 = vpop.f32.mrb[0].mxu0
  %1366 = vmatprep.mubr.bf16.mxu0 0
  %1367 = vmatmul.mubr.bf16.gmra.mrb[0].mxu0 %v1314
  %v1368 = vpop.f32.mrb[0].mxu0
  %v1369 = vadd.f32 0.0, %v1368
  %v1370 = vpop.f32.mrb[0].mxu0
  %v1371 = vpop.f32.mrb[0].mxu0
  %v1372 = vadd.f32 0.0, %v1371
  %v1373 = vpop.f32.mrb[0].mxu0
  %1374 = vdwg.mxu0
  %v1375 = vmul.f32 %v1353, 0.088388346
  %v1376 = vmul.f32 %v1356, 0.088388346
  %v1377 = vmul.f32 %v1361, 0.088388346
  %v1378 = vmul.f32 %v1364, 0.088388346
  %v1379 = vmul.f32 %v1369, 0.088388346
  %v1380 = vmul.f32 %v1372, 0.088388346
  %v1381 = vsel %vm1173, %v1375, -inf
  %1382 = vmax.xlane.f32.xlu0 %v1381
  %v1383 = vpop.xlane.xlu0 %1382
  %v1384 = vsel %vm1173, %v1376, -inf
  %1385 = vmax.xlane.f32.xlu0 %v1384
  %v1386 = vpop.xlane.xlu0 %1385
  %v1387 = vsel %vm1173, %v1377, -inf
  %1388 = vmax.xlane.f32.xlu0 %v1387
  %v1389 = vpop.xlane.xlu0 %1388
  %v1390 = vsel %vm1173, %v1378, -inf
  %1391 = vmax.xlane.f32.xlu0 %v1390
  %v1392 = vpop.xlane.xlu0 %1391
  %v1393 = vsel %vm1173, %v1379, -inf
  %1394 = vmax.xlane.f32.xlu0 %v1393
  %v1395 = vpop.xlane.xlu0 %1394
  %v1396 = vsel %vm1173, %v1380, -inf
  %1397 = vmax.xlane.f32.xlu0 %v1396
  %v1398 = vpop.xlane.xlu0 %1397
  %v1399 = vsub.f32 %v1375, %v1383
  %v1400 = vsub.f32 %v1376, %v1386
  %v1401 = vsub.f32 %v1377, %v1389
  %v1402 = vsub.f32 %v1378, %v1392
  %v1403 = vsub.f32 %v1379, %v1395
  %v1404 = vsub.f32 %v1380, %v1398
  %v1405 = vmul.f32 %v1399, 1.442695
  %v1406 = vpow.pop %v1405
  %v1407 = vmul.f32 %v1400, 1.442695
  %v1408 = vpow.pop %v1407
  %v1409 = vmul.f32 %v1401, 1.442695
  %v1410 = vpow.pop %v1409
  %v1411 = vmul.f32 %v1402, 1.442695
  %v1412 = vpow.pop %v1411
  %v1413 = vmul.f32 %v1403, 1.442695
  %v1414 = vpow.pop %v1413
  %v1415 = vmul.f32 %v1404, 1.442695
  %v1416 = vpow.pop %v1415
  %v1417 = vsel %vm1173, %v1406, 0.0
  %1418 = vadd.xlane.f32.xlu0 %v1417
  %v1419 = vpop.xlane.xlu0 %1418
  %v1420 = vsel %vm1173, %v1408, 0.0
  %1421 = vadd.xlane.f32.xlu0 %v1420
  %v1422 = vpop.xlane.xlu0 %1421
  %v1423 = vsel %vm1173, %v1410, 0.0
  %1424 = vadd.xlane.f32.xlu0 %v1423
  %v1425 = vpop.xlane.xlu0 %1424
  %v1426 = vsel %vm1173, %v1412, 0.0
  %1427 = vadd.xlane.f32.xlu0 %v1426
  %v1428 = vpop.xlane.xlu0 %1427
  %v1429 = vsel %vm1173, %v1414, 0.0
  %1430 = vadd.xlane.f32.xlu0 %v1429
  %v1431 = vpop.xlane.xlu0 %1430
  %v1432 = vsel %vm1173, %v1416, 0.0
  %1433 = vadd.xlane.f32.xlu0 %v1432
  %v1434 = vpop.xlane.xlu0 %1433
  %v1435 = vrcp.pop %v1419
  %v1436 = vrcp.pop %v1422
  %v1437 = vrcp.pop %v1425
  %v1438 = vrcp.pop %v1428
  %v1439 = vrcp.pop %v1431
  %v1440 = vrcp.pop %v1434
  %v1441 = vmul.f32 %v1406, %v1435
  %v1442 = vmul.f32 %v1408, %v1436
  %v1443 = vmul.f32 %v1410, %v1437
  %v1444 = vmul.f32 %v1412, %v1438
  %v1445 = vmul.f32 %v1414, %v1439
  %v1446 = vmul.f32 %v1416, %v1440
  %v1447 = vpack.c.bf16 %v1442, %v1441
  %v1448 = vpack.c.bf16 %v1444, %v1443
  %v1449 = vpack.c.bf16 %v1446, %v1445
  %v1450 = vpack.c.bf16 %v1099, %v1098
  %v1451 = vpack.c.bf16 %v1101, %v1100
  %v1452 = vpack.c.bf16 %v1103, %v1102
  %v1454 = vsel %vm1173, %v1447, 0
  %v1457 = vsel %vm1173, %v1448, 0
  %v1460 = vsel %vm1173, %v1449, 0
  %1462 = vmatprep.subr.bf16.mxu0 0
  %1463 = vmatpush1.bf16.msra.mxu0 %v1450
  %1464 = vmatprep.subr.bf16.mxu0 0
  %1465 = vmatpush1.bf16.msra.mxu0 %v1451
  %1466 = vmatprep.subr.bf16.mxu0 0
  %1467 = vmatpush1.bf16.msra.mxu0 %v1452
  %1468 = vmatprep.subr.bf16.mxu0 0
  %1469 = vmatpush1.bf16.msra.mxu0 0
  %1470 = vmatprep.subr.bf16.mxu0 0
  %1471 = vmatpush1.bf16.msra.mxu0 0
  %1472 = vmatprep.subr.bf16.mxu0 0
  %1473 = vmatpush1.bf16.msra.mxu0 0
  %1474 = vmatprep.subr.bf16.mxu0 0
  %1475 = vmatpush1.bf16.msra.mxu0 0
  %1476 = vmatprep.subr.bf16.mxu0 0
  %1477 = vmatpush1.bf16.msra.mxu0 0
  %1478 = vmatprep.subr.bf16.mxu0 0
  %1479 = vmatpush1.bf16.msra.mxu0 0
  %1480 = vmatprep.subr.bf16.mxu0 0
  %1481 = vmatpush1.bf16.msra.mxu0 0
  %1482 = vmatprep.subr.bf16.mxu0 0
  %1483 = vmatpush1.bf16.msra.mxu0 0
  %1484 = vmatprep.subr.bf16.mxu0 0
  %1485 = vmatpush1.bf16.msra.mxu0 0
  %1486 = vmatprep.subr.bf16.mxu0 0
  %1487 = vmatpush1.bf16.msra.mxu0 0
  %1488 = vmatprep.subr.bf16.mxu0 0
  %1489 = vmatpush1.bf16.msra.mxu0 0
  %1490 = vmatprep.subr.bf16.mxu0 0
  %1491 = vmatpush1.bf16.msra.mxu0 0
  %1492 = vmatprep.subr.bf16.mxu0 0
  %1493 = vmatpush1.bf16.msra.mxu0 0
  %1494 = vmatprep.mubr.bf16.mxu0 0
  %1495 = vmatmul.mubr.bf16.gmra.mrb[0].mxu0 %v1454
  %v1496 = vpop.f32.mrb[0].mxu0
  %v1497 = vadd.f32 0.0, %v1496
  %v1498 = vpop.f32.mrb[0].mxu0
  %v1499 = vpop.f32.mrb[0].mxu0
  %v1500 = vadd.f32 0.0, %v1499
  %v1501 = vpop.f32.mrb[0].mxu0
  %1502 = vmatprep.mubr.bf16.mxu0 0
  %1503 = vmatmul.mubr.bf16.gmra.mrb[0].mxu0 %v1457
  %v1504 = vpop.f32.mrb[0].mxu0
  %v1505 = vadd.f32 0.0, %v1504
  %v1506 = vpop.f32.mrb[0].mxu0
  %v1507 = vpop.f32.mrb[0].mxu0
  %v1508 = vadd.f32 0.0, %v1507
  %v1509 = vpop.f32.mrb[0].mxu0
  %1510 = vmatprep.mubr.bf16.mxu0 0
  %1511 = vmatmul.mubr.bf16.gmra.mrb[0].mxu0 %v1460
  %v1512 = vpop.f32.mrb[0].mxu0
  %v1513 = vadd.f32 0.0, %v1512
  %v1514 = vpop.f32.mrb[0].mxu0
  %v1515 = vpop.f32.mrb[0].mxu0
  %v1516 = vadd.f32 0.0, %v1515
  %v1517 = vpop.f32.mrb[0].mxu0
  %1518 = vdwg.mxu0
  %v1519 = vld [vmem:[%s2 + $0x80] sm:$0xf]
  %v1520 = vld [vmem:[%s2 + $0x84] sm:$0xf]
  %v1521 = vld [vmem:[%s2 + $0x88] sm:$0xf]
  %v1522 = vld [vmem:[%s2 + $0x8c] sm:$0xf]
  %v1523 = vld [vmem:[%s2 + $0x90] sm:$0xf]
  %v1524 = vld [vmem:[%s2 + $0x94] sm:$0xf]
  %v1525 = vld [vmem:[%s2 + $0x98] sm:$0xf]
  %v1526 = vld [vmem:[%s2 + $0x9c] sm:$0xf]
  %v1527 = vld [vmem:[%s2 + $0xa0] sm:$0xf]
  %v1528 = vld [vmem:[%s2 + $0xa4] sm:$0xf]
  %v1529 = vld [vmem:[%s2 + $0xa8] sm:$0xf]
  %v1530 = vld [vmem:[%s2 + $0xac] sm:$0xf]
  %v1531 = vld [vmem:[%s2 + $0xb0] sm:$0xf]
  %v1532 = vld [vmem:[%s2 + $0xb4] sm:$0xf]
  %v1533 = vld [vmem:[%s2 + $0xb8] sm:$0xf]
  %v1534 = vld [vmem:[%s2 + $0xbc] sm:$0xf]
  %v1535 = vpack.c.bf16 %v1293, %v1290
  %v1536 = vpack.c.bf16 %v1301, %v1298
  %v1537 = vpack.c.bf16 %v1309, %v1306
  %v1538 = vpack.c.bf16 %v1500, %v1497
  %v1539 = vpack.c.bf16 %v1508, %v1505
  %v1540 = vpack.c.bf16 %v1516, %v1513
  %v1557 = vunpack.c.l.b16 %v1519
  %v1558 = vunpack.c.l.b16 %v1520
  %v1559 = vunpack.c.l.b16 %v1521
  %v1560 = vunpack.c.l.b16 %v1522
  %v1561 = vunpack.c.l.b16 %v1523
  %v1562 = vunpack.c.l.b16 %v1524
  %v1563 = vunpack.c.l.b16 %v1525
  %v1564 = vunpack.c.l.b16 %v1526
  %v1565 = vunpack.c.l.b16 %v1527
  %v1566 = vunpack.c.l.b16 %v1528
  %v1567 = vunpack.c.l.b16 %v1529
  %v1568 = vunpack.c.l.b16 %v1530
  %v1569 = vunpack.c.l.b16 %v1531
  %v1570 = vunpack.c.l.b16 %v1532
  %v1571 = vunpack.c.l.b16 %v1533
  %v1572 = vunpack.c.l.b16 %v1534
  %v1573 = vpack.c.b16 %v1558, %v1557
  %v1574 = vpack.c.b16 %v1560, %v1559
  %v1575 = vpack.c.b16 %v1562, %v1561
  %v1576 = vpack.c.b16 %v1564, %v1563
  %v1577 = vpack.c.b16 %v1566, %v1565
  %v1578 = vpack.c.b16 %v1568, %v1567
  %v1579 = vpack.c.b16 %v1570, %v1569
  %v1580 = vpack.c.b16 %v1572, %v1571
  %1589 = vmatprep.subr.bf16.mxu0 0
  %1590 = vmatpush1.bf16.msra.mxu0 %v1573
  %1591 = vmatprep.subr.bf16.mxu0 0
  %1592 = vmatpush1.bf16.msra.mxu0 %v1574
  %1593 = vmatprep.subr.bf16.mxu0 0
  %1594 = vmatpush1.bf16.msra.mxu0 %v1575
  %1595 = vmatprep.subr.bf16.mxu0 0
  %1596 = vmatpush1.bf16.msra.mxu0 %v1576
  %1597 = vmatprep.subr.bf16.mxu0 0
  %1598 = vmatpush1.bf16.msra.mxu0 %v1577
  %1599 = vmatprep.subr.bf16.mxu0 0
  %1600 = vmatpush1.bf16.msra.mxu0 %v1578
  %1601 = vmatprep.subr.bf16.mxu0 0
  %1602 = vmatpush1.bf16.msra.mxu0 %v1579
  %1603 = vmatprep.subr.bf16.mxu0 0
  %1604 = vmatpush1.bf16.msra.mxu0 %v1580
  %1605 = vmatprep.subr.bf16.mxu0 0
  %1606 = vmatpush1.bf16.msra.mxu0 0
  %1607 = vmatprep.subr.bf16.mxu0 0
  %1608 = vmatpush1.bf16.msra.mxu0 0
  %1609 = vmatprep.subr.bf16.mxu0 0
  %1610 = vmatpush1.bf16.msra.mxu0 0
  %1611 = vmatprep.subr.bf16.mxu0 0
  %1612 = vmatpush1.bf16.msra.mxu0 0
  %1613 = vmatprep.subr.bf16.mxu0 0
  %1614 = vmatpush1.bf16.msra.mxu0 0
  %1615 = vmatprep.subr.bf16.mxu0 0
  %1616 = vmatpush1.bf16.msra.mxu0 0
  %1617 = vmatprep.subr.bf16.mxu0 0
  %1618 = vmatpush1.bf16.msra.mxu0 0
  %1619 = vmatprep.subr.bf16.mxu0 0
  %1620 = vmatpush1.bf16.msra.mxu0 0
  %1621 = vmatprep.mubr.bf16.mxu0 0
  %1622 = vmatmul.mubr.bf16.gmra.mrb[0].mxu0 %v1535
  %v1623 = vpop.f32.mrb[0].mxu0
  %v1624 = vadd.f32 0.0, %v1623
  %v1625 = vpop.f32.mrb[0].mxu0
  %v1626 = vpop.f32.mrb[0].mxu0
  %v1627 = vadd.f32 0.0, %v1626
  %v1628 = vpop.f32.mrb[0].mxu0
  %1629 = vmatprep.mubr.bf16.mxu0 0
  %1630 = vmatmul.mubr.bf16.gmra.mrb[0].mxu0 %v1536
  %v1631 = vpop.f32.mrb[0].mxu0
  %v1632 = vadd.f32 0.0, %v1631
  %v1633 = vpop.f32.mrb[0].mxu0
  %v1634 = vpop.f32.mrb[0].mxu0
  %v1635 = vadd.f32 0.0, %v1634
  %v1636 = vpop.f32.mrb[0].mxu0
  %1637 = vmatprep.mubr.bf16.mxu0 0
  %1638 = vmatmul.mubr.bf16.gmra.mrb[0].mxu0 %v1537
  %v1639 = vpop.f32.mrb[0].mxu0
  %v1640 = vadd.f32 0.0, %v1639
  %v1641 = vpop.f32.mrb[0].mxu0
  %v1642 = vpop.f32.mrb[0].mxu0
  %v1643 = vadd.f32 0.0, %v1642
  %v1644 = vpop.f32.mrb[0].mxu0
  %1645 = vmatprep.mubr.bf16.mxu0 0
  %1646 = vmatmul.mubr.bf16.gmra.mrb[0].mxu0 %v1538
  %v1647 = vpop.f32.mrb[0].mxu0
  %v1648 = vadd.f32 0.0, %v1647
  %v1649 = vpop.f32.mrb[0].mxu0
  %v1650 = vpop.f32.mrb[0].mxu0
  %v1651 = vadd.f32 0.0, %v1650
  %v1652 = vpop.f32.mrb[0].mxu0
  %1653 = vmatprep.mubr.bf16.mxu0 0
  %1654 = vmatmul.mubr.bf16.gmra.mrb[0].mxu0 %v1539
  %v1655 = vpop.f32.mrb[0].mxu0
  %v1656 = vadd.f32 0.0, %v1655
  %v1657 = vpop.f32.mrb[0].mxu0
  %v1658 = vpop.f32.mrb[0].mxu0
  %v1659 = vadd.f32 0.0, %v1658
  %v1660 = vpop.f32.mrb[0].mxu0
  %1661 = vmatprep.mubr.bf16.mxu0 0
  %1662 = vmatmul.mubr.bf16.gmra.mrb[0].mxu0 %v1540
  %v1663 = vpop.f32.mrb[0].mxu0
  %v1664 = vadd.f32 0.0, %v1663
  %v1665 = vpop.f32.mrb[0].mxu0
  %v1666 = vpop.f32.mrb[0].mxu0
  %v1667 = vadd.f32 0.0, %v1666
  %v1668 = vpop.f32.mrb[0].mxu0
  %1669 = vdwg.mxu0
  %v1670 = vadd.f32 %v704, %v1624
  %v1671 = vadd.f32 %v705, %v1627
  %v1672 = vadd.f32 %v706, %v1632
  %v1673 = vadd.f32 %v707, %v1635
  %v1674 = vadd.f32 %v708, %v1640
  %v1675 = vadd.f32 %v709, %v1643
  %v1676 = vadd.f32 %v710, %v1648
  %v1677 = vadd.f32 %v711, %v1651
  %v1678 = vadd.f32 %v712, %v1656
  %v1679 = vadd.f32 %v713, %v1659
  %v1680 = vadd.f32 %v714, %v1664
  %v1681 = vadd.f32 %v715, %v1667
  %v1682 = vlaneseq
  %v1683 = vshrl.u32 %v1682, 7
  %v1684 = vsub.s32 1, %v1683
  %v1685 = vrot.slane %v27, %v1684
  %v1686 = vadd.f32 %v1670, %v1685
  %v1687 = vadd.f32 %v1671, %v1685
  %v1688 = vadd.f32 %v1672, %v1685
  %v1689 = vadd.f32 %v1673, %v1685
  %v1690 = vadd.f32 %v1674, %v1685
  %v1691 = vadd.f32 %v1675, %v1685
  %v1692 = vadd.f32 %v1676, %v1685
  %v1693 = vadd.f32 %v1677, %v1685
  %v1694 = vadd.f32 %v1678, %v1685
  %v1695 = vadd.f32 %v1679, %v1685
  %v1696 = vadd.f32 %v1680, %v1685
  %v1697 = vadd.f32 %v1681, %v1685
  %1698 = vadd.xlane.f32.xlu0 %v1686
  %v1699 = vpop.xlane.xlu0 %1698
  %1700 = vadd.xlane.f32.xlu0 %v1687
  %v1701 = vpop.xlane.xlu0 %1700
  %1702 = vadd.xlane.f32.xlu0 %v1688
  %v1703 = vpop.xlane.xlu0 %1702
  %1704 = vadd.xlane.f32.xlu0 %v1689
  %v1705 = vpop.xlane.xlu0 %1704
  %1706 = vadd.xlane.f32.xlu0 %v1690
  %v1707 = vpop.xlane.xlu0 %1706
  %1708 = vadd.xlane.f32.xlu0 %v1691
  %v1709 = vpop.xlane.xlu0 %1708
  %1710 = vadd.xlane.f32.xlu0 %v1692
  %v1711 = vpop.xlane.xlu0 %1710
  %1712 = vadd.xlane.f32.xlu0 %v1693
  %v1713 = vpop.xlane.xlu0 %1712
  %1714 = vadd.xlane.f32.xlu0 %v1694
  %v1715 = vpop.xlane.xlu0 %1714
  %1716 = vadd.xlane.f32.xlu0 %v1695
  %v1717 = vpop.xlane.xlu0 %1716
  %1718 = vadd.xlane.f32.xlu0 %v1696
  %v1719 = vpop.xlane.xlu0 %1718
  %1720 = vadd.xlane.f32.xlu0 %v1697
  %v1721 = vpop.xlane.xlu0 %1720
  %v1722 = vmul.f32 %v1699, %v387
  %v1723 = vmul.f32 %v1701, %v387
  %v1724 = vmul.f32 %v1703, %v387
  %v1725 = vmul.f32 %v1705, %v387
  %v1726 = vmul.f32 %v1707, %v387
  %v1727 = vmul.f32 %v1709, %v387
  %v1728 = vmul.f32 %v1711, %v387
  %v1729 = vmul.f32 %v1713, %v387
  %v1730 = vmul.f32 %v1715, %v387
  %v1731 = vmul.f32 %v1717, %v387
  %v1732 = vmul.f32 %v1719, %v387
  %v1733 = vmul.f32 %v1721, %v387
  %v1734 = vsub.f32 %v1686, %v1722
  %v1735 = vsub.f32 %v1687, %v1723
  %v1736 = vsub.f32 %v1688, %v1724
  %v1737 = vsub.f32 %v1689, %v1725
  %v1738 = vsub.f32 %v1690, %v1726
  %v1739 = vsub.f32 %v1691, %v1727
  %v1740 = vsub.f32 %v1692, %v1728
  %v1741 = vsub.f32 %v1693, %v1729
  %v1742 = vsub.f32 %v1694, %v1730
  %v1743 = vsub.f32 %v1695, %v1731
  %v1744 = vsub.f32 %v1696, %v1732
  %v1745 = vsub.f32 %v1697, %v1733
  %v1746 = vmul.f32 %v1734, %v1734
  %v1747 = vmul.f32 %v1735, %v1735
  %v1748 = vmul.f32 %v1736, %v1736
  %v1749 = vmul.f32 %v1737, %v1737
  %v1750 = vmul.f32 %v1738, %v1738
  %v1751 = vmul.f32 %v1739, %v1739
  %v1752 = vmul.f32 %v1740, %v1740
  %v1753 = vmul.f32 %v1741, %v1741
  %v1754 = vmul.f32 %v1742, %v1742
  %v1755 = vmul.f32 %v1743, %v1743
  %v1756 = vmul.f32 %v1744, %v1744
  %v1757 = vmul.f32 %v1745, %v1745
  %1758 = vadd.xlane.f32.xlu0 %v1746
  %v1759 = vpop.xlane.xlu0 %1758
  %1760 = vadd.xlane.f32.xlu0 %v1747
  %v1761 = vpop.xlane.xlu0 %1760
  %1762 = vadd.xlane.f32.xlu0 %v1748
  %v1763 = vpop.xlane.xlu0 %1762
  %1764 = vadd.xlane.f32.xlu0 %v1749
  %v1765 = vpop.xlane.xlu0 %1764
  %1766 = vadd.xlane.f32.xlu0 %v1750
  %v1767 = vpop.xlane.xlu0 %1766
  %1768 = vadd.xlane.f32.xlu0 %v1751
  %v1769 = vpop.xlane.xlu0 %1768
  %1770 = vadd.xlane.f32.xlu0 %v1752
  %v1771 = vpop.xlane.xlu0 %1770
  %1772 = vadd.xlane.f32.xlu0 %v1753
  %v1773 = vpop.xlane.xlu0 %1772
  %1774 = vadd.xlane.f32.xlu0 %v1754
  %v1775 = vpop.xlane.xlu0 %1774
  %1776 = vadd.xlane.f32.xlu0 %v1755
  %v1777 = vpop.xlane.xlu0 %1776
  %1778 = vadd.xlane.f32.xlu0 %v1756
  %v1779 = vpop.xlane.xlu0 %1778
  %1780 = vadd.xlane.f32.xlu0 %v1757
  %v1781 = vpop.xlane.xlu0 %1780
  %v1782 = vmul.f32 %v1759, %v387
  %v1783 = vmul.f32 %v1761, %v387
  %v1784 = vmul.f32 %v1763, %v387
  %v1785 = vmul.f32 %v1765, %v387
  %v1786 = vmul.f32 %v1767, %v387
  %v1787 = vmul.f32 %v1769, %v387
  %v1788 = vmul.f32 %v1771, %v387
  %v1789 = vmul.f32 %v1773, %v387
  %v1790 = vmul.f32 %v1775, %v387
  %v1791 = vmul.f32 %v1777, %v387
  %v1792 = vmul.f32 %v1779, %v387
  %v1793 = vmul.f32 %v1781, %v387
  %v1794 = vadd.f32 %v1782, 1e-05
  %v1795 = vadd.f32 %v1783, 1e-05
  %v1796 = vadd.f32 %v1784, 1e-05
  %v1797 = vadd.f32 %v1785, 1e-05
  %v1798 = vadd.f32 %v1786, 1e-05
  %v1799 = vadd.f32 %v1787, 1e-05
  %v1800 = vadd.f32 %v1788, 1e-05
  %v1801 = vadd.f32 %v1789, 1e-05
  %v1802 = vadd.f32 %v1790, 1e-05
  %v1803 = vadd.f32 %v1791, 1e-05
  %v1804 = vadd.f32 %v1792, 1e-05
  %v1805 = vadd.f32 %v1793, 1e-05
  %v1806 = vrsqrt.pop %v1794
  %v1807 = vrsqrt.pop %v1795
  %v1808 = vrsqrt.pop %v1796
  %v1809 = vrsqrt.pop %v1797
  %v1810 = vrsqrt.pop %v1798
  %v1811 = vrsqrt.pop %v1799
  %v1812 = vrsqrt.pop %v1800
  %v1813 = vrsqrt.pop %v1801
  %v1814 = vrsqrt.pop %v1802
  %v1815 = vrsqrt.pop %v1803
  %v1816 = vrsqrt.pop %v1804
  %v1817 = vrsqrt.pop %v1805
  %v1818 = vmul.f32 %v1734, %v1806
  %v1819 = vmul.f32 %v1735, %v1807
  %v1820 = vmul.f32 %v1736, %v1808
  %v1821 = vmul.f32 %v1737, %v1809
  %v1822 = vmul.f32 %v1738, %v1810
  %v1823 = vmul.f32 %v1739, %v1811
  %v1824 = vmul.f32 %v1740, %v1812
  %v1825 = vmul.f32 %v1741, %v1813
  %v1826 = vmul.f32 %v1742, %v1814
  %v1827 = vmul.f32 %v1743, %v1815
  %v1828 = vmul.f32 %v1744, %v1816
  %v1829 = vmul.f32 %v1745, %v1817
  %v1830 = vlaneseq
  %v1831 = vshrl.u32 %v1830, 7
  %v1832 = vsub.s32 4, %v1831
  %v1833 = vrot.slane %v27, %v1832
  %v1834 = vmul.f32 %v1818, %v1833
  %v1835 = vmul.f32 %v1819, %v1833
  %v1836 = vmul.f32 %v1820, %v1833
  %v1837 = vmul.f32 %v1821, %v1833
  %v1838 = vmul.f32 %v1822, %v1833
  %v1839 = vmul.f32 %v1823, %v1833
  %v1840 = vmul.f32 %v1824, %v1833
  %v1841 = vmul.f32 %v1825, %v1833
  %v1842 = vmul.f32 %v1826, %v1833
  %v1843 = vmul.f32 %v1827, %v1833
  %v1844 = vmul.f32 %v1828, %v1833
  %v1845 = vmul.f32 %v1829, %v1833
  %v1846 = vlaneseq
  %v1847 = vshrl.u32 %v1846, 7
  %v1848 = vsub.s32 5, %v1847
  %v1849 = vrot.slane %v27, %v1848
  %v1850 = vadd.f32 %v1834, %v1849
  %v1851 = vadd.f32 %v1835, %v1849
  %v1852 = vadd.f32 %v1836, %v1849
  %v1853 = vadd.f32 %v1837, %v1849
  %v1854 = vadd.f32 %v1838, %v1849
  %v1855 = vadd.f32 %v1839, %v1849
  %v1856 = vadd.f32 %v1840, %v1849
  %v1857 = vadd.f32 %v1841, %v1849
  %v1858 = vadd.f32 %v1842, %v1849
  %v1859 = vadd.f32 %v1843, %v1849
  %v1860 = vadd.f32 %v1844, %v1849
  %v1861 = vadd.f32 %v1845, %v1849
  %v1862 = vld [vmem:[%s2 + $0xc0] sm:$0xf]
  %v1863 = vld [vmem:[%s2 + $0xc4] sm:$0xf]
  %v1864 = vld [vmem:[%s2 + $0xc8] sm:$0xf]
  %v1865 = vld [vmem:[%s2 + $0xcc] sm:$0xf]
  %v1866 = vld [vmem:[%s2 + $0xd0] sm:$0xf]
  %v1867 = vld [vmem:[%s2 + $0xd4] sm:$0xf]
  %v1868 = vld [vmem:[%s2 + $0xd8] sm:$0xf]
  %v1869 = vld [vmem:[%s2 + $0xdc] sm:$0xf]
  %v1870 = vld [vmem:[%s2 + $0xe0] sm:$0xf]
  %v1871 = vld [vmem:[%s2 + $0xe4] sm:$0xf]
  %v1872 = vld [vmem:[%s2 + $0xe8] sm:$0xf]
  %v1873 = vld [vmem:[%s2 + $0xec] sm:$0xf]
  %v1874 = vld [vmem:[%s2 + $0xf0] sm:$0xf]
  %v1875 = vld [vmem:[%s2 + $0xf4] sm:$0xf]
  %v1876 = vld [vmem:[%s2 + $0xf8] sm:$0xf]
  %v1877 = vld [vmem:[%s2 + $0xfc] sm:$0xf]
  %v1878 = vpack.c.bf16 %v1851, %v1850
  %v1879 = vpack.c.bf16 %v1853, %v1852
  %v1880 = vpack.c.bf16 %v1855, %v1854
  %v1881 = vpack.c.bf16 %v1857, %v1856
  %v1882 = vpack.c.bf16 %v1859, %v1858
  %v1883 = vpack.c.bf16 %v1861, %v1860
  %v1884 = vlaneseq
  %v1885 = vshrl.u32 %v1884, 7
  %v1886 = vsub.s32 2, %v1885
  %v1887 = vrot.slane %v27, %v1886
  %v1904 = vunpack.c.l.b16 %v1862
  %v1905 = vunpack.c.l.b16 %v1863
  %v1906 = vunpack.c.l.b16 %v1864
  %v1907 = vunpack.c.l.b16 %v1865
  %v1908 = vunpack.c.l.b16 %v1866
  %v1909 = vunpack.c.l.b16 %v1867
  %v1910 = vunpack.c.l.b16 %v1868
  %v1911 = vunpack.c.l.b16 %v1869
  %v1912 = vunpack.c.l.b16 %v1870
  %v1913 = vunpack.c.l.b16 %v1871
  %v1914 = vunpack.c.l.b16 %v1872
  %v1915 = vunpack.c.l.b16 %v1873
  %v1916 = vunpack.c.l.b16 %v1874
  %v1917 = vunpack.c.l.b16 %v1875
  %v1918 = vunpack.c.l.b16 %v1876
  %v1919 = vunpack.c.l.b16 %v1877
  %v1920 = vpack.c.b16 %v1905, %v1904
  %v1921 = vpack.c.b16 %v1907, %v1906
  %v1922 = vpack.c.b16 %v1909, %v1908
  %v1923 = vpack.c.b16 %v1911, %v1910
  %v1924 = vpack.c.b16 %v1913, %v1912
  %v1925 = vpack.c.b16 %v1915, %v1914
  %v1926 = vpack.c.b16 %v1917, %v1916
  %v1927 = vpack.c.b16 %v1919, %v1918
  %1936 = vmatprep.subr.bf16.mxu0 0
  %1937 = vmatpush1.bf16.msra.mxu0 %v1920
  %1938 = vmatprep.subr.bf16.mxu0 0
  %1939 = vmatpush1.bf16.msra.mxu0 %v1921
  %1940 = vmatprep.subr.bf16.mxu0 0
  %1941 = vmatpush1.bf16.msra.mxu0 %v1922
  %1942 = vmatprep.subr.bf16.mxu0 0
  %1943 = vmatpush1.bf16.msra.mxu0 %v1923
  %1944 = vmatprep.subr.bf16.mxu0 0
  %1945 = vmatpush1.bf16.msra.mxu0 %v1924
  %1946 = vmatprep.subr.bf16.mxu0 0
  %1947 = vmatpush1.bf16.msra.mxu0 %v1925
  %1948 = vmatprep.subr.bf16.mxu0 0
  %1949 = vmatpush1.bf16.msra.mxu0 %v1926
  %1950 = vmatprep.subr.bf16.mxu0 0
  %1951 = vmatpush1.bf16.msra.mxu0 %v1927
  %1952 = vmatprep.subr.bf16.mxu0 0
  %1953 = vmatpush1.bf16.msra.mxu0 0
  %1954 = vmatprep.subr.bf16.mxu0 0
  %1955 = vmatpush1.bf16.msra.mxu0 0
  %1956 = vmatprep.subr.bf16.mxu0 0
  %1957 = vmatpush1.bf16.msra.mxu0 0
  %1958 = vmatprep.subr.bf16.mxu0 0
  %1959 = vmatpush1.bf16.msra.mxu0 0
  %1960 = vmatprep.subr.bf16.mxu0 0
  %1961 = vmatpush1.bf16.msra.mxu0 0
  %1962 = vmatprep.subr.bf16.mxu0 0
  %1963 = vmatpush1.bf16.msra.mxu0 0
  %1964 = vmatprep.subr.bf16.mxu0 0
  %1965 = vmatpush1.bf16.msra.mxu0 0
  %1966 = vmatprep.subr.bf16.mxu0 0
  %1967 = vmatpush1.bf16.msra.mxu0 0
  %1968 = vmatprep.mubr.bf16.mxu0 0
  %1969 = vmatmul.mubr.bf16.gmra.mrb[0].mxu0 %v1878
  %v1970 = vpop.f32.mrb[0].mxu0
  %v1971 = vadd.f32 %v1887, %v1970
  %v1972 = vpop.f32.mrb[0].mxu0
  %v1973 = vpop.f32.mrb[0].mxu0
  %v1974 = vadd.f32 %v1887, %v1973
  %v1975 = vpop.f32.mrb[0].mxu0
  %1976 = vmatprep.mubr.bf16.mxu0 0
  %1977 = vmatmul.mubr.bf16.gmra.mrb[0].mxu0 %v1879
  %v1978 = vpop.f32.mrb[0].mxu0
  %v1979 = vadd.f32 %v1887, %v1978
  %v1980 = vpop.f32.mrb[0].mxu0
  %v1981 = vpop.f32.mrb[0].mxu0
  %v1982 = vadd.f32 %v1887, %v1981
  %v1983 = vpop.f32.mrb[0].mxu0
  %1984 = vmatprep.mubr.bf16.mxu0 0
  %1985 = vmatmul.mubr.bf16.gmra.mrb[0].mxu0 %v1880
  %v1986 = vpop.f32.mrb[0].mxu0
  %v1987 = vadd.f32 %v1887, %v1986
  %v1988 = vpop.f32.mrb[0].mxu0
  %v1989 = vpop.f32.mrb[0].mxu0
  %v1990 = vadd.f32 %v1887, %v1989
  %v1991 = vpop.f32.mrb[0].mxu0
  %1992 = vmatprep.mubr.bf16.mxu0 0
  %1993 = vmatmul.mubr.bf16.gmra.mrb[0].mxu0 %v1881
  %v1994 = vpop.f32.mrb[0].mxu0
  %v1995 = vadd.f32 %v1887, %v1994
  %v1996 = vpop.f32.mrb[0].mxu0
  %v1997 = vpop.f32.mrb[0].mxu0
  %v1998 = vadd.f32 %v1887, %v1997
  %v1999 = vpop.f32.mrb[0].mxu0
  %2000 = vmatprep.mubr.bf16.mxu0 0
  %2001 = vmatmul.mubr.bf16.gmra.mrb[0].mxu0 %v1882
  %v2002 = vpop.f32.mrb[0].mxu0
  %v2003 = vadd.f32 %v1887, %v2002
  %v2004 = vpop.f32.mrb[0].mxu0
  %v2005 = vpop.f32.mrb[0].mxu0
  %v2006 = vadd.f32 %v1887, %v2005
  %v2007 = vpop.f32.mrb[0].mxu0
  %2008 = vmatprep.mubr.bf16.mxu0 0
  %2009 = vmatmul.mubr.bf16.gmra.mrb[0].mxu0 %v1883
  %v2010 = vpop.f32.mrb[0].mxu0
  %v2011 = vadd.f32 %v1887, %v2010
  %v2012 = vpop.f32.mrb[0].mxu0
  %v2013 = vpop.f32.mrb[0].mxu0
  %v2014 = vadd.f32 %v1887, %v2013
  %v2015 = vpop.f32.mrb[0].mxu0
  %2016 = vdwg.mxu0
  %v2017 = vmax.f32 %v1971, 0.0
  %v2018 = vmax.f32 %v1974, 0.0
  %v2019 = vmax.f32 %v1979, 0.0
  %v2020 = vmax.f32 %v1982, 0.0
  %v2021 = vmax.f32 %v1987, 0.0
  %v2022 = vmax.f32 %v1990, 0.0
  %v2023 = vmax.f32 %v1995, 0.0
  %v2024 = vmax.f32 %v1998, 0.0
  %v2025 = vmax.f32 %v2003, 0.0
  %v2026 = vmax.f32 %v2006, 0.0
  %v2027 = vmax.f32 %v2011, 0.0
  %v2028 = vmax.f32 %v2014, 0.0
  %v2029 = vld [vmem:[%s2 + $0x100] sm:$0xf]
  %v2030 = vld [vmem:[%s2 + $0x104] sm:$0xf]
  %v2031 = vld [vmem:[%s2 + $0x108] sm:$0xf]
  %v2032 = vld [vmem:[%s2 + $0x10c] sm:$0xf]
  %v2033 = vld [vmem:[%s2 + $0x110] sm:$0xf]
  %v2034 = vld [vmem:[%s2 + $0x114] sm:$0xf]
  %v2035 = vld [vmem:[%s2 + $0x118] sm:$0xf]
  %v2036 = vld [vmem:[%s2 + $0x11c] sm:$0xf]
  %v2037 = vld [vmem:[%s2 + $0x120] sm:$0xf]
  %v2038 = vld [vmem:[%s2 + $0x124] sm:$0xf]
  %v2039 = vld [vmem:[%s2 + $0x128] sm:$0xf]
  %v2040 = vld [vmem:[%s2 + $0x12c] sm:$0xf]
  %v2041 = vld [vmem:[%s2 + $0x130] sm:$0xf]
  %v2042 = vld [vmem:[%s2 + $0x134] sm:$0xf]
  %v2043 = vld [vmem:[%s2 + $0x138] sm:$0xf]
  %v2044 = vld [vmem:[%s2 + $0x13c] sm:$0xf]
  %v2045 = vpack.c.bf16 %v2018, %v2017
  %v2046 = vpack.c.bf16 %v2020, %v2019
  %v2047 = vpack.c.bf16 %v2022, %v2021
  %v2048 = vpack.c.bf16 %v2024, %v2023
  %v2049 = vpack.c.bf16 %v2026, %v2025
  %v2050 = vpack.c.bf16 %v2028, %v2027
  %v2067 = vunpack.c.l.b16 %v2029
  %v2068 = vunpack.c.l.b16 %v2030
  %v2069 = vunpack.c.l.b16 %v2031
  %v2070 = vunpack.c.l.b16 %v2032
  %v2071 = vunpack.c.l.b16 %v2033
  %v2072 = vunpack.c.l.b16 %v2034
  %v2073 = vunpack.c.l.b16 %v2035
  %v2074 = vunpack.c.l.b16 %v2036
  %v2075 = vunpack.c.l.b16 %v2037
  %v2076 = vunpack.c.l.b16 %v2038
  %v2077 = vunpack.c.l.b16 %v2039
  %v2078 = vunpack.c.l.b16 %v2040
  %v2079 = vunpack.c.l.b16 %v2041
  %v2080 = vunpack.c.l.b16 %v2042
  %v2081 = vunpack.c.l.b16 %v2043
  %v2082 = vunpack.c.l.b16 %v2044
  %v2083 = vpack.c.b16 %v2068, %v2067
  %v2084 = vpack.c.b16 %v2070, %v2069
  %v2085 = vpack.c.b16 %v2072, %v2071
  %v2086 = vpack.c.b16 %v2074, %v2073
  %v2087 = vpack.c.b16 %v2076, %v2075
  %v2088 = vpack.c.b16 %v2078, %v2077
  %v2089 = vpack.c.b16 %v2080, %v2079
  %v2090 = vpack.c.b16 %v2082, %v2081
  %2099 = vmatprep.subr.bf16.mxu0 0
  %2100 = vmatpush1.bf16.msra.mxu0 %v2083
  %2101 = vmatprep.subr.bf16.mxu0 0
  %2102 = vmatpush1.bf16.msra.mxu0 %v2084
  %2103 = vmatprep.subr.bf16.mxu0 0
  %2104 = vmatpush1.bf16.msra.mxu0 %v2085
  %2105 = vmatprep.subr.bf16.mxu0 0
  %2106 = vmatpush1.bf16.msra.mxu0 %v2086
  %2107 = vmatprep.subr.bf16.mxu0 0
  %2108 = vmatpush1.bf16.msra.mxu0 %v2087
  %2109 = vmatprep.subr.bf16.mxu0 0
  %2110 = vmatpush1.bf16.msra.mxu0 %v2088
  %2111 = vmatprep.subr.bf16.mxu0 0
  %2112 = vmatpush1.bf16.msra.mxu0 %v2089
  %2113 = vmatprep.subr.bf16.mxu0 0
  %2114 = vmatpush1.bf16.msra.mxu0 %v2090
  %2115 = vmatprep.subr.bf16.mxu0 0
  %2116 = vmatpush1.bf16.msra.mxu0 0
  %2117 = vmatprep.subr.bf16.mxu0 0
  %2118 = vmatpush1.bf16.msra.mxu0 0
  %2119 = vmatprep.subr.bf16.mxu0 0
  %2120 = vmatpush1.bf16.msra.mxu0 0
  %2121 = vmatprep.subr.bf16.mxu0 0
  %2122 = vmatpush1.bf16.msra.mxu0 0
  %2123 = vmatprep.subr.bf16.mxu0 0
  %2124 = vmatpush1.bf16.msra.mxu0 0
  %2125 = vmatprep.subr.bf16.mxu0 0
  %2126 = vmatpush1.bf16.msra.mxu0 0
  %2127 = vmatprep.subr.bf16.mxu0 0
  %2128 = vmatpush1.bf16.msra.mxu0 0
  %2129 = vmatprep.subr.bf16.mxu0 0
  %2130 = vmatpush1.bf16.msra.mxu0 0
  %2131 = vmatprep.mubr.bf16.mxu0 0
  %2132 = vmatmul.mubr.bf16.gmra.mrb[0].mxu0 %v2045
  %v2133 = vpop.f32.mrb[0].mxu0
  %v2134 = vadd.f32 0.0, %v2133
  %v2135 = vpop.f32.mrb[0].mxu0
  %v2136 = vpop.f32.mrb[0].mxu0
  %v2137 = vadd.f32 0.0, %v2136
  %v2138 = vpop.f32.mrb[0].mxu0
  %2139 = vmatprep.mubr.bf16.mxu0 0
  %2140 = vmatmul.mubr.bf16.gmra.mrb[0].mxu0 %v2046
  %v2141 = vpop.f32.mrb[0].mxu0
  %v2142 = vadd.f32 0.0, %v2141
  %v2143 = vpop.f32.mrb[0].mxu0
  %v2144 = vpop.f32.mrb[0].mxu0
  %v2145 = vadd.f32 0.0, %v2144
  %v2146 = vpop.f32.mrb[0].mxu0
  %2147 = vmatprep.mubr.bf16.mxu0 0
  %2148 = vmatmul.mubr.bf16.gmra.mrb[0].mxu0 %v2047
  %v2149 = vpop.f32.mrb[0].mxu0
  %v2150 = vadd.f32 0.0, %v2149
  %v2151 = vpop.f32.mrb[0].mxu0
  %v2152 = vpop.f32.mrb[0].mxu0
  %v2153 = vadd.f32 0.0, %v2152
  %v2154 = vpop.f32.mrb[0].mxu0
  %2155 = vmatprep.mubr.bf16.mxu0 0
  %2156 = vmatmul.mubr.bf16.gmra.mrb[0].mxu0 %v2048
  %v2157 = vpop.f32.mrb[0].mxu0
  %v2158 = vadd.f32 0.0, %v2157
  %v2159 = vpop.f32.mrb[0].mxu0
  %v2160 = vpop.f32.mrb[0].mxu0
  %v2161 = vadd.f32 0.0, %v2160
  %v2162 = vpop.f32.mrb[0].mxu0
  %2163 = vmatprep.mubr.bf16.mxu0 0
  %2164 = vmatmul.mubr.bf16.gmra.mrb[0].mxu0 %v2049
  %v2165 = vpop.f32.mrb[0].mxu0
  %v2166 = vadd.f32 0.0, %v2165
  %v2167 = vpop.f32.mrb[0].mxu0
  %v2168 = vpop.f32.mrb[0].mxu0
  %v2169 = vadd.f32 0.0, %v2168
  %v2170 = vpop.f32.mrb[0].mxu0
  %2171 = vmatprep.mubr.bf16.mxu0 0
  %2172 = vmatmul.mubr.bf16.gmra.mrb[0].mxu0 %v2050
  %v2173 = vpop.f32.mrb[0].mxu0
  %v2174 = vadd.f32 0.0, %v2173
  %v2175 = vpop.f32.mrb[0].mxu0
  %v2176 = vpop.f32.mrb[0].mxu0
  %v2177 = vadd.f32 0.0, %v2176
  %v2178 = vpop.f32.mrb[0].mxu0
  %2179 = vdwg.mxu0
  %v2180 = vadd.f32 %v1850, %v2134
  %v2181 = vadd.f32 %v1851, %v2137
  %v2182 = vadd.f32 %v1852, %v2142
  %v2183 = vadd.f32 %v1853, %v2145
  %v2184 = vadd.f32 %v1854, %v2150
  %v2185 = vadd.f32 %v1855, %v2153
  %v2186 = vadd.f32 %v1856, %v2158
  %v2187 = vadd.f32 %v1857, %v2161
  %v2188 = vadd.f32 %v1858, %v2166
  %v2189 = vadd.f32 %v1859, %v2169
  %v2190 = vadd.f32 %v1860, %v2174
  %v2191 = vadd.f32 %v1861, %v2177
  %v2192 = vlaneseq
  %v2193 = vshrl.u32 %v2192, 7
  %v2194 = vsub.s32 3, %v2193
  %v2195 = vrot.slane %v27, %v2194
  %v2196 = vadd.f32 %v2180, %v2195
  %v2197 = vadd.f32 %v2181, %v2195
  %v2198 = vadd.f32 %v2182, %v2195
  %v2199 = vadd.f32 %v2183, %v2195
  %v2200 = vadd.f32 %v2184, %v2195
  %v2201 = vadd.f32 %v2185, %v2195
  %v2202 = vadd.f32 %v2186, %v2195
  %v2203 = vadd.f32 %v2187, %v2195
  %v2204 = vadd.f32 %v2188, %v2195
  %v2205 = vadd.f32 %v2189, %v2195
  %v2206 = vadd.f32 %v2190, %v2195
  %v2207 = vadd.f32 %v2191, %v2195
  %2208 = vadd.xlane.f32.xlu0 %v2196
  %v2209 = vpop.xlane.xlu0 %2208
  %2210 = vadd.xlane.f32.xlu0 %v2197
  %v2211 = vpop.xlane.xlu0 %2210
  %2212 = vadd.xlane.f32.xlu0 %v2198
  %v2213 = vpop.xlane.xlu0 %2212
  %2214 = vadd.xlane.f32.xlu0 %v2199
  %v2215 = vpop.xlane.xlu0 %2214
  %2216 = vadd.xlane.f32.xlu0 %v2200
  %v2217 = vpop.xlane.xlu0 %2216
  %2218 = vadd.xlane.f32.xlu0 %v2201
  %v2219 = vpop.xlane.xlu0 %2218
  %2220 = vadd.xlane.f32.xlu0 %v2202
  %v2221 = vpop.xlane.xlu0 %2220
  %2222 = vadd.xlane.f32.xlu0 %v2203
  %v2223 = vpop.xlane.xlu0 %2222
  %2224 = vadd.xlane.f32.xlu0 %v2204
  %v2225 = vpop.xlane.xlu0 %2224
  %2226 = vadd.xlane.f32.xlu0 %v2205
  %v2227 = vpop.xlane.xlu0 %2226
  %2228 = vadd.xlane.f32.xlu0 %v2206
  %v2229 = vpop.xlane.xlu0 %2228
  %2230 = vadd.xlane.f32.xlu0 %v2207
  %v2231 = vpop.xlane.xlu0 %2230
  %v2232 = vmul.f32 %v2209, %v387
  %v2233 = vmul.f32 %v2211, %v387
  %v2234 = vmul.f32 %v2213, %v387
  %v2235 = vmul.f32 %v2215, %v387
  %v2236 = vmul.f32 %v2217, %v387
  %v2237 = vmul.f32 %v2219, %v387
  %v2238 = vmul.f32 %v2221, %v387
  %v2239 = vmul.f32 %v2223, %v387
  %v2240 = vmul.f32 %v2225, %v387
  %v2241 = vmul.f32 %v2227, %v387
  %v2242 = vmul.f32 %v2229, %v387
  %v2243 = vmul.f32 %v2231, %v387
  %v2244 = vsub.f32 %v2196, %v2232
  %v2245 = vsub.f32 %v2197, %v2233
  %v2246 = vsub.f32 %v2198, %v2234
  %v2247 = vsub.f32 %v2199, %v2235
  %v2248 = vsub.f32 %v2200, %v2236
  %v2249 = vsub.f32 %v2201, %v2237
  %v2250 = vsub.f32 %v2202, %v2238
  %v2251 = vsub.f32 %v2203, %v2239
  %v2252 = vsub.f32 %v2204, %v2240
  %v2253 = vsub.f32 %v2205, %v2241
  %v2254 = vsub.f32 %v2206, %v2242
  %v2255 = vsub.f32 %v2207, %v2243
  %v2256 = vmul.f32 %v2244, %v2244
  %v2257 = vmul.f32 %v2245, %v2245
  %v2258 = vmul.f32 %v2246, %v2246
  %v2259 = vmul.f32 %v2247, %v2247
  %v2260 = vmul.f32 %v2248, %v2248
  %v2261 = vmul.f32 %v2249, %v2249
  %v2262 = vmul.f32 %v2250, %v2250
  %v2263 = vmul.f32 %v2251, %v2251
  %v2264 = vmul.f32 %v2252, %v2252
  %v2265 = vmul.f32 %v2253, %v2253
  %v2266 = vmul.f32 %v2254, %v2254
  %v2267 = vmul.f32 %v2255, %v2255
  %2268 = vadd.xlane.f32.xlu0 %v2256
  %v2269 = vpop.xlane.xlu0 %2268
  %2270 = vadd.xlane.f32.xlu0 %v2257
  %v2271 = vpop.xlane.xlu0 %2270
  %2272 = vadd.xlane.f32.xlu0 %v2258
  %v2273 = vpop.xlane.xlu0 %2272
  %2274 = vadd.xlane.f32.xlu0 %v2259
  %v2275 = vpop.xlane.xlu0 %2274
  %2276 = vadd.xlane.f32.xlu0 %v2260
  %v2277 = vpop.xlane.xlu0 %2276
  %2278 = vadd.xlane.f32.xlu0 %v2261
  %v2279 = vpop.xlane.xlu0 %2278
  %2280 = vadd.xlane.f32.xlu0 %v2262
  %v2281 = vpop.xlane.xlu0 %2280
  %2282 = vadd.xlane.f32.xlu0 %v2263
  %v2283 = vpop.xlane.xlu0 %2282
  %2284 = vadd.xlane.f32.xlu0 %v2264
  %v2285 = vpop.xlane.xlu0 %2284
  %2286 = vadd.xlane.f32.xlu0 %v2265
  %v2287 = vpop.xlane.xlu0 %2286
  %2288 = vadd.xlane.f32.xlu0 %v2266
  %v2289 = vpop.xlane.xlu0 %2288
  %2290 = vadd.xlane.f32.xlu0 %v2267
  %v2291 = vpop.xlane.xlu0 %2290
  %v2292 = vmul.f32 %v2269, %v387
  %v2293 = vmul.f32 %v2271, %v387
  %v2294 = vmul.f32 %v2273, %v387
  %v2295 = vmul.f32 %v2275, %v387
  %v2296 = vmul.f32 %v2277, %v387
  %v2297 = vmul.f32 %v2279, %v387
  %v2298 = vmul.f32 %v2281, %v387
  %v2299 = vmul.f32 %v2283, %v387
  %v2300 = vmul.f32 %v2285, %v387
  %v2301 = vmul.f32 %v2287, %v387
  %v2302 = vmul.f32 %v2289, %v387
  %v2303 = vmul.f32 %v2291, %v387
  %v2304 = vadd.f32 %v2292, 1e-05
  %v2305 = vadd.f32 %v2293, 1e-05
  %v2306 = vadd.f32 %v2294, 1e-05
  %v2307 = vadd.f32 %v2295, 1e-05
  %v2308 = vadd.f32 %v2296, 1e-05
  %v2309 = vadd.f32 %v2297, 1e-05
  %v2310 = vadd.f32 %v2298, 1e-05
  %v2311 = vadd.f32 %v2299, 1e-05
  %v2312 = vadd.f32 %v2300, 1e-05
  %v2313 = vadd.f32 %v2301, 1e-05
  %v2314 = vadd.f32 %v2302, 1e-05
  %v2315 = vadd.f32 %v2303, 1e-05
  %v2316 = vrsqrt.pop %v2304
  %v2317 = vrsqrt.pop %v2305
  %v2318 = vrsqrt.pop %v2306
  %v2319 = vrsqrt.pop %v2307
  %v2320 = vrsqrt.pop %v2308
  %v2321 = vrsqrt.pop %v2309
  %v2322 = vrsqrt.pop %v2310
  %v2323 = vrsqrt.pop %v2311
  %v2324 = vrsqrt.pop %v2312
  %v2325 = vrsqrt.pop %v2313
  %v2326 = vrsqrt.pop %v2314
  %v2327 = vrsqrt.pop %v2315
  %v2328 = vmul.f32 %v2244, %v2316
  %v2329 = vmul.f32 %v2245, %v2317
  %v2330 = vmul.f32 %v2246, %v2318
  %v2331 = vmul.f32 %v2247, %v2319
  %v2332 = vmul.f32 %v2248, %v2320
  %v2333 = vmul.f32 %v2249, %v2321
  %v2334 = vmul.f32 %v2250, %v2322
  %v2335 = vmul.f32 %v2251, %v2323
  %v2336 = vmul.f32 %v2252, %v2324
  %v2337 = vmul.f32 %v2253, %v2325
  %v2338 = vmul.f32 %v2254, %v2326
  %v2339 = vmul.f32 %v2255, %v2327
  %v2340 = vlaneseq
  %v2341 = vshrl.u32 %v2340, 7
  %v2342 = vsub.s32 6, %v2341
  %v2343 = vrot.slane %v27, %v2342
  %v2344 = vmul.f32 %v2328, %v2343
  %v2345 = vmul.f32 %v2329, %v2343
  %v2346 = vmul.f32 %v2330, %v2343
  %v2347 = vmul.f32 %v2331, %v2343
  %v2348 = vmul.f32 %v2332, %v2343
  %v2349 = vmul.f32 %v2333, %v2343
  %v2350 = vmul.f32 %v2334, %v2343
  %v2351 = vmul.f32 %v2335, %v2343
  %v2352 = vmul.f32 %v2336, %v2343
  %v2353 = vmul.f32 %v2337, %v2343
  %v2354 = vmul.f32 %v2338, %v2343
  %v2355 = vmul.f32 %v2339, %v2343
  %v2356 = vlaneseq
  %v2357 = vshrl.u32 %v2356, 7
  %v2358 = vsub.s32 7, %v2357
  %v2359 = vrot.slane %v27, %v2358
  %v2360 = vadd.f32 %v2344, %v2359
  %v2361 = vadd.f32 %v2345, %v2359
  %v2362 = vadd.f32 %v2346, %v2359
  %v2363 = vadd.f32 %v2347, %v2359
  %v2364 = vadd.f32 %v2348, %v2359
  %v2365 = vadd.f32 %v2349, %v2359
  %v2366 = vadd.f32 %v2350, %v2359
  %v2367 = vadd.f32 %v2351, %v2359
  %v2368 = vadd.f32 %v2352, %v2359
  %v2369 = vadd.f32 %v2353, %v2359
  %v2370 = vadd.f32 %v2354, %v2359
  %v2371 = vadd.f32 %v2355, %v2359
  %v2372 = vld [vmem:[%s4] sm:$0xff]
  %v2373 = vld [vmem:[%s4 + $0x8] sm:$0xff]
  %v2374 = vld [vmem:[%s4 + $0x10] sm:$0xff]
  %v2375 = vld [vmem:[%s4 + $0x18] sm:$0xff]
  %v2376 = vld [vmem:[%s4 + $0x20] sm:$0xff]
  %v2377 = vld [vmem:[%s4 + $0x28] sm:$0xff]
  %v2378 = vld [vmem:[%s4 + $0x30] sm:$0xff]
  %v2379 = vld [vmem:[%s4 + $0x38] sm:$0xff]
  %v2380 = vld [vmem:[%s4 + $0x40] sm:$0xff]
  %v2381 = vld [vmem:[%s4 + $0x48] sm:$0xff]
  %v2382 = vld [vmem:[%s4 + $0x50] sm:$0xff]
  %v2383 = vld [vmem:[%s4 + $0x58] sm:$0xff]
  %v2384 = vld [vmem:[%s4 + $0x60] sm:$0xff]
  %v2385 = vld [vmem:[%s4 + $0x68] sm:$0xff]
  %v2386 = vld [vmem:[%s4 + $0x70] sm:$0xff]
  %v2387 = vld [vmem:[%s4 + $0x78] sm:$0xff]
  %v2388 = vpack.c.bf16 %v2361, %v2360
  %v2389 = vpack.c.bf16 %v2363, %v2362
  %v2390 = vpack.c.bf16 %v2365, %v2364
  %v2391 = vpack.c.bf16 %v2367, %v2366
  %v2392 = vpack.c.bf16 %v2369, %v2368
  %v2393 = vpack.c.bf16 %v2371, %v2370
  %v2395 = vrot.slane %v28, 1
  %v2397 = vlaneseq
  %v2398 = vshrl.u32 %v2397, 7
  %v2399 = vsub.s32 0, %v2398
  %v2400 = vrot.slane %v28, %v2399
  %v2401 = vlaneseq
  %v2402 = vshrl.u32 %v2401, 7
  %v2403 = vsub.s32 0, %v2402
  %v2404 = vrot.slane %v2395, %v2403
  %v2421 = vunpack.c.l.b16 %v2372
  %v2422 = vunpack.c.h.b16 %v2372
  %v2423 = vunpack.c.l.b16 %v2373
  %v2424 = vunpack.c.h.b16 %v2373
  %v2425 = vunpack.c.l.b16 %v2374
  %v2426 = vunpack.c.h.b16 %v2374
  %v2427 = vunpack.c.l.b16 %v2375
  %v2428 = vunpack.c.h.b16 %v2375
  %v2429 = vunpack.c.l.b16 %v2376
  %v2430 = vunpack.c.h.b16 %v2376
  %v2431 = vunpack.c.l.b16 %v2377
  %v2432 = vunpack.c.h.b16 %v2377
  %v2433 = vunpack.c.l.b16 %v2378
  %v2434 = vunpack.c.h.b16 %v2378
  %v2435 = vunpack.c.l.b16 %v2379
  %v2436 = vunpack.c.h.b16 %v2379
  %v2437 = vunpack.c.l.b16 %v2380
  %v2438 = vunpack.c.h.b16 %v2380
  %v2439 = vunpack.c.l.b16 %v2381
  %v2440 = vunpack.c.h.b16 %v2381
  %v2441 = vunpack.c.l.b16 %v2382
  %v2442 = vunpack.c.h.b16 %v2382
  %v2443 = vunpack.c.l.b16 %v2383
  %v2444 = vunpack.c.h.b16 %v2383
  %v2445 = vunpack.c.l.b16 %v2384
  %v2446 = vunpack.c.h.b16 %v2384
  %v2447 = vunpack.c.l.b16 %v2385
  %v2448 = vunpack.c.h.b16 %v2385
  %v2449 = vunpack.c.l.b16 %v2386
  %v2450 = vunpack.c.h.b16 %v2386
  %v2451 = vunpack.c.l.b16 %v2387
  %v2452 = vunpack.c.h.b16 %v2387
  %v2453 = vpack.c.b16 %v2423, %v2421
  %v2454 = vpack.c.b16 %v2424, %v2422
  %v2455 = vpack.c.b16 %v2427, %v2425
  %v2456 = vpack.c.b16 %v2428, %v2426
  %v2457 = vpack.c.b16 %v2431, %v2429
  %v2458 = vpack.c.b16 %v2432, %v2430
  %v2459 = vpack.c.b16 %v2435, %v2433
  %v2460 = vpack.c.b16 %v2436, %v2434
  %v2461 = vpack.c.b16 %v2439, %v2437
  %v2462 = vpack.c.b16 %v2440, %v2438
  %v2463 = vpack.c.b16 %v2443, %v2441
  %v2464 = vpack.c.b16 %v2444, %v2442
  %v2465 = vpack.c.b16 %v2447, %v2445
  %v2466 = vpack.c.b16 %v2448, %v2446
  %v2467 = vpack.c.b16 %v2451, %v2449
  %v2468 = vpack.c.b16 %v2452, %v2450
  %2485 = vmatprep.subr.bf16.mxu0 %v2454
  %2486 = vmatpush1.bf16.msra.mxu0 %v2453
  %2487 = vmatprep.subr.bf16.mxu0 %v2456
  %2488 = vmatpush1.bf16.msra.mxu0 %v2455
  %2489 = vmatprep.subr.bf16.mxu0 %v2458
  %2490 = vmatpush1.bf16.msra.mxu0 %v2457
  %2491 = vmatprep.subr.bf16.mxu0 %v2460
  %2492 = vmatpush1.bf16.msra.mxu0 %v2459
  %2493 = vmatprep.subr.bf16.mxu0 %v2462
  %2494 = vmatpush1.bf16.msra.mxu0 %v2461
  %2495 = vmatprep.subr.bf16.mxu0 %v2464
  %2496 = vmatpush1.bf16.msra.mxu0 %v2463
  %2497 = vmatprep.subr.bf16.mxu0 %v2466
  %2498 = vmatpush1.bf16.msra.mxu0 %v2465
  %2499 = vmatprep.subr.bf16.mxu0 %v2468
  %2500 = vmatpush1.bf16.msra.mxu0 %v2467
  %2501 = vmatprep.subr.bf16.mxu0 0
  %2502 = vmatpush1.bf16.msra.mxu0 0
  %2503 = vmatprep.subr.bf16.mxu0 0
  %2504 = vmatpush1.bf16.msra.mxu0 0
  %2505 = vmatprep.subr.bf16.mxu0 0
  %2506 = vmatpush1.bf16.msra.mxu0 0
  %2507 = vmatprep.subr.bf16.mxu0 0
  %2508 = vmatpush1.bf16.msra.mxu0 0
  %2509 = vmatprep.subr.bf16.mxu0 0
  %2510 = vmatpush1.bf16.msra.mxu0 0
  %2511 = vmatprep.subr.bf16.mxu0 0
  %2512 = vmatpush1.bf16.msra.mxu0 0
  %2513 = vmatprep.subr.bf16.mxu0 0
  %2514 = vmatpush1.bf16.msra.mxu0 0
  %2515 = vmatprep.subr.bf16.mxu0 0
  %2516 = vmatpush1.bf16.msra.mxu0 0
  %2517 = vmatprep.mubr.bf16.mxu0 0
  %2518 = vmatmul.mubr.bf16.gmra.mrb[0].mxu0 %v2388
  %v2519 = vpop.f32.mrb[0].mxu0
  %v2520 = vadd.f32 %v2400, %v2519
  %v2521 = vpop.f32.mrb[0].mxu0
  %v2522 = vadd.f32 %v2404, %v2521
  %v2523 = vpop.f32.mrb[0].mxu0
  %v2524 = vadd.f32 %v2400, %v2523
  %v2525 = vpop.f32.mrb[0].mxu0
  %v2526 = vadd.f32 %v2404, %v2525
  %2527 = vmatprep.mubr.bf16.mxu0 0
  %2528 = vmatmul.mubr.bf16.gmra.mrb[0].mxu0 %v2389
  %v2529 = vpop.f32.mrb[0].mxu0
  %v2530 = vadd.f32 %v2400, %v2529
  %v2531 = vpop.f32.mrb[0].mxu0
  %v2532 = vadd.f32 %v2404, %v2531
  %v2533 = vpop.f32.mrb[0].mxu0
  %v2534 = vadd.f32 %v2400, %v2533
  %v2535 = vpop.f32.mrb[0].mxu0
  %v2536 = vadd.f32 %v2404, %v2535
  %2537 = vmatprep.mubr.bf16.mxu0 0
  %2538 = vmatmul.mubr.bf16.gmra.mrb[0].mxu0 %v2390
  %v2539 = vpop.f32.mrb[0].mxu0
  %v2540 = vadd.f32 %v2400, %v2539
  %v2541 = vpop.f32.mrb[0].mxu0
  %v2542 = vadd.f32 %v2404, %v2541
  %v2543 = vpop.f32.mrb[0].mxu0
  %v2544 = vadd.f32 %v2400, %v2543
  %v2545 = vpop.f32.mrb[0].mxu0
  %v2546 = vadd.f32 %v2404, %v2545
  %2547 = vmatprep.mubr.bf16.mxu0 0
  %2548 = vmatmul.mubr.bf16.gmra.mrb[0].mxu0 %v2391
  %v2549 = vpop.f32.mrb[0].mxu0
  %v2550 = vadd.f32 %v2400, %v2549
  %v2551 = vpop.f32.mrb[0].mxu0
  %v2552 = vadd.f32 %v2404, %v2551
  %v2553 = vpop.f32.mrb[0].mxu0
  %v2554 = vadd.f32 %v2400, %v2553
  %v2555 = vpop.f32.mrb[0].mxu0
  %v2556 = vadd.f32 %v2404, %v2555
  %2557 = vmatprep.mubr.bf16.mxu0 0
  %2558 = vmatmul.mubr.bf16.gmra.mrb[0].mxu0 %v2392
  %v2559 = vpop.f32.mrb[0].mxu0
  %v2560 = vadd.f32 %v2400, %v2559
  %v2561 = vpop.f32.mrb[0].mxu0
  %v2562 = vadd.f32 %v2404, %v2561
  %v2563 = vpop.f32.mrb[0].mxu0
  %v2564 = vadd.f32 %v2400, %v2563
  %v2565 = vpop.f32.mrb[0].mxu0
  %v2566 = vadd.f32 %v2404, %v2565
  %2567 = vmatprep.mubr.bf16.mxu0 0
  %2568 = vmatmul.mubr.bf16.gmra.mrb[0].mxu0 %v2393
  %v2569 = vpop.f32.mrb[0].mxu0
  %v2570 = vadd.f32 %v2400, %v2569
  %v2571 = vpop.f32.mrb[0].mxu0
  %v2572 = vadd.f32 %v2404, %v2571
  %v2573 = vpop.f32.mrb[0].mxu0
  %v2574 = vadd.f32 %v2400, %v2573
  %v2575 = vpop.f32.mrb[0].mxu0
  %v2576 = vadd.f32 %v2404, %v2575
  %2577 = vdwg.mxu0
  %v2578 = vpack.c.bf16 %v2524, %v2520
  %v2579 = vpack.c.bf16 %v2526, %v2522
  %v2580 = vpack.c.bf16 %v2534, %v2530
  %v2581 = vpack.c.bf16 %v2536, %v2532
  %v2582 = vpack.c.bf16 %v2544, %v2540
  %v2583 = vpack.c.bf16 %v2546, %v2542
  %v2584 = vpack.c.bf16 %v2554, %v2550
  %v2585 = vpack.c.bf16 %v2556, %v2552
  %v2586 = vpack.c.bf16 %v2564, %v2560
  %v2587 = vpack.c.bf16 %v2566, %v2562
  %v2588 = vpack.c.bf16 %v2574, %v2570
  %v2589 = vpack.c.bf16 %v2576, %v2572
  %v2602 = vunpack.c.l.b16 %v2578
  %v2603 = vunpack.c.l.b16 %v2579
  %v2604 = vunpack.c.h.b16 %v2578
  %v2605 = vunpack.c.h.b16 %v2579
  %v2606 = vunpack.c.l.b16 %v2580
  %v2607 = vunpack.c.l.b16 %v2581
  %v2608 = vunpack.c.h.b16 %v2580
  %v2609 = vunpack.c.h.b16 %v2581
  %v2610 = vunpack.c.l.b16 %v2582
  %v2611 = vunpack.c.l.b16 %v2583
  %v2612 = vunpack.c.h.b16 %v2582
  %v2613 = vunpack.c.h.b16 %v2583
  %v2614 = vunpack.c.l.b16 %v2584
  %v2615 = vunpack.c.l.b16 %v2585
  %v2616 = vunpack.c.h.b16 %v2584
  %v2617 = vunpack.c.h.b16 %v2585
  %v2618 = vunpack.c.l.b16 %v2586
  %v2619 = vunpack.c.l.b16 %v2587
  %v2620 = vunpack.c.h.b16 %v2586
  %v2621 = vunpack.c.h.b16 %v2587
  %v2622 = vunpack.c.l.b16 %v2588
  %v2623 = vunpack.c.l.b16 %v2589
  %v2624 = vunpack.c.h.b16 %v2588
  %v2625 = vunpack.c.h.b16 %v2589
  %v2626 = vpack.c.b16 %v2603, %v2602
  %v2627 = vpack.c.b16 %v2605, %v2604
  %v2628 = vpack.c.b16 %v2607, %v2606
  %v2629 = vpack.c.b16 %v2609, %v2608
  %v2630 = vpack.c.b16 %v2611, %v2610
  %v2631 = vpack.c.b16 %v2613, %v2612
  %v2632 = vpack.c.b16 %v2615, %v2614
  %v2633 = vpack.c.b16 %v2617, %v2616
  %v2634 = vpack.c.b16 %v2619, %v2618
  %v2635 = vpack.c.b16 %v2621, %v2620
  %v2636 = vpack.c.b16 %v2623, %v2622
  %v2637 = vpack.c.b16 %v2625, %v2624
  %2650 = vst [vmem:[%s7] sm:$0xff] %v2626
  %2651 = vst [vmem:[%s7 + $0x8] sm:$0xff] %v2627
  %2652 = vst [vmem:[%s7 + $0x10] sm:$0xff] %v2628
  %2653 = vst [vmem:[%s7 + $0x18] sm:$0xff] %v2629
  %2654 = vst [vmem:[%s7 + $0x20] sm:$0xff] %v2630
  %2655 = vst [vmem:[%s7 + $0x28] sm:$0xff] %v2631
  %2656 = vst [vmem:[%s7 + $0x30] sm:$0xff] %v2632
  %2657 = vst [vmem:[%s7 + $0x38] sm:$0xff] %v2633
  %2658 = vst [vmem:[%s7 + $0x40] sm:$0xff] %v2634
  %2659 = vst [vmem:[%s7 + $0x48] sm:$0xff] %v2635
  %2660 = vst [vmem:[%s7 + $0x50] sm:$0xff] %v2636
  %2661 = vst [vmem:[%s7 + $0x58] sm:$0xff] %v2637
  // Predicated region
  $region26: #{forward.2} parent=0 // pred_check
    _
  $region27: #{forward.2} parent=0 // pred_check_branch
    %2663 = sbr.rel (0) target = $region29
  $region28: #{forward.2} parent=0 // pred_region
    _
  $region29: #{forward.2} parent=0 // pred_fallthru
    _
  // Predicated region
  $region30: #{forward.2} parent=0 // pred_check
    _
  $region31: #{forward.2} parent=0 // pred_check_branch
    %2665 = sbr.rel (0) target = $region33
  $region32: #{forward.2} parent=0 // pred_region
    _
  $region33: #{forward.2} parent=0 // pred_fallthru
    _
  // Predicated region
  $region34: #{forward.2} parent=0 // pred_check
    _
  $region35: #{forward.2} parent=0 // pred_check_branch
    %2667 = sbr.rel (0) target = $region37
  $region36: #{forward.2} parent=0 // pred_region
    _
  $region37: #{forward.2} parent=0 // pred_fallthru
    _
  // Predicated region
  $region38: #{forward.2} parent=0 // pred_check
    _
  $region39: #{forward.2} parent=0 // pred_check_branch
    %2669 = sbr.rel (0) target = $region41
  $region40: #{forward.2} parent=0 // pred_region
    _
  $region41: #{forward.2} parent=0 // pred_fallthru
    _

// kernel: forward.3
$region0: #{forward.3}
  #allocation0 [shape = 'u32[]', space=smem, size = 0x4, offset = 0x4, fixed_abs, tag = 'smem constant byte address 0x4 - core index']
  #allocation1 [shape = 'u32[144,128]{1,0:T(1,128)}', space=vmem, size = 0x12000, scoped, tag = 'internal scratch']
  %s0 = inlined_call_operand.vmem [shape: f32[2,8,128], index: 0, kind: input, shape index: {}]
  %s1 = inlined_call_operand.vmem [shape: f32[2,8,128], index: 1, kind: input, shape index: {}]
  %s2 = inlined_call_operand.vmem [shape: bf16[2,256,128], index: 2, kind: input, shape index: {}]
  %s3 = inlined_call_operand.vmem [shape: bf16[2,128,48], index: 3, kind: input, shape index: {}]
  %s4 = inlined_call_operand.vmem [shape: bf16[2,48,128], index: 4, kind: input, shape index: {}]
  %s5 = inlined_call_operand.vmem [shape: f32[2,8,128], index: 5, kind: input, shape index: {}]
  %s6 = inlined_call_operand.vmem [shape: f32[24,128], index: 6, kind: input, shape index: {}]
  %s7 = inlined_call_operand.vmem [shape: bf16[128,384], index: 7, kind: input, shape index: {}]
  %s8 = inlined_call_operand.vmem [shape: bf16[896,128], index: 8, kind: input, shape index: {}]
  %s9 = inlined_call_operand.vmem [shape: f32[24,128], index: 9, kind: input, shape index: {}]
  %s10 = inlined_call_operand.vmem [shape: f32[2,24,128], index: 10, kind: output, shape index: {}]
  %s11 = sld [smem:[#allocation0]]
  $region73: #{forward.3} parent=0
    _
  %s13 = ssub.s32 1, %s11
  %s14 = scalar_select 0, %s13, %s11
  loop: start=0, step=1, limit=4
  $region2: #{forward.3} parent=0 // loop_pre_header
    _
  $region3: #{forward.3} parent=0 // loop_header
    %s16 = sphi 0, %s20
    %p17 = scmp.ge.s32.totalorder %s16, 4
    %s26 = sphi 0, %s28
    %s29 = sphi 0, %s26
    %s30 = sphi 0, %s29
    %s46 = sphi 0, %s30
    %s52 = sphi 0, %s54
    %s55 = sphi 0, %s52
    %s56 = sphi 0, %s55
    %s72 = sphi 0, %s56
    %s78 = sphi 0, %s80
    %s81 = sphi 0, %s78
    %s82 = sphi 0, %s81
    %s98 = sphi 0, %s82
    %s104 = sphi 0, %s106
    %s107 = sphi 0, %s104
    %s108 = sphi 0, %s107
    %s124 = sphi 0, %s108
    %s130 = sphi 0, %s132
    %s133 = sphi 0, %s130
    %s134 = sphi 0, %s133
    %s150 = sphi 0, %s134
    %s156 = sphi 0, %s158
    %s159 = sphi 0, %s156
    %s160 = sphi 0, %s159
    %s176 = sphi 0, %s160
    %s180 = sphi 0, %s180
    %s182 = sphi 0, %s180
    %s183 = sphi 0, %s182
    %s197 = sphi 0, %s183
    %s201 = sphi 0, %s201
    %s203 = sphi 0, %s201
    %s204 = sphi 0, %s203
    %s218 = sphi 0, %s204
    %s222 = sphi 0, %s222
    %s224 = sphi 0, %s222
    %s225 = sphi 0, %s224
    %s239 = sphi 0, %s225
    %s243 = sphi 0, %s243
    %s245 = sphi 0, %s243
    %s246 = sphi 0, %s245
    %s260 = sphi 0, %s246
    %s266 = sphi 0, %s268
    %s269 = sphi 0, %s266
    %s270 = sphi 0, %s269
    %s286 = sphi 0, %s270
  $region4: #{forward.3} parent=0 // loop_header_branch
    %19 = sbr.rel (%p17) target = $region8
  $region5: #{forward.3} parent=0 // loop_body
    %s21 = ssub.s32 %s16, 1
    %s22 = ssub.s32 %s16, 2
    %s23 = sadd.s32 %s16, 1
    %s24 = ssub.s32 %s16, %s23
    %p25 = scmp.eq.s32.totalorder %s24, 0
    %s27 = sadd.s32 %s26, 1
    %s28 = scalar_select %p25, %s26, %s27
    %p31 = pneg %p25
    %p32 = scmp.eq.s32.totalorder %s16, 1
    %p33 = por %p31, %p32
    %p34 = scmp.ne.s32.totalorder %s26, %s29
    %p35 = scmp.eq.s32.totalorder %s16, 0
    %p36 = por %p34, %p35
    %p37 = scmp.ne.s32.totalorder %s26, %s29
    %p38 = scmp.eq.s32.totalorder %s21, 1
    %p39 = por %p37, %p38
    %p40 = scmp.ne.s32.totalorder %s29, %s30
    %p41 = scmp.eq.s32.totalorder %s21, 0
    %p42 = por %p40, %p41
    %p43 = scmp.ne.s32.totalorder %s29, %s30
    %p44 = scmp.eq.s32.totalorder %s22, 1
    %p45 = por %p43, %p44
    %p47 = scmp.ne.s32.totalorder %s30, %s46
    %p48 = scmp.eq.s32.totalorder %s22, 0
    %p49 = por %p47, %p48
    %s50 = ssub.s32 %s16, %s23
    %p51 = scmp.eq.s32.totalorder %s50, 0
    %s53 = sadd.s32 %s52, 1
    %s54 = scalar_select %p51, %s52, %s53
    %p57 = pneg %p51
    %p58 = scmp.eq.s32.totalorder %s16, 1
    %p59 = por %p57, %p58
    %p60 = scmp.ne.s32.totalorder %s52, %s55
    %p61 = scmp.eq.s32.totalorder %s16, 0
    %p62 = por %p60, %p61
    %p63 = scmp.ne.s32.totalorder %s52, %s55
    %p64 = scmp.eq.s32.totalorder %s21, 1
    %p65 = por %p63, %p64
    %p66 = scmp.ne.s32.totalorder %s55, %s56
    %p67 = scmp.eq.s32.totalorder %s21, 0
    %p68 = por %p66, %p67
    %p69 = scmp.ne.s32.totalorder %s55, %s56
    %p70 = scmp.eq.s32.totalorder %s22, 1
    %p71 = por %p69, %p70
    %p73 = scmp.ne.s32.totalorder %s56, %s72
    %p74 = scmp.eq.s32.totalorder %s22, 0
    %p75 = por %p73, %p74
    %s76 = ssub.s32 %s16, %s23
    %p77 = scmp.eq.s32.totalorder %s76, 0
    %s79 = sadd.s32 %s78, 1
    %s80 = scalar_select %p77, %s78, %s79
    %p83 = pneg %p77
    %p84 = scmp.eq.s32.totalorder %s16, 1
    %p85 = por %p83, %p84
    %p86 = scmp.ne.s32.totalorder %s78, %s81
    %p87 = scmp.eq.s32.totalorder %s16, 0
    %p88 = por %p86, %p87
    %p89 = scmp.ne.s32.totalorder %s78, %s81
    %p90 = scmp.eq.s32.totalorder %s21, 1
    %p91 = por %p89, %p90
    %p92 = scmp.ne.s32.totalorder %s81, %s82
    %p93 = scmp.eq.s32.totalorder %s21, 0
    %p94 = por %p92, %p93
    %p95 = scmp.ne.s32.totalorder %s81, %s82
    %p96 = scmp.eq.s32.totalorder %s22, 1
    %p97 = por %p95, %p96
    %p99 = scmp.ne.s32.totalorder %s82, %s98
    %p100 = scmp.eq.s32.totalorder %s22, 0
    %p101 = por %p99, %p100
    %s102 = ssub.s32 %s16, %s23
    %p103 = scmp.eq.s32.totalorder %s102, 0
    %s105 = sadd.s32 %s104, 1
    %s106 = scalar_select %p103, %s104, %s105
    %p109 = pneg %p103
    %p110 = scmp.eq.s32.totalorder %s16, 1
    %p111 = por %p109, %p110
    %p112 = scmp.ne.s32.totalorder %s104, %s107
    %p113 = scmp.eq.s32.totalorder %s16, 0
    %p114 = por %p112, %p113
    %p115 = scmp.ne.s32.totalorder %s104, %s107
    %p116 = scmp.eq.s32.totalorder %s21, 1
    %p117 = por %p115, %p116
    %p118 = scmp.ne.s32.totalorder %s107, %s108
    %p119 = scmp.eq.s32.totalorder %s21, 0
    %p120 = por %p118, %p119
    %p121 = scmp.ne.s32.totalorder %s107, %s108
    %p122 = scmp.eq.s32.totalorder %s22, 1
    %p123 = por %p121, %p122
    %p125 = scmp.ne.s32.totalorder %s108, %s124
    %p126 = scmp.eq.s32.totalorder %s22, 0
    %p127 = por %p125, %p126
    %s128 = ssub.s32 %s16, %s23
    %p129 = scmp.eq.s32.totalorder %s128, 0
    %s131 = sadd.s32 %s130, 1
    %s132 = scalar_select %p129, %s130, %s131
    %p135 = pneg %p129
    %p136 = scmp.eq.s32.totalorder %s16, 1
    %p137 = por %p135, %p136
    %p138 = scmp.ne.s32.totalorder %s130, %s133
    %p139 = scmp.eq.s32.totalorder %s16, 0
    %p140 = por %p138, %p139
    %p141 = scmp.ne.s32.totalorder %s130, %s133
    %p142 = scmp.eq.s32.totalorder %s21, 1
    %p143 = por %p141, %p142
    %p144 = scmp.ne.s32.totalorder %s133, %s134
    %p145 = scmp.eq.s32.totalorder %s21, 0
    %p146 = por %p144, %p145
    %p147 = scmp.ne.s32.totalorder %s133, %s134
    %p148 = scmp.eq.s32.totalorder %s22, 1
    %p149 = por %p147, %p148
    %p151 = scmp.ne.s32.totalorder %s134, %s150
    %p152 = scmp.eq.s32.totalorder %s22, 0
    %p153 = por %p151, %p152
    %s154 = ssub.s32 %s16, %s23
    %p155 = scmp.eq.s32.totalorder %s154, 0
    %s157 = sadd.s32 %s156, 1
    %s158 = scalar_select %p155, %s156, %s157
    %p161 = pneg %p155
    %p162 = scmp.eq.s32.totalorder %s16, 1
    %p163 = por %p161, %p162
    %p164 = scmp.ne.s32.totalorder %s156, %s159
    %p165 = scmp.eq.s32.totalorder %s16, 0
    %p166 = por %p164, %p165
    %p167 = scmp.ne.s32.totalorder %s156, %s159
    %p168 = scmp.eq.s32.totalorder %s21, 1
    %p169 = por %p167, %p168
    %p170 = scmp.ne.s32.totalorder %s159, %s160
    %p171 = scmp.eq.s32.totalorder %s21, 0
    %p172 = por %p170, %p171
    %p173 = scmp.ne.s32.totalorder %s159, %s160
    %p174 = scmp.eq.s32.totalorder %s22, 1
    %p175 = por %p173, %p174
    %p177 = scmp.ne.s32.totalorder %s160, %s176
    %p178 = scmp.eq.s32.totalorder %s22, 0
    %p179 = por %p177, %p178
    %s181 = sadd.s32 %s180, 1
    %p184 = scmp.eq.s32.totalorder %s16, 1
    %p185 = scmp.ne.s32.totalorder %s180, %s182
    %p186 = scmp.eq.s32.totalorder %s16, 0
    %p187 = por %p185, %p186
    %p188 = scmp.ne.s32.totalorder %s180, %s182
    %p189 = scmp.eq.s32.totalorder %s21, 1
    %p190 = por %p188, %p189
    %p191 = scmp.ne.s32.totalorder %s182, %s183
    %p192 = scmp.eq.s32.totalorder %s21, 0
    %p193 = por %p191, %p192
    %p194 = scmp.ne.s32.totalorder %s182, %s183
    %p195 = scmp.eq.s32.totalorder %s22, 1
    %p196 = por %p194, %p195
    %p198 = scmp.ne.s32.totalorder %s183, %s197
    %p199 = scmp.eq.s32.totalorder %s22, 0
    %p200 = por %p198, %p199
    %s202 = sadd.s32 %s201, 1
    %p205 = scmp.eq.s32.totalorder %s16, 1
    %p206 = scmp.ne.s32.totalorder %s201, %s203
    %p207 = scmp.eq.s32.totalorder %s16, 0
    %p208 = por %p206, %p207
    %p209 = scmp.ne.s32.totalorder %s201, %s203
    %p210 = scmp.eq.s32.totalorder %s21, 1
    %p211 = por %p209, %p210
    %p212 = scmp.ne.s32.totalorder %s203, %s204
    %p213 = scmp.eq.s32.totalorder %s21, 0
    %p214 = por %p212, %p213
    %p215 = scmp.ne.s32.totalorder %s203, %s204
    %p216 = scmp.eq.s32.totalorder %s22, 1
    %p217 = por %p215, %p216
    %p219 = scmp.ne.s32.totalorder %s204, %s218
    %p220 = scmp.eq.s32.totalorder %s22, 0
    %p221 = por %p219, %p220
    %s223 = sadd.s32 %s222, 1
    %p226 = scmp.eq.s32.totalorder %s16, 1
    %p227 = scmp.ne.s32.totalorder %s222, %s224
    %p228 = scmp.eq.s32.totalorder %s16, 0
    %p229 = por %p227, %p228
    %p230 = scmp.ne.s32.totalorder %s222, %s224
    %p231 = scmp.eq.s32.totalorder %s21, 1
    %p232 = por %p230, %p231
    %p233 = scmp.ne.s32.totalorder %s224, %s225
    %p234 = scmp.eq.s32.totalorder %s21, 0
    %p235 = por %p233, %p234
    %p236 = scmp.ne.s32.totalorder %s224, %s225
    %p237 = scmp.eq.s32.totalorder %s22, 1
    %p238 = por %p236, %p237
    %p240 = scmp.ne.s32.totalorder %s225, %s239
    %p241 = scmp.eq.s32.totalorder %s22, 0
    %p242 = por %p240, %p241
    %s244 = sadd.s32 %s243, 1
    %p247 = scmp.eq.s32.totalorder %s16, 1
    %p248 = scmp.ne.s32.totalorder %s243, %s245
    %p249 = scmp.eq.s32.totalorder %s16, 0
    %p250 = por %p248, %p249
    %p251 = scmp.ne.s32.totalorder %s243, %s245
    %p252 = scmp.eq.s32.totalorder %s21, 1
    %p253 = por %p251, %p252
    %p254 = scmp.ne.s32.totalorder %s245, %s246
    %p255 = scmp.eq.s32.totalorder %s21, 0
    %p256 = por %p254, %p255
    %p257 = scmp.ne.s32.totalorder %s245, %s246
    %p258 = scmp.eq.s32.totalorder %s22, 1
    %p259 = por %p257, %p258
    %p261 = scmp.ne.s32.totalorder %s246, %s260
    %p262 = scmp.eq.s32.totalorder %s22, 0
    %p263 = por %p261, %p262
    %s264 = ssub.s32 %s16, %s23
    %p265 = scmp.eq.s32.totalorder %s264, 0
    %s267 = sadd.s32 %s266, 1
    %s268 = scalar_select %p265, %s266, %s267
    %p271 = pneg %p265
    %p272 = scmp.eq.s32.totalorder %s16, 1
    %p273 = por %p271, %p272
    %p274 = scmp.ne.s32.totalorder %s266, %s269
    %p275 = scmp.eq.s32.totalorder %s16, 0
    %p276 = por %p274, %p275
    %p277 = scmp.ne.s32.totalorder %s266, %s269
    %p278 = scmp.eq.s32.totalorder %s21, 1
    %p279 = por %p277, %p278
    %p280 = scmp.ne.s32.totalorder %s269, %s270
    %p281 = scmp.eq.s32.totalorder %s21, 0
    %p282 = por %p280, %p281
    %p283 = scmp.ne.s32.totalorder %s269, %s270
    %p284 = scmp.eq.s32.totalorder %s22, 1
    %p285 = por %p283, %p284
    %p287 = scmp.ne.s32.totalorder %s270, %s286
    %p288 = scmp.eq.s32.totalorder %s22, 0
    %p289 = por %p287, %p288
    %p290 = scmp.le.s32.totalorder 1, %s16
    %p291 = scmp.lt.s32.totalorder %s16, 3
    %p292 = pnand %p290, %p291
    %p293 = pneg %p292
    // Predicated region
    $region9: #{forward.3} parent=5 // pred_check
      _
    $region10: #{forward.3} parent=5 // pred_check_branch
      %295 = sbr.rel (%p292) target = $region12
    $region11: #{forward.3} parent=5 // pred_region
      %s296 = ssub.s32 %s16, 1
      // Predicated region
      $region13: #{forward.3} parent=11 // pred_check
        %p297 = pneg %p193
      $region14: #{forward.3} parent=11 // pred_check_branch
        %299 = sbr.rel (%p297) target = $region16
      $region15: #{forward.3} parent=11 // pred_region
        _
      $region16: #{forward.3} parent=11 // pred_fallthru
        _
      // Predicated region
      $region17: #{forward.3} parent=11 // pred_check
        %p300 = pneg %p214
      $region18: #{forward.3} parent=11 // pred_check_branch
        %302 = sbr.rel (%p300) target = $region20
      $region19: #{forward.3} parent=11 // pred_region
        _
      $region20: #{forward.3} parent=11 // pred_fallthru
        _
      // Predicated region
      $region21: #{forward.3} parent=11 // pred_check
        %p303 = pneg %p235
      $region22: #{forward.3} parent=11 // pred_check_branch
        %305 = sbr.rel (%p303) target = $region24
      $region23: #{forward.3} parent=11 // pred_region
        _
      $region24: #{forward.3} parent=11 // pred_fallthru
        _
      // Predicated region
      $region25: #{forward.3} parent=11 // pred_check
        %p306 = pneg %p256
      $region26: #{forward.3} parent=11 // pred_check_branch
        %308 = sbr.rel (%p306) target = $region28
      $region27: #{forward.3} parent=11 // pred_region
        _
      $region28: #{forward.3} parent=11 // pred_fallthru
        _
    $region12: #{forward.3} parent=5 // pred_fallthru
      _
    %p309 = scmp.lt.s32.totalorder %s16, 2
    // Predicated region
    $region29: #{forward.3} parent=5 // pred_check
      %p310 = pneg %p309
    $region30: #{forward.3} parent=5 // pred_check_branch
      %312 = sbr.rel (%p310) target = $region32
    $region31: #{forward.3} parent=5 // pred_region
      // Predicated region
      $region33: #{forward.3} parent=31 // pred_check
        %p313 = pneg %p36
      $region34: #{forward.3} parent=31 // pred_check_branch
        %315 = sbr.rel (%p313) target = $region36
      $region35: #{forward.3} parent=31 // pred_region
        %p316 = scmp.lt.s32.totalorder %s16, 1
        %s317 = scalar_select %p316, %s16, 1
        %s318 = smul.addr %s317, 8
        %s319 = scalar_lea.vmem %s0, %s318
      $region36: #{forward.3} parent=31 // pred_fallthru
        _
      // Predicated region
      $region37: #{forward.3} parent=31 // pred_check
        %p320 = pneg %p62
      $region38: #{forward.3} parent=31 // pred_check_branch
        %322 = sbr.rel (%p320) target = $region40
      $region39: #{forward.3} parent=31 // pred_region
        %p323 = scmp.lt.s32.totalorder %s16, 1
        %s324 = scalar_select %p323, %s16, 1
        %s325 = smul.addr %s324, 8
        %s326 = scalar_lea.vmem %s1, %s325
      $region40: #{forward.3} parent=31 // pred_fallthru
        _
      // Predicated region
      $region41: #{forward.3} parent=31 // pred_check
        %p327 = pneg %p88
      $region42: #{forward.3} parent=31 // pred_check_branch
        %329 = sbr.rel (%p327) target = $region44
      $region43: #{forward.3} parent=31 // pred_region
        %p330 = scmp.lt.s32.totalorder %s16, 1
        %s331 = scalar_select %p330, %s16, 1
        %s332 = smul.addr %s331, 32
        %s333 = smul.addr %s332, 4
        %s334 = scalar_lea.vmem %s2, %s333
      $region44: #{forward.3} parent=31 // pred_fallthru
        _
      // Predicated region
      $region45: #{forward.3} parent=31 // pred_check
        %p335 = pneg %p114
      $region46: #{forward.3} parent=31 // pred_check_branch
        %337 = sbr.rel (%p335) target = $region48
      $region47: #{forward.3} parent=31 // pred_region
        %p338 = scmp.lt.s32.totalorder %s16, 1
        %s339 = scalar_select %p338, %s16, 1
        %s340 = smul.addr %s339, 16
        %s341 = smul.addr %s340, 4
        %s342 = scalar_lea.vmem %s3, %s341
      $region48: #{forward.3} parent=31 // pred_fallthru
        _
      // Predicated region
      $region49: #{forward.3} parent=31 // pred_check
        %p343 = pneg %p140
      $region50: #{forward.3} parent=31 // pred_check_branch
        %345 = sbr.rel (%p343) target = $region52
      $region51: #{forward.3} parent=31 // pred_region
        %p346 = scmp.lt.s32.totalorder %s16, 1
        %s347 = scalar_select %p346, %s16, 1
        %s348 = smul.addr %s347, 6
        %s349 = smul.addr %s348, 4
        %s350 = scalar_lea.vmem %s4, %s349
      $region52: #{forward.3} parent=31 // pred_fallthru
        _
      // Predicated region
      $region53: #{forward.3} parent=31 // pred_check
        %p351 = pneg %p166
      $region54: #{forward.3} parent=31 // pred_check_branch
        %353 = sbr.rel (%p351) target = $region56
      $region55: #{forward.3} parent=31 // pred_region
        %p354 = scmp.lt.s32.totalorder %s16, 1
        %s355 = scalar_select %p354, %s16, 1
        %s356 = smul.addr %s355, 8
        %s357 = scalar_lea.vmem %s5, %s356
      $region56: #{forward.3} parent=31 // pred_fallthru
        _
    $region32: #{forward.3} parent=5 // pred_fallthru
      _
    %p358 = scmp.le.s32.totalorder 1, %s16
    %p359 = scmp.lt.s32.totalorder %s16, 3
    %p360 = pnand %p358, %p359
    %p361 = pneg %p360
    // Predicated region
    $region57: #{forward.3} parent=5 // pred_check
      _
    $region58: #{forward.3} parent=5 // pred_check_branch
      %363 = sbr.rel (%p360) target = $region60
    $region59: #{forward.3} parent=5 // pred_region
      %s364 = ssub.s32 %s16, 1
      %p365 = scmp.lt.s32.totalorder %s21, 1
      %s366 = scalar_select %p365, %s21, 1
      %s367 = smul.addr %s366, 8
      %s368 = scalar_lea.vmem %s0, %s367
      %p369 = pneg %p42
      %p370 = pneg %p39
      %p371 = scmp.lt.s32.totalorder %s21, 1
      %s372 = scalar_select %p371, %s21, 1
      %s373 = smul.addr %s372, 8
      %s374 = scalar_lea.vmem %s1, %s373
      %p375 = pneg %p68
      %p376 = pneg %p65
      %p377 = scmp.lt.s32.totalorder %s21, 1
      %s378 = scalar_select %p377, %s21, 1
      %s379 = smul.addr %s378, 32
      %s380 = smul.addr %s379, 4
      %s381 = scalar_lea.vmem %s2, %s380
      %p382 = pneg %p94
      %p383 = pneg %p91
      %p384 = scmp.lt.s32.totalorder %s21, 1
      %s385 = scalar_select %p384, %s21, 1
      %s386 = smul.addr %s385, 16
      %s387 = smul.addr %s386, 4
      %s388 = scalar_lea.vmem %s3, %s387
      %p389 = pneg %p120
      %p390 = pneg %p117
      %p391 = scmp.lt.s32.totalorder %s21, 1
      %s392 = scalar_select %p391, %s21, 1
      %s393 = smul.addr %s392, 6
      %s394 = smul.addr %s393, 4
      %s395 = scalar_lea.vmem %s4, %s394
      %p396 = pneg %p146
      %p397 = pneg %p143
      %p398 = scmp.lt.s32.totalorder %s21, 1
      %s399 = scalar_select %p398, %s21, 1
      %s400 = smul.addr %s399, 8
      %s401 = scalar_lea.vmem %s5, %s400
      %p402 = pneg %p172
      %p403 = pneg %p169
      %p404 = pneg %p193
      %p405 = pneg %p190
      %p406 = pneg %p214
      %p407 = pneg %p211
      %p408 = pneg %p235
      %p409 = pneg %p232
      %p410 = pneg %p256
      %p411 = pneg %p253
      %p412 = pneg %p282
      %p413 = pneg %p279
      %p414 = scmp.lt.s32.totalorder %s21, 1
      %s415 = scalar_select %p414, %s21, 1
      %s416 = smul.addr %s415, 3
      %s417 = smul.addr %s416, 8
      %s418 = scalar_lea.vmem %s10, %s417
      %p419 = scmp.lt.s32.totalorder %s21, 1
      %s420 = scalar_select %p419, %s21, 1
      %s421 = smul.addr %s420, 8
      %s422 = scalar_lea.vmem %s0, %s421
      %p423 = scmp.lt.s32.totalorder %s21, 1
      %s424 = scalar_select %p423, %s21, 1
      %s425 = smul.addr %s424, 8
      %s426 = scalar_lea.vmem %s1, %s425
      %p427 = scmp.lt.s32.totalorder %s21, 1
      %s428 = scalar_select %p427, %s21, 1
      %s429 = smul.addr %s428, 32
      %s430 = smul.addr %s429, 4
      %s431 = scalar_lea.vmem %s2, %s430
      %p432 = scmp.lt.s32.totalorder %s21, 1
      %s433 = scalar_select %p432, %s21, 1
      %s434 = smul.addr %s433, 16
      %s435 = smul.addr %s434, 4
      %s436 = scalar_lea.vmem %s3, %s435
      %p437 = scmp.lt.s32.totalorder %s21, 1
      %s438 = scalar_select %p437, %s21, 1
      %s439 = smul.addr %s438, 6
      %s440 = smul.addr %s439, 4
      %s441 = scalar_lea.vmem %s4, %s440
      %p442 = scmp.lt.s32.totalorder %s21, 1
      %s443 = scalar_select %p442, %s21, 1
      %s444 = smul.addr %s443, 8
      %s445 = scalar_lea.vmem %s5, %s444
      %p446 = scmp.lt.s32.totalorder %s21, 1
      %s447 = scalar_select %p446, %s21, 1
      %s448 = smul.addr %s447, 3
      %s449 = smul.addr %s448, 8
      %s450 = scalar_lea.vmem %s10, %s449
      %v452 = vld [vmem:[%s9] sm:$0xff]
      %v453 = vld [vmem:[%s9 + $0x8] sm:$0xff]
      %v454 = vld [vmem:[%s9 + $0x10] sm:$0xff]
      %v455 = vld [vmem:[%s6] sm:$0xff]
      %v456 = vld [vmem:[%s6 + $0x8] sm:$0xff]
      %v457 = vld [vmem:[%s6 + $0x10] sm:$0xff]
      %v458 = vld [vmem:[%s422] sm:$0xff]
      %459 = vadd.xlane.f32.xlu0 %v458
      %v460 = vpop.xlane.xlu0 %459
      %v461 = vrcp.pop 128.0
      %v462 = vmul.f32 %v460, %v461
      %v463 = vsub.f32 %v458, %v462
      %v464 = vmul.f32 %v463, %v463
      %465 = vadd.xlane.f32.xlu0 %v464
      %v466 = vpop.xlane.xlu0 %465
      %v467 = vmul.f32 %v466, %v461
      %v468 = vadd.f32 %v467, 1e-05
      %v469 = vrsqrt.pop %v468
      %v470 = vmul.f32 %v463, %v469
      %v471 = vlaneseq
      %v472 = vshrl.u32 %v471, 7
      %v473 = vsub.s32 0, %v472
      %v474 = vrot.slane %v454, %v473
      %v475 = vmul.f32 %v470, %v474
      %v476 = vlaneseq
      %v477 = vshrl.u32 %v476, 7
      %v478 = vsub.s32 1, %v477
      %v479 = vrot.slane %v454, %v478
      %v480 = vadd.f32 %v475, %v479
      %v481 = vadd.f32 %v480, %v455
      %v482 = vld [vmem:[%s426] sm:$0xff]
      %483 = vadd.xlane.f32.xlu0 %v482
      %v484 = vpop.xlane.xlu0 %483
      %v485 = vmul.f32 %v484, %v461
      %v486 = vsub.f32 %v482, %v485
      %v487 = vmul.f32 %v486, %v486
      %488 = vadd.xlane.f32.xlu0 %v487
      %v489 = vpop.xlane.xlu0 %488
      %v490 = vmul.f32 %v489, %v461
      %v491 = vadd.f32 %v490, 1e-05
      %v492 = vrsqrt.pop %v491
      %v493 = vmul.f32 %v486, %v492
      %v494 = vmul.f32 %v493, %v474
      %v495 = vadd.f32 %v494, %v479
      %v496 = vadd.f32 %v495, %v457
      %v497 = vld [vmem:[%s431] sm:$0xf]
      %v498 = vld [vmem:[%s431 + $0x4] sm:$0xf]
      %v499 = vld [vmem:[%s431 + $0x8] sm:$0xf]
      %v500 = vld [vmem:[%s431 + $0xc] sm:$0xf]
      %v501 = vld [vmem:[%s431 + $0x10] sm:$0xf]
      %v502 = vld [vmem:[%s431 + $0x14] sm:$0xf]
      %v503 = vld [vmem:[%s431 + $0x18] sm:$0xf]
      %v504 = vld [vmem:[%s431 + $0x1c] sm:$0xf]
      %v505 = vld [vmem:[%s431 + $0x20] sm:$0xf]
      %v506 = vld [vmem:[%s431 + $0x24] sm:$0xf]
      %v507 = vld [vmem:[%s431 + $0x28] sm:$0xf]
      %v508 = vld [vmem:[%s431 + $0x2c] sm:$0xf]
      %v509 = vld [vmem:[%s431 + $0x30] sm:$0xf]
      %v510 = vld [vmem:[%s431 + $0x34] sm:$0xf]
      %v511 = vld [vmem:[%s431 + $0x38] sm:$0xf]
      %v512 = vld [vmem:[%s431 + $0x3c] sm:$0xf]
      %v513 = vld [vmem:[%s431 + $0x40] sm:$0xf]
      %v514 = vld [vmem:[%s431 + $0x44] sm:$0xf]
      %v515 = vld [vmem:[%s431 + $0x48] sm:$0xf]
      %v516 = vld [vmem:[%s431 + $0x4c] sm:$0xf]
      %v517 = vld [vmem:[%s431 + $0x50] sm:$0xf]
      %v518 = vld [vmem:[%s431 + $0x54] sm:$0xf]
      %v519 = vld [vmem:[%s431 + $0x58] sm:$0xf]
      %v520 = vld [vmem:[%s431 + $0x5c] sm:$0xf]
      %v521 = vld [vmem:[%s431 + $0x60] sm:$0xf]
      %v522 = vld [vmem:[%s431 + $0x64] sm:$0xf]
      %v523 = vld [vmem:[%s431 + $0x68] sm:$0xf]
      %v524 = vld [vmem:[%s431 + $0x6c] sm:$0xf]
      %v525 = vld [vmem:[%s431 + $0x70] sm:$0xf]
      %v526 = vld [vmem:[%s431 + $0x74] sm:$0xf]
      %v527 = vld [vmem:[%s431 + $0x78] sm:$0xf]
      %v528 = vld [vmem:[%s431 + $0x7c] sm:$0xf]
      %v529 = vld [vmem:[%s436] sm:$0xf]
      %v530 = vld [vmem:[%s436 + $0x4] sm:$0xf]
      %v531 = vld [vmem:[%s436 + $0x8] sm:$0xf]
      %v532 = vld [vmem:[%s436 + $0xc] sm:$0xf]
      %v533 = vld [vmem:[%s436 + $0x10] sm:$0xf]
      %v534 = vld [vmem:[%s436 + $0x14] sm:$0xf]
      %v535 = vld [vmem:[%s436 + $0x18] sm:$0xf]
      %v536 = vld [vmem:[%s436 + $0x1c] sm:$0xf]
      %v537 = vld [vmem:[%s436 + $0x20] sm:$0xf]
      %v538 = vld [vmem:[%s436 + $0x24] sm:$0xf]
      %v539 = vld [vmem:[%s436 + $0x28] sm:$0xf]
      %v540 = vld [vmem:[%s436 + $0x2c] sm:$0xf]
      %v541 = vld [vmem:[%s436 + $0x30] sm:$0xf]
      %v542 = vld [vmem:[%s436 + $0x34] sm:$0xf]
      %v543 = vld [vmem:[%s436 + $0x38] sm:$0xf]
      %v544 = vld [vmem:[%s436 + $0x3c] sm:$0xf]
      %v545 = vld [vmem:[%s441] sm:$0xf]
      %v546 = vld [vmem:[%s441 + $0x4] sm:$0xf]
      %v547 = vld [vmem:[%s441 + $0x8] sm:$0xf]
      %v548 = vld [vmem:[%s441 + $0xc] sm:$0xf]
      %v549 = vld [vmem:[%s441 + $0x10] sm:$0xf]
      %v550 = vld [vmem:[%s441 + $0x14] sm:$0xf]
      %v551 = vlaneseq
      %v552 = vand.u32 %v551, 127
      %v553 = vadd.s32 %v552, 128
      %v554 = vld [vmem:[%s445] sm:$0xff]
      %vm555 = vcmp.eq.s32.totalorder %v552, 0
      %v556 = vsel %vm555, %v554, 0.0
      %557 = vadd.xlane.f32.xlu0 %v556
      %v558 = vpop.xlane.xlu0 %557
      %vm559 = vcmp.eq.s32.totalorder %v552, 1
      %v560 = vsel %vm559, %v554, 0.0
      %561 = vadd.xlane.f32.xlu0 %v560
      %v562 = vpop.xlane.xlu0 %561
      %v563 = vmax.f32 %v558, 0.0
      %v564 = vmin.f32 %v563, 15.0
      %v565 = vmax.f32 %v562, 0.0
      %v566 = vmin.f32 %v565, 15.0
      %v567 = vcvt.f32.s32.to.zero.pseudo %v564
      %v568 = vmul.u32 %v567, 16
      %v569 = vcvt.f32.s32.to.zero.pseudo %v566
      %v570 = vadd.s32 %v568, %v569
      %vm571 = vcmp.eq.s32.totalorder %v552, %v570
      %vm572 = vcmp.eq.s32.totalorder %v553, %v570
      %v573 = vsel %vm571, 1, 0
      %v574 = vsel %vm572, 1, 0
      %v575 = vcvt.s32.f32 %v573
      %v576 = vcvt.s32.f32 %v574
      %v577 = vpack.c.bf16 %v575, %v575
      %v578 = vpack.c.bf16 %v576, %v576
      %v611 = vunpack.c.l.b16 %v497
      %v612 = vunpack.c.l.b16 %v498
      %v613 = vunpack.c.l.b16 %v499
      %v614 = vunpack.c.l.b16 %v500
      %v615 = vunpack.c.l.b16 %v501
      %v616 = vunpack.c.l.b16 %v502
      %v617 = vunpack.c.l.b16 %v503
      %v618 = vunpack.c.l.b16 %v504
      %v619 = vunpack.c.l.b16 %v505
      %v620 = vunpack.c.l.b16 %v506
      %v621 = vunpack.c.l.b16 %v507
      %v622 = vunpack.c.l.b16 %v508
      %v623 = vunpack.c.l.b16 %v509
      %v624 = vunpack.c.l.b16 %v510
      %v625 = vunpack.c.l.b16 %v511
      %v626 = vunpack.c.l.b16 %v512
      %v627 = vunpack.c.l.b16 %v513
      %v628 = vunpack.c.l.b16 %v514
      %v629 = vunpack.c.l.b16 %v515
      %v630 = vunpack.c.l.b16 %v516
      %v631 = vunpack.c.l.b16 %v517
      %v632 = vunpack.c.l.b16 %v518
      %v633 = vunpack.c.l.b16 %v519
      %v634 = vunpack.c.l.b16 %v520
      %v635 = vunpack.c.l.b16 %v521
      %v636 = vunpack.c.l.b16 %v522
      %v637 = vunpack.c.l.b16 %v523
      %v638 = vunpack.c.l.b16 %v524
      %v639 = vunpack.c.l.b16 %v525
      %v640 = vunpack.c.l.b16 %v526
      %v641 = vunpack.c.l.b16 %v527
      %v642 = vunpack.c.l.b16 %v528
      %v643 = vpack.c.b16 %v612, %v611
      %v644 = vpack.c.b16 %v614, %v613
      %v645 = vpack.c.b16 %v616, %v615
      %v646 = vpack.c.b16 %v618, %v617
      %v647 = vpack.c.b16 %v620, %v619
      %v648 = vpack.c.b16 %v622, %v621
      %v649 = vpack.c.b16 %v624, %v623
      %v650 = vpack.c.b16 %v626, %v625
      %v651 = vpack.c.b16 %v628, %v627
      %v652 = vpack.c.b16 %v630, %v629
      %v653 = vpack.c.b16 %v632, %v631
      %v654 = vpack.c.b16 %v634, %v633
      %v655 = vpack.c.b16 %v636, %v635
      %v656 = vpack.c.b16 %v638, %v637
      %v657 = vpack.c.b16 %v640, %v639
      %v658 = vpack.c.b16 %v642, %v641
      %675 = vmatprep.subr.bf16.mxu0 0
      %676 = vmatpush1.bf16.msra.mxu0 %v643
      %677 = vmatprep.subr.bf16.mxu0 0
      %678 = vmatpush1.bf16.msra.mxu0 %v644
      %679 = vmatprep.subr.bf16.mxu0 0
      %680 = vmatpush1.bf16.msra.mxu0 %v645
      %681 = vmatprep.subr.bf16.mxu0 0
      %682 = vmatpush1.bf16.msra.mxu0 %v646
      %683 = vmatprep.subr.bf16.mxu0 0
      %684 = vmatpush1.bf16.msra.mxu0 %v647
      %685 = vmatprep.subr.bf16.mxu0 0
      %686 = vmatpush1.bf16.msra.mxu0 %v648
      %687 = vmatprep.subr.bf16.mxu0 0
      %688 = vmatpush1.bf16.msra.mxu0 %v649
      %689 = vmatprep.subr.bf16.mxu0 0
      %690 = vmatpush1.bf16.msra.mxu0 %v650
      %691 = vmatprep.subr.bf16.mxu0 0
      %692 = vmatpush1.bf16.msra.mxu0 %v651
      %693 = vmatprep.subr.bf16.mxu0 0
      %694 = vmatpush1.bf16.msra.mxu0 %v652
      %695 = vmatprep.subr.bf16.mxu0 0
      %696 = vmatpush1.bf16.msra.mxu0 %v653
      %697 = vmatprep.subr.bf16.mxu0 0
      %698 = vmatpush1.bf16.msra.mxu0 %v654
      %699 = vmatprep.subr.bf16.mxu0 0
      %700 = vmatpush1.bf16.msra.mxu0 %v655
      %701 = vmatprep.subr.bf16.mxu0 0
      %702 = vmatpush1.bf16.msra.mxu0 %v656
      %703 = vmatprep.subr.bf16.mxu0 0
      %704 = vmatpush1.bf16.msra.mxu0 %v657
      %705 = vmatprep.subr.bf16.mxu0 0
      %706 = vmatpush1.bf16.msra.mxu0 %v658
      %707 = vmatprep.mubr.bf16.mxu0 %v578
      %708 = vmatmul.mubr.bf16.gmra.mrb[0].mxu0 %v577
      %v709 = vpop.f32.mrb[0].mxu0
      %v710 = vadd.f32 0.0, %v709
      %v711 = vpop.f32.mrb[0].mxu0
      %v712 = vpop.f32.mrb[0].mxu0
      %v713 = vpop.f32.mrb[0].mxu0
      %714 = vdwg.mxu0
      %vm715 = vcmp.lt.s32.totalorder %v552, 126
      %v716 = vsel %vm715, %v710, 0.0
      %vm717 = vcmp.eq.s32.totalorder %v552, 126
      %v718 = vsel %vm717, %v564, 0.0
      %v719 = vadd.f32 %v716, %v718
      %vm720 = vcmp.eq.s32.totalorder %v552, 127
      %v721 = vsel %vm720, %v566, 0.0
      %v722 = vadd.f32 %v719, %v721
      %723 = vadd.xlane.f32.xlu0 %v722
      %v724 = vpop.xlane.xlu0 %723
      %v725 = vmul.f32 %v724, %v461
      %v726 = vsub.f32 %v722, %v725
      %v727 = vmul.f32 %v726, %v726
      %728 = vadd.xlane.f32.xlu0 %v727
      %v729 = vpop.xlane.xlu0 %728
      %v730 = vmul.f32 %v729, %v461
      %v731 = vadd.f32 %v730, 1e-05
      %v732 = vrsqrt.pop %v731
      %v733 = vmul.f32 %v726, %v732
      %v734 = vmul.f32 %v733, %v474
      %v735 = vadd.f32 %v734, %v479
      %v736 = vadd.f32 %v735, %v456
      %v737 = vld [vmem:[%s7] sm:$0xff]
      %v738 = vld [vmem:[%s7 + $0x8] sm:$0xf]
      %v739 = vld [vmem:[%s7 + $0xc] sm:$0xff]
      %v740 = vld [vmem:[%s7 + $0x14] sm:$0xf]
      %v741 = vld [vmem:[%s7 + $0x18] sm:$0xff]
      %v742 = vld [vmem:[%s7 + $0x20] sm:$0xf]
      %v743 = vld [vmem:[%s7 + $0x24] sm:$0xff]
      %v744 = vld [vmem:[%s7 + $0x2c] sm:$0xf]
      %v745 = vld [vmem:[%s7 + $0x30] sm:$0xff]
      %v746 = vld [vmem:[%s7 + $0x38] sm:$0xf]
      %v747 = vld [vmem:[%s7 + $0x3c] sm:$0xff]
      %v748 = vld [vmem:[%s7 + $0x44] sm:$0xf]
      %v749 = vld [vmem:[%s7 + $0x48] sm:$0xff]
      %v750 = vld [vmem:[%s7 + $0x50] sm:$0xf]
      %v751 = vld [vmem:[%s7 + $0x54] sm:$0xff]
      %v752 = vld [vmem:[%s7 + $0x5c] sm:$0xf]
      %v753 = vld [vmem:[%s7 + $0x60] sm:$0xff]
      %v754 = vld [vmem:[%s7 + $0x68] sm:$0xf]
      %v755 = vld [vmem:[%s7 + $0x6c] sm:$0xff]
      %v756 = vld [vmem:[%s7 + $0x74] sm:$0xf]
      %v757 = vld [vmem:[%s7 + $0x78] sm:$0xff]
      %v758 = vld [vmem:[%s7 + $0x80] sm:$0xf]
      %v759 = vld [vmem:[%s7 + $0x84] sm:$0xff]
      %v760 = vld [vmem:[%s7 + $0x8c] sm:$0xf]
      %v761 = vld [vmem:[%s7 + $0x90] sm:$0xff]
      %v762 = vld [vmem:[%s7 + $0x98] sm:$0xf]
      %v763 = vld [vmem:[%s7 + $0x9c] sm:$0xff]
      %v764 = vld [vmem:[%s7 + $0xa4] sm:$0xf]
      %v765 = vld [vmem:[%s7 + $0xa8] sm:$0xff]
      %v766 = vld [vmem:[%s7 + $0xb0] sm:$0xf]
      %v767 = vld [vmem:[%s7 + $0xb4] sm:$0xff]
      %v768 = vld [vmem:[%s7 + $0xbc] sm:$0xf]
      %v769 = vpack.c.bf16 %v736, %v481
      %v770 = vpack.c.bf16 %v496, %v496
      %v803 = vunpack.c.l.b16 %v737
      %v804 = vunpack.c.h.b16 %v737
      %v805 = vunpack.c.l.b16 %v738
      %v806 = vunpack.c.l.b16 %v739
      %v807 = vunpack.c.h.b16 %v739
      %v808 = vunpack.c.l.b16 %v740
      %v809 = vunpack.c.l.b16 %v741
      %v810 = vunpack.c.h.b16 %v741
      %v811 = vunpack.c.l.b16 %v742
      %v812 = vunpack.c.l.b16 %v743
      %v813 = vunpack.c.h.b16 %v743
      %v814 = vunpack.c.l.b16 %v744
      %v815 = vunpack.c.l.b16 %v745
      %v816 = vunpack.c.h.b16 %v745
      %v817 = vunpack.c.l.b16 %v746
      %v818 = vunpack.c.l.b16 %v747
      %v819 = vunpack.c.h.b16 %v747
      %v820 = vunpack.c.l.b16 %v748
      %v821 = vunpack.c.l.b16 %v749
      %v822 = vunpack.c.h.b16 %v749
      %v823 = vunpack.c.l.b16 %v750
      %v824 = vunpack.c.l.b16 %v751
      %v825 = vunpack.c.h.b16 %v751
      %v826 = vunpack.c.l.b16 %v752
      %v827 = vunpack.c.l.b16 %v753
      %v828 = vunpack.c.h.b16 %v753
      %v829 = vunpack.c.l.b16 %v754
      %v830 = vunpack.c.l.b16 %v755
      %v831 = vunpack.c.h.b16 %v755
      %v832 = vunpack.c.l.b16 %v756
      %v833 = vunpack.c.l.b16 %v757
      %v834 = vunpack.c.h.b16 %v757
      %v835 = vunpack.c.l.b16 %v758
      %v836 = vunpack.c.l.b16 %v759
      %v837 = vunpack.c.h.b16 %v759
      %v838 = vunpack.c.l.b16 %v760
      %v839 = vunpack.c.l.b16 %v761
      %v840 = vunpack.c.h.b16 %v761
      %v841 = vunpack.c.l.b16 %v762
      %v842 = vunpack.c.l.b16 %v763
      %v843 = vunpack.c.h.b16 %v763
      %v844 = vunpack.c.l.b16 %v764
      %v845 = vunpack.c.l.b16 %v765
      %v846 = vunpack.c.h.b16 %v765
      %v847 = vunpack.c.l.b16 %v766
      %v848 = vunpack.c.l.b16 %v767
      %v849 = vunpack.c.h.b16 %v767
      %v850 = vunpack.c.l.b16 %v768
      %v851 = vpack.c.b16 %v806, %v803
      %v852 = vpack.c.b16 %v807, %v804
      %v853 = vpack.c.b16 %v808, %v805
      %v854 = vpack.c.b16 %v812, %v809
      %v855 = vpack.c.b16 %v813, %v810
      %v856 = vpack.c.b16 %v814, %v811
      %v857 = vpack.c.b16 %v818, %v815
      %v858 = vpack.c.b16 %v819, %v816
      %v859 = vpack.c.b16 %v820, %v817
      %v860 = vpack.c.b16 %v824, %v821
      %v861 = vpack.c.b16 %v825, %v822
      %v862 = vpack.c.b16 %v826, %v823
      %v863 = vpack.c.b16 %v830, %v827
      %v864 = vpack.c.b16 %v831, %v828
      %v865 = vpack.c.b16 %v832, %v829
      %v866 = vpack.c.b16 %v836, %v833
      %v867 = vpack.c.b16 %v837, %v834
      %v868 = vpack.c.b16 %v838, %v835
      %v869 = vpack.c.b16 %v842, %v839
      %v870 = vpack.c.b16 %v843, %v840
      %v871 = vpack.c.b16 %v844, %v841
      %v872 = vpack.c.b16 %v848, %v845
      %v873 = vpack.c.b16 %v849, %v846
      %v874 = vpack.c.b16 %v850, %v847
      %899 = vmatprep.subr.bf16.mxu0 %v852
      %900 = vmatpush1.bf16.msra.mxu0 %v851
      %901 = vmatprep.subr.bf16.mxu0 %v855
      %902 = vmatpush1.bf16.msra.mxu0 %v854
      %903 = vmatprep.subr.bf16.mxu0 %v858
      %904 = vmatpush1.bf16.msra.mxu0 %v857
      %905 = vmatprep.subr.bf16.mxu0 %v861
      %906 = vmatpush1.bf16.msra.mxu0 %v860
      %907 = vmatprep.subr.bf16.mxu0 %v864
      %908 = vmatpush1.bf16.msra.mxu0 %v863
      %909 = vmatprep.subr.bf16.mxu0 %v867
      %910 = vmatpush1.bf16.msra.mxu0 %v866
      %911 = vmatprep.subr.bf16.mxu0 %v870
      %912 = vmatpush1.bf16.msra.mxu0 %v869
      %913 = vmatprep.subr.bf16.mxu0 %v873
      %914 = vmatpush1.bf16.msra.mxu0 %v872
      %915 = vmatprep.subr.bf16.mxu0 0
      %916 = vmatpush1.bf16.msra.mxu0 0
      %917 = vmatprep.subr.bf16.mxu0 0
      %918 = vmatpush1.bf16.msra.mxu0 0
      %919 = vmatprep.subr.bf16.mxu0 0
      %920 = vmatpush1.bf16.msra.mxu0 0
      %921 = vmatprep.subr.bf16.mxu0 0
      %922 = vmatpush1.bf16.msra.mxu0 0
      %923 = vmatprep.subr.bf16.mxu0 0
      %924 = vmatpush1.bf16.msra.mxu0 0
      %925 = vmatprep.subr.bf16.mxu0 0
      %926 = vmatpush1.bf16.msra.mxu0 0
      %927 = vmatprep.subr.bf16.mxu0 0
      %928 = vmatpush1.bf16.msra.mxu0 0
      %929 = vmatprep.subr.bf16.mxu0 0
      %930 = vmatpush1.bf16.msra.mxu0 0
      %931 = vmatprep.mubr.bf16.mxu0 0
      %932 = vmatmul.mubr.bf16.gmra.mrb[0].mxu0 %v769
      %v933 = vpop.f32.mrb[0].mxu0
      %v934 = vadd.f32 0.0, %v933
      %v935 = vpop.f32.mrb[0].mxu0
      %v936 = vadd.f32 0.0, %v935
      %v937 = vpop.f32.mrb[0].mxu0
      %v938 = vadd.f32 0.0, %v937
      %v939 = vpop.f32.mrb[0].mxu0
      %v940 = vadd.f32 0.0, %v939
      %941 = vmatprep.mubr.bf16.mxu0 0
      %942 = vmatmul.mubr.bf16.gmra.mrb[0].mxu0 %v770
      %v943 = vpop.f32.mrb[0].mxu0
      %v944 = vadd.f32 0.0, %v943
      %v945 = vpop.f32.mrb[0].mxu0
      %v946 = vadd.f32 0.0, %v945
      %v947 = vpop.f32.mrb[0].mxu0
      %v948 = vpop.f32.mrb[0].mxu0
      %949 = vdwg.mxu0
      %950 = vmatprep.subr.bf16.mxu0 0
      %951 = vmatpush1.bf16.msra.mxu0 %v853
      %952 = vmatprep.subr.bf16.mxu0 0
      %953 = vmatpush1.bf16.msra.mxu0 %v856
      %954 = vmatprep.subr.bf16.mxu0 0
      %955 = vmatpush1.bf16.msra.mxu0 %v859
      %956 = vmatprep.subr.bf16.mxu0 0
      %957 = vmatpush1.bf16.msra.mxu0 %v862
      %958 = vmatprep.subr.bf16.mxu0 0
      %959 = vmatpush1.bf16.msra.mxu0 %v865
      %960 = vmatprep.subr.bf16.mxu0 0
      %961 = vmatpush1.bf16.msra.mxu0 %v868
      %962 = vmatprep.subr.bf16.mxu0 0
      %963 = vmatpush1.bf16.msra.mxu0 %v871
      %964 = vmatprep.subr.bf16.mxu0 0
      %965 = vmatpush1.bf16.msra.mxu0 %v874
      %966 = vmatprep.subr.bf16.mxu0 0
      %967 = vmatpush1.bf16.msra.mxu0 0
      %968 = vmatprep.subr.bf16.mxu0 0
      %969 = vmatpush1.bf16.msra.mxu0 0
      %970 = vmatprep.subr.bf16.mxu0 0
      %971 = vmatpush1.bf16.msra.mxu0 0
      %972 = vmatprep.subr.bf16.mxu0 0
      %973 = vmatpush1.bf16.msra.mxu0 0
      %974 = vmatprep.subr.bf16.mxu0 0
      %975 = vmatpush1.bf16.msra.mxu0 0
      %976 = vmatprep.subr.bf16.mxu0 0
      %977 = vmatpush1.bf16.msra.mxu0 0
      %978 = vmatprep.subr.bf16.mxu0 0
      %979 = vmatpush1.bf16.msra.mxu0 0
      %980 = vmatprep.subr.bf16.mxu0 0
      %981 = vmatpush1.bf16.msra.mxu0 0
      %982 = vmatprep.mubr.bf16.mxu0 0
      %983 = vmatmul.mubr.bf16.gmra.mrb[0].mxu0 %v769
      %v984 = vpop.f32.mrb[0].mxu0
      %v985 = vadd.f32 0.0, %v984
      %v986 = vpop.f32.mrb[0].mxu0
      %v987 = vpop.f32.mrb[0].mxu0
      %v988 = vadd.f32 0.0, %v987
      %v989 = vpop.f32.mrb[0].mxu0
      %990 = vmatprep.mubr.bf16.mxu0 0
      %991 = vmatmul.mubr.bf16.gmra.mrb[0].mxu0 %v770
      %v992 = vpop.f32.mrb[0].mxu0
      %v993 = vadd.f32 0.0, %v992
      %v994 = vpop.f32.mrb[0].mxu0
      %v995 = vpop.f32.mrb[0].mxu0
      %v996 = vpop.f32.mrb[0].mxu0
      %997 = vdwg.mxu0
      %v998 = vlaneseq
      %v999 = vshrl.u32 %v998, 7
      %v1000 = vsub.s32 0, %v999
      %v1001 = vrot.slane %v452, %v1000
      %v1002 = vadd.f32 %v934, %v1001
      %v1003 = vadd.f32 %v938, %v1001
      %v1004 = vadd.f32 %v944, %v1001
      %v1005 = vlaneseq
      %v1006 = vshrl.u32 %v1005, 7
      %v1007 = vsub.s32 1, %v1006
      %v1008 = vrot.slane %v452, %v1007
      %v1009 = vadd.f32 %v936, %v1008
      %v1010 = vadd.f32 %v940, %v1008
      %v1011 = vadd.f32 %v946, %v1008
      %v1012 = vlaneseq
      %v1013 = vshrl.u32 %v1012, 7
      %v1014 = vsub.s32 2, %v1013
      %v1015 = vrot.slane %v452, %v1014
      %v1016 = vadd.f32 %v985, %v1015
      %v1017 = vadd.f32 %v988, %v1015
      %v1018 = vadd.f32 %v993, %v1015
      %v1019 = vpack.c.bf16 %v1003, %v1002
      %v1020 = vpack.c.bf16 %v1004, %v1004
      %v1021 = vpack.c.bf16 %v1010, %v1009
      %v1022 = vpack.c.bf16 %v1011, %v1011
      %1023 = vmatprep.subr.bf16.mxu0 0
      %1024 = vmatpush1.bf16.xpose.msra.mxu0 %v1021
      %1025 = vmatprep.subr.bf16.mxu0 0
      %1026 = vmatpush1.bf16.xpose.msra.mxu0 %v1022
      %1027 = vmatprep.subr.bf16.mxu0 0
      %1028 = vmatpush1.bf16.xpose.msra.mxu0 0
      %1029 = vmatprep.subr.bf16.mxu0 0
      %1030 = vmatpush1.bf16.xpose.msra.mxu0 0
      %1031 = vmatprep.subr.bf16.mxu0 0
      %1032 = vmatpush1.bf16.xpose.msra.mxu0 0
      %1033 = vmatprep.subr.bf16.mxu0 0
      %1034 = vmatpush1.bf16.xpose.msra.mxu0 0
      %1035 = vmatprep.subr.bf16.mxu0 0
      %1036 = vmatpush1.bf16.xpose.msra.mxu0 0
      %1037 = vmatprep.subr.bf16.mxu0 0
      %1038 = vmatpush1.bf16.xpose.msra.mxu0 0
      %1039 = vmatprep.subr.bf16.mxu0 0
      %1040 = vmatpush1.bf16.xpose.msra.mxu0 0
      %1041 = vmatprep.subr.bf16.mxu0 0
      %1042 = vmatpush1.bf16.xpose.msra.mxu0 0
      %1043 = vmatprep.subr.bf16.mxu0 0
      %1044 = vmatpush1.bf16.xpose.msra.mxu0 0
      %1045 = vmatprep.subr.bf16.mxu0 0
      %1046 = vmatpush1.bf16.xpose.msra.mxu0 0
      %1047 = vmatprep.subr.bf16.mxu0 0
      %1048 = vmatpush1.bf16.xpose.msra.mxu0 0
      %1049 = vmatprep.subr.bf16.mxu0 0
      %1050 = vmatpush1.bf16.xpose.msra.mxu0 0
      %1051 = vmatprep.subr.bf16.mxu0 0
      %1052 = vmatpush1.bf16.xpose.msra.mxu0 0
      %1053 = vmatprep.subr.bf16.mxu0 0
      %1054 = vmatpush1.bf16.xpose.msra.mxu0 0
      %1055 = vmatprep.mubr.bf16.mxu0 0
      %1056 = vmatmul.mubr.bf16.gmra.mrb[0].mxu0 %v1019
      %v1057 = vpop.f32.mrb[0].mxu0
      %v1058 = vadd.f32 0.0, %v1057
      %v1059 = vpop.f32.mrb[0].mxu0
      %v1060 = vpop.f32.mrb[0].mxu0
      %v1061 = vadd.f32 0.0, %v1060
      %v1062 = vpop.f32.mrb[0].mxu0
      %1063 = vmatprep.mubr.bf16.mxu0 0
      %1064 = vmatmul.mubr.bf16.gmra.mrb[0].mxu0 %v1020
      %v1065 = vpop.f32.mrb[0].mxu0
      %v1066 = vadd.f32 0.0, %v1065
      %v1067 = vpop.f32.mrb[0].mxu0
      %v1068 = vpop.f32.mrb[0].mxu0
      %v1069 = vpop.f32.mrb[0].mxu0
      %1070 = vdwg.mxu0
      %v1071 = vmul.f32 %v1058, 0.088388346
      %v1072 = vmul.f32 %v1061, 0.088388346
      %v1073 = vmul.f32 %v1066, 0.088388346
      %vm1074 = vcmask 195584
      %v1075 = vsel %vm1074, %v1071, -inf
      %1076 = vmax.xlane.f32.xlu0 %v1075
      %v1077 = vpop.xlane.xlu0 %1076
      %v1078 = vsel %vm1074, %v1072, -inf
      %1079 = vmax.xlane.f32.xlu0 %v1078
      %v1080 = vpop.xlane.xlu0 %1079
      %v1081 = vsel %vm1074, %v1073, -inf
      %1082 = vmax.xlane.f32.xlu0 %v1081
      %v1083 = vpop.xlane.xlu0 %1082
      %v1084 = vsub.f32 %v1071, %v1077
      %v1085 = vsub.f32 %v1072, %v1080
      %v1086 = vsub.f32 %v1073, %v1083
      %v1087 = vmul.f32 %v1084, 1.442695
      %v1088 = vpow.pop %v1087
      %v1089 = vmul.f32 %v1085, 1.442695
      %v1090 = vpow.pop %v1089
      %v1091 = vmul.f32 %v1086, 1.442695
      %v1092 = vpow.pop %v1091
      %v1093 = vsel %vm1074, %v1088, 0.0
      %1094 = vadd.xlane.f32.xlu0 %v1093
      %v1095 = vpop.xlane.xlu0 %1094
      %v1096 = vsel %vm1074, %v1090, 0.0
      %1097 = vadd.xlane.f32.xlu0 %v1096
      %v1098 = vpop.xlane.xlu0 %1097
      %v1099 = vsel %vm1074, %v1092, 0.0
      %1100 = vadd.xlane.f32.xlu0 %v1099
      %v1101 = vpop.xlane.xlu0 %1100
      %v1102 = vrcp.pop %v1095
      %v1103 = vrcp.pop %v1098
      %v1104 = vrcp.pop %v1101
      %v1105 = vmul.f32 %v1088, %v1102
      %v1106 = vmul.f32 %v1090, %v1103
      %v1107 = vmul.f32 %v1092, %v1104
      %v1108 = vpack.c.bf16 %v1106, %v1105
      %v1109 = vpack.c.bf16 %v1107, %v1107
      %v1110 = vpack.c.bf16 %v1017, %v1016
      %v1111 = vpack.c.bf16 %v1018, %v1018
      %v1113 = vsel %vm1074, %v1108, 0
      %v1116 = vsel %vm1074, %v1109, 0
      %vm1118 = vcmask 1043456
      %v1120 = vsel %vm1118, %v1111, 0
      %1122 = vmatprep.subr.bf16.mxu0 0
      %1123 = vmatpush1.bf16.msra.mxu0 %v1110
      %1124 = vmatprep.subr.bf16.mxu0 0
      %1125 = vmatpush1.bf16.msra.mxu0 %v1120
      %1126 = vmatprep.subr.bf16.mxu0 0
      %1127 = vmatpush1.bf16.msra.mxu0 0
      %1128 = vmatprep.subr.bf16.mxu0 0
      %1129 = vmatpush1.bf16.msra.mxu0 0
      %1130 = vmatprep.subr.bf16.mxu0 0
      %1131 = vmatpush1.bf16.msra.mxu0 0
      %1132 = vmatprep.subr.bf16.mxu0 0
      %1133 = vmatpush1.bf16.msra.mxu0 0
      %1134 = vmatprep.subr.bf16.mxu0 0
      %1135 = vmatpush1.bf16.msra.mxu0 0
      %1136 = vmatprep.subr.bf16.mxu0 0
      %1137 = vmatpush1.bf16.msra.mxu0 0
      %1138 = vmatprep.subr.bf16.mxu0 0
      %1139 = vmatpush1.bf16.msra.mxu0 0
      %1140 = vmatprep.subr.bf16.mxu0 0
      %1141 = vmatpush1.bf16.msra.mxu0 0
      %1142 = vmatprep.subr.bf16.mxu0 0
      %1143 = vmatpush1.bf16.msra.mxu0 0
      %1144 = vmatprep.subr.bf16.mxu0 0
      %1145 = vmatpush1.bf16.msra.mxu0 0
      %1146 = vmatprep.subr.bf16.mxu0 0
      %1147 = vmatpush1.bf16.msra.mxu0 0
      %1148 = vmatprep.subr.bf16.mxu0 0
      %1149 = vmatpush1.bf16.msra.mxu0 0
      %1150 = vmatprep.subr.bf16.mxu0 0
      %1151 = vmatpush1.bf16.msra.mxu0 0
      %1152 = vmatprep.subr.bf16.mxu0 0
      %1153 = vmatpush1.bf16.msra.mxu0 0
      %1154 = vmatprep.mubr.bf16.mxu0 0
      %1155 = vmatmul.mubr.bf16.gmra.mrb[0].mxu0 %v1113
      %v1156 = vpop.f32.mrb[0].mxu0
      %v1157 = vadd.f32 0.0, %v1156
      %v1158 = vpop.f32.mrb[0].mxu0
      %v1159 = vpop.f32.mrb[0].mxu0
      %v1160 = vadd.f32 0.0, %v1159
      %v1161 = vpop.f32.mrb[0].mxu0
      %1162 = vmatprep.mubr.bf16.mxu0 0
      %1163 = vmatmul.mubr.bf16.gmra.mrb[0].mxu0 %v1116
      %v1164 = vpop.f32.mrb[0].mxu0
      %v1165 = vadd.f32 0.0, %v1164
      %v1166 = vpop.f32.mrb[0].mxu0
      %v1167 = vpop.f32.mrb[0].mxu0
      %v1168 = vpop.f32.mrb[0].mxu0
      %1169 = vdwg.mxu0
      %v1170 = vld [vmem:[%s8] sm:$0xf]
      %v1171 = vld [vmem:[%s8 + $0x4] sm:$0xf]
      %v1172 = vld [vmem:[%s8 + $0x8] sm:$0xf]
      %v1173 = vld [vmem:[%s8 + $0xc] sm:$0xf]
      %v1174 = vld [vmem:[%s8 + $0x10] sm:$0xf]
      %v1175 = vld [vmem:[%s8 + $0x14] sm:$0xf]
      %v1176 = vld [vmem:[%s8 + $0x18] sm:$0xf]
      %v1177 = vld [vmem:[%s8 + $0x1c] sm:$0xf]
      %v1178 = vld [vmem:[%s8 + $0x20] sm:$0xf]
      %v1179 = vld [vmem:[%s8 + $0x24] sm:$0xf]
      %v1180 = vld [vmem:[%s8 + $0x28] sm:$0xf]
      %v1181 = vld [vmem:[%s8 + $0x2c] sm:$0xf]
      %v1182 = vld [vmem:[%s8 + $0x30] sm:$0xf]
      %v1183 = vld [vmem:[%s8 + $0x34] sm:$0xf]
      %v1184 = vld [vmem:[%s8 + $0x38] sm:$0xf]
      %v1185 = vld [vmem:[%s8 + $0x3c] sm:$0xf]
      %v1186 = vpack.c.bf16 %v1160, %v1157
      %v1187 = vpack.c.bf16 %v1165, %v1165
      %v1204 = vunpack.c.l.b16 %v1170
      %v1205 = vunpack.c.l.b16 %v1171
      %v1206 = vunpack.c.l.b16 %v1172
      %v1207 = vunpack.c.l.b16 %v1173
      %v1208 = vunpack.c.l.b16 %v1174
      %v1209 = vunpack.c.l.b16 %v1175
      %v1210 = vunpack.c.l.b16 %v1176
      %v1211 = vunpack.c.l.b16 %v1177
      %v1212 = vunpack.c.l.b16 %v1178
      %v1213 = vunpack.c.l.b16 %v1179
      %v1214 = vunpack.c.l.b16 %v1180
      %v1215 = vunpack.c.l.b16 %v1181
      %v1216 = vunpack.c.l.b16 %v1182
      %v1217 = vunpack.c.l.b16 %v1183
      %v1218 = vunpack.c.l.b16 %v1184
      %v1219 = vunpack.c.l.b16 %v1185
      %v1220 = vpack.c.b16 %v1205, %v1204
      %v1221 = vpack.c.b16 %v1207, %v1206
      %v1222 = vpack.c.b16 %v1209, %v1208
      %v1223 = vpack.c.b16 %v1211, %v1210
      %v1224 = vpack.c.b16 %v1213, %v1212
      %v1225 = vpack.c.b16 %v1215, %v1214
      %v1226 = vpack.c.b16 %v1217, %v1216
      %v1227 = vpack.c.b16 %v1219, %v1218
      %1236 = vmatprep.subr.bf16.mxu0 0
      %1237 = vmatpush1.bf16.msra.mxu0 %v1220
      %1238 = vmatprep.subr.bf16.mxu0 0
      %1239 = vmatpush1.bf16.msra.mxu0 %v1221
      %1240 = vmatprep.subr.bf16.mxu0 0
      %1241 = vmatpush1.bf16.msra.mxu0 %v1222
      %1242 = vmatprep.subr.bf16.mxu0 0
      %1243 = vmatpush1.bf16.msra.mxu0 %v1223
      %1244 = vmatprep.subr.bf16.mxu0 0
      %1245 = vmatpush1.bf16.msra.mxu0 %v1224
      %1246 = vmatprep.subr.bf16.mxu0 0
      %1247 = vmatpush1.bf16.msra.mxu0 %v1225
      %1248 = vmatprep.subr.bf16.mxu0 0
      %1249 = vmatpush1.bf16.msra.mxu0 %v1226
      %1250 = vmatprep.subr.bf16.mxu0 0
      %1251 = vmatpush1.bf16.msra.mxu0 %v1227
      %1252 = vmatprep.subr.bf16.mxu0 0
      %1253 = vmatpush1.bf16.msra.mxu0 0
      %1254 = vmatprep.subr.bf16.mxu0 0
      %1255 = vmatpush1.bf16.msra.mxu0 0
      %1256 = vmatprep.subr.bf16.mxu0 0
      %1257 = vmatpush1.bf16.msra.mxu0 0
      %1258 = vmatprep.subr.bf16.mxu0 0
      %1259 = vmatpush1.bf16.msra.mxu0 0
      %1260 = vmatprep.subr.bf16.mxu0 0
      %1261 = vmatpush1.bf16.msra.mxu0 0
      %1262 = vmatprep.subr.bf16.mxu0 0
      %1263 = vmatpush1.bf16.msra.mxu0 0
      %1264 = vmatprep.subr.bf16.mxu0 0
      %1265 = vmatpush1.bf16.msra.mxu0 0
      %1266 = vmatprep.subr.bf16.mxu0 0
      %1267 = vmatpush1.bf16.msra.mxu0 0
      %1268 = vmatprep.mubr.bf16.mxu0 0
      %1269 = vmatmul.mubr.bf16.gmra.mrb[0].mxu0 %v1186
      %v1270 = vpop.f32.mrb[0].mxu0
      %v1271 = vadd.f32 0.0, %v1270
      %v1272 = vpop.f32.mrb[0].mxu0
      %v1273 = vpop.f32.mrb[0].mxu0
      %v1274 = vadd.f32 0.0, %v1273
      %v1275 = vpop.f32.mrb[0].mxu0
      %1276 = vmatprep.mubr.bf16.mxu0 0
      %1277 = vmatmul.mubr.bf16.gmra.mrb[0].mxu0 %v1187
      %v1278 = vpop.f32.mrb[0].mxu0
      %v1279 = vadd.f32 0.0, %v1278
      %v1280 = vpop.f32.mrb[0].mxu0
      %v1281 = vpop.f32.mrb[0].mxu0
      %v1282 = vpop.f32.mrb[0].mxu0
      %1283 = vdwg.mxu0
      %v1284 = vadd.f32 %v481, %v1271
      %v1285 = vadd.f32 %v736, %v1274
      %v1286 = vadd.f32 %v496, %v1279
      %v1287 = vlaneseq
      %v1288 = vshrl.u32 %v1287, 7
      %v1289 = vsub.s32 3, %v1288
      %v1290 = vrot.slane %v452, %v1289
      %v1291 = vadd.f32 %v1284, %v1290
      %v1292 = vadd.f32 %v1285, %v1290
      %v1293 = vadd.f32 %v1286, %v1290
      %1294 = vadd.xlane.f32.xlu0 %v1291
      %v1295 = vpop.xlane.xlu0 %1294
      %1296 = vadd.xlane.f32.xlu0 %v1292
      %v1297 = vpop.xlane.xlu0 %1296
      %1298 = vadd.xlane.f32.xlu0 %v1293
      %v1299 = vpop.xlane.xlu0 %1298
      %v1300 = vmul.f32 %v1295, %v461
      %v1301 = vmul.f32 %v1297, %v461
      %v1302 = vmul.f32 %v1299, %v461
      %v1303 = vsub.f32 %v1291, %v1300
      %v1304 = vsub.f32 %v1292, %v1301
      %v1305 = vsub.f32 %v1293, %v1302
      %v1306 = vmul.f32 %v1303, %v1303
      %v1307 = vmul.f32 %v1304, %v1304
      %v1308 = vmul.f32 %v1305, %v1305
      %1309 = vadd.xlane.f32.xlu0 %v1306
      %v1310 = vpop.xlane.xlu0 %1309
      %1311 = vadd.xlane.f32.xlu0 %v1307
      %v1312 = vpop.xlane.xlu0 %1311
      %1313 = vadd.xlane.f32.xlu0 %v1308
      %v1314 = vpop.xlane.xlu0 %1313
      %v1315 = vmul.f32 %v1310, %v461
      %v1316 = vmul.f32 %v1312, %v461
      %v1317 = vmul.f32 %v1314, %v461
      %v1318 = vadd.f32 %v1315, 1e-05
      %v1319 = vadd.f32 %v1316, 1e-05
      %v1320 = vadd.f32 %v1317, 1e-05
      %v1321 = vrsqrt.pop %v1318
      %v1322 = vrsqrt.pop %v1319
      %v1323 = vrsqrt.pop %v1320
      %v1324 = vmul.f32 %v1303, %v1321
      %v1325 = vmul.f32 %v1304, %v1322
      %v1326 = vmul.f32 %v1305, %v1323
      %v1327 = vlaneseq
      %v1328 = vshrl.u32 %v1327, 7
      %v1329 = vsub.s32 0, %v1328
      %v1330 = vrot.slane %v453, %v1329
      %v1331 = vmul.f32 %v1324, %v1330
      %v1332 = vmul.f32 %v1325, %v1330
      %v1333 = vmul.f32 %v1326, %v1330
      %v1334 = vlaneseq
      %v1335 = vshrl.u32 %v1334, 7
      %v1336 = vsub.s32 1, %v1335
      %v1337 = vrot.slane %v453, %v1336
      %v1338 = vadd.f32 %v1331, %v1337
      %v1339 = vadd.f32 %v1332, %v1337
      %v1340 = vadd.f32 %v1333, %v1337
      %v1341 = vld [vmem:[%s8 + $0x40] sm:$0xf]
      %v1342 = vld [vmem:[%s8 + $0x44] sm:$0xf]
      %v1343 = vld [vmem:[%s8 + $0x48] sm:$0xf]
      %v1344 = vld [vmem:[%s8 + $0x4c] sm:$0xf]
      %v1345 = vld [vmem:[%s8 + $0x50] sm:$0xf]
      %v1346 = vld [vmem:[%s8 + $0x54] sm:$0xf]
      %v1347 = vld [vmem:[%s8 + $0x58] sm:$0xf]
      %v1348 = vld [vmem:[%s8 + $0x5c] sm:$0xf]
      %v1349 = vld [vmem:[%s8 + $0x60] sm:$0xf]
      %v1350 = vld [vmem:[%s8 + $0x64] sm:$0xf]
      %v1351 = vld [vmem:[%s8 + $0x68] sm:$0xf]
      %v1352 = vld [vmem:[%s8 + $0x6c] sm:$0xf]
      %v1353 = vld [vmem:[%s8 + $0x70] sm:$0xf]
      %v1354 = vld [vmem:[%s8 + $0x74] sm:$0xf]
      %v1355 = vld [vmem:[%s8 + $0x78] sm:$0xf]
      %v1356 = vld [vmem:[%s8 + $0x7c] sm:$0xf]
      %v1357 = vpack.c.bf16 %v1339, %v1338
      %v1358 = vpack.c.bf16 %v1340, %v1340
      %v1359 = vlaneseq
      %v1360 = vshrl.u32 %v1359, 7
      %v1361 = vsub.s32 4, %v1360
      %v1362 = vrot.slane %v452, %v1361
      %v1379 = vunpack.c.l.b16 %v1341
      %v1380 = vunpack.c.l.b16 %v1342
      %v1381 = vunpack.c.l.b16 %v1343
      %v1382 = vunpack.c.l.b16 %v1344
      %v1383 = vunpack.c.l.b16 %v1345
      %v1384 = vunpack.c.l.b16 %v1346
      %v1385 = vunpack.c.l.b16 %v1347
      %v1386 = vunpack.c.l.b16 %v1348
      %v1387 = vunpack.c.l.b16 %v1349
      %v1388 = vunpack.c.l.b16 %v1350
      %v1389 = vunpack.c.l.b16 %v1351
      %v1390 = vunpack.c.l.b16 %v1352
      %v1391 = vunpack.c.l.b16 %v1353
      %v1392 = vunpack.c.l.b16 %v1354
      %v1393 = vunpack.c.l.b16 %v1355
      %v1394 = vunpack.c.l.b16 %v1356
      %v1395 = vpack.c.b16 %v1380, %v1379
      %v1396 = vpack.c.b16 %v1382, %v1381
      %v1397 = vpack.c.b16 %v1384, %v1383
      %v1398 = vpack.c.b16 %v1386, %v1385
      %v1399 = vpack.c.b16 %v1388, %v1387
      %v1400 = vpack.c.b16 %v1390, %v1389
      %v1401 = vpack.c.b16 %v1392, %v1391
      %v1402 = vpack.c.b16 %v1394, %v1393
      %1411 = vmatprep.subr.bf16.mxu0 0
      %1412 = vmatpush1.bf16.msra.mxu0 %v1395
      %1413 = vmatprep.subr.bf16.mxu0 0
      %1414 = vmatpush1.bf16.msra.mxu0 %v1396
      %1415 = vmatprep.subr.bf16.mxu0 0
      %1416 = vmatpush1.bf16.msra.mxu0 %v1397
      %1417 = vmatprep.subr.bf16.mxu0 0
      %1418 = vmatpush1.bf16.msra.mxu0 %v1398
      %1419 = vmatprep.subr.bf16.mxu0 0
      %1420 = vmatpush1.bf16.msra.mxu0 %v1399
      %1421 = vmatprep.subr.bf16.mxu0 0
      %1422 = vmatpush1.bf16.msra.mxu0 %v1400
      %1423 = vmatprep.subr.bf16.mxu0 0
      %1424 = vmatpush1.bf16.msra.mxu0 %v1401
      %1425 = vmatprep.subr.bf16.mxu0 0
      %1426 = vmatpush1.bf16.msra.mxu0 %v1402
      %1427 = vmatprep.subr.bf16.mxu0 0
      %1428 = vmatpush1.bf16.msra.mxu0 0
      %1429 = vmatprep.subr.bf16.mxu0 0
      %1430 = vmatpush1.bf16.msra.mxu0 0
      %1431 = vmatprep.subr.bf16.mxu0 0
      %1432 = vmatpush1.bf16.msra.mxu0 0
      %1433 = vmatprep.subr.bf16.mxu0 0
      %1434 = vmatpush1.bf16.msra.mxu0 0
      %1435 = vmatprep.subr.bf16.mxu0 0
      %1436 = vmatpush1.bf16.msra.mxu0 0
      %1437 = vmatprep.subr.bf16.mxu0 0
      %1438 = vmatpush1.bf16.msra.mxu0 0
      %1439 = vmatprep.subr.bf16.mxu0 0
      %1440 = vmatpush1.bf16.msra.mxu0 0
      %1441 = vmatprep.subr.bf16.mxu0 0
      %1442 = vmatpush1.bf16.msra.mxu0 0
      %1443 = vmatprep.mubr.bf16.mxu0 0
      %1444 = vmatmul.mubr.bf16.gmra.mrb[0].mxu0 %v1357
      %v1445 = vpop.f32.mrb[0].mxu0
      %v1446 = vadd.f32 %v1362, %v1445
      %v1447 = vpop.f32.mrb[0].mxu0
      %v1448 = vpop.f32.mrb[0].mxu0
      %v1449 = vadd.f32 %v1362, %v1448
      %v1450 = vpop.f32.mrb[0].mxu0
      %1451 = vmatprep.mubr.bf16.mxu0 0
      %1452 = vmatmul.mubr.bf16.gmra.mrb[0].mxu0 %v1358
      %v1453 = vpop.f32.mrb[0].mxu0
      %v1454 = vadd.f32 %v1362, %v1453
      %v1455 = vpop.f32.mrb[0].mxu0
      %v1456 = vpop.f32.mrb[0].mxu0
      %v1457 = vpop.f32.mrb[0].mxu0
      %1458 = vdwg.mxu0
      %v1459 = vpack.c.bf16 %v1449, %v1446
      %v1460 = vpack.c.bf16 %v1454, %v1454
      %v1477 = vunpack.c.l.b16 %v529
      %v1478 = vunpack.c.l.b16 %v530
      %v1479 = vunpack.c.l.b16 %v531
      %v1480 = vunpack.c.l.b16 %v532
      %v1481 = vunpack.c.l.b16 %v533
      %v1482 = vunpack.c.l.b16 %v534
      %v1483 = vunpack.c.l.b16 %v535
      %v1484 = vunpack.c.l.b16 %v536
      %v1485 = vunpack.c.l.b16 %v537
      %v1486 = vunpack.c.l.b16 %v538
      %v1487 = vunpack.c.l.b16 %v539
      %v1488 = vunpack.c.l.b16 %v540
      %v1489 = vunpack.c.l.b16 %v541
      %v1490 = vunpack.c.l.b16 %v542
      %v1491 = vunpack.c.l.b16 %v543
      %v1492 = vunpack.c.l.b16 %v544
      %v1493 = vpack.c.b16 %v1478, %v1477
      %v1494 = vpack.c.b16 %v1480, %v1479
      %v1495 = vpack.c.b16 %v1482, %v1481
      %v1496 = vpack.c.b16 %v1484, %v1483
      %v1497 = vpack.c.b16 %v1486, %v1485
      %v1498 = vpack.c.b16 %v1488, %v1487
      %v1499 = vpack.c.b16 %v1490, %v1489
      %v1500 = vpack.c.b16 %v1492, %v1491
      %1509 = vmatprep.subr.bf16.mxu0 0
      %1510 = vmatpush1.bf16.msra.mxu0 %v1493
      %1511 = vmatprep.subr.bf16.mxu0 0
      %1512 = vmatpush1.bf16.msra.mxu0 %v1494
      %1513 = vmatprep.subr.bf16.mxu0 0
      %1514 = vmatpush1.bf16.msra.mxu0 %v1495
      %1515 = vmatprep.subr.bf16.mxu0 0
      %1516 = vmatpush1.bf16.msra.mxu0 %v1496
      %1517 = vmatprep.subr.bf16.mxu0 0
      %1518 = vmatpush1.bf16.msra.mxu0 %v1497
      %1519 = vmatprep.subr.bf16.mxu0 0
      %1520 = vmatpush1.bf16.msra.mxu0 %v1498
      %1521 = vmatprep.subr.bf16.mxu0 0
      %1522 = vmatpush1.bf16.msra.mxu0 %v1499
      %1523 = vmatprep.subr.bf16.mxu0 0
      %1524 = vmatpush1.bf16.msra.mxu0 %v1500
      %1525 = vmatprep.subr.bf16.mxu0 0
      %1526 = vmatpush1.bf16.msra.mxu0 0
      %1527 = vmatprep.subr.bf16.mxu0 0
      %1528 = vmatpush1.bf16.msra.mxu0 0
      %1529 = vmatprep.subr.bf16.mxu0 0
      %1530 = vmatpush1.bf16.msra.mxu0 0
      %1531 = vmatprep.subr.bf16.mxu0 0
      %1532 = vmatpush1.bf16.msra.mxu0 0
      %1533 = vmatprep.subr.bf16.mxu0 0
      %1534 = vmatpush1.bf16.msra.mxu0 0
      %1535 = vmatprep.subr.bf16.mxu0 0
      %1536 = vmatpush1.bf16.msra.mxu0 0
      %1537 = vmatprep.subr.bf16.mxu0 0
      %1538 = vmatpush1.bf16.msra.mxu0 0
      %1539 = vmatprep.subr.bf16.mxu0 0
      %1540 = vmatpush1.bf16.msra.mxu0 0
      %1541 = vmatprep.mubr.bf16.mxu0 0
      %1542 = vmatmul.mubr.bf16.gmra.mrb[0].mxu0 %v1459
      %v1543 = vpop.f32.mrb[0].mxu0
      %v1544 = vadd.f32 0.0, %v1543
      %v1545 = vpop.f32.mrb[0].mxu0
      %v1546 = vpop.f32.mrb[0].mxu0
      %v1547 = vadd.f32 0.0, %v1546
      %v1548 = vpop.f32.mrb[0].mxu0
      %1549 = vmatprep.mubr.bf16.mxu0 0
      %1550 = vmatmul.mubr.bf16.gmra.mrb[0].mxu0 %v1460
      %v1551 = vpop.f32.mrb[0].mxu0
      %v1552 = vadd.f32 0.0, %v1551
      %v1553 = vpop.f32.mrb[0].mxu0
      %v1554 = vpop.f32.mrb[0].mxu0
      %v1555 = vpop.f32.mrb[0].mxu0
      %1556 = vdwg.mxu0
      %v1557 = vmul.f32 %v1544, 0.088388346
      %v1558 = vmul.f32 %v1547, 0.088388346
      %v1559 = vmul.f32 %v1552, 0.088388346
      %vm1560 = vcmask 392192
      %v1561 = vsel %vm1560, %v1557, -inf
      %1562 = vmax.xlane.f32.xlu0 %v1561
      %v1563 = vpop.xlane.xlu0 %1562
      %v1564 = vsel %vm1560, %v1558, -inf
      %1565 = vmax.xlane.f32.xlu0 %v1564
      %v1566 = vpop.xlane.xlu0 %1565
      %v1567 = vsel %vm1560, %v1559, -inf
      %1568 = vmax.xlane.f32.xlu0 %v1567
      %v1569 = vpop.xlane.xlu0 %1568
      %v1570 = vsub.f32 %v1557, %v1563
      %v1571 = vsub.f32 %v1558, %v1566
      %v1572 = vsub.f32 %v1559, %v1569
      %v1573 = vmul.f32 %v1570, 1.442695
      %v1574 = vpow.pop %v1573
      %v1575 = vmul.f32 %v1571, 1.442695
      %v1576 = vpow.pop %v1575
      %v1577 = vmul.f32 %v1572, 1.442695
      %v1578 = vpow.pop %v1577
      %v1579 = vsel %vm1560, %v1574, 0.0
      %1580 = vadd.xlane.f32.xlu0 %v1579
      %v1581 = vpop.xlane.xlu0 %1580
      %v1582 = vsel %vm1560, %v1576, 0.0
      %1583 = vadd.xlane.f32.xlu0 %v1582
      %v1584 = vpop.xlane.xlu0 %1583
      %v1585 = vsel %vm1560, %v1578, 0.0
      %1586 = vadd.xlane.f32.xlu0 %v1585
      %v1587 = vpop.xlane.xlu0 %1586
      %v1588 = vrcp.pop %v1581
      %v1589 = vrcp.pop %v1584
      %v1590 = vrcp.pop %v1587
      %v1591 = vmul.f32 %v1574, %v1588
      %v1592 = vmul.f32 %v1576, %v1589
      %v1593 = vmul.f32 %v1578, %v1590
      %v1594 = vpack.c.bf16 %v1592, %v1591
      %v1595 = vpack.c.bf16 %v1593, %v1593
      %v1602 = vunpack.c.l.b16 %v545
      %v1603 = vunpack.c.l.b16 %v546
      %v1604 = vunpack.c.l.b16 %v547
      %v1605 = vunpack.c.l.b16 %v548
      %v1606 = vunpack.c.l.b16 %v549
      %v1607 = vunpack.c.l.b16 %v550
      %v1608 = vpack.c.b16 %v1603, %v1602
      %v1609 = vpack.c.b16 %v1605, %v1604
      %v1610 = vpack.c.b16 %v1607, %v1606
      %v1615 = vsel %vm1560, %v1594, 0
      %v1618 = vsel %vm1560, %v1595, 0
      %1620 = vmatprep.subr.bf16.mxu0 0
      %1621 = vmatpush1.bf16.msra.mxu0 %v1608
      %1622 = vmatprep.subr.bf16.mxu0 0
      %1623 = vmatpush1.bf16.msra.mxu0 %v1609
      %1624 = vmatprep.subr.bf16.mxu0 0
      %1625 = vmatpush1.bf16.msra.mxu0 %v1610
      %1626 = vmatprep.subr.bf16.mxu0 0
      %1627 = vmatpush1.bf16.msra.mxu0 0
      %1628 = vmatprep.subr.bf16.mxu0 0
      %1629 = vmatpush1.bf16.msra.mxu0 0
      %1630 = vmatprep.subr.bf16.mxu0 0
      %1631 = vmatpush1.bf16.msra.mxu0 0
      %1632 = vmatprep.subr.bf16.mxu0 0
      %1633 = vmatpush1.bf16.msra.mxu0 0
      %1634 = vmatprep.subr.bf16.mxu0 0
      %1635 = vmatpush1.bf16.msra.mxu0 0
      %1636 = vmatprep.subr.bf16.mxu0 0
      %1637 = vmatpush1.bf16.msra.mxu0 0
      %1638 = vmatprep.subr.bf16.mxu0 0
      %1639 = vmatpush1.bf16.msra.mxu0 0
      %1640 = vmatprep.subr.bf16.mxu0 0
      %1641 = vmatpush1.bf16.msra.mxu0 0
      %1642 = vmatprep.subr.bf16.mxu0 0
      %1643 = vmatpush1.bf16.msra.mxu0 0
      %1644 = vmatprep.subr.bf16.mxu0 0
      %1645 = vmatpush1.bf16.msra.mxu0 0
      %1646 = vmatprep.subr.bf16.mxu0 0
      %1647 = vmatpush1.bf16.msra.mxu0 0
      %1648 = vmatprep.subr.bf16.mxu0 0
      %1649 = vmatpush1.bf16.msra.mxu0 0
      %1650 = vmatprep.subr.bf16.mxu0 0
      %1651 = vmatpush1.bf16.msra.mxu0 0
      %1652 = vmatprep.mubr.bf16.mxu0 0
      %1653 = vmatmul.mubr.bf16.gmra.mrb[0].mxu0 %v1615
      %v1654 = vpop.f32.mrb[0].mxu0
      %v1655 = vadd.f32 0.0, %v1654
      %v1656 = vpop.f32.mrb[0].mxu0
      %v1657 = vpop.f32.mrb[0].mxu0
      %v1658 = vadd.f32 0.0, %v1657
      %v1659 = vpop.f32.mrb[0].mxu0
      %1660 = vmatprep.mubr.bf16.mxu0 0
      %1661 = vmatmul.mubr.bf16.gmra.mrb[0].mxu0 %v1618
      %v1662 = vpop.f32.mrb[0].mxu0
      %v1663 = vadd.f32 0.0, %v1662
      %v1664 = vpop.f32.mrb[0].mxu0
      %v1665 = vpop.f32.mrb[0].mxu0
      %v1666 = vpop.f32.mrb[0].mxu0
      %1667 = vdwg.mxu0
      %v1668 = vld [vmem:[%s8 + $0x80] sm:$0xf]
      %v1669 = vld [vmem:[%s8 + $0x84] sm:$0xf]
      %v1670 = vld [vmem:[%s8 + $0x88] sm:$0xf]
      %v1671 = vld [vmem:[%s8 + $0x8c] sm:$0xf]
      %v1672 = vld [vmem:[%s8 + $0x90] sm:$0xf]
      %v1673 = vld [vmem:[%s8 + $0x94] sm:$0xf]
      %v1674 = vld [vmem:[%s8 + $0x98] sm:$0xf]
      %v1675 = vld [vmem:[%s8 + $0x9c] sm:$0xf]
      %v1676 = vld [vmem:[%s8 + $0xa0] sm:$0xf]
      %v1677 = vld [vmem:[%s8 + $0xa4] sm:$0xf]
      %v1678 = vld [vmem:[%s8 + $0xa8] sm:$0xf]
      %v1679 = vld [vmem:[%s8 + $0xac] sm:$0xf]
      %v1680 = vld [vmem:[%s8 + $0xb0] sm:$0xf]
      %v1681 = vld [vmem:[%s8 + $0xb4] sm:$0xf]
      %v1682 = vld [vmem:[%s8 + $0xb8] sm:$0xf]
      %v1683 = vld [vmem:[%s8 + $0xbc] sm:$0xf]
      %v1684 = vpack.c.bf16 %v1658, %v1655
      %v1685 = vpack.c.bf16 %v1663, %v1663
      %v1702 = vunpack.c.l.b16 %v1668
      %v1703 = vunpack.c.l.b16 %v1669
      %v1704 = vunpack.c.l.b16 %v1670
      %v1705 = vunpack.c.l.b16 %v1671
      %v1706 = vunpack.c.l.b16 %v1672
      %v1707 = vunpack.c.l.b16 %v1673
      %v1708 = vunpack.c.l.b16 %v1674
      %v1709 = vunpack.c.l.b16 %v1675
      %v1710 = vunpack.c.l.b16 %v1676
      %v1711 = vunpack.c.l.b16 %v1677
      %v1712 = vunpack.c.l.b16 %v1678
      %v1713 = vunpack.c.l.b16 %v1679
      %v1714 = vunpack.c.l.b16 %v1680
      %v1715 = vunpack.c.l.b16 %v1681
      %v1716 = vunpack.c.l.b16 %v1682
      %v1717 = vunpack.c.l.b16 %v1683
      %v1718 = vpack.c.b16 %v1703, %v1702
      %v1719 = vpack.c.b16 %v1705, %v1704
      %v1720 = vpack.c.b16 %v1707, %v1706
      %v1721 = vpack.c.b16 %v1709, %v1708
      %v1722 = vpack.c.b16 %v1711, %v1710
      %v1723 = vpack.c.b16 %v1713, %v1712
      %v1724 = vpack.c.b16 %v1715, %v1714
      %v1725 = vpack.c.b16 %v1717, %v1716
      %1734 = vmatprep.subr.bf16.mxu0 0
      %1735 = vmatpush1.bf16.msra.mxu0 %v1718
      %1736 = vmatprep.subr.bf16.mxu0 0
      %1737 = vmatpush1.bf16.msra.mxu0 %v1719
      %1738 = vmatprep.subr.bf16.mxu0 0
      %1739 = vmatpush1.bf16.msra.mxu0 %v1720
      %1740 = vmatprep.subr.bf16.mxu0 0
      %1741 = vmatpush1.bf16.msra.mxu0 %v1721
      %1742 = vmatprep.subr.bf16.mxu0 0
      %1743 = vmatpush1.bf16.msra.mxu0 %v1722
      %1744 = vmatprep.subr.bf16.mxu0 0
      %1745 = vmatpush1.bf16.msra.mxu0 %v1723
      %1746 = vmatprep.subr.bf16.mxu0 0
      %1747 = vmatpush1.bf16.msra.mxu0 %v1724
      %1748 = vmatprep.subr.bf16.mxu0 0
      %1749 = vmatpush1.bf16.msra.mxu0 %v1725
      %1750 = vmatprep.subr.bf16.mxu0 0
      %1751 = vmatpush1.bf16.msra.mxu0 0
      %1752 = vmatprep.subr.bf16.mxu0 0
      %1753 = vmatpush1.bf16.msra.mxu0 0
      %1754 = vmatprep.subr.bf16.mxu0 0
      %1755 = vmatpush1.bf16.msra.mxu0 0
      %1756 = vmatprep.subr.bf16.mxu0 0
      %1757 = vmatpush1.bf16.msra.mxu0 0
      %1758 = vmatprep.subr.bf16.mxu0 0
      %1759 = vmatpush1.bf16.msra.mxu0 0
      %1760 = vmatprep.subr.bf16.mxu0 0
      %1761 = vmatpush1.bf16.msra.mxu0 0
      %1762 = vmatprep.subr.bf16.mxu0 0
      %1763 = vmatpush1.bf16.msra.mxu0 0
      %1764 = vmatprep.subr.bf16.mxu0 0
      %1765 = vmatpush1.bf16.msra.mxu0 0
      %1766 = vmatprep.mubr.bf16.mxu0 0
      %1767 = vmatmul.mubr.bf16.gmra.mrb[0].mxu0 %v1684
      %v1768 = vpop.f32.mrb[0].mxu0
      %v1769 = vadd.f32 0.0, %v1768
      %v1770 = vpop.f32.mrb[0].mxu0
      %v1771 = vpop.f32.mrb[0].mxu0
      %v1772 = vadd.f32 0.0, %v1771
      %v1773 = vpop.f32.mrb[0].mxu0
      %1774 = vmatprep.mubr.bf16.mxu0 0
      %1775 = vmatmul.mubr.bf16.gmra.mrb[0].mxu0 %v1685
      %v1776 = vpop.f32.mrb[0].mxu0
      %v1777 = vadd.f32 0.0, %v1776
      %v1778 = vpop.f32.mrb[0].mxu0
      %v1779 = vpop.f32.mrb[0].mxu0
      %v1780 = vpop.f32.mrb[0].mxu0
      %1781 = vdwg.mxu0
      %v1782 = vadd.f32 %v1338, %v1769
      %v1783 = vadd.f32 %v1339, %v1772
      %v1784 = vadd.f32 %v1340, %v1777
      %v1785 = vlaneseq
      %v1786 = vshrl.u32 %v1785, 7
      %v1787 = vsub.s32 5, %v1786
      %v1788 = vrot.slane %v452, %v1787
      %v1789 = vadd.f32 %v1782, %v1788
      %v1790 = vadd.f32 %v1783, %v1788
      %v1791 = vadd.f32 %v1784, %v1788
      %1792 = vadd.xlane.f32.xlu0 %v1789
      %v1793 = vpop.xlane.xlu0 %1792
      %1794 = vadd.xlane.f32.xlu0 %v1790
      %v1795 = vpop.xlane.xlu0 %1794
      %1796 = vadd.xlane.f32.xlu0 %v1791
      %v1797 = vpop.xlane.xlu0 %1796
      %v1798 = vmul.f32 %v1793, %v461
      %v1799 = vmul.f32 %v1795, %v461
      %v1800 = vmul.f32 %v1797, %v461
      %v1801 = vsub.f32 %v1789, %v1798
      %v1802 = vsub.f32 %v1790, %v1799
      %v1803 = vsub.f32 %v1791, %v1800
      %v1804 = vmul.f32 %v1801, %v1801
      %v1805 = vmul.f32 %v1802, %v1802
      %v1806 = vmul.f32 %v1803, %v1803
      %1807 = vadd.xlane.f32.xlu0 %v1804
      %v1808 = vpop.xlane.xlu0 %1807
      %1809 = vadd.xlane.f32.xlu0 %v1805
      %v1810 = vpop.xlane.xlu0 %1809
      %1811 = vadd.xlane.f32.xlu0 %v1806
      %v1812 = vpop.xlane.xlu0 %1811
      %v1813 = vmul.f32 %v1808, %v461
      %v1814 = vmul.f32 %v1810, %v461
      %v1815 = vmul.f32 %v1812, %v461
      %v1816 = vadd.f32 %v1813, 1e-05
      %v1817 = vadd.f32 %v1814, 1e-05
      %v1818 = vadd.f32 %v1815, 1e-05
      %v1819 = vrsqrt.pop %v1816
      %v1820 = vrsqrt.pop %v1817
      %v1821 = vrsqrt.pop %v1818
      %v1822 = vmul.f32 %v1801, %v1819
      %v1823 = vmul.f32 %v1802, %v1820
      %v1824 = vmul.f32 %v1803, %v1821
      %v1825 = vlaneseq
      %v1826 = vshrl.u32 %v1825, 7
      %v1827 = vsub.s32 2, %v1826
      %v1828 = vrot.slane %v453, %v1827
      %v1829 = vmul.f32 %v1822, %v1828
      %v1830 = vmul.f32 %v1823, %v1828
      %v1831 = vmul.f32 %v1824, %v1828
      %v1832 = vlaneseq
      %v1833 = vshrl.u32 %v1832, 7
      %v1834 = vsub.s32 3, %v1833
      %v1835 = vrot.slane %v453, %v1834
      %v1836 = vadd.f32 %v1829, %v1835
      %v1837 = vadd.f32 %v1830, %v1835
      %v1838 = vadd.f32 %v1831, %v1835
      %v1839 = vld [vmem:[%s8 + $0xc0] sm:$0xf]
      %v1840 = vld [vmem:[%s8 + $0xc4] sm:$0xf]
      %v1841 = vld [vmem:[%s8 + $0xc8] sm:$0xf]
      %v1842 = vld [vmem:[%s8 + $0xcc] sm:$0xf]
      %v1843 = vld [vmem:[%s8 + $0xd0] sm:$0xf]
      %v1844 = vld [vmem:[%s8 + $0xd4] sm:$0xf]
      %v1845 = vld [vmem:[%s8 + $0xd8] sm:$0xf]
      %v1846 = vld [vmem:[%s8 + $0xdc] sm:$0xf]
      %v1847 = vld [vmem:[%s8 + $0xe0] sm:$0xf]
      %v1848 = vld [vmem:[%s8 + $0xe4] sm:$0xf]
      %v1849 = vld [vmem:[%s8 + $0xe8] sm:$0xf]
      %v1850 = vld [vmem:[%s8 + $0xec] sm:$0xf]
      %v1851 = vld [vmem:[%s8 + $0xf0] sm:$0xf]
      %v1852 = vld [vmem:[%s8 + $0xf4] sm:$0xf]
      %v1853 = vld [vmem:[%s8 + $0xf8] sm:$0xf]
      %v1854 = vld [vmem:[%s8 + $0xfc] sm:$0xf]
      %v1855 = vpack.c.bf16 %v1837, %v1836
      %v1856 = vpack.c.bf16 %v1838, %v1838
      %v1857 = vlaneseq
      %v1858 = vshrl.u32 %v1857, 7
      %v1859 = vsub.s32 6, %v1858
      %v1860 = vrot.slane %v452, %v1859
      %v1877 = vunpack.c.l.b16 %v1839
      %v1878 = vunpack.c.l.b16 %v1840
      %v1879 = vunpack.c.l.b16 %v1841
      %v1880 = vunpack.c.l.b16 %v1842
      %v1881 = vunpack.c.l.b16 %v1843
      %v1882 = vunpack.c.l.b16 %v1844
      %v1883 = vunpack.c.l.b16 %v1845
      %v1884 = vunpack.c.l.b16 %v1846
      %v1885 = vunpack.c.l.b16 %v1847
      %v1886 = vunpack.c.l.b16 %v1848
      %v1887 = vunpack.c.l.b16 %v1849
      %v1888 = vunpack.c.l.b16 %v1850
      %v1889 = vunpack.c.l.b16 %v1851
      %v1890 = vunpack.c.l.b16 %v1852
      %v1891 = vunpack.c.l.b16 %v1853
      %v1892 = vunpack.c.l.b16 %v1854
      %v1893 = vpack.c.b16 %v1878, %v1877
      %v1894 = vpack.c.b16 %v1880, %v1879
      %v1895 = vpack.c.b16 %v1882, %v1881
      %v1896 = vpack.c.b16 %v1884, %v1883
      %v1897 = vpack.c.b16 %v1886, %v1885
      %v1898 = vpack.c.b16 %v1888, %v1887
      %v1899 = vpack.c.b16 %v1890, %v1889
      %v1900 = vpack.c.b16 %v1892, %v1891
      %1909 = vmatprep.subr.bf16.mxu0 0
      %1910 = vmatpush1.bf16.msra.mxu0 %v1893
      %1911 = vmatprep.subr.bf16.mxu0 0
      %1912 = vmatpush1.bf16.msra.mxu0 %v1894
      %1913 = vmatprep.subr.bf16.mxu0 0
      %1914 = vmatpush1.bf16.msra.mxu0 %v1895
      %1915 = vmatprep.subr.bf16.mxu0 0
      %1916 = vmatpush1.bf16.msra.mxu0 %v1896
      %1917 = vmatprep.subr.bf16.mxu0 0
      %1918 = vmatpush1.bf16.msra.mxu0 %v1897
      %1919 = vmatprep.subr.bf16.mxu0 0
      %1920 = vmatpush1.bf16.msra.mxu0 %v1898
      %1921 = vmatprep.subr.bf16.mxu0 0
      %1922 = vmatpush1.bf16.msra.mxu0 %v1899
      %1923 = vmatprep.subr.bf16.mxu0 0
      %1924 = vmatpush1.bf16.msra.mxu0 %v1900
      %1925 = vmatprep.subr.bf16.mxu0 0
      %1926 = vmatpush1.bf16.msra.mxu0 0
      %1927 = vmatprep.subr.bf16.mxu0 0
      %1928 = vmatpush1.bf16.msra.mxu0 0
      %1929 = vmatprep.subr.bf16.mxu0 0
      %1930 = vmatpush1.bf16.msra.mxu0 0
      %1931 = vmatprep.subr.bf16.mxu0 0
      %1932 = vmatpush1.bf16.msra.mxu0 0
      %1933 = vmatprep.subr.bf16.mxu0 0
      %1934 = vmatpush1.bf16.msra.mxu0 0
      %1935 = vmatprep.subr.bf16.mxu0 0
      %1936 = vmatpush1.bf16.msra.mxu0 0
      %1937 = vmatprep.subr.bf16.mxu0 0
      %1938 = vmatpush1.bf16.msra.mxu0 0
      %1939 = vmatprep.subr.bf16.mxu0 0
      %1940 = vmatpush1.bf16.msra.mxu0 0
      %1941 = vmatprep.mubr.bf16.mxu0 0
      %1942 = vmatmul.mubr.bf16.gmra.mrb[0].mxu0 %v1855
      %v1943 = vpop.f32.mrb[0].mxu0
      %v1944 = vadd.f32 %v1860, %v1943
      %v1945 = vpop.f32.mrb[0].mxu0
      %v1946 = vpop.f32.mrb[0].mxu0
      %v1947 = vadd.f32 %v1860, %v1946
      %v1948 = vpop.f32.mrb[0].mxu0
      %1949 = vmatprep.mubr.bf16.mxu0 0
      %1950 = vmatmul.mubr.bf16.gmra.mrb[0].mxu0 %v1856
      %v1951 = vpop.f32.mrb[0].mxu0
      %v1952 = vadd.f32 %v1860, %v1951
      %v1953 = vpop.f32.mrb[0].mxu0
      %v1954 = vpop.f32.mrb[0].mxu0
      %v1955 = vpop.f32.mrb[0].mxu0
      %1956 = vdwg.mxu0
      %v1957 = vmax.f32 %v1944, 0.0
      %v1958 = vmax.f32 %v1947, 0.0
      %v1959 = vmax.f32 %v1952, 0.0
      %v1960 = vld [vmem:[%s8 + $0x100] sm:$0xf]
      %v1961 = vld [vmem:[%s8 + $0x104] sm:$0xf]
      %v1962 = vld [vmem:[%s8 + $0x108] sm:$0xf]
      %v1963 = vld [vmem:[%s8 + $0x10c] sm:$0xf]
      %v1964 = vld [vmem:[%s8 + $0x110] sm:$0xf]
      %v1965 = vld [vmem:[%s8 + $0x114] sm:$0xf]
      %v1966 = vld [vmem:[%s8 + $0x118] sm:$0xf]
      %v1967 = vld [vmem:[%s8 + $0x11c] sm:$0xf]
      %v1968 = vld [vmem:[%s8 + $0x120] sm:$0xf]
      %v1969 = vld [vmem:[%s8 + $0x124] sm:$0xf]
      %v1970 = vld [vmem:[%s8 + $0x128] sm:$0xf]
      %v1971 = vld [vmem:[%s8 + $0x12c] sm:$0xf]
      %v1972 = vld [vmem:[%s8 + $0x130] sm:$0xf]
      %v1973 = vld [vmem:[%s8 + $0x134] sm:$0xf]
      %v1974 = vld [vmem:[%s8 + $0x138] sm:$0xf]
      %v1975 = vld [vmem:[%s8 + $0x13c] sm:$0xf]
      %v1976 = vpack.c.bf16 %v1958, %v1957
      %v1977 = vpack.c.bf16 %v1959, %v1959
      %v1994 = vunpack.c.l.b16 %v1960
      %v1995 = vunpack.c.l.b16 %v1961
      %v1996 = vunpack.c.l.b16 %v1962
      %v1997 = vunpack.c.l.b16 %v1963
      %v1998 = vunpack.c.l.b16 %v1964
      %v1999 = vunpack.c.l.b16 %v1965
      %v2000 = vunpack.c.l.b16 %v1966
      %v2001 = vunpack.c.l.b16 %v1967
      %v2002 = vunpack.c.l.b16 %v1968
      %v2003 = vunpack.c.l.b16 %v1969
      %v2004 = vunpack.c.l.b16 %v1970
      %v2005 = vunpack.c.l.b16 %v1971
      %v2006 = vunpack.c.l.b16 %v1972
      %v2007 = vunpack.c.l.b16 %v1973
      %v2008 = vunpack.c.l.b16 %v1974
      %v2009 = vunpack.c.l.b16 %v1975
      %v2010 = vpack.c.b16 %v1995, %v1994
      %v2011 = vpack.c.b16 %v1997, %v1996
      %v2012 = vpack.c.b16 %v1999, %v1998
      %v2013 = vpack.c.b16 %v2001, %v2000
      %v2014 = vpack.c.b16 %v2003, %v2002
      %v2015 = vpack.c.b16 %v2005, %v2004
      %v2016 = vpack.c.b16 %v2007, %v2006
      %v2017 = vpack.c.b16 %v2009, %v2008
      %2026 = vmatprep.subr.bf16.mxu0 0
      %2027 = vmatpush1.bf16.msra.mxu0 %v2010
      %2028 = vmatprep.subr.bf16.mxu0 0
      %2029 = vmatpush1.bf16.msra.mxu0 %v2011
      %2030 = vmatprep.subr.bf16.mxu0 0
      %2031 = vmatpush1.bf16.msra.mxu0 %v2012
      %2032 = vmatprep.subr.bf16.mxu0 0
      %2033 = vmatpush1.bf16.msra.mxu0 %v2013
      %2034 = vmatprep.subr.bf16.mxu0 0
      %2035 = vmatpush1.bf16.msra.mxu0 %v2014
      %2036 = vmatprep.subr.bf16.mxu0 0
      %2037 = vmatpush1.bf16.msra.mxu0 %v2015
      %2038 = vmatprep.subr.bf16.mxu0 0
      %2039 = vmatpush1.bf16.msra.mxu0 %v2016
      %2040 = vmatprep.subr.bf16.mxu0 0
      %2041 = vmatpush1.bf16.msra.mxu0 %v2017
      %2042 = vmatprep.subr.bf16.mxu0 0
      %2043 = vmatpush1.bf16.msra.mxu0 0
      %2044 = vmatprep.subr.bf16.mxu0 0
      %2045 = vmatpush1.bf16.msra.mxu0 0
      %2046 = vmatprep.subr.bf16.mxu0 0
      %2047 = vmatpush1.bf16.msra.mxu0 0
      %2048 = vmatprep.subr.bf16.mxu0 0
      %2049 = vmatpush1.bf16.msra.mxu0 0
      %2050 = vmatprep.subr.bf16.mxu0 0
      %2051 = vmatpush1.bf16.msra.mxu0 0
      %2052 = vmatprep.subr.bf16.mxu0 0
      %2053 = vmatpush1.bf16.msra.mxu0 0
      %2054 = vmatprep.subr.bf16.mxu0 0
      %2055 = vmatpush1.bf16.msra.mxu0 0
      %2056 = vmatprep.subr.bf16.mxu0 0
      %2057 = vmatpush1.bf16.msra.mxu0 0
      %2058 = vmatprep.mubr.bf16.mxu0 0
      %2059 = vmatmul.mubr.bf16.gmra.mrb[0].mxu0 %v1976
      %v2060 = vpop.f32.mrb[0].mxu0
      %v2061 = vpop.f32.mrb[0].mxu0
      %v2062 = vpop.f32.mrb[0].mxu0
      %v2063 = vadd.f32 0.0, %v2062
      %v2064 = vpop.f32.mrb[0].mxu0
      %2065 = vmatprep.mubr.bf16.mxu0 0
      %2066 = vmatmul.mubr.bf16.gmra.mrb[0].mxu0 %v1977
      %v2067 = vpop.f32.mrb[0].mxu0
      %v2068 = vpop.f32.mrb[0].mxu0
      %v2069 = vpop.f32.mrb[0].mxu0
      %v2070 = vpop.f32.mrb[0].mxu0
      %2071 = vdwg.mxu0
      %v2072 = vadd.f32 %v1837, %v2063
      %v2073 = vlaneseq
      %v2074 = vshrl.u32 %v2073, 7
      %v2075 = vsub.s32 7, %v2074
      %v2076 = vrot.slane %v452, %v2075
      %v2077 = vadd.f32 %v2072, %v2076
      %2078 = vadd.xlane.f32.xlu0 %v2077
      %v2079 = vpop.xlane.xlu0 %2078
      %v2080 = vmul.f32 %v2079, %v461
      %v2081 = vsub.f32 %v2077, %v2080
      %v2082 = vmul.f32 %v2081, %v2081
      %2083 = vadd.xlane.f32.xlu0 %v2082
      %v2084 = vpop.xlane.xlu0 %2083
      %v2085 = vmul.f32 %v2084, %v461
      %v2086 = vadd.f32 %v2085, 1e-05
      %v2087 = vrsqrt.pop %v2086
      %v2088 = vmul.f32 %v2081, %v2087
      %v2089 = vlaneseq
      %v2090 = vshrl.u32 %v2089, 7
      %v2091 = vsub.s32 4, %v2090
      %v2092 = vrot.slane %v453, %v2091
      %v2093 = vmul.f32 %v2088, %v2092
      %v2094 = vlaneseq
      %v2095 = vshrl.u32 %v2094, 7
      %v2096 = vsub.s32 5, %v2095
      %v2097 = vrot.slane %v453, %v2096
      %v2098 = vadd.f32 %v2093, %v2097
      %v2099 = vld [vmem:[%s8 + $0x140] sm:$0xf]
      %v2100 = vld [vmem:[%s8 + $0x144] sm:$0xf]
      %v2101 = vld [vmem:[%s8 + $0x148] sm:$0xf]
      %v2102 = vld [vmem:[%s8 + $0x14c] sm:$0xf]
      %v2103 = vld [vmem:[%s8 + $0x150] sm:$0xf]
      %v2104 = vld [vmem:[%s8 + $0x154] sm:$0xf]
      %v2105 = vld [vmem:[%s8 + $0x158] sm:$0xf]
      %v2106 = vld [vmem:[%s8 + $0x15c] sm:$0xf]
      %v2107 = vld [vmem:[%s8 + $0x160] sm:$0xf]
      %v2108 = vld [vmem:[%s8 + $0x164] sm:$0xf]
      %v2109 = vld [vmem:[%s8 + $0x168] sm:$0xf]
      %v2110 = vld [vmem:[%s8 + $0x16c] sm:$0xf]
      %v2111 = vld [vmem:[%s8 + $0x170] sm:$0xf]
      %v2112 = vld [vmem:[%s8 + $0x174] sm:$0xf]
      %v2113 = vld [vmem:[%s8 + $0x178] sm:$0xf]
      %v2114 = vld [vmem:[%s8 + $0x17c] sm:$0xf]
      %v2115 = vpack.c.bf16 %v2098, %v2098
      %v2116 = vlaneseq
      %v2117 = vshrl.u32 %v2116, 7
      %v2118 = vsub.s32 6, %v2117
      %v2119 = vrot.slane %v453, %v2118
      %v2136 = vunpack.c.l.b16 %v2099
      %v2137 = vunpack.c.l.b16 %v2100
      %v2138 = vunpack.c.l.b16 %v2101
      %v2139 = vunpack.c.l.b16 %v2102
      %v2140 = vunpack.c.l.b16 %v2103
      %v2141 = vunpack.c.l.b16 %v2104
      %v2142 = vunpack.c.l.b16 %v2105
      %v2143 = vunpack.c.l.b16 %v2106
      %v2144 = vunpack.c.l.b16 %v2107
      %v2145 = vunpack.c.l.b16 %v2108
      %v2146 = vunpack.c.l.b16 %v2109
      %v2147 = vunpack.c.l.b16 %v2110
      %v2148 = vunpack.c.l.b16 %v2111
      %v2149 = vunpack.c.l.b16 %v2112
      %v2150 = vunpack.c.l.b16 %v2113
      %v2151 = vunpack.c.l.b16 %v2114
      %v2152 = vpack.c.b16 %v2137, %v2136
      %v2153 = vpack.c.b16 %v2139, %v2138
      %v2154 = vpack.c.b16 %v2141, %v2140
      %v2155 = vpack.c.b16 %v2143, %v2142
      %v2156 = vpack.c.b16 %v2145, %v2144
      %v2157 = vpack.c.b16 %v2147, %v2146
      %v2158 = vpack.c.b16 %v2149, %v2148
      %v2159 = vpack.c.b16 %v2151, %v2150
      %2168 = vmatprep.subr.bf16.mxu0 0
      %2169 = vmatpush1.bf16.msra.mxu0 %v2152
      %2170 = vmatprep.subr.bf16.mxu0 0
      %2171 = vmatpush1.bf16.msra.mxu0 %v2153
      %2172 = vmatprep.subr.bf16.mxu0 0
      %2173 = vmatpush1.bf16.msra.mxu0 %v2154
      %2174 = vmatprep.subr.bf16.mxu0 0
      %2175 = vmatpush1.bf16.msra.mxu0 %v2155
      %2176 = vmatprep.subr.bf16.mxu0 0
      %2177 = vmatpush1.bf16.msra.mxu0 %v2156
      %2178 = vmatprep.subr.bf16.mxu0 0
      %2179 = vmatpush1.bf16.msra.mxu0 %v2157
      %2180 = vmatprep.subr.bf16.mxu0 0
      %2181 = vmatpush1.bf16.msra.mxu0 %v2158
      %2182 = vmatprep.subr.bf16.mxu0 0
      %2183 = vmatpush1.bf16.msra.mxu0 %v2159
      %2184 = vmatprep.subr.bf16.mxu0 0
      %2185 = vmatpush1.bf16.msra.mxu0 0
      %2186 = vmatprep.subr.bf16.mxu0 0
      %2187 = vmatpush1.bf16.msra.mxu0 0
      %2188 = vmatprep.subr.bf16.mxu0 0
      %2189 = vmatpush1.bf16.msra.mxu0 0
      %2190 = vmatprep.subr.bf16.mxu0 0
      %2191 = vmatpush1.bf16.msra.mxu0 0
      %2192 = vmatprep.subr.bf16.mxu0 0
      %2193 = vmatpush1.bf16.msra.mxu0 0
      %2194 = vmatprep.subr.bf16.mxu0 0
      %2195 = vmatpush1.bf16.msra.mxu0 0
      %2196 = vmatprep.subr.bf16.mxu0 0
      %2197 = vmatpush1.bf16.msra.mxu0 0
      %2198 = vmatprep.subr.bf16.mxu0 0
      %2199 = vmatpush1.bf16.msra.mxu0 0
      %2200 = vmatprep.mubr.bf16.mxu0 0
      %2201 = vmatmul.mubr.bf16.gmra.mrb[0].mxu0 %v2115
      %v2202 = vpop.f32.mrb[0].mxu0
      %v2203 = vadd.f32 %v2119, %v2202
      %v2204 = vpop.f32.mrb[0].mxu0
      %v2205 = vpop.f32.mrb[0].mxu0
      %v2206 = vpop.f32.mrb[0].mxu0
      %2207 = vdwg.mxu0
      %v2208 = vmax.f32 %v2203, 0.0
      %v2209 = vld [vmem:[%s8 + $0x180] sm:$0xf]
      %v2210 = vld [vmem:[%s8 + $0x184] sm:$0xf]
      %v2211 = vld [vmem:[%s8 + $0x188] sm:$0xf]
      %v2212 = vld [vmem:[%s8 + $0x18c] sm:$0xf]
      %v2213 = vld [vmem:[%s8 + $0x190] sm:$0xf]
      %v2214 = vld [vmem:[%s8 + $0x194] sm:$0xf]
      %v2215 = vld [vmem:[%s8 + $0x198] sm:$0xf]
      %v2216 = vld [vmem:[%s8 + $0x19c] sm:$0xf]
      %v2217 = vld [vmem:[%s8 + $0x1a0] sm:$0xf]
      %v2218 = vld [vmem:[%s8 + $0x1a4] sm:$0xf]
      %v2219 = vld [vmem:[%s8 + $0x1a8] sm:$0xf]
      %v2220 = vld [vmem:[%s8 + $0x1ac] sm:$0xf]
      %v2221 = vld [vmem:[%s8 + $0x1b0] sm:$0xf]
      %v2222 = vld [vmem:[%s8 + $0x1b4] sm:$0xf]
      %v2223 = vld [vmem:[%s8 + $0x1b8] sm:$0xf]
      %v2224 = vld [vmem:[%s8 + $0x1bc] sm:$0xf]
      %v2225 = vpack.c.bf16 %v2208, %v2208
      %v2226 = vlaneseq
      %v2227 = vshrl.u32 %v2226, 7
      %v2228 = vsub.s32 7, %v2227
      %v2229 = vrot.slane %v453, %v2228
      %v2246 = vunpack.c.l.b16 %v2209
      %v2247 = vunpack.c.l.b16 %v2210
      %v2248 = vunpack.c.l.b16 %v2211
      %v2249 = vunpack.c.l.b16 %v2212
      %v2250 = vunpack.c.l.b16 %v2213
      %v2251 = vunpack.c.l.b16 %v2214
      %v2252 = vunpack.c.l.b16 %v2215
      %v2253 = vunpack.c.l.b16 %v2216
      %v2254 = vunpack.c.l.b16 %v2217
      %v2255 = vunpack.c.l.b16 %v2218
      %v2256 = vunpack.c.l.b16 %v2219
      %v2257 = vunpack.c.l.b16 %v2220
      %v2258 = vunpack.c.l.b16 %v2221
      %v2259 = vunpack.c.l.b16 %v2222
      %v2260 = vunpack.c.l.b16 %v2223
      %v2261 = vunpack.c.l.b16 %v2224
      %v2262 = vpack.c.b16 %v2247, %v2246
      %v2263 = vpack.c.b16 %v2249, %v2248
      %v2264 = vpack.c.b16 %v2251, %v2250
      %v2265 = vpack.c.b16 %v2253, %v2252
      %v2266 = vpack.c.b16 %v2255, %v2254
      %v2267 = vpack.c.b16 %v2257, %v2256
      %v2268 = vpack.c.b16 %v2259, %v2258
      %v2269 = vpack.c.b16 %v2261, %v2260
      %2278 = vmatprep.subr.bf16.mxu0 0
      %2279 = vmatpush1.bf16.msra.mxu0 %v2262
      %2280 = vmatprep.subr.bf16.mxu0 0
      %2281 = vmatpush1.bf16.msra.mxu0 %v2263
      %2282 = vmatprep.subr.bf16.mxu0 0
      %2283 = vmatpush1.bf16.msra.mxu0 %v2264
      %2284 = vmatprep.subr.bf16.mxu0 0
      %2285 = vmatpush1.bf16.msra.mxu0 %v2265
      %2286 = vmatprep.subr.bf16.mxu0 0
      %2287 = vmatpush1.bf16.msra.mxu0 %v2266
      %2288 = vmatprep.subr.bf16.mxu0 0
      %2289 = vmatpush1.bf16.msra.mxu0 %v2267
      %2290 = vmatprep.subr.bf16.mxu0 0
      %2291 = vmatpush1.bf16.msra.mxu0 %v2268
      %2292 = vmatprep.subr.bf16.mxu0 0
      %2293 = vmatpush1.bf16.msra.mxu0 %v2269
      %2294 = vmatprep.subr.bf16.mxu0 0
      %2295 = vmatpush1.bf16.msra.mxu0 0
      %2296 = vmatprep.subr.bf16.mxu0 0
      %2297 = vmatpush1.bf16.msra.mxu0 0
      %2298 = vmatprep.subr.bf16.mxu0 0
      %2299 = vmatpush1.bf16.msra.mxu0 0
      %2300 = vmatprep.subr.bf16.mxu0 0
      %2301 = vmatpush1.bf16.msra.mxu0 0
      %2302 = vmatprep.subr.bf16.mxu0 0
      %2303 = vmatpush1.bf16.msra.mxu0 0
      %2304 = vmatprep.subr.bf16.mxu0 0
      %2305 = vmatpush1.bf16.msra.mxu0 0
      %2306 = vmatprep.subr.bf16.mxu0 0
      %2307 = vmatpush1.bf16.msra.mxu0 0
      %2308 = vmatprep.subr.bf16.mxu0 0
      %2309 = vmatpush1.bf16.msra.mxu0 0
      %2310 = vmatprep.mubr.bf16.mxu0 0
      %2311 = vmatmul.mubr.bf16.gmra.mrb[0].mxu0 %v2225
      %v2312 = vpop.f32.mrb[0].mxu0
      %v2313 = vadd.f32 %v2229, %v2312
      %v2314 = vpop.f32.mrb[0].mxu0
      %v2315 = vpop.f32.mrb[0].mxu0
      %v2316 = vpop.f32.mrb[0].mxu0
      %2317 = vdwg.mxu0
      %v2318 = vsel %vm555, %v2313, 0.0
      %2319 = vadd.xlane.f32.xlu0 %v2318
      %v2320 = vpop.xlane.xlu0 %2319
      %v2321 = vadd.f32 %v564, %v2320
      %v2322 = vsel %vm559, %v2313, 0.0
      %2323 = vadd.xlane.f32.xlu0 %v2322
      %v2324 = vpop.xlane.xlu0 %2323
      %v2325 = vadd.f32 %v566, %v2324
      %v2326 = vsel %vm555, %v2321, 0.0
      %v2327 = vsel %vm559, %v2325, 0.0
      %v2328 = vadd.f32 %v2326, %v2327
      %2329 = vst [vmem:[%s450] sm:$0xff] %v2328
      %v2330 = vmax.f32 %v2321, 0.0
      %v2331 = vmin.f32 %v2330, 15.0
      %v2332 = vmax.f32 %v2325, 0.0
      %v2333 = vmin.f32 %v2332, 15.0
      %v2334 = vcvt.f32.s32.to.zero.pseudo %v2331
      %v2335 = vmul.u32 %v2334, 16
      %v2336 = vcvt.f32.s32.to.zero.pseudo %v2333
      %v2337 = vadd.s32 %v2335, %v2336
      %vm2338 = vcmp.eq.s32.totalorder %v552, %v2337
      %vm2339 = vcmp.eq.s32.totalorder %v553, %v2337
      %v2340 = vsel %vm2338, 1, 0
      %v2341 = vsel %vm2339, 1, 0
      %v2342 = vcvt.s32.f32 %v2340
      %v2343 = vcvt.s32.f32 %v2341
      %v2344 = vpack.c.bf16 %v2342, %v2342
      %v2345 = vpack.c.bf16 %v2343, %v2343
      %2346 = vmatprep.subr.bf16.mxu0 0
      %2347 = vmatpush1.bf16.msra.mxu0 %v643
      %2348 = vmatprep.subr.bf16.mxu0 0
      %2349 = vmatpush1.bf16.msra.mxu0 %v644
      %2350 = vmatprep.subr.bf16.mxu0 0
      %2351 = vmatpush1.bf16.msra.mxu0 %v645
      %2352 = vmatprep.subr.bf16.mxu0 0
      %2353 = vmatpush1.bf16.msra.mxu0 %v646
      %2354 = vmatprep.subr.bf16.mxu0 0
      %2355 = vmatpush1.bf16.msra.mxu0 %v647
      %2356 = vmatprep.subr.bf16.mxu0 0
      %2357 = vmatpush1.bf16.msra.mxu0 %v648
      %2358 = vmatprep.subr.bf16.mxu0 0
      %2359 = vmatpush1.bf16.msra.mxu0 %v649
      %2360 = vmatprep.subr.bf16.mxu0 0
      %2361 = vmatpush1.bf16.msra.mxu0 %v650
      %2362 = vmatprep.subr.bf16.mxu0 0
      %2363 = vmatpush1.bf16.msra.mxu0 %v651
      %2364 = vmatprep.subr.bf16.mxu0 0
      %2365 = vmatpush1.bf16.msra.mxu0 %v652
      %2366 = vmatprep.subr.bf16.mxu0 0
      %2367 = vmatpush1.bf16.msra.mxu0 %v653
      %2368 = vmatprep.subr.bf16.mxu0 0
      %2369 = vmatpush1.bf16.msra.mxu0 %v654
      %2370 = vmatprep.subr.bf16.mxu0 0
      %2371 = vmatpush1.bf16.msra.mxu0 %v655
      %2372 = vmatprep.subr.bf16.mxu0 0
      %2373 = vmatpush1.bf16.msra.mxu0 %v656
      %2374 = vmatprep.subr.bf16.mxu0 0
      %2375 = vmatpush1.bf16.msra.mxu0 %v657
      %2376 = vmatprep.subr.bf16.mxu0 0
      %2377 = vmatpush1.bf16.msra.mxu0 %v658
      %2378 = vmatprep.mubr.bf16.mxu0 %v2345
      %2379 = vmatmul.mubr.bf16.gmra.mrb[0].mxu0 %v2344
      %v2380 = vpop.f32.mrb[0].mxu0
      %v2381 = vadd.f32 0.0, %v2380
      %v2382 = vpop.f32.mrb[0].mxu0
      %v2383 = vpop.f32.mrb[0].mxu0
      %v2384 = vpop.f32.mrb[0].mxu0
      %2385 = vdwg.mxu0
      %v2386 = vsel %vm715, %v2381, 0.0
      %v2387 = vsel %vm717, %v2331, 0.0
      %v2388 = vadd.f32 %v2386, %v2387
      %v2389 = vsel %vm720, %v2333, 0.0
      %v2390 = vadd.f32 %v2388, %v2389
      %2391 = vadd.xlane.f32.xlu0 %v2390
      %v2392 = vpop.xlane.xlu0 %2391
      %v2393 = vmul.f32 %v2392, %v461
      %v2394 = vsub.f32 %v2390, %v2393
      %v2395 = vmul.f32 %v2394, %v2394
      %2396 = vadd.xlane.f32.xlu0 %v2395
      %v2397 = vpop.xlane.xlu0 %2396
      %v2398 = vmul.f32 %v2397, %v461
      %v2399 = vadd.f32 %v2398, 1e-05
      %v2400 = vrsqrt.pop %v2399
      %v2401 = vmul.f32 %v2394, %v2400
      %v2402 = vmul.f32 %v2401, %v474
      %v2403 = vadd.f32 %v2402, %v479
      %v2404 = vadd.f32 %v2403, %v456
      %v2405 = vld [vmem:[%s7] sm:$0xff]
      %v2406 = vld [vmem:[%s7 + $0x8] sm:$0xf]
      %v2407 = vld [vmem:[%s7 + $0xc] sm:$0xff]
      %v2408 = vld [vmem:[%s7 + $0x14] sm:$0xf]
      %v2409 = vld [vmem:[%s7 + $0x18] sm:$0xff]
      %v2410 = vld [vmem:[%s7 + $0x20] sm:$0xf]
      %v2411 = vld [vmem:[%s7 + $0x24] sm:$0xff]
      %v2412 = vld [vmem:[%s7 + $0x2c] sm:$0xf]
      %v2413 = vld [vmem:[%s7 + $0x30] sm:$0xff]
      %v2414 = vld [vmem:[%s7 + $0x38] sm:$0xf]
      %v2415 = vld [vmem:[%s7 + $0x3c] sm:$0xff]
      %v2416 = vld [vmem:[%s7 + $0x44] sm:$0xf]
      %v2417 = vld [vmem:[%s7 + $0x48] sm:$0xff]
      %v2418 = vld [vmem:[%s7 + $0x50] sm:$0xf]
      %v2419 = vld [vmem:[%s7 + $0x54] sm:$0xff]
      %v2420 = vld [vmem:[%s7 + $0x5c] sm:$0xf]
      %v2421 = vld [vmem:[%s7 + $0x60] sm:$0xff]
      %v2422 = vld [vmem:[%s7 + $0x68] sm:$0xf]
      %v2423 = vld [vmem:[%s7 + $0x6c] sm:$0xff]
      %v2424 = vld [vmem:[%s7 + $0x74] sm:$0xf]
      %v2425 = vld [vmem:[%s7 + $0x78] sm:$0xff]
      %v2426 = vld [vmem:[%s7 + $0x80] sm:$0xf]
      %v2427 = vld [vmem:[%s7 + $0x84] sm:$0xff]
      %v2428 = vld [vmem:[%s7 + $0x8c] sm:$0xf]
      %v2429 = vld [vmem:[%s7 + $0x90] sm:$0xff]
      %v2430 = vld [vmem:[%s7 + $0x98] sm:$0xf]
      %v2431 = vld [vmem:[%s7 + $0x9c] sm:$0xff]
      %v2432 = vld [vmem:[%s7 + $0xa4] sm:$0xf]
      %v2433 = vld [vmem:[%s7 + $0xa8] sm:$0xff]
      %v2434 = vld [vmem:[%s7 + $0xb0] sm:$0xf]
      %v2435 = vld [vmem:[%s7 + $0xb4] sm:$0xff]
      %v2436 = vld [vmem:[%s7 + $0xbc] sm:$0xf]
      %v2437 = vpack.c.bf16 %v2404, %v481
      %v2470 = vunpack.c.l.b16 %v2405
      %v2471 = vunpack.c.h.b16 %v2405
      %v2472 = vunpack.c.l.b16 %v2406
      %v2473 = vunpack.c.l.b16 %v2407
      %v2474 = vunpack.c.h.b16 %v2407
      %v2475 = vunpack.c.l.b16 %v2408
      %v2476 = vunpack.c.l.b16 %v2409
      %v2477 = vunpack.c.h.b16 %v2409
      %v2478 = vunpack.c.l.b16 %v2410
      %v2479 = vunpack.c.l.b16 %v2411
      %v2480 = vunpack.c.h.b16 %v2411
      %v2481 = vunpack.c.l.b16 %v2412
      %v2482 = vunpack.c.l.b16 %v2413
      %v2483 = vunpack.c.h.b16 %v2413
      %v2484 = vunpack.c.l.b16 %v2414
      %v2485 = vunpack.c.l.b16 %v2415
      %v2486 = vunpack.c.h.b16 %v2415
      %v2487 = vunpack.c.l.b16 %v2416
      %v2488 = vunpack.c.l.b16 %v2417
      %v2489 = vunpack.c.h.b16 %v2417
      %v2490 = vunpack.c.l.b16 %v2418
      %v2491 = vunpack.c.l.b16 %v2419
      %v2492 = vunpack.c.h.b16 %v2419
      %v2493 = vunpack.c.l.b16 %v2420
      %v2494 = vunpack.c.l.b16 %v2421
      %v2495 = vunpack.c.h.b16 %v2421
      %v2496 = vunpack.c.l.b16 %v2422
      %v2497 = vunpack.c.l.b16 %v2423
      %v2498 = vunpack.c.h.b16 %v2423
      %v2499 = vunpack.c.l.b16 %v2424
      %v2500 = vunpack.c.l.b16 %v2425
      %v2501 = vunpack.c.h.b16 %v2425
      %v2502 = vunpack.c.l.b16 %v2426
      %v2503 = vunpack.c.l.b16 %v2427
      %v2504 = vunpack.c.h.b16 %v2427
      %v2505 = vunpack.c.l.b16 %v2428
      %v2506 = vunpack.c.l.b16 %v2429
      %v2507 = vunpack.c.h.b16 %v2429
      %v2508 = vunpack.c.l.b16 %v2430
      %v2509 = vunpack.c.l.b16 %v2431
      %v2510 = vunpack.c.h.b16 %v2431
      %v2511 = vunpack.c.l.b16 %v2432
      %v2512 = vunpack.c.l.b16 %v2433
      %v2513 = vunpack.c.h.b16 %v2433
      %v2514 = vunpack.c.l.b16 %v2434
      %v2515 = vunpack.c.l.b16 %v2435
      %v2516 = vunpack.c.h.b16 %v2435
      %v2517 = vunpack.c.l.b16 %v2436
      %v2518 = vpack.c.b16 %v2473, %v2470
      %v2519 = vpack.c.b16 %v2474, %v2471
      %v2520 = vpack.c.b16 %v2475, %v2472
      %v2521 = vpack.c.b16 %v2479, %v2476
      %v2522 = vpack.c.b16 %v2480, %v2477
      %v2523 = vpack.c.b16 %v2481, %v2478
      %v2524 = vpack.c.b16 %v2485, %v2482
      %v2525 = vpack.c.b16 %v2486, %v2483
      %v2526 = vpack.c.b16 %v2487, %v2484
      %v2527 = vpack.c.b16 %v2491, %v2488
      %v2528 = vpack.c.b16 %v2492, %v2489
      %v2529 = vpack.c.b16 %v2493, %v2490
      %v2530 = vpack.c.b16 %v2497, %v2494
      %v2531 = vpack.c.b16 %v2498, %v2495
      %v2532 = vpack.c.b16 %v2499, %v2496
      %v2533 = vpack.c.b16 %v2503, %v2500
      %v2534 = vpack.c.b16 %v2504, %v2501
      %v2535 = vpack.c.b16 %v2505, %v2502
      %v2536 = vpack.c.b16 %v2509, %v2506
      %v2537 = vpack.c.b16 %v2510, %v2507
      %v2538 = vpack.c.b16 %v2511, %v2508
      %v2539 = vpack.c.b16 %v2515, %v2512
      %v2540 = vpack.c.b16 %v2516, %v2513
      %v2541 = vpack.c.b16 %v2517, %v2514
      %2566 = vmatprep.subr.bf16.mxu0 %v2519
      %2567 = vmatpush1.bf16.msra.mxu0 %v2518
      %2568 = vmatprep.subr.bf16.mxu0 %v2522
      %2569 = vmatpush1.bf16.msra.mxu0 %v2521
      %2570 = vmatprep.subr.bf16.mxu0 %v2525
      %2571 = vmatpush1.bf16.msra.mxu0 %v2524
      %2572 = vmatprep.subr.bf16.mxu0 %v2528
      %2573 = vmatpush1.bf16.msra.mxu0 %v2527
      %2574 = vmatprep.subr.bf16.mxu0 %v2531
      %2575 = vmatpush1.bf16.msra.mxu0 %v2530
      %2576 = vmatprep.subr.bf16.mxu0 %v2534
      %2577 = vmatpush1.bf16.msra.mxu0 %v2533
      %2578 = vmatprep.subr.bf16.mxu0 %v2537
      %2579 = vmatpush1.bf16.msra.mxu0 %v2536
      %2580 = vmatprep.subr.bf16.mxu0 %v2540
      %2581 = vmatpush1.bf16.msra.mxu0 %v2539
      %2582 = vmatprep.subr.bf16.mxu0 0
      %2583 = vmatpush1.bf16.msra.mxu0 0
      %2584 = vmatprep.subr.bf16.mxu0 0
      %2585 = vmatpush1.bf16.msra.mxu0 0
      %2586 = vmatprep.subr.bf16.mxu0 0
      %2587 = vmatpush1.bf16.msra.mxu0 0
      %2588 = vmatprep.subr.bf16.mxu0 0
      %2589 = vmatpush1.bf16.msra.mxu0 0
      %2590 = vmatprep.subr.bf16.mxu0 0
      %2591 = vmatpush1.bf16.msra.mxu0 0
      %2592 = vmatprep.subr.bf16.mxu0 0
      %2593 = vmatpush1.bf16.msra.mxu0 0
      %2594 = vmatprep.subr.bf16.mxu0 0
      %2595 = vmatpush1.bf16.msra.mxu0 0
      %2596 = vmatprep.subr.bf16.mxu0 0
      %2597 = vmatpush1.bf16.msra.mxu0 0
      %2598 = vmatprep.mubr.bf16.mxu0 0
      %2599 = vmatmul.mubr.bf16.gmra.mrb[0].mxu0 %v2437
      %v2600 = vpop.f32.mrb[0].mxu0
      %v2601 = vadd.f32 0.0, %v2600
      %v2602 = vpop.f32.mrb[0].mxu0
      %v2603 = vadd.f32 0.0, %v2602
      %v2604 = vpop.f32.mrb[0].mxu0
      %v2605 = vadd.f32 0.0, %v2604
      %v2606 = vpop.f32.mrb[0].mxu0
      %v2607 = vadd.f32 0.0, %v2606
      %2608 = vmatprep.mubr.bf16.mxu0 0
      %2609 = vmatmul.mubr.bf16.gmra.mrb[0].mxu0 %v770
      %v2610 = vpop.f32.mrb[0].mxu0
      %v2611 = vadd.f32 0.0, %v2610
      %v2612 = vpop.f32.mrb[0].mxu0
      %v2613 = vadd.f32 0.0, %v2612
      %v2614 = vpop.f32.mrb[0].mxu0
      %v2615 = vpop.f32.mrb[0].mxu0
      %2616 = vdwg.mxu0
      %2617 = vmatprep.subr.bf16.mxu0 0
      %2618 = vmatpush1.bf16.msra.mxu0 %v2520
      %2619 = vmatprep.subr.bf16.mxu0 0
      %2620 = vmatpush1.bf16.msra.mxu0 %v2523
      %2621 = vmatprep.subr.bf16.mxu0 0
      %2622 = vmatpush1.bf16.msra.mxu0 %v2526
      %2623 = vmatprep.subr.bf16.mxu0 0
      %2624 = vmatpush1.bf16.msra.mxu0 %v2529
      %2625 = vmatprep.subr.bf16.mxu0 0
      %2626 = vmatpush1.bf16.msra.mxu0 %v2532
      %2627 = vmatprep.subr.bf16.mxu0 0
      %2628 = vmatpush1.bf16.msra.mxu0 %v2535
      %2629 = vmatprep.subr.bf16.mxu0 0
      %2630 = vmatpush1.bf16.msra.mxu0 %v2538
      %2631 = vmatprep.subr.bf16.mxu0 0
      %2632 = vmatpush1.bf16.msra.mxu0 %v2541
      %2633 = vmatprep.subr.bf16.mxu0 0
      %2634 = vmatpush1.bf16.msra.mxu0 0
      %2635 = vmatprep.subr.bf16.mxu0 0
      %2636 = vmatpush1.bf16.msra.mxu0 0
      %2637 = vmatprep.subr.bf16.mxu0 0
      %2638 = vmatpush1.bf16.msra.mxu0 0
      %2639 = vmatprep.subr.bf16.mxu0 0
      %2640 = vmatpush1.bf16.msra.mxu0 0
      %2641 = vmatprep.subr.bf16.mxu0 0
      %2642 = vmatpush1.bf16.msra.mxu0 0
      %2643 = vmatprep.subr.bf16.mxu0 0
      %2644 = vmatpush1.bf16.msra.mxu0 0
      %2645 = vmatprep.subr.bf16.mxu0 0
      %2646 = vmatpush1.bf16.msra.mxu0 0
      %2647 = vmatprep.subr.bf16.mxu0 0
      %2648 = vmatpush1.bf16.msra.mxu0 0
      %2649 = vmatprep.mubr.bf16.mxu0 0
      %2650 = vmatmul.mubr.bf16.gmra.mrb[0].mxu0 %v2437
      %v2651 = vpop.f32.mrb[0].mxu0
      %v2652 = vadd.f32 0.0, %v2651
      %v2653 = vpop.f32.mrb[0].mxu0
      %v2654 = vpop.f32.mrb[0].mxu0
      %v2655 = vadd.f32 0.0, %v2654
      %v2656 = vpop.f32.mrb[0].mxu0
      %2657 = vmatprep.mubr.bf16.mxu0 0
      %2658 = vmatmul.mubr.bf16.gmra.mrb[0].mxu0 %v770
      %v2659 = vpop.f32.mrb[0].mxu0
      %v2660 = vadd.f32 0.0, %v2659
      %v2661 = vpop.f32.mrb[0].mxu0
      %v2662 = vpop.f32.mrb[0].mxu0
      %v2663 = vpop.f32.mrb[0].mxu0
      %2664 = vdwg.mxu0
      %v2665 = vadd.f32 %v2601, %v1001
      %v2666 = vadd.f32 %v2605, %v1001
      %v2667 = vadd.f32 %v2611, %v1001
      %v2668 = vadd.f32 %v2603, %v1008
      %v2669 = vadd.f32 %v2607, %v1008
      %v2670 = vadd.f32 %v2613, %v1008
      %v2671 = vadd.f32 %v2652, %v1015
      %v2672 = vadd.f32 %v2655, %v1015
      %v2673 = vadd.f32 %v2660, %v1015
      %v2674 = vpack.c.bf16 %v2666, %v2665
      %v2675 = vpack.c.bf16 %v2667, %v2667
      %v2676 = vpack.c.bf16 %v2669, %v2668
      %v2677 = vpack.c.bf16 %v2670, %v2670
      %2678 = vmatprep.subr.bf16.mxu0 0
      %2679 = vmatpush1.bf16.xpose.msra.mxu0 %v2676
      %2680 = vmatprep.subr.bf16.mxu0 0
      %2681 = vmatpush1.bf16.xpose.msra.mxu0 %v2677
      %2682 = vmatprep.subr.bf16.mxu0 0
      %2683 = vmatpush1.bf16.xpose.msra.mxu0 0
      %2684 = vmatprep.subr.bf16.mxu0 0
      %2685 = vmatpush1.bf16.xpose.msra.mxu0 0
      %2686 = vmatprep.subr.bf16.mxu0 0
      %2687 = vmatpush1.bf16.xpose.msra.mxu0 0
      %2688 = vmatprep.subr.bf16.mxu0 0
      %2689 = vmatpush1.bf16.xpose.msra.mxu0 0
      %2690 = vmatprep.subr.bf16.mxu0 0
      %2691 = vmatpush1.bf16.xpose.msra.mxu0 0
      %2692 = vmatprep.subr.bf16.mxu0 0
      %2693 = vmatpush1.bf16.xpose.msra.mxu0 0
      %2694 = vmatprep.subr.bf16.mxu0 0
      %2695 = vmatpush1.bf16.xpose.msra.mxu0 0
      %2696 = vmatprep.subr.bf16.mxu0 0
      %2697 = vmatpush1.bf16.xpose.msra.mxu0 0
      %2698 = vmatprep.subr.bf16.mxu0 0
      %2699 = vmatpush1.bf16.xpose.msra.mxu0 0
      %2700 = vmatprep.subr.bf16.mxu0 0
      %2701 = vmatpush1.bf16.xpose.msra.mxu0 0
      %2702 = vmatprep.subr.bf16.mxu0 0
      %2703 = vmatpush1.bf16.xpose.msra.mxu0 0
      %2704 = vmatprep.subr.bf16.mxu0 0
      %2705 = vmatpush1.bf16.xpose.msra.mxu0 0
      %2706 = vmatprep.subr.bf16.mxu0 0
      %2707 = vmatpush1.bf16.xpose.msra.mxu0 0
      %2708 = vmatprep.subr.bf16.mxu0 0
      %2709 = vmatpush1.bf16.xpose.msra.mxu0 0
      %2710 = vmatprep.mubr.bf16.mxu0 0
      %2711 = vmatmul.mubr.bf16.gmra.mrb[0].mxu0 %v2674
      %v2712 = vpop.f32.mrb[0].mxu0
      %v2713 = vadd.f32 0.0, %v2712
      %v2714 = vpop.f32.mrb[0].mxu0
      %v2715 = vpop.f32.mrb[0].mxu0
      %v2716 = vadd.f32 0.0, %v2715
      %v2717 = vpop.f32.mrb[0].mxu0
      %2718 = vmatprep.mubr.bf16.mxu0 0
      %2719 = vmatmul.mubr.bf16.gmra.mrb[0].mxu0 %v2675
      %v2720 = vpop.f32.mrb[0].mxu0
      %v2721 = vadd.f32 0.0, %v2720
      %v2722 = vpop.f32.mrb[0].mxu0
      %v2723 = vpop.f32.mrb[0].mxu0
      %v2724 = vpop.f32.mrb[0].mxu0
      %2725 = vdwg.mxu0
      %v2726 = vmul.f32 %v2713, 0.088388346
      %v2727 = vmul.f32 %v2716, 0.088388346
      %v2728 = vmul.f32 %v2721, 0.088388346
      %v2729 = vsel %vm1074, %v2726, -inf
      %2730 = vmax.xlane.f32.xlu0 %v2729
      %v2731 = vpop.xlane.xlu0 %2730
      %v2732 = vsel %vm1074, %v2727, -inf
      %2733 = vmax.xlane.f32.xlu0 %v2732
      %v2734 = vpop.xlane.xlu0 %2733
      %v2735 = vsel %vm1074, %v2728, -inf
      %2736 = vmax.xlane.f32.xlu0 %v2735
      %v2737 = vpop.xlane.xlu0 %2736
      %v2738 = vsub.f32 %v2726, %v2731
      %v2739 = vsub.f32 %v2727, %v2734
      %v2740 = vsub.f32 %v2728, %v2737
      %v2741 = vmul.f32 %v2738, 1.442695
      %v2742 = vpow.pop %v2741
      %v2743 = vmul.f32 %v2739, 1.442695
      %v2744 = vpow.pop %v2743
      %v2745 = vmul.f32 %v2740, 1.442695
      %v2746 = vpow.pop %v2745
      %v2747 = vsel %vm1074, %v2742, 0.0
      %2748 = vadd.xlane.f32.xlu0 %v2747
      %v2749 = vpop.xlane.xlu0 %2748
      %v2750 = vsel %vm1074, %v2744, 0.0
      %2751 = vadd.xlane.f32.xlu0 %v2750
      %v2752 = vpop.xlane.xlu0 %2751
      %v2753 = vsel %vm1074, %v2746, 0.0
      %2754 = vadd.xlane.f32.xlu0 %v2753
      %v2755 = vpop.xlane.xlu0 %2754
      %v2756 = vrcp.pop %v2749
      %v2757 = vrcp.pop %v2752
      %v2758 = vrcp.pop %v2755
      %v2759 = vmul.f32 %v2742, %v2756
      %v2760 = vmul.f32 %v2744, %v2757
      %v2761 = vmul.f32 %v2746, %v2758
      %v2762 = vpack.c.bf16 %v2760, %v2759
      %v2763 = vpack.c.bf16 %v2761, %v2761
      %v2764 = vpack.c.bf16 %v2672, %v2671
      %v2765 = vpack.c.bf16 %v2673, %v2673
      %v2767 = vsel %vm1074, %v2762, 0
      %v2770 = vsel %vm1074, %v2763, 0
      %v2773 = vsel %vm1118, %v2765, 0
      %2775 = vmatprep.subr.bf16.mxu0 0
      %2776 = vmatpush1.bf16.msra.mxu0 %v2764
      %2777 = vmatprep.subr.bf16.mxu0 0
      %2778 = vmatpush1.bf16.msra.mxu0 %v2773
      %2779 = vmatprep.subr.bf16.mxu0 0
      %2780 = vmatpush1.bf16.msra.mxu0 0
      %2781 = vmatprep.subr.bf16.mxu0 0
      %2782 = vmatpush1.bf16.msra.mxu0 0
      %2783 = vmatprep.subr.bf16.mxu0 0
      %2784 = vmatpush1.bf16.msra.mxu0 0
      %2785 = vmatprep.subr.bf16.mxu0 0
      %2786 = vmatpush1.bf16.msra.mxu0 0
      %2787 = vmatprep.subr.bf16.mxu0 0
      %2788 = vmatpush1.bf16.msra.mxu0 0
      %2789 = vmatprep.subr.bf16.mxu0 0
      %2790 = vmatpush1.bf16.msra.mxu0 0
      %2791 = vmatprep.subr.bf16.mxu0 0
      %2792 = vmatpush1.bf16.msra.mxu0 0
      %2793 = vmatprep.subr.bf16.mxu0 0
      %2794 = vmatpush1.bf16.msra.mxu0 0
      %2795 = vmatprep.subr.bf16.mxu0 0
      %2796 = vmatpush1.bf16.msra.mxu0 0
      %2797 = vmatprep.subr.bf16.mxu0 0
      %2798 = vmatpush1.bf16.msra.mxu0 0
      %2799 = vmatprep.subr.bf16.mxu0 0
      %2800 = vmatpush1.bf16.msra.mxu0 0
      %2801 = vmatprep.subr.bf16.mxu0 0
      %2802 = vmatpush1.bf16.msra.mxu0 0
      %2803 = vmatprep.subr.bf16.mxu0 0
      %2804 = vmatpush1.bf16.msra.mxu0 0
      %2805 = vmatprep.subr.bf16.mxu0 0
      %2806 = vmatpush1.bf16.msra.mxu0 0
      %2807 = vmatprep.mubr.bf16.mxu0 0
      %2808 = vmatmul.mubr.bf16.gmra.mrb[0].mxu0 %v2767
      %v2809 = vpop.f32.mrb[0].mxu0
      %v2810 = vadd.f32 0.0, %v2809
      %v2811 = vpop.f32.mrb[0].mxu0
      %v2812 = vpop.f32.mrb[0].mxu0
      %v2813 = vadd.f32 0.0, %v2812
      %v2814 = vpop.f32.mrb[0].mxu0
      %2815 = vmatprep.mubr.bf16.mxu0 0
      %2816 = vmatmul.mubr.bf16.gmra.mrb[0].mxu0 %v2770
      %v2817 = vpop.f32.mrb[0].mxu0
      %v2818 = vadd.f32 0.0, %v2817
      %v2819 = vpop.f32.mrb[0].mxu0
      %v2820 = vpop.f32.mrb[0].mxu0
      %v2821 = vpop.f32.mrb[0].mxu0
      %2822 = vdwg.mxu0
      %v2823 = vld [vmem:[%s8] sm:$0xf]
      %v2824 = vld [vmem:[%s8 + $0x4] sm:$0xf]
      %v2825 = vld [vmem:[%s8 + $0x8] sm:$0xf]
      %v2826 = vld [vmem:[%s8 + $0xc] sm:$0xf]
      %v2827 = vld [vmem:[%s8 + $0x10] sm:$0xf]
      %v2828 = vld [vmem:[%s8 + $0x14] sm:$0xf]
      %v2829 = vld [vmem:[%s8 + $0x18] sm:$0xf]
      %v2830 = vld [vmem:[%s8 + $0x1c] sm:$0xf]
      %v2831 = vld [vmem:[%s8 + $0x20] sm:$0xf]
      %v2832 = vld [vmem:[%s8 + $0x24] sm:$0xf]
      %v2833 = vld [vmem:[%s8 + $0x28] sm:$0xf]
      %v2834 = vld [vmem:[%s8 + $0x2c] sm:$0xf]
      %v2835 = vld [vmem:[%s8 + $0x30] sm:$0xf]
      %v2836 = vld [vmem:[%s8 + $0x34] sm:$0xf]
      %v2837 = vld [vmem:[%s8 + $0x38] sm:$0xf]
      %v2838 = vld [vmem:[%s8 + $0x3c] sm:$0xf]
      %v2839 = vpack.c.bf16 %v2813, %v2810
      %v2840 = vpack.c.bf16 %v2818, %v2818
      %v2857 = vunpack.c.l.b16 %v2823
      %v2858 = vunpack.c.l.b16 %v2824
      %v2859 = vunpack.c.l.b16 %v2825
      %v2860 = vunpack.c.l.b16 %v2826
      %v2861 = vunpack.c.l.b16 %v2827
      %v2862 = vunpack.c.l.b16 %v2828
      %v2863 = vunpack.c.l.b16 %v2829
      %v2864 = vunpack.c.l.b16 %v2830
      %v2865 = vunpack.c.l.b16 %v2831
      %v2866 = vunpack.c.l.b16 %v2832
      %v2867 = vunpack.c.l.b16 %v2833
      %v2868 = vunpack.c.l.b16 %v2834
      %v2869 = vunpack.c.l.b16 %v2835
      %v2870 = vunpack.c.l.b16 %v2836
      %v2871 = vunpack.c.l.b16 %v2837
      %v2872 = vunpack.c.l.b16 %v2838
      %v2873 = vpack.c.b16 %v2858, %v2857
      %v2874 = vpack.c.b16 %v2860, %v2859
      %v2875 = vpack.c.b16 %v2862, %v2861
      %v2876 = vpack.c.b16 %v2864, %v2863
      %v2877 = vpack.c.b16 %v2866, %v2865
      %v2878 = vpack.c.b16 %v2868, %v2867
      %v2879 = vpack.c.b16 %v2870, %v2869
      %v2880 = vpack.c.b16 %v2872, %v2871
      %2889 = vmatprep.subr.bf16.mxu0 0
      %2890 = vmatpush1.bf16.msra.mxu0 %v2873
      %2891 = vmatprep.subr.bf16.mxu0 0
      %2892 = vmatpush1.bf16.msra.mxu0 %v2874
      %2893 = vmatprep.subr.bf16.mxu0 0
      %2894 = vmatpush1.bf16.msra.mxu0 %v2875
      %2895 = vmatprep.subr.bf16.mxu0 0
      %2896 = vmatpush1.bf16.msra.mxu0 %v2876
      %2897 = vmatprep.subr.bf16.mxu0 0
      %2898 = vmatpush1.bf16.msra.mxu0 %v2877
      %2899 = vmatprep.subr.bf16.mxu0 0
      %2900 = vmatpush1.bf16.msra.mxu0 %v2878
      %2901 = vmatprep.subr.bf16.mxu0 0
      %2902 = vmatpush1.bf16.msra.mxu0 %v2879
      %2903 = vmatprep.subr.bf16.mxu0 0
      %2904 = vmatpush1.bf16.msra.mxu0 %v2880
      %2905 = vmatprep.subr.bf16.mxu0 0
      %2906 = vmatpush1.bf16.msra.mxu0 0
      %2907 = vmatprep.subr.bf16.mxu0 0
      %2908 = vmatpush1.bf16.msra.mxu0 0
      %2909 = vmatprep.subr.bf16.mxu0 0
      %2910 = vmatpush1.bf16.msra.mxu0 0
      %2911 = vmatprep.subr.bf16.mxu0 0
      %2912 = vmatpush1.bf16.msra.mxu0 0
      %2913 = vmatprep.subr.bf16.mxu0 0
      %2914 = vmatpush1.bf16.msra.mxu0 0
      %2915 = vmatprep.subr.bf16.mxu0 0
      %2916 = vmatpush1.bf16.msra.mxu0 0
      %2917 = vmatprep.subr.bf16.mxu0 0
      %2918 = vmatpush1.bf16.msra.mxu0 0
      %2919 = vmatprep.subr.bf16.mxu0 0
      %2920 = vmatpush1.bf16.msra.mxu0 0
      %2921 = vmatprep.mubr.bf16.mxu0 0
      %2922 = vmatmul.mubr.bf16.gmra.mrb[0].mxu0 %v2839
      %v2923 = vpop.f32.mrb[0].mxu0
      %v2924 = vadd.f32 0.0, %v2923
      %v2925 = vpop.f32.mrb[0].mxu0
      %v2926 = vpop.f32.mrb[0].mxu0
      %v2927 = vadd.f32 0.0, %v2926
      %v2928 = vpop.f32.mrb[0].mxu0
      %2929 = vmatprep.mubr.bf16.mxu0 0
      %2930 = vmatmul.mubr.bf16.gmra.mrb[0].mxu0 %v2840
      %v2931 = vpop.f32.mrb[0].mxu0
      %v2932 = vadd.f32 0.0, %v2931
      %v2933 = vpop.f32.mrb[0].mxu0
      %v2934 = vpop.f32.mrb[0].mxu0
      %v2935 = vpop.f32.mrb[0].mxu0
      %2936 = vdwg.mxu0
      %v2937 = vadd.f32 %v481, %v2924
      %v2938 = vadd.f32 %v2404, %v2927
      %v2939 = vadd.f32 %v496, %v2932
      %v2940 = vadd.f32 %v2937, %v1290
      %v2941 = vadd.f32 %v2938, %v1290
      %v2942 = vadd.f32 %v2939, %v1290
      %2943 = vadd.xlane.f32.xlu0 %v2940
      %v2944 = vpop.xlane.xlu0 %2943
      %2945 = vadd.xlane.f32.xlu0 %v2941
      %v2946 = vpop.xlane.xlu0 %2945
      %2947 = vadd.xlane.f32.xlu0 %v2942
      %v2948 = vpop.xlane.xlu0 %2947
      %v2949 = vmul.f32 %v2944, %v461
      %v2950 = vmul.f32 %v2946, %v461
      %v2951 = vmul.f32 %v2948, %v461
      %v2952 = vsub.f32 %v2940, %v2949
      %v2953 = vsub.f32 %v2941, %v2950
      %v2954 = vsub.f32 %v2942, %v2951
      %v2955 = vmul.f32 %v2952, %v2952
      %v2956 = vmul.f32 %v2953, %v2953
      %v2957 = vmul.f32 %v2954, %v2954
      %2958 = vadd.xlane.f32.xlu0 %v2955
      %v2959 = vpop.xlane.xlu0 %2958
      %2960 = vadd.xlane.f32.xlu0 %v2956
      %v2961 = vpop.xlane.xlu0 %2960
      %2962 = vadd.xlane.f32.xlu0 %v2957
      %v2963 = vpop.xlane.xlu0 %2962
      %v2964 = vmul.f32 %v2959, %v461
      %v2965 = vmul.f32 %v2961, %v461
      %v2966 = vmul.f32 %v2963, %v461
      %v2967 = vadd.f32 %v2964, 1e-05
      %v2968 = vadd.f32 %v2965, 1e-05
      %v2969 = vadd.f32 %v2966, 1e-05
      %v2970 = vrsqrt.pop %v2967
      %v2971 = vrsqrt.pop %v2968
      %v2972 = vrsqrt.pop %v2969
      %v2973 = vmul.f32 %v2952, %v2970
      %v2974 = vmul.f32 %v2953, %v2971
      %v2975 = vmul.f32 %v2954, %v2972
      %v2976 = vmul.f32 %v2973, %v1330
      %v2977 = vmul.f32 %v2974, %v1330
      %v2978 = vmul.f32 %v2975, %v1330
      %v2979 = vadd.f32 %v2976, %v1337
      %v2980 = vadd.f32 %v2977, %v1337
      %v2981 = vadd.f32 %v2978, %v1337
      %v2982 = vld [vmem:[%s8 + $0x40] sm:$0xf]
      %v2983 = vld [vmem:[%s8 + $0x44] sm:$0xf]
      %v2984 = vld [vmem:[%s8 + $0x48] sm:$0xf]
      %v2985 = vld [vmem:[%s8 + $0x4c] sm:$0xf]
      %v2986 = vld [vmem:[%s8 + $0x50] sm:$0xf]
      %v2987 = vld [vmem:[%s8 + $0x54] sm:$0xf]
      %v2988 = vld [vmem:[%s8 + $0x58] sm:$0xf]
      %v2989 = vld [vmem:[%s8 + $0x5c] sm:$0xf]
      %v2990 = vld [vmem:[%s8 + $0x60] sm:$0xf]
      %v2991 = vld [vmem:[%s8 + $0x64] sm:$0xf]
      %v2992 = vld [vmem:[%s8 + $0x68] sm:$0xf]
      %v2993 = vld [vmem:[%s8 + $0x6c] sm:$0xf]
      %v2994 = vld [vmem:[%s8 + $0x70] sm:$0xf]
      %v2995 = vld [vmem:[%s8 + $0x74] sm:$0xf]
      %v2996 = vld [vmem:[%s8 + $0x78] sm:$0xf]
      %v2997 = vld [vmem:[%s8 + $0x7c] sm:$0xf]
      %v2998 = vpack.c.bf16 %v2980, %v2979
      %v2999 = vpack.c.bf16 %v2981, %v2981
      %v3016 = vunpack.c.l.b16 %v2982
      %v3017 = vunpack.c.l.b16 %v2983
      %v3018 = vunpack.c.l.b16 %v2984
      %v3019 = vunpack.c.l.b16 %v2985
      %v3020 = vunpack.c.l.b16 %v2986
      %v3021 = vunpack.c.l.b16 %v2987
      %v3022 = vunpack.c.l.b16 %v2988
      %v3023 = vunpack.c.l.b16 %v2989
      %v3024 = vunpack.c.l.b16 %v2990
      %v3025 = vunpack.c.l.b16 %v2991
      %v3026 = vunpack.c.l.b16 %v2992
      %v3027 = vunpack.c.l.b16 %v2993
      %v3028 = vunpack.c.l.b16 %v2994
      %v3029 = vunpack.c.l.b16 %v2995
      %v3030 = vunpack.c.l.b16 %v2996
      %v3031 = vunpack.c.l.b16 %v2997
      %v3032 = vpack.c.b16 %v3017, %v3016
      %v3033 = vpack.c.b16 %v3019, %v3018
      %v3034 = vpack.c.b16 %v3021, %v3020
      %v3035 = vpack.c.b16 %v3023, %v3022
      %v3036 = vpack.c.b16 %v3025, %v3024
      %v3037 = vpack.c.b16 %v3027, %v3026
      %v3038 = vpack.c.b16 %v3029, %v3028
      %v3039 = vpack.c.b16 %v3031, %v3030
      %3048 = vmatprep.subr.bf16.mxu0 0
      %3049 = vmatpush1.bf16.msra.mxu0 %v3032
      %3050 = vmatprep.subr.bf16.mxu0 0
      %3051 = vmatpush1.bf16.msra.mxu0 %v3033
      %3052 = vmatprep.subr.bf16.mxu0 0
      %3053 = vmatpush1.bf16.msra.mxu0 %v3034
      %3054 = vmatprep.subr.bf16.mxu0 0
      %3055 = vmatpush1.bf16.msra.mxu0 %v3035
      %3056 = vmatprep.subr.bf16.mxu0 0
      %3057 = vmatpush1.bf16.msra.mxu0 %v3036
      %3058 = vmatprep.subr.bf16.mxu0 0
      %3059 = vmatpush1.bf16.msra.mxu0 %v3037
      %3060 = vmatprep.subr.bf16.mxu0 0
      %3061 = vmatpush1.bf16.msra.mxu0 %v3038
      %3062 = vmatprep.subr.bf16.mxu0 0
      %3063 = vmatpush1.bf16.msra.mxu0 %v3039
      %3064 = vmatprep.subr.bf16.mxu0 0
      %3065 = vmatpush1.bf16.msra.mxu0 0
      %3066 = vmatprep.subr.bf16.mxu0 0
      %3067 = vmatpush1.bf16.msra.mxu0 0
      %3068 = vmatprep.subr.bf16.mxu0 0
      %3069 = vmatpush1.bf16.msra.mxu0 0
      %3070 = vmatprep.subr.bf16.mxu0 0
      %3071 = vmatpush1.bf16.msra.mxu0 0
      %3072 = vmatprep.subr.bf16.mxu0 0
      %3073 = vmatpush1.bf16.msra.mxu0 0
      %3074 = vmatprep.subr.bf16.mxu0 0
      %3075 = vmatpush1.bf16.msra.mxu0 0
      %3076 = vmatprep.subr.bf16.mxu0 0
      %3077 = vmatpush1.bf16.msra.mxu0 0
      %3078 = vmatprep.subr.bf16.mxu0 0
      %3079 = vmatpush1.bf16.msra.mxu0 0
      %3080 = vmatprep.mubr.bf16.mxu0 0
      %3081 = vmatmul.mubr.bf16.gmra.mrb[0].mxu0 %v2998
      %v3082 = vpop.f32.mrb[0].mxu0
      %v3083 = vadd.f32 %v1362, %v3082
      %v3084 = vpop.f32.mrb[0].mxu0
      %v3085 = vpop.f32.mrb[0].mxu0
      %v3086 = vadd.f32 %v1362, %v3085
      %v3087 = vpop.f32.mrb[0].mxu0
      %3088 = vmatprep.mubr.bf16.mxu0 0
      %3089 = vmatmul.mubr.bf16.gmra.mrb[0].mxu0 %v2999
      %v3090 = vpop.f32.mrb[0].mxu0
      %v3091 = vadd.f32 %v1362, %v3090
      %v3092 = vpop.f32.mrb[0].mxu0
      %v3093 = vpop.f32.mrb[0].mxu0
      %v3094 = vpop.f32.mrb[0].mxu0
      %3095 = vdwg.mxu0
      %v3096 = vpack.c.bf16 %v3086, %v3083
      %v3097 = vpack.c.bf16 %v3091, %v3091
      %3098 = vmatprep.subr.bf16.mxu0 0
      %3099 = vmatpush1.bf16.msra.mxu0 %v1493
      %3100 = vmatprep.subr.bf16.mxu0 0
      %3101 = vmatpush1.bf16.msra.mxu0 %v1494
      %3102 = vmatprep.subr.bf16.mxu0 0
      %3103 = vmatpush1.bf16.msra.mxu0 %v1495
      %3104 = vmatprep.subr.bf16.mxu0 0
      %3105 = vmatpush1.bf16.msra.mxu0 %v1496
      %3106 = vmatprep.subr.bf16.mxu0 0
      %3107 = vmatpush1.bf16.msra.mxu0 %v1497
      %3108 = vmatprep.subr.bf16.mxu0 0
      %3109 = vmatpush1.bf16.msra.mxu0 %v1498
      %3110 = vmatprep.subr.bf16.mxu0 0
      %3111 = vmatpush1.bf16.msra.mxu0 %v1499
      %3112 = vmatprep.subr.bf16.mxu0 0
      %3113 = vmatpush1.bf16.msra.mxu0 %v1500
      %3114 = vmatprep.subr.bf16.mxu0 0
      %3115 = vmatpush1.bf16.msra.mxu0 0
      %3116 = vmatprep.subr.bf16.mxu0 0
      %3117 = vmatpush1.bf16.msra.mxu0 0
      %3118 = vmatprep.subr.bf16.mxu0 0
      %3119 = vmatpush1.bf16.msra.mxu0 0
      %3120 = vmatprep.subr.bf16.mxu0 0
      %3121 = vmatpush1.bf16.msra.mxu0 0
      %3122 = vmatprep.subr.bf16.mxu0 0
      %3123 = vmatpush1.bf16.msra.mxu0 0
      %3124 = vmatprep.subr.bf16.mxu0 0
      %3125 = vmatpush1.bf16.msra.mxu0 0
      %3126 = vmatprep.subr.bf16.mxu0 0
      %3127 = vmatpush1.bf16.msra.mxu0 0
      %3128 = vmatprep.subr.bf16.mxu0 0
      %3129 = vmatpush1.bf16.msra.mxu0 0
      %3130 = vmatprep.mubr.bf16.mxu0 0
      %3131 = vmatmul.mubr.bf16.gmra.mrb[0].mxu0 %v3096
      %v3132 = vpop.f32.mrb[0].mxu0
      %v3133 = vadd.f32 0.0, %v3132
      %v3134 = vpop.f32.mrb[0].mxu0
      %v3135 = vpop.f32.mrb[0].mxu0
      %v3136 = vadd.f32 0.0, %v3135
      %v3137 = vpop.f32.mrb[0].mxu0
      %3138 = vmatprep.mubr.bf16.mxu0 0
      %3139 = vmatmul.mubr.bf16.gmra.mrb[0].mxu0 %v3097
      %v3140 = vpop.f32.mrb[0].mxu0
      %v3141 = vadd.f32 0.0, %v3140
      %v3142 = vpop.f32.mrb[0].mxu0
      %v3143 = vpop.f32.mrb[0].mxu0
      %v3144 = vpop.f32.mrb[0].mxu0
      %3145 = vdwg.mxu0
      %v3146 = vmul.f32 %v3133, 0.088388346
      %v3147 = vmul.f32 %v3136, 0.088388346
      %v3148 = vmul.f32 %v3141, 0.088388346
      %v3149 = vsel %vm1560, %v3146, -inf
      %3150 = vmax.xlane.f32.xlu0 %v3149
      %v3151 = vpop.xlane.xlu0 %3150
      %v3152 = vsel %vm1560, %v3147, -inf
      %3153 = vmax.xlane.f32.xlu0 %v3152
      %v3154 = vpop.xlane.xlu0 %3153
      %v3155 = vsel %vm1560, %v3148, -inf
      %3156 = vmax.xlane.f32.xlu0 %v3155
      %v3157 = vpop.xlane.xlu0 %3156
      %v3158 = vsub.f32 %v3146, %v3151
      %v3159 = vsub.f32 %v3147, %v3154
      %v3160 = vsub.f32 %v3148, %v3157
      %v3161 = vmul.f32 %v3158, 1.442695
      %v3162 = vpow.pop %v3161
      %v3163 = vmul.f32 %v3159, 1.442695
      %v3164 = vpow.pop %v3163
      %v3165 = vmul.f32 %v3160, 1.442695
      %v3166 = vpow.pop %v3165
      %v3167 = vsel %vm1560, %v3162, 0.0
      %3168 = vadd.xlane.f32.xlu0 %v3167
      %v3169 = vpop.xlane.xlu0 %3168
      %v3170 = vsel %vm1560, %v3164, 0.0
      %3171 = vadd.xlane.f32.xlu0 %v3170
      %v3172 = vpop.xlane.xlu0 %3171
      %v3173 = vsel %vm1560, %v3166, 0.0
      %3174 = vadd.xlane.f32.xlu0 %v3173
      %v3175 = vpop.xlane.xlu0 %3174
      %v3176 = vrcp.pop %v3169
      %v3177 = vrcp.pop %v3172
      %v3178 = vrcp.pop %v3175
      %v3179 = vmul.f32 %v3162, %v3176
      %v3180 = vmul.f32 %v3164, %v3177
      %v3181 = vmul.f32 %v3166, %v3178
      %v3182 = vpack.c.bf16 %v3180, %v3179
      %v3183 = vpack.c.bf16 %v3181, %v3181
      %v3185 = vsel %vm1560, %v3182, 0
      %v3188 = vsel %vm1560, %v3183, 0
      %3190 = vmatprep.subr.bf16.mxu0 0
      %3191 = vmatpush1.bf16.msra.mxu0 %v1608
      %3192 = vmatprep.subr.bf16.mxu0 0
      %3193 = vmatpush1.bf16.msra.mxu0 %v1609
      %3194 = vmatprep.subr.bf16.mxu0 0
      %3195 = vmatpush1.bf16.msra.mxu0 %v1610
      %3196 = vmatprep.subr.bf16.mxu0 0
      %3197 = vmatpush1.bf16.msra.mxu0 0
      %3198 = vmatprep.subr.bf16.mxu0 0
      %3199 = vmatpush1.bf16.msra.mxu0 0
      %3200 = vmatprep.subr.bf16.mxu0 0
      %3201 = vmatpush1.bf16.msra.mxu0 0
      %3202 = vmatprep.subr.bf16.mxu0 0
      %3203 = vmatpush1.bf16.msra.mxu0 0
      %3204 = vmatprep.subr.bf16.mxu0 0
      %3205 = vmatpush1.bf16.msra.mxu0 0
      %3206 = vmatprep.subr.bf16.mxu0 0
      %3207 = vmatpush1.bf16.msra.mxu0 0
      %3208 = vmatprep.subr.bf16.mxu0 0
      %3209 = vmatpush1.bf16.msra.mxu0 0
      %3210 = vmatprep.subr.bf16.mxu0 0
      %3211 = vmatpush1.bf16.msra.mxu0 0
      %3212 = vmatprep.subr.bf16.mxu0 0
      %3213 = vmatpush1.bf16.msra.mxu0 0
      %3214 = vmatprep.subr.bf16.mxu0 0
      %3215 = vmatpush1.bf16.msra.mxu0 0
      %3216 = vmatprep.subr.bf16.mxu0 0
      %3217 = vmatpush1.bf16.msra.mxu0 0
      %3218 = vmatprep.subr.bf16.mxu0 0
      %3219 = vmatpush1.bf16.msra.mxu0 0
      %3220 = vmatprep.subr.bf16.mxu0 0
      %3221 = vmatpush1.bf16.msra.mxu0 0
      %3222 = vmatprep.mubr.bf16.mxu0 0
      %3223 = vmatmul.mubr.bf16.gmra.mrb[0].mxu0 %v3185
      %v3224 = vpop.f32.mrb[0].mxu0
      %v3225 = vadd.f32 0.0, %v3224
      %v3226 = vpop.f32.mrb[0].mxu0
      %v3227 = vpop.f32.mrb[0].mxu0
      %v3228 = vadd.f32 0.0, %v3227
      %v3229 = vpop.f32.mrb[0].mxu0
      %3230 = vmatprep.mubr.bf16.mxu0 0
      %3231 = vmatmul.mubr.bf16.gmra.mrb[0].mxu0 %v3188
      %v3232 = vpop.f32.mrb[0].mxu0
      %v3233 = vadd.f32 0.0, %v3232
      %v3234 = vpop.f32.mrb[0].mxu0
      %v3235 = vpop.f32.mrb[0].mxu0
      %v3236 = vpop.f32.mrb[0].mxu0
      %3237 = vdwg.mxu0
      %v3238 = vld [vmem:[%s8 + $0x80] sm:$0xf]
      %v3239 = vld [vmem:[%s8 + $0x84] sm:$0xf]
      %v3240 = vld [vmem:[%s8 + $0x88] sm:$0xf]
      %v3241 = vld [vmem:[%s8 + $0x8c] sm:$0xf]
      %v3242 = vld [vmem:[%s8 + $0x90] sm:$0xf]
      %v3243 = vld [vmem:[%s8 + $0x94] sm:$0xf]
      %v3244 = vld [vmem:[%s8 + $0x98] sm:$0xf]
      %v3245 = vld [vmem:[%s8 + $0x9c] sm:$0xf]
      %v3246 = vld [vmem:[%s8 + $0xa0] sm:$0xf]
      %v3247 = vld [vmem:[%s8 + $0xa4] sm:$0xf]
      %v3248 = vld [vmem:[%s8 + $0xa8] sm:$0xf]
      %v3249 = vld [vmem:[%s8 + $0xac] sm:$0xf]
      %v3250 = vld [vmem:[%s8 + $0xb0] sm:$0xf]
      %v3251 = vld [vmem:[%s8 + $0xb4] sm:$0xf]
      %v3252 = vld [vmem:[%s8 + $0xb8] sm:$0xf]
      %v3253 = vld [vmem:[%s8 + $0xbc] sm:$0xf]
      %v3254 = vpack.c.bf16 %v3228, %v3225
      %v3255 = vpack.c.bf16 %v3233, %v3233
      %v3272 = vunpack.c.l.b16 %v3238
      %v3273 = vunpack.c.l.b16 %v3239
      %v3274 = vunpack.c.l.b16 %v3240
      %v3275 = vunpack.c.l.b16 %v3241
      %v3276 = vunpack.c.l.b16 %v3242
      %v3277 = vunpack.c.l.b16 %v3243
      %v3278 = vunpack.c.l.b16 %v3244
      %v3279 = vunpack.c.l.b16 %v3245
      %v3280 = vunpack.c.l.b16 %v3246
      %v3281 = vunpack.c.l.b16 %v3247
      %v3282 = vunpack.c.l.b16 %v3248
      %v3283 = vunpack.c.l.b16 %v3249
      %v3284 = vunpack.c.l.b16 %v3250
      %v3285 = vunpack.c.l.b16 %v3251
      %v3286 = vunpack.c.l.b16 %v3252
      %v3287 = vunpack.c.l.b16 %v3253
      %v3288 = vpack.c.b16 %v3273, %v3272
      %v3289 = vpack.c.b16 %v3275, %v3274
      %v3290 = vpack.c.b16 %v3277, %v3276
      %v3291 = vpack.c.b16 %v3279, %v3278
      %v3292 = vpack.c.b16 %v3281, %v3280
      %v3293 = vpack.c.b16 %v3283, %v3282
      %v3294 = vpack.c.b16 %v3285, %v3284
      %v3295 = vpack.c.b16 %v3287, %v3286
      %3304 = vmatprep.subr.bf16.mxu0 0
      %3305 = vmatpush1.bf16.msra.mxu0 %v3288
      %3306 = vmatprep.subr.bf16.mxu0 0
      %3307 = vmatpush1.bf16.msra.mxu0 %v3289
      %3308 = vmatprep.subr.bf16.mxu0 0
      %3309 = vmatpush1.bf16.msra.mxu0 %v3290
      %3310 = vmatprep.subr.bf16.mxu0 0
      %3311 = vmatpush1.bf16.msra.mxu0 %v3291
      %3312 = vmatprep.subr.bf16.mxu0 0
      %3313 = vmatpush1.bf16.msra.mxu0 %v3292
      %3314 = vmatprep.subr.bf16.mxu0 0
      %3315 = vmatpush1.bf16.msra.mxu0 %v3293
      %3316 = vmatprep.subr.bf16.mxu0 0
      %3317 = vmatpush1.bf16.msra.mxu0 %v3294
      %3318 = vmatprep.subr.bf16.mxu0 0
      %3319 = vmatpush1.bf16.msra.mxu0 %v3295
      %3320 = vmatprep.subr.bf16.mxu0 0
      %3321 = vmatpush1.bf16.msra.mxu0 0
      %3322 = vmatprep.subr.bf16.mxu0 0
      %3323 = vmatpush1.bf16.msra.mxu0 0
      %3324 = vmatprep.subr.bf16.mxu0 0
      %3325 = vmatpush1.bf16.msra.mxu0 0
      %3326 = vmatprep.subr.bf16.mxu0 0
      %3327 = vmatpush1.bf16.msra.mxu0 0
      %3328 = vmatprep.subr.bf16.mxu0 0
      %3329 = vmatpush1.bf16.msra.mxu0 0
      %3330 = vmatprep.subr.bf16.mxu0 0
      %3331 = vmatpush1.bf16.msra.mxu0 0
      %3332 = vmatprep.subr.bf16.mxu0 0
      %3333 = vmatpush1.bf16.msra.mxu0 0
      %3334 = vmatprep.subr.bf16.mxu0 0
      %3335 = vmatpush1.bf16.msra.mxu0 0
      %3336 = vmatprep.mubr.bf16.mxu0 0
      %3337 = vmatmul.mubr.bf16.gmra.mrb[0].mxu0 %v3254
      %v3338 = vpop.f32.mrb[0].mxu0
      %v3339 = vadd.f32 0.0, %v3338
      %v3340 = vpop.f32.mrb[0].mxu0
      %v3341 = vpop.f32.mrb[0].mxu0
      %v3342 = vadd.f32 0.0, %v3341
      %v3343 = vpop.f32.mrb[0].mxu0
      %3344 = vmatprep.mubr.bf16.mxu0 0
      %3345 = vmatmul.mubr.bf16.gmra.mrb[0].mxu0 %v3255
      %v3346 = vpop.f32.mrb[0].mxu0
      %v3347 = vadd.f32 0.0, %v3346
      %v3348 = vpop.f32.mrb[0].mxu0
      %v3349 = vpop.f32.mrb[0].mxu0
      %v3350 = vpop.f32.mrb[0].mxu0
      %3351 = vdwg.mxu0
      %v3352 = vadd.f32 %v2979, %v3339
      %v3353 = vadd.f32 %v2980, %v3342
      %v3354 = vadd.f32 %v2981, %v3347
      %v3355 = vadd.f32 %v3352, %v1788
      %v3356 = vadd.f32 %v3353, %v1788
      %v3357 = vadd.f32 %v3354, %v1788
      %3358 = vadd.xlane.f32.xlu0 %v3355
      %v3359 = vpop.xlane.xlu0 %3358
      %3360 = vadd.xlane.f32.xlu0 %v3356
      %v3361 = vpop.xlane.xlu0 %3360
      %3362 = vadd.xlane.f32.xlu0 %v3357
      %v3363 = vpop.xlane.xlu0 %3362
      %v3364 = vmul.f32 %v3359, %v461
      %v3365 = vmul.f32 %v3361, %v461
      %v3366 = vmul.f32 %v3363, %v461
      %v3367 = vsub.f32 %v3355, %v3364
      %v3368 = vsub.f32 %v3356, %v3365
      %v3369 = vsub.f32 %v3357, %v3366
      %v3370 = vmul.f32 %v3367, %v3367
      %v3371 = vmul.f32 %v3368, %v3368
      %v3372 = vmul.f32 %v3369, %v3369
      %3373 = vadd.xlane.f32.xlu0 %v3370
      %v3374 = vpop.xlane.xlu0 %3373
      %3375 = vadd.xlane.f32.xlu0 %v3371
      %v3376 = vpop.xlane.xlu0 %3375
      %3377 = vadd.xlane.f32.xlu0 %v3372
      %v3378 = vpop.xlane.xlu0 %3377
      %v3379 = vmul.f32 %v3374, %v461
      %v3380 = vmul.f32 %v3376, %v461
      %v3381 = vmul.f32 %v3378, %v461
      %v3382 = vadd.f32 %v3379, 1e-05
      %v3383 = vadd.f32 %v3380, 1e-05
      %v3384 = vadd.f32 %v3381, 1e-05
      %v3385 = vrsqrt.pop %v3382
      %v3386 = vrsqrt.pop %v3383
      %v3387 = vrsqrt.pop %v3384
      %v3388 = vmul.f32 %v3367, %v3385
      %v3389 = vmul.f32 %v3368, %v3386
      %v3390 = vmul.f32 %v3369, %v3387
      %v3391 = vmul.f32 %v3388, %v1828
      %v3392 = vmul.f32 %v3389, %v1828
      %v3393 = vmul.f32 %v3390, %v1828
      %v3394 = vadd.f32 %v3391, %v1835
      %v3395 = vadd.f32 %v3392, %v1835
      %v3396 = vadd.f32 %v3393, %v1835
      %v3397 = vld [vmem:[%s8 + $0xc0] sm:$0xf]
      %v3398 = vld [vmem:[%s8 + $0xc4] sm:$0xf]
      %v3399 = vld [vmem:[%s8 + $0xc8] sm:$0xf]
      %v3400 = vld [vmem:[%s8 + $0xcc] sm:$0xf]
      %v3401 = vld [vmem:[%s8 + $0xd0] sm:$0xf]
      %v3402 = vld [vmem:[%s8 + $0xd4] sm:$0xf]
      %v3403 = vld [vmem:[%s8 + $0xd8] sm:$0xf]
      %v3404 = vld [vmem:[%s8 + $0xdc] sm:$0xf]
      %v3405 = vld [vmem:[%s8 + $0xe0] sm:$0xf]
      %v3406 = vld [vmem:[%s8 + $0xe4] sm:$0xf]
      %v3407 = vld [vmem:[%s8 + $0xe8] sm:$0xf]
      %v3408 = vld [vmem:[%s8 + $0xec] sm:$0xf]
      %v3409 = vld [vmem:[%s8 + $0xf0] sm:$0xf]
      %v3410 = vld [vmem:[%s8 + $0xf4] sm:$0xf]
      %v3411 = vld [vmem:[%s8 + $0xf8] sm:$0xf]
      %v3412 = vld [vmem:[%s8 + $0xfc] sm:$0xf]
      %v3413 = vpack.c.bf16 %v3395, %v3394
      %v3414 = vpack.c.bf16 %v3396, %v3396
      %v3431 = vunpack.c.l.b16 %v3397
      %v3432 = vunpack.c.l.b16 %v3398
      %v3433 = vunpack.c.l.b16 %v3399
      %v3434 = vunpack.c.l.b16 %v3400
      %v3435 = vunpack.c.l.b16 %v3401
      %v3436 = vunpack.c.l.b16 %v3402
      %v3437 = vunpack.c.l.b16 %v3403
      %v3438 = vunpack.c.l.b16 %v3404
      %v3439 = vunpack.c.l.b16 %v3405
      %v3440 = vunpack.c.l.b16 %v3406
      %v3441 = vunpack.c.l.b16 %v3407
      %v3442 = vunpack.c.l.b16 %v3408
      %v3443 = vunpack.c.l.b16 %v3409
      %v3444 = vunpack.c.l.b16 %v3410
      %v3445 = vunpack.c.l.b16 %v3411
      %v3446 = vunpack.c.l.b16 %v3412
      %v3447 = vpack.c.b16 %v3432, %v3431
      %v3448 = vpack.c.b16 %v3434, %v3433
      %v3449 = vpack.c.b16 %v3436, %v3435
      %v3450 = vpack.c.b16 %v3438, %v3437
      %v3451 = vpack.c.b16 %v3440, %v3439
      %v3452 = vpack.c.b16 %v3442, %v3441
      %v3453 = vpack.c.b16 %v3444, %v3443
      %v3454 = vpack.c.b16 %v3446, %v3445
      %3463 = vmatprep.subr.bf16.mxu0 0
      %3464 = vmatpush1.bf16.msra.mxu0 %v3447
      %3465 = vmatprep.subr.bf16.mxu0 0
      %3466 = vmatpush1.bf16.msra.mxu0 %v3448
      %3467 = vmatprep.subr.bf16.mxu0 0
      %3468 = vmatpush1.bf16.msra.mxu0 %v3449
      %3469 = vmatprep.subr.bf16.mxu0 0
      %3470 = vmatpush1.bf16.msra.mxu0 %v3450
      %3471 = vmatprep.subr.bf16.mxu0 0
      %3472 = vmatpush1.bf16.msra.mxu0 %v3451
      %3473 = vmatprep.subr.bf16.mxu0 0
      %3474 = vmatpush1.bf16.msra.mxu0 %v3452
      %3475 = vmatprep.subr.bf16.mxu0 0
      %3476 = vmatpush1.bf16.msra.mxu0 %v3453
      %3477 = vmatprep.subr.bf16.mxu0 0
      %3478 = vmatpush1.bf16.msra.mxu0 %v3454
      %3479 = vmatprep.subr.bf16.mxu0 0
      %3480 = vmatpush1.bf16.msra.mxu0 0
      %3481 = vmatprep.subr.bf16.mxu0 0
      %3482 = vmatpush1.bf16.msra.mxu0 0
      %3483 = vmatprep.subr.bf16.mxu0 0
      %3484 = vmatpush1.bf16.msra.mxu0 0
      %3485 = vmatprep.subr.bf16.mxu0 0
      %3486 = vmatpush1.bf16.msra.mxu0 0
      %3487 = vmatprep.subr.bf16.mxu0 0
      %3488 = vmatpush1.bf16.msra.mxu0 0
      %3489 = vmatprep.subr.bf16.mxu0 0
      %3490 = vmatpush1.bf16.msra.mxu0 0
      %3491 = vmatprep.subr.bf16.mxu0 0
      %3492 = vmatpush1.bf16.msra.mxu0 0
      %3493 = vmatprep.subr.bf16.mxu0 0
      %3494 = vmatpush1.bf16.msra.mxu0 0
      %3495 = vmatprep.mubr.bf16.mxu0 0
      %3496 = vmatmul.mubr.bf16.gmra.mrb[0].mxu0 %v3413
      %v3497 = vpop.f32.mrb[0].mxu0
      %v3498 = vadd.f32 %v1860, %v3497
      %v3499 = vpop.f32.mrb[0].mxu0
      %v3500 = vpop.f32.mrb[0].mxu0
      %v3501 = vadd.f32 %v1860, %v3500
      %v3502 = vpop.f32.mrb[0].mxu0
      %3503 = vmatprep.mubr.bf16.mxu0 0
      %3504 = vmatmul.mubr.bf16.gmra.mrb[0].mxu0 %v3414
      %v3505 = vpop.f32.mrb[0].mxu0
      %v3506 = vadd.f32 %v1860, %v3505
      %v3507 = vpop.f32.mrb[0].mxu0
      %v3508 = vpop.f32.mrb[0].mxu0
      %v3509 = vpop.f32.mrb[0].mxu0
      %3510 = vdwg.mxu0
      %v3511 = vmax.f32 %v3498, 0.0
      %v3512 = vmax.f32 %v3501, 0.0
      %v3513 = vmax.f32 %v3506, 0.0
      %v3514 = vld [vmem:[%s8 + $0x100] sm:$0xf]
      %v3515 = vld [vmem:[%s8 + $0x104] sm:$0xf]
      %v3516 = vld [vmem:[%s8 + $0x108] sm:$0xf]
      %v3517 = vld [vmem:[%s8 + $0x10c] sm:$0xf]
      %v3518 = vld [vmem:[%s8 + $0x110] sm:$0xf]
      %v3519 = vld [vmem:[%s8 + $0x114] sm:$0xf]
      %v3520 = vld [vmem:[%s8 + $0x118] sm:$0xf]
      %v3521 = vld [vmem:[%s8 + $0x11c] sm:$0xf]
      %v3522 = vld [vmem:[%s8 + $0x120] sm:$0xf]
      %v3523 = vld [vmem:[%s8 + $0x124] sm:$0xf]
      %v3524 = vld [vmem:[%s8 + $0x128] sm:$0xf]
      %v3525 = vld [vmem:[%s8 + $0x12c] sm:$0xf]
      %v3526 = vld [vmem:[%s8 + $0x130] sm:$0xf]
      %v3527 = vld [vmem:[%s8 + $0x134] sm:$0xf]
      %v3528 = vld [vmem:[%s8 + $0x138] sm:$0xf]
      %v3529 = vld [vmem:[%s8 + $0x13c] sm:$0xf]
      %v3530 = vpack.c.bf16 %v3512, %v3511
      %v3531 = vpack.c.bf16 %v3513, %v3513
      %v3548 = vunpack.c.l.b16 %v3514
      %v3549 = vunpack.c.l.b16 %v3515
      %v3550 = vunpack.c.l.b16 %v3516
      %v3551 = vunpack.c.l.b16 %v3517
      %v3552 = vunpack.c.l.b16 %v3518
      %v3553 = vunpack.c.l.b16 %v3519
      %v3554 = vunpack.c.l.b16 %v3520
      %v3555 = vunpack.c.l.b16 %v3521
      %v3556 = vunpack.c.l.b16 %v3522
      %v3557 = vunpack.c.l.b16 %v3523
      %v3558 = vunpack.c.l.b16 %v3524
      %v3559 = vunpack.c.l.b16 %v3525
      %v3560 = vunpack.c.l.b16 %v3526
      %v3561 = vunpack.c.l.b16 %v3527
      %v3562 = vunpack.c.l.b16 %v3528
      %v3563 = vunpack.c.l.b16 %v3529
      %v3564 = vpack.c.b16 %v3549, %v3548
      %v3565 = vpack.c.b16 %v3551, %v3550
      %v3566 = vpack.c.b16 %v3553, %v3552
      %v3567 = vpack.c.b16 %v3555, %v3554
      %v3568 = vpack.c.b16 %v3557, %v3556
      %v3569 = vpack.c.b16 %v3559, %v3558
      %v3570 = vpack.c.b16 %v3561, %v3560
      %v3571 = vpack.c.b16 %v3563, %v3562
      %3580 = vmatprep.subr.bf16.mxu0 0
      %3581 = vmatpush1.bf16.msra.mxu0 %v3564
      %3582 = vmatprep.subr.bf16.mxu0 0
      %3583 = vmatpush1.bf16.msra.mxu0 %v3565
      %3584 = vmatprep.subr.bf16.mxu0 0
      %3585 = vmatpush1.bf16.msra.mxu0 %v3566
      %3586 = vmatprep.subr.bf16.mxu0 0
      %3587 = vmatpush1.bf16.msra.mxu0 %v3567
      %3588 = vmatprep.subr.bf16.mxu0 0
      %3589 = vmatpush1.bf16.msra.mxu0 %v3568
      %3590 = vmatprep.subr.bf16.mxu0 0
      %3591 = vmatpush1.bf16.msra.mxu0 %v3569
      %3592 = vmatprep.subr.bf16.mxu0 0
      %3593 = vmatpush1.bf16.msra.mxu0 %v3570
      %3594 = vmatprep.subr.bf16.mxu0 0
      %3595 = vmatpush1.bf16.msra.mxu0 %v3571
      %3596 = vmatprep.subr.bf16.mxu0 0
      %3597 = vmatpush1.bf16.msra.mxu0 0
      %3598 = vmatprep.subr.bf16.mxu0 0
      %3599 = vmatpush1.bf16.msra.mxu0 0
      %3600 = vmatprep.subr.bf16.mxu0 0
      %3601 = vmatpush1.bf16.msra.mxu0 0
      %3602 = vmatprep.subr.bf16.mxu0 0
      %3603 = vmatpush1.bf16.msra.mxu0 0
      %3604 = vmatprep.subr.bf16.mxu0 0
      %3605 = vmatpush1.bf16.msra.mxu0 0
      %3606 = vmatprep.subr.bf16.mxu0 0
      %3607 = vmatpush1.bf16.msra.mxu0 0
      %3608 = vmatprep.subr.bf16.mxu0 0
      %3609 = vmatpush1.bf16.msra.mxu0 0
      %3610 = vmatprep.subr.bf16.mxu0 0
      %3611 = vmatpush1.bf16.msra.mxu0 0
      %3612 = vmatprep.mubr.bf16.mxu0 0
      %3613 = vmatmul.mubr.bf16.gmra.mrb[0].mxu0 %v3530
      %v3614 = vpop.f32.mrb[0].mxu0
      %v3615 = vpop.f32.mrb[0].mxu0
      %v3616 = vpop.f32.mrb[0].mxu0
      %v3617 = vadd.f32 0.0, %v3616
      %v3618 = vpop.f32.mrb[0].mxu0
      %3619 = vmatprep.mubr.bf16.mxu0 0
      %3620 = vmatmul.mubr.bf16.gmra.mrb[0].mxu0 %v3531
      %v3621 = vpop.f32.mrb[0].mxu0
      %v3622 = vpop.f32.mrb[0].mxu0
      %v3623 = vpop.f32.mrb[0].mxu0
      %v3624 = vpop.f32.mrb[0].mxu0
      %3625 = vdwg.mxu0
      %v3626 = vadd.f32 %v3395, %v3617
      %v3627 = vadd.f32 %v3626, %v2076
      %3628 = vadd.xlane.f32.xlu0 %v3627
      %v3629 = vpop.xlane.xlu0 %3628
      %v3630 = vmul.f32 %v3629, %v461
      %v3631 = vsub.f32 %v3627, %v3630
      %v3632 = vmul.f32 %v3631, %v3631
      %3633 = vadd.xlane.f32.xlu0 %v3632
      %v3634 = vpop.xlane.xlu0 %3633
      %v3635 = vmul.f32 %v3634, %v461
      %v3636 = vadd.f32 %v3635, 1e-05
      %v3637 = vrsqrt.pop %v3636
      %v3638 = vmul.f32 %v3631, %v3637
      %v3639 = vmul.f32 %v3638, %v2092
      %v3640 = vadd.f32 %v3639, %v2097
      %v3641 = vld [vmem:[%s8 + $0x140] sm:$0xf]
      %v3642 = vld [vmem:[%s8 + $0x144] sm:$0xf]
      %v3643 = vld [vmem:[%s8 + $0x148] sm:$0xf]
      %v3644 = vld [vmem:[%s8 + $0x14c] sm:$0xf]
      %v3645 = vld [vmem:[%s8 + $0x150] sm:$0xf]
      %v3646 = vld [vmem:[%s8 + $0x154] sm:$0xf]
      %v3647 = vld [vmem:[%s8 + $0x158] sm:$0xf]
      %v3648 = vld [vmem:[%s8 + $0x15c] sm:$0xf]
      %v3649 = vld [vmem:[%s8 + $0x160] sm:$0xf]
      %v3650 = vld [vmem:[%s8 + $0x164] sm:$0xf]
      %v3651 = vld [vmem:[%s8 + $0x168] sm:$0xf]
      %v3652 = vld [vmem:[%s8 + $0x16c] sm:$0xf]
      %v3653 = vld [vmem:[%s8 + $0x170] sm:$0xf]
      %v3654 = vld [vmem:[%s8 + $0x174] sm:$0xf]
      %v3655 = vld [vmem:[%s8 + $0x178] sm:$0xf]
      %v3656 = vld [vmem:[%s8 + $0x17c] sm:$0xf]
      %v3657 = vpack.c.bf16 %v3640, %v3640
      %v3674 = vunpack.c.l.b16 %v3641
      %v3675 = vunpack.c.l.b16 %v3642
      %v3676 = vunpack.c.l.b16 %v3643
      %v3677 = vunpack.c.l.b16 %v3644
      %v3678 = vunpack.c.l.b16 %v3645
      %v3679 = vunpack.c.l.b16 %v3646
      %v3680 = vunpack.c.l.b16 %v3647
      %v3681 = vunpack.c.l.b16 %v3648
      %v3682 = vunpack.c.l.b16 %v3649
      %v3683 = vunpack.c.l.b16 %v3650
      %v3684 = vunpack.c.l.b16 %v3651
      %v3685 = vunpack.c.l.b16 %v3652
      %v3686 = vunpack.c.l.b16 %v3653
      %v3687 = vunpack.c.l.b16 %v3654
      %v3688 = vunpack.c.l.b16 %v3655
      %v3689 = vunpack.c.l.b16 %v3656
      %v3690 = vpack.c.b16 %v3675, %v3674
      %v3691 = vpack.c.b16 %v3677, %v3676
      %v3692 = vpack.c.b16 %v3679, %v3678
      %v3693 = vpack.c.b16 %v3681, %v3680
      %v3694 = vpack.c.b16 %v3683, %v3682
      %v3695 = vpack.c.b16 %v3685, %v3684
      %v3696 = vpack.c.b16 %v3687, %v3686
      %v3697 = vpack.c.b16 %v3689, %v3688
      %3706 = vmatprep.subr.bf16.mxu0 0
      %3707 = vmatpush1.bf16.msra.mxu0 %v3690
      %3708 = vmatprep.subr.bf16.mxu0 0
      %3709 = vmatpush1.bf16.msra.mxu0 %v3691
      %3710 = vmatprep.subr.bf16.mxu0 0
      %3711 = vmatpush1.bf16.msra.mxu0 %v3692
      %3712 = vmatprep.subr.bf16.mxu0 0
      %3713 = vmatpush1.bf16.msra.mxu0 %v3693
      %3714 = vmatprep.subr.bf16.mxu0 0
      %3715 = vmatpush1.bf16.msra.mxu0 %v3694
      %3716 = vmatprep.subr.bf16.mxu0 0
      %3717 = vmatpush1.bf16.msra.mxu0 %v3695
      %3718 = vmatprep.subr.bf16.mxu0 0
      %3719 = vmatpush1.bf16.msra.mxu0 %v3696
      %3720 = vmatprep.subr.bf16.mxu0 0
      %3721 = vmatpush1.bf16.msra.mxu0 %v3697
      %3722 = vmatprep.subr.bf16.mxu0 0
      %3723 = vmatpush1.bf16.msra.mxu0 0
      %3724 = vmatprep.subr.bf16.mxu0 0
      %3725 = vmatpush1.bf16.msra.mxu0 0
      %3726 = vmatprep.subr.bf16.mxu0 0
      %3727 = vmatpush1.bf16.msra.mxu0 0
      %3728 = vmatprep.subr.bf16.mxu0 0
      %3729 = vmatpush1.bf16.msra.mxu0 0
      %3730 = vmatprep.subr.bf16.mxu0 0
      %3731 = vmatpush1.bf16.msra.mxu0 0
      %3732 = vmatprep.subr.bf16.mxu0 0
      %3733 = vmatpush1.bf16.msra.mxu0 0
      %3734 = vmatprep.subr.bf16.mxu0 0
      %3735 = vmatpush1.bf16.msra.mxu0 0
      %3736 = vmatprep.subr.bf16.mxu0 0
      %3737 = vmatpush1.bf16.msra.mxu0 0
      %3738 = vmatprep.mubr.bf16.mxu0 0
      %3739 = vmatmul.mubr.bf16.gmra.mrb[0].mxu0 %v3657
      %v3740 = vpop.f32.mrb[0].mxu0
      %v3741 = vadd.f32 %v2119, %v3740
      %v3742 = vpop.f32.mrb[0].mxu0
      %v3743 = vpop.f32.mrb[0].mxu0
      %v3744 = vpop.f32.mrb[0].mxu0
      %3745 = vdwg.mxu0
      %v3746 = vmax.f32 %v3741, 0.0
      %v3747 = vld [vmem:[%s8 + $0x180] sm:$0xf]
      %v3748 = vld [vmem:[%s8 + $0x184] sm:$0xf]
      %v3749 = vld [vmem:[%s8 + $0x188] sm:$0xf]
      %v3750 = vld [vmem:[%s8 + $0x18c] sm:$0xf]
      %v3751 = vld [vmem:[%s8 + $0x190] sm:$0xf]
      %v3752 = vld [vmem:[%s8 + $0x194] sm:$0xf]
      %v3753 = vld [vmem:[%s8 + $0x198] sm:$0xf]
      %v3754 = vld [vmem:[%s8 + $0x19c] sm:$0xf]
      %v3755 = vld [vmem:[%s8 + $0x1a0] sm:$0xf]
      %v3756 = vld [vmem:[%s8 + $0x1a4] sm:$0xf]
      %v3757 = vld [vmem:[%s8 + $0x1a8] sm:$0xf]
      %v3758 = vld [vmem:[%s8 + $0x1ac] sm:$0xf]
      %v3759 = vld [vmem:[%s8 + $0x1b0] sm:$0xf]
      %v3760 = vld [vmem:[%s8 + $0x1b4] sm:$0xf]
      %v3761 = vld [vmem:[%s8 + $0x1b8] sm:$0xf]
      %v3762 = vld [vmem:[%s8 + $0x1bc] sm:$0xf]
      %v3763 = vpack.c.bf16 %v3746, %v3746
      %v3780 = vunpack.c.l.b16 %v3747
      %v3781 = vunpack.c.l.b16 %v3748
      %v3782 = vunpack.c.l.b16 %v3749
      %v3783 = vunpack.c.l.b16 %v3750
      %v3784 = vunpack.c.l.b16 %v3751
      %v3785 = vunpack.c.l.b16 %v3752
      %v3786 = vunpack.c.l.b16 %v3753
      %v3787 = vunpack.c.l.b16 %v3754
      %v3788 = vunpack.c.l.b16 %v3755
      %v3789 = vunpack.c.l.b16 %v3756
      %v3790 = vunpack.c.l.b16 %v3757
      %v3791 = vunpack.c.l.b16 %v3758
      %v3792 = vunpack.c.l.b16 %v3759
      %v3793 = vunpack.c.l.b16 %v3760
      %v3794 = vunpack.c.l.b16 %v3761
      %v3795 = vunpack.c.l.b16 %v3762
      %v3796 = vpack.c.b16 %v3781, %v3780
      %v3797 = vpack.c.b16 %v3783, %v3782
      %v3798 = vpack.c.b16 %v3785, %v3784
      %v3799 = vpack.c.b16 %v3787, %v3786
      %v3800 = vpack.c.b16 %v3789, %v3788
      %v3801 = vpack.c.b16 %v3791, %v3790
      %v3802 = vpack.c.b16 %v3793, %v3792
      %v3803 = vpack.c.b16 %v3795, %v3794
      %3812 = vmatprep.subr.bf16.mxu0 0
      %3813 = vmatpush1.bf16.msra.mxu0 %v3796
      %3814 = vmatprep.subr.bf16.mxu0 0
      %3815 = vmatpush1.bf16.msra.mxu0 %v3797
      %3816 = vmatprep.subr.bf16.mxu0 0
      %3817 = vmatpush1.bf16.msra.mxu0 %v3798
      %3818 = vmatprep.subr.bf16.mxu0 0
      %3819 = vmatpush1.bf16.msra.mxu0 %v3799
      %3820 = vmatprep.subr.bf16.mxu0 0
      %3821 = vmatpush1.bf16.msra.mxu0 %v3800
      %3822 = vmatprep.subr.bf16.mxu0 0
      %3823 = vmatpush1.bf16.msra.mxu0 %v3801
      %3824 = vmatprep.subr.bf16.mxu0 0
      %3825 = vmatpush1.bf16.msra.mxu0 %v3802
      %3826 = vmatprep.subr.bf16.mxu0 0
      %3827 = vmatpush1.bf16.msra.mxu0 %v3803
      %3828 = vmatprep.subr.bf16.mxu0 0
      %3829 = vmatpush1.bf16.msra.mxu0 0
      %3830 = vmatprep.subr.bf16.mxu0 0
      %3831 = vmatpush1.bf16.msra.mxu0 0
      %3832 = vmatprep.subr.bf16.mxu0 0
      %3833 = vmatpush1.bf16.msra.mxu0 0
      %3834 = vmatprep.subr.bf16.mxu0 0
      %3835 = vmatpush1.bf16.msra.mxu0 0
      %3836 = vmatprep.subr.bf16.mxu0 0
      %3837 = vmatpush1.bf16.msra.mxu0 0
      %3838 = vmatprep.subr.bf16.mxu0 0
      %3839 = vmatpush1.bf16.msra.mxu0 0
      %3840 = vmatprep.subr.bf16.mxu0 0
      %3841 = vmatpush1.bf16.msra.mxu0 0
      %3842 = vmatprep.subr.bf16.mxu0 0
      %3843 = vmatpush1.bf16.msra.mxu0 0
      %3844 = vmatprep.mubr.bf16.mxu0 0
      %3845 = vmatmul.mubr.bf16.gmra.mrb[0].mxu0 %v3763
      %v3846 = vpop.f32.mrb[0].mxu0
      %v3847 = vadd.f32 %v2229, %v3846
      %v3848 = vpop.f32.mrb[0].mxu0
      %v3849 = vpop.f32.mrb[0].mxu0
      %v3850 = vpop.f32.mrb[0].mxu0
      %3851 = vdwg.mxu0
      %v3852 = vsel %vm555, %v3847, 0.0
      %3853 = vadd.xlane.f32.xlu0 %v3852
      %v3854 = vpop.xlane.xlu0 %3853
      %v3855 = vadd.f32 %v2331, %v3854
      %v3856 = vsel %vm559, %v3847, 0.0
      %3857 = vadd.xlane.f32.xlu0 %v3856
      %v3858 = vpop.xlane.xlu0 %3857
      %v3859 = vadd.f32 %v2333, %v3858
      %v3860 = vsel %vm555, %v3855, 0.0
      %v3861 = vsel %vm559, %v3859, 0.0
      %v3862 = vadd.f32 %v3860, %v3861
      %3863 = vst [vmem:[%s450 + $0x8] sm:$0xff] %v3862
      %v3864 = vmax.f32 %v3855, 0.0
      %v3865 = vmin.f32 %v3864, 15.0
      %v3866 = vmax.f32 %v3859, 0.0
      %v3867 = vmin.f32 %v3866, 15.0
      %v3868 = vcvt.f32.s32.to.zero.pseudo %v3865
      %v3869 = vmul.u32 %v3868, 16
      %v3870 = vcvt.f32.s32.to.zero.pseudo %v3867
      %v3871 = vadd.s32 %v3869, %v3870
      %vm3872 = vcmp.eq.s32.totalorder %v552, %v3871
      %vm3873 = vcmp.eq.s32.totalorder %v553, %v3871
      %v3874 = vsel %vm3872, 1, 0
      %v3875 = vsel %vm3873, 1, 0
      %v3876 = vcvt.s32.f32 %v3874
      %v3877 = vcvt.s32.f32 %v3875
      %v3878 = vpack.c.bf16 %v3876, %v3876
      %v3879 = vpack.c.bf16 %v3877, %v3877
      %3880 = vmatprep.subr.bf16.mxu0 0
      %3881 = vmatpush1.bf16.msra.mxu0 %v643
      %3882 = vmatprep.subr.bf16.mxu0 0
      %3883 = vmatpush1.bf16.msra.mxu0 %v644
      %3884 = vmatprep.subr.bf16.mxu0 0
      %3885 = vmatpush1.bf16.msra.mxu0 %v645
      %3886 = vmatprep.subr.bf16.mxu0 0
      %3887 = vmatpush1.bf16.msra.mxu0 %v646
      %3888 = vmatprep.subr.bf16.mxu0 0
      %3889 = vmatpush1.bf16.msra.mxu0 %v647
      %3890 = vmatprep.subr.bf16.mxu0 0
      %3891 = vmatpush1.bf16.msra.mxu0 %v648
      %3892 = vmatprep.subr.bf16.mxu0 0
      %3893 = vmatpush1.bf16.msra.mxu0 %v649
      %3894 = vmatprep.subr.bf16.mxu0 0
      %3895 = vmatpush1.bf16.msra.mxu0 %v650
      %3896 = vmatprep.subr.bf16.mxu0 0
      %3897 = vmatpush1.bf16.msra.mxu0 %v651
      %3898 = vmatprep.subr.bf16.mxu0 0
      %3899 = vmatpush1.bf16.msra.mxu0 %v652
      %3900 = vmatprep.subr.bf16.mxu0 0
      %3901 = vmatpush1.bf16.msra.mxu0 %v653
      %3902 = vmatprep.subr.bf16.mxu0 0
      %3903 = vmatpush1.bf16.msra.mxu0 %v654
      %3904 = vmatprep.subr.bf16.mxu0 0
      %3905 = vmatpush1.bf16.msra.mxu0 %v655
      %3906 = vmatprep.subr.bf16.mxu0 0
      %3907 = vmatpush1.bf16.msra.mxu0 %v656
      %3908 = vmatprep.subr.bf16.mxu0 0
      %3909 = vmatpush1.bf16.msra.mxu0 %v657
      %3910 = vmatprep.subr.bf16.mxu0 0
      %3911 = vmatpush1.bf16.msra.mxu0 %v658
      %3912 = vmatprep.mubr.bf16.mxu0 %v3879
      %3913 = vmatmul.mubr.bf16.gmra.mrb[0].mxu0 %v3878
      %v3914 = vpop.f32.mrb[0].mxu0
      %v3915 = vadd.f32 0.0, %v3914
      %v3916 = vpop.f32.mrb[0].mxu0
      %v3917 = vpop.f32.mrb[0].mxu0
      %v3918 = vpop.f32.mrb[0].mxu0
      %3919 = vdwg.mxu0
      %v3920 = vsel %vm715, %v3915, 0.0
      %v3921 = vsel %vm717, %v3865, 0.0
      %v3922 = vadd.f32 %v3920, %v3921
      %v3923 = vsel %vm720, %v3867, 0.0
      %v3924 = vadd.f32 %v3922, %v3923
      %3925 = vadd.xlane.f32.xlu0 %v3924
      %v3926 = vpop.xlane.xlu0 %3925
      %v3927 = vmul.f32 %v3926, %v461
      %v3928 = vsub.f32 %v3924, %v3927
      %v3929 = vmul.f32 %v3928, %v3928
      %3930 = vadd.xlane.f32.xlu0 %v3929
      %v3931 = vpop.xlane.xlu0 %3930
      %v3932 = vmul.f32 %v3931, %v461
      %v3933 = vadd.f32 %v3932, 1e-05
      %v3934 = vrsqrt.pop %v3933
      %v3935 = vmul.f32 %v3928, %v3934
      %v3936 = vmul.f32 %v3935, %v474
      %v3937 = vadd.f32 %v3936, %v479
      %v3938 = vadd.f32 %v3937, %v456
      %v3939 = vld [vmem:[%s7] sm:$0xff]
      %v3940 = vld [vmem:[%s7 + $0x8] sm:$0xf]
      %v3941 = vld [vmem:[%s7 + $0xc] sm:$0xff]
      %v3942 = vld [vmem:[%s7 + $0x14] sm:$0xf]
      %v3943 = vld [vmem:[%s7 + $0x18] sm:$0xff]
      %v3944 = vld [vmem:[%s7 + $0x20] sm:$0xf]
      %v3945 = vld [vmem:[%s7 + $0x24] sm:$0xff]
      %v3946 = vld [vmem:[%s7 + $0x2c] sm:$0xf]
      %v3947 = vld [vmem:[%s7 + $0x30] sm:$0xff]
      %v3948 = vld [vmem:[%s7 + $0x38] sm:$0xf]
      %v3949 = vld [vmem:[%s7 + $0x3c] sm:$0xff]
      %v3950 = vld [vmem:[%s7 + $0x44] sm:$0xf]
      %v3951 = vld [vmem:[%s7 + $0x48] sm:$0xff]
      %v3952 = vld [vmem:[%s7 + $0x50] sm:$0xf]
      %v3953 = vld [vmem:[%s7 + $0x54] sm:$0xff]
      %v3954 = vld [vmem:[%s7 + $0x5c] sm:$0xf]
      %v3955 = vld [vmem:[%s7 + $0x60] sm:$0xff]
      %v3956 = vld [vmem:[%s7 + $0x68] sm:$0xf]
      %v3957 = vld [vmem:[%s7 + $0x6c] sm:$0xff]
      %v3958 = vld [vmem:[%s7 + $0x74] sm:$0xf]
      %v3959 = vld [vmem:[%s7 + $0x78] sm:$0xff]
      %v3960 = vld [vmem:[%s7 + $0x80] sm:$0xf]
      %v3961 = vld [vmem:[%s7 + $0x84] sm:$0xff]
      %v3962 = vld [vmem:[%s7 + $0x8c] sm:$0xf]
      %v3963 = vld [vmem:[%s7 + $0x90] sm:$0xff]
      %v3964 = vld [vmem:[%s7 + $0x98] sm:$0xf]
      %v3965 = vld [vmem:[%s7 + $0x9c] sm:$0xff]
      %v3966 = vld [vmem:[%s7 + $0xa4] sm:$0xf]
      %v3967 = vld [vmem:[%s7 + $0xa8] sm:$0xff]
      %v3968 = vld [vmem:[%s7 + $0xb0] sm:$0xf]
      %v3969 = vld [vmem:[%s7 + $0xb4] sm:$0xff]
      %v3970 = vld [vmem:[%s7 + $0xbc] sm:$0xf]
      %v3971 = vpack.c.bf16 %v3938, %v481
      %v4004 = vunpack.c.l.b16 %v3939
      %v4005 = vunpack.c.h.b16 %v3939
      %v4006 = vunpack.c.l.b16 %v3940
      %v4007 = vunpack.c.l.b16 %v3941
      %v4008 = vunpack.c.h.b16 %v3941
      %v4009 = vunpack.c.l.b16 %v3942
      %v4010 = vunpack.c.l.b16 %v3943
      %v4011 = vunpack.c.h.b16 %v3943
      %v4012 = vunpack.c.l.b16 %v3944
      %v4013 = vunpack.c.l.b16 %v3945
      %v4014 = vunpack.c.h.b16 %v3945
      %v4015 = vunpack.c.l.b16 %v3946
      %v4016 = vunpack.c.l.b16 %v3947
      %v4017 = vunpack.c.h.b16 %v3947
      %v4018 = vunpack.c.l.b16 %v3948
      %v4019 = vunpack.c.l.b16 %v3949
      %v4020 = vunpack.c.h.b16 %v3949
      %v4021 = vunpack.c.l.b16 %v3950
      %v4022 = vunpack.c.l.b16 %v3951
      %v4023 = vunpack.c.h.b16 %v3951
      %v4024 = vunpack.c.l.b16 %v3952
      %v4025 = vunpack.c.l.b16 %v3953
      %v4026 = vunpack.c.h.b16 %v3953
      %v4027 = vunpack.c.l.b16 %v3954
      %v4028 = vunpack.c.l.b16 %v3955
      %v4029 = vunpack.c.h.b16 %v3955
      %v4030 = vunpack.c.l.b16 %v3956
      %v4031 = vunpack.c.l.b16 %v3957
      %v4032 = vunpack.c.h.b16 %v3957
      %v4033 = vunpack.c.l.b16 %v3958
      %v4034 = vunpack.c.l.b16 %v3959
      %v4035 = vunpack.c.h.b16 %v3959
      %v4036 = vunpack.c.l.b16 %v3960
      %v4037 = vunpack.c.l.b16 %v3961
      %v4038 = vunpack.c.h.b16 %v3961
      %v4039 = vunpack.c.l.b16 %v3962
      %v4040 = vunpack.c.l.b16 %v3963
      %v4041 = vunpack.c.h.b16 %v3963
      %v4042 = vunpack.c.l.b16 %v3964
      %v4043 = vunpack.c.l.b16 %v3965
      %v4044 = vunpack.c.h.b16 %v3965
      %v4045 = vunpack.c.l.b16 %v3966
      %v4046 = vunpack.c.l.b16 %v3967
      %v4047 = vunpack.c.h.b16 %v3967
      %v4048 = vunpack.c.l.b16 %v3968
      %v4049 = vunpack.c.l.b16 %v3969
      %v4050 = vunpack.c.h.b16 %v3969
      %v4051 = vunpack.c.l.b16 %v3970
      %v4052 = vpack.c.b16 %v4007, %v4004
      %v4053 = vpack.c.b16 %v4008, %v4005
      %v4054 = vpack.c.b16 %v4009, %v4006
      %v4055 = vpack.c.b16 %v4013, %v4010
      %v4056 = vpack.c.b16 %v4014, %v4011
      %v4057 = vpack.c.b16 %v4015, %v4012
      %v4058 = vpack.c.b16 %v4019, %v4016
      %v4059 = vpack.c.b16 %v4020, %v4017
      %v4060 = vpack.c.b16 %v4021, %v4018
      %v4061 = vpack.c.b16 %v4025, %v4022
      %v4062 = vpack.c.b16 %v4026, %v4023
      %v4063 = vpack.c.b16 %v4027, %v4024
      %v4064 = vpack.c.b16 %v4031, %v4028
      %v4065 = vpack.c.b16 %v4032, %v4029
      %v4066 = vpack.c.b16 %v4033, %v4030
      %v4067 = vpack.c.b16 %v4037, %v4034
      %v4068 = vpack.c.b16 %v4038, %v4035
      %v4069 = vpack.c.b16 %v4039, %v4036
      %v4070 = vpack.c.b16 %v4043, %v4040
      %v4071 = vpack.c.b16 %v4044, %v4041
      %v4072 = vpack.c.b16 %v4045, %v4042
      %v4073 = vpack.c.b16 %v4049, %v4046
      %v4074 = vpack.c.b16 %v4050, %v4047
      %v4075 = vpack.c.b16 %v4051, %v4048
      %4100 = vmatprep.subr.bf16.mxu0 %v4053
      %4101 = vmatpush1.bf16.msra.mxu0 %v4052
      %4102 = vmatprep.subr.bf16.mxu0 %v4056
      %4103 = vmatpush1.bf16.msra.mxu0 %v4055
      %4104 = vmatprep.subr.bf16.mxu0 %v4059
      %4105 = vmatpush1.bf16.msra.mxu0 %v4058
      %4106 = vmatprep.subr.bf16.mxu0 %v4062
      %4107 = vmatpush1.bf16.msra.mxu0 %v4061
      %4108 = vmatprep.subr.bf16.mxu0 %v4065
      %4109 = vmatpush1.bf16.msra.mxu0 %v4064
      %4110 = vmatprep.subr.bf16.mxu0 %v4068
      %4111 = vmatpush1.bf16.msra.mxu0 %v4067
      %4112 = vmatprep.subr.bf16.mxu0 %v4071
      %4113 = vmatpush1.bf16.msra.mxu0 %v4070
      %4114 = vmatprep.subr.bf16.mxu0 %v4074
      %4115 = vmatpush1.bf16.msra.mxu0 %v4073
      %4116 = vmatprep.subr.bf16.mxu0 0
      %4117 = vmatpush1.bf16.msra.mxu0 0
      %4118 = vmatprep.subr.bf16.mxu0 0
      %4119 = vmatpush1.bf16.msra.mxu0 0
      %4120 = vmatprep.subr.bf16.mxu0 0
      %4121 = vmatpush1.bf16.msra.mxu0 0
      %4122 = vmatprep.subr.bf16.mxu0 0
      %4123 = vmatpush1.bf16.msra.mxu0 0
      %4124 = vmatprep.subr.bf16.mxu0 0
      %4125 = vmatpush1.bf16.msra.mxu0 0
      %4126 = vmatprep.subr.bf16.mxu0 0
      %4127 = vmatpush1.bf16.msra.mxu0 0
      %4128 = vmatprep.subr.bf16.mxu0 0
      %4129 = vmatpush1.bf16.msra.mxu0 0
      %4130 = vmatprep.subr.bf16.mxu0 0
      %4131 = vmatpush1.bf16.msra.mxu0 0
      %4132 = vmatprep.mubr.bf16.mxu0 0
      %4133 = vmatmul.mubr.bf16.gmra.mrb[0].mxu0 %v3971
      %v4134 = vpop.f32.mrb[0].mxu0
      %v4135 = vadd.f32 0.0, %v4134
      %v4136 = vpop.f32.mrb[0].mxu0
      %v4137 = vadd.f32 0.0, %v4136
      %v4138 = vpop.f32.mrb[0].mxu0
      %v4139 = vadd.f32 0.0, %v4138
      %v4140 = vpop.f32.mrb[0].mxu0
      %v4141 = vadd.f32 0.0, %v4140
      %4142 = vmatprep.mubr.bf16.mxu0 0
      %4143 = vmatmul.mubr.bf16.gmra.mrb[0].mxu0 %v770
      %v4144 = vpop.f32.mrb[0].mxu0
      %v4145 = vadd.f32 0.0, %v4144
      %v4146 = vpop.f32.mrb[0].mxu0
      %v4147 = vadd.f32 0.0, %v4146
      %v4148 = vpop.f32.mrb[0].mxu0
      %v4149 = vpop.f32.mrb[0].mxu0
      %4150 = vdwg.mxu0
      %4151 = vmatprep.subr.bf16.mxu0 0
      %4152 = vmatpush1.bf16.msra.mxu0 %v4054
      %4153 = vmatprep.subr.bf16.mxu0 0
      %4154 = vmatpush1.bf16.msra.mxu0 %v4057
      %4155 = vmatprep.subr.bf16.mxu0 0
      %4156 = vmatpush1.bf16.msra.mxu0 %v4060
      %4157 = vmatprep.subr.bf16.mxu0 0
      %4158 = vmatpush1.bf16.msra.mxu0 %v4063
      %4159 = vmatprep.subr.bf16.mxu0 0
      %4160 = vmatpush1.bf16.msra.mxu0 %v4066
      %4161 = vmatprep.subr.bf16.mxu0 0
      %4162 = vmatpush1.bf16.msra.mxu0 %v4069
      %4163 = vmatprep.subr.bf16.mxu0 0
      %4164 = vmatpush1.bf16.msra.mxu0 %v4072
      %4165 = vmatprep.subr.bf16.mxu0 0
      %4166 = vmatpush1.bf16.msra.mxu0 %v4075
      %4167 = vmatprep.subr.bf16.mxu0 0
      %4168 = vmatpush1.bf16.msra.mxu0 0
      %4169 = vmatprep.subr.bf16.mxu0 0
      %4170 = vmatpush1.bf16.msra.mxu0 0
      %4171 = vmatprep.subr.bf16.mxu0 0
      %4172 = vmatpush1.bf16.msra.mxu0 0
      %4173 = vmatprep.subr.bf16.mxu0 0
      %4174 = vmatpush1.bf16.msra.mxu0 0
      %4175 = vmatprep.subr.bf16.mxu0 0
      %4176 = vmatpush1.bf16.msra.mxu0 0
      %4177 = vmatprep.subr.bf16.mxu0 0
      %4178 = vmatpush1.bf16.msra.mxu0 0
      %4179 = vmatprep.subr.bf16.mxu0 0
      %4180 = vmatpush1.bf16.msra.mxu0 0
      %4181 = vmatprep.subr.bf16.mxu0 0
      %4182 = vmatpush1.bf16.msra.mxu0 0
      %4183 = vmatprep.mubr.bf16.mxu0 0
      %4184 = vmatmul.mubr.bf16.gmra.mrb[0].mxu0 %v3971
      %v4185 = vpop.f32.mrb[0].mxu0
      %v4186 = vadd.f32 0.0, %v4185
      %v4187 = vpop.f32.mrb[0].mxu0
      %v4188 = vpop.f32.mrb[0].mxu0
      %v4189 = vadd.f32 0.0, %v4188
      %v4190 = vpop.f32.mrb[0].mxu0
      %4191 = vmatprep.mubr.bf16.mxu0 0
      %4192 = vmatmul.mubr.bf16.gmra.mrb[0].mxu0 %v770
      %v4193 = vpop.f32.mrb[0].mxu0
      %v4194 = vadd.f32 0.0, %v4193
      %v4195 = vpop.f32.mrb[0].mxu0
      %v4196 = vpop.f32.mrb[0].mxu0
      %v4197 = vpop.f32.mrb[0].mxu0
      %4198 = vdwg.mxu0
      %v4199 = vadd.f32 %v4135, %v1001
      %v4200 = vadd.f32 %v4139, %v1001
      %v4201 = vadd.f32 %v4145, %v1001
      %v4202 = vadd.f32 %v4137, %v1008
      %v4203 = vadd.f32 %v4141, %v1008
      %v4204 = vadd.f32 %v4147, %v1008
      %v4205 = vadd.f32 %v4186, %v1015
      %v4206 = vadd.f32 %v4189, %v1015
      %v4207 = vadd.f32 %v4194, %v1015
      %v4208 = vpack.c.bf16 %v4200, %v4199
      %v4209 = vpack.c.bf16 %v4201, %v4201
      %v4210 = vpack.c.bf16 %v4203, %v4202
      %v4211 = vpack.c.bf16 %v4204, %v4204
      %4212 = vmatprep.subr.bf16.mxu0 0
      %4213 = vmatpush1.bf16.xpose.msra.mxu0 %v4210
      %4214 = vmatprep.subr.bf16.mxu0 0
      %4215 = vmatpush1.bf16.xpose.msra.mxu0 %v4211
      %4216 = vmatprep.subr.bf16.mxu0 0
      %4217 = vmatpush1.bf16.xpose.msra.mxu0 0
      %4218 = vmatprep.subr.bf16.mxu0 0
      %4219 = vmatpush1.bf16.xpose.msra.mxu0 0
      %4220 = vmatprep.subr.bf16.mxu0 0
      %4221 = vmatpush1.bf16.xpose.msra.mxu0 0
      %4222 = vmatprep.subr.bf16.mxu0 0
      %4223 = vmatpush1.bf16.xpose.msra.mxu0 0
      %4224 = vmatprep.subr.bf16.mxu0 0
      %4225 = vmatpush1.bf16.xpose.msra.mxu0 0
      %4226 = vmatprep.subr.bf16.mxu0 0
      %4227 = vmatpush1.bf16.xpose.msra.mxu0 0
      %4228 = vmatprep.subr.bf16.mxu0 0
      %4229 = vmatpush1.bf16.xpose.msra.mxu0 0
      %4230 = vmatprep.subr.bf16.mxu0 0
      %4231 = vmatpush1.bf16.xpose.msra.mxu0 0
      %4232 = vmatprep.subr.bf16.mxu0 0
      %4233 = vmatpush1.bf16.xpose.msra.mxu0 0
      %4234 = vmatprep.subr.bf16.mxu0 0
      %4235 = vmatpush1.bf16.xpose.msra.mxu0 0
      %4236 = vmatprep.subr.bf16.mxu0 0
      %4237 = vmatpush1.bf16.xpose.msra.mxu0 0
      %4238 = vmatprep.subr.bf16.mxu0 0
      %4239 = vmatpush1.bf16.xpose.msra.mxu0 0
      %4240 = vmatprep.subr.bf16.mxu0 0
      %4241 = vmatpush1.bf16.xpose.msra.mxu0 0
      %4242 = vmatprep.subr.bf16.mxu0 0
      %4243 = vmatpush1.bf16.xpose.msra.mxu0 0
      %4244 = vmatprep.mubr.bf16.mxu0 0
      %4245 = vmatmul.mubr.bf16.gmra.mrb[0].mxu0 %v4208
      %v4246 = vpop.f32.mrb[0].mxu0
      %v4247 = vadd.f32 0.0, %v4246
      %v4248 = vpop.f32.mrb[0].mxu0
      %v4249 = vpop.f32.mrb[0].mxu0
      %v4250 = vadd.f32 0.0, %v4249
      %v4251 = vpop.f32.mrb[0].mxu0
      %4252 = vmatprep.mubr.bf16.mxu0 0
      %4253 = vmatmul.mubr.bf16.gmra.mrb[0].mxu0 %v4209
      %v4254 = vpop.f32.mrb[0].mxu0
      %v4255 = vadd.f32 0.0, %v4254
      %v4256 = vpop.f32.mrb[0].mxu0
      %v4257 = vpop.f32.mrb[0].mxu0
      %v4258 = vpop.f32.mrb[0].mxu0
      %4259 = vdwg.mxu0
      %v4260 = vmul.f32 %v4247, 0.088388346
      %v4261 = vmul.f32 %v4250, 0.088388346
      %v4262 = vmul.f32 %v4255, 0.088388346
      %v4263 = vsel %vm1074, %v4260, -inf
      %4264 = vmax.xlane.f32.xlu0 %v4263
      %v4265 = vpop.xlane.xlu0 %4264
      %v4266 = vsel %vm1074, %v4261, -inf
      %4267 = vmax.xlane.f32.xlu0 %v4266
      %v4268 = vpop.xlane.xlu0 %4267
      %v4269 = vsel %vm1074, %v4262, -inf
      %4270 = vmax.xlane.f32.xlu0 %v4269
      %v4271 = vpop.xlane.xlu0 %4270
      %v4272 = vsub.f32 %v4260, %v4265
      %v4273 = vsub.f32 %v4261, %v4268
      %v4274 = vsub.f32 %v4262, %v4271
      %v4275 = vmul.f32 %v4272, 1.442695
      %v4276 = vpow.pop %v4275
      %v4277 = vmul.f32 %v4273, 1.442695
      %v4278 = vpow.pop %v4277
      %v4279 = vmul.f32 %v4274, 1.442695
      %v4280 = vpow.pop %v4279
      %v4281 = vsel %vm1074, %v4276, 0.0
      %4282 = vadd.xlane.f32.xlu0 %v4281
      %v4283 = vpop.xlane.xlu0 %4282
      %v4284 = vsel %vm1074, %v4278, 0.0
      %4285 = vadd.xlane.f32.xlu0 %v4284
      %v4286 = vpop.xlane.xlu0 %4285
      %v4287 = vsel %vm1074, %v4280, 0.0
      %4288 = vadd.xlane.f32.xlu0 %v4287
      %v4289 = vpop.xlane.xlu0 %4288
      %v4290 = vrcp.pop %v4283
      %v4291 = vrcp.pop %v4286
      %v4292 = vrcp.pop %v4289
      %v4293 = vmul.f32 %v4276, %v4290
      %v4294 = vmul.f32 %v4278, %v4291
      %v4295 = vmul.f32 %v4280, %v4292
      %v4296 = vpack.c.bf16 %v4294, %v4293
      %v4297 = vpack.c.bf16 %v4295, %v4295
      %v4298 = vpack.c.bf16 %v4206, %v4205
      %v4299 = vpack.c.bf16 %v4207, %v4207
      %v4301 = vsel %vm1074, %v4296, 0
      %v4304 = vsel %vm1074, %v4297, 0
      %v4307 = vsel %vm1118, %v4299, 0
      %4309 = vmatprep.subr.bf16.mxu0 0
      %4310 = vmatpush1.bf16.msra.mxu0 %v4298
      %4311 = vmatprep.subr.bf16.mxu0 0
      %4312 = vmatpush1.bf16.msra.mxu0 %v4307
      %4313 = vmatprep.subr.bf16.mxu0 0
      %4314 = vmatpush1.bf16.msra.mxu0 0
      %4315 = vmatprep.subr.bf16.mxu0 0
      %4316 = vmatpush1.bf16.msra.mxu0 0
      %4317 = vmatprep.subr.bf16.mxu0 0
      %4318 = vmatpush1.bf16.msra.mxu0 0
      %4319 = vmatprep.subr.bf16.mxu0 0
      %4320 = vmatpush1.bf16.msra.mxu0 0
      %4321 = vmatprep.subr.bf16.mxu0 0
      %4322 = vmatpush1.bf16.msra.mxu0 0
      %4323 = vmatprep.subr.bf16.mxu0 0
      %4324 = vmatpush1.bf16.msra.mxu0 0
      %4325 = vmatprep.subr.bf16.mxu0 0
      %4326 = vmatpush1.bf16.msra.mxu0 0
      %4327 = vmatprep.subr.bf16.mxu0 0
      %4328 = vmatpush1.bf16.msra.mxu0 0
      %4329 = vmatprep.subr.bf16.mxu0 0
      %4330 = vmatpush1.bf16.msra.mxu0 0
      %4331 = vmatprep.subr.bf16.mxu0 0
      %4332 = vmatpush1.bf16.msra.mxu0 0
      %4333 = vmatprep.subr.bf16.mxu0 0
      %4334 = vmatpush1.bf16.msra.mxu0 0
      %4335 = vmatprep.subr.bf16.mxu0 0
      %4336 = vmatpush1.bf16.msra.mxu0 0
      %4337 = vmatprep.subr.bf16.mxu0 0
      %4338 = vmatpush1.bf16.msra.mxu0 0
      %4339 = vmatprep.subr.bf16.mxu0 0
      %4340 = vmatpush1.bf16.msra.mxu0 0
      %4341 = vmatprep.mubr.bf16.mxu0 0
      %4342 = vmatmul.mubr.bf16.gmra.mrb[0].mxu0 %v4301
      %v4343 = vpop.f32.mrb[0].mxu0
      %v4344 = vadd.f32 0.0, %v4343
      %v4345 = vpop.f32.mrb[0].mxu0
      %v4346 = vpop.f32.mrb[0].mxu0
      %v4347 = vadd.f32 0.0, %v4346
      %v4348 = vpop.f32.mrb[0].mxu0
      %4349 = vmatprep.mubr.bf16.mxu0 0
      %4350 = vmatmul.mubr.bf16.gmra.mrb[0].mxu0 %v4304
      %v4351 = vpop.f32.mrb[0].mxu0
      %v4352 = vadd.f32 0.0, %v4351
      %v4353 = vpop.f32.mrb[0].mxu0
      %v4354 = vpop.f32.mrb[0].mxu0
      %v4355 = vpop.f32.mrb[0].mxu0
      %4356 = vdwg.mxu0
      %v4357 = vld [vmem:[%s8] sm:$0xf]
      %v4358 = vld [vmem:[%s8 + $0x4] sm:$0xf]
      %v4359 = vld [vmem:[%s8 + $0x8] sm:$0xf]
      %v4360 = vld [vmem:[%s8 + $0xc] sm:$0xf]
      %v4361 = vld [vmem:[%s8 + $0x10] sm:$0xf]
      %v4362 = vld [vmem:[%s8 + $0x14] sm:$0xf]
      %v4363 = vld [vmem:[%s8 + $0x18] sm:$0xf]
      %v4364 = vld [vmem:[%s8 + $0x1c] sm:$0xf]
      %v4365 = vld [vmem:[%s8 + $0x20] sm:$0xf]
      %v4366 = vld [vmem:[%s8 + $0x24] sm:$0xf]
      %v4367 = vld [vmem:[%s8 + $0x28] sm:$0xf]
      %v4368 = vld [vmem:[%s8 + $0x2c] sm:$0xf]
      %v4369 = vld [vmem:[%s8 + $0x30] sm:$0xf]
      %v4370 = vld [vmem:[%s8 + $0x34] sm:$0xf]
      %v4371 = vld [vmem:[%s8 + $0x38] sm:$0xf]
      %v4372 = vld [vmem:[%s8 + $0x3c] sm:$0xf]
      %v4373 = vpack.c.bf16 %v4347, %v4344
      %v4374 = vpack.c.bf16 %v4352, %v4352
      %v4391 = vunpack.c.l.b16 %v4357
      %v4392 = vunpack.c.l.b16 %v4358
      %v4393 = vunpack.c.l.b16 %v4359
      %v4394 = vunpack.c.l.b16 %v4360
      %v4395 = vunpack.c.l.b16 %v4361
      %v4396 = vunpack.c.l.b16 %v4362
      %v4397 = vunpack.c.l.b16 %v4363
      %v4398 = vunpack.c.l.b16 %v4364
      %v4399 = vunpack.c.l.b16 %v4365
      %v4400 = vunpack.c.l.b16 %v4366
      %v4401 = vunpack.c.l.b16 %v4367
      %v4402 = vunpack.c.l.b16 %v4368
      %v4403 = vunpack.c.l.b16 %v4369
      %v4404 = vunpack.c.l.b16 %v4370
      %v4405 = vunpack.c.l.b16 %v4371
      %v4406 = vunpack.c.l.b16 %v4372
      %v4407 = vpack.c.b16 %v4392, %v4391
      %v4408 = vpack.c.b16 %v4394, %v4393
      %v4409 = vpack.c.b16 %v4396, %v4395
      %v4410 = vpack.c.b16 %v4398, %v4397
      %v4411 = vpack.c.b16 %v4400, %v4399
      %v4412 = vpack.c.b16 %v4402, %v4401
      %v4413 = vpack.c.b16 %v4404, %v4403
      %v4414 = vpack.c.b16 %v4406, %v4405
      %4423 = vmatprep.subr.bf16.mxu0 0
      %4424 = vmatpush1.bf16.msra.mxu0 %v4407
      %4425 = vmatprep.subr.bf16.mxu0 0
      %4426 = vmatpush1.bf16.msra.mxu0 %v4408
      %4427 = vmatprep.subr.bf16.mxu0 0
      %4428 = vmatpush1.bf16.msra.mxu0 %v4409
      %4429 = vmatprep.subr.bf16.mxu0 0
      %4430 = vmatpush1.bf16.msra.mxu0 %v4410
      %4431 = vmatprep.subr.bf16.mxu0 0
      %4432 = vmatpush1.bf16.msra.mxu0 %v4411
      %4433 = vmatprep.subr.bf16.mxu0 0
      %4434 = vmatpush1.bf16.msra.mxu0 %v4412
      %4435 = vmatprep.subr.bf16.mxu0 0
      %4436 = vmatpush1.bf16.msra.mxu0 %v4413
      %4437 = vmatprep.subr.bf16.mxu0 0
      %4438 = vmatpush1.bf16.msra.mxu0 %v4414
      %4439 = vmatprep.subr.bf16.mxu0 0
      %4440 = vmatpush1.bf16.msra.mxu0 0
      %4441 = vmatprep.subr.bf16.mxu0 0
      %4442 = vmatpush1.bf16.msra.mxu0 0
      %4443 = vmatprep.subr.bf16.mxu0 0
      %4444 = vmatpush1.bf16.msra.mxu0 0
      %4445 = vmatprep.subr.bf16.mxu0 0
      %4446 = vmatpush1.bf16.msra.mxu0 0
      %4447 = vmatprep.subr.bf16.mxu0 0
      %4448 = vmatpush1.bf16.msra.mxu0 0
      %4449 = vmatprep.subr.bf16.mxu0 0
      %4450 = vmatpush1.bf16.msra.mxu0 0
      %4451 = vmatprep.subr.bf16.mxu0 0
      %4452 = vmatpush1.bf16.msra.mxu0 0
      %4453 = vmatprep.subr.bf16.mxu0 0
      %4454 = vmatpush1.bf16.msra.mxu0 0
      %4455 = vmatprep.mubr.bf16.mxu0 0
      %4456 = vmatmul.mubr.bf16.gmra.mrb[0].mxu0 %v4373
      %v4457 = vpop.f32.mrb[0].mxu0
      %v4458 = vadd.f32 0.0, %v4457
      %v4459 = vpop.f32.mrb[0].mxu0
      %v4460 = vpop.f32.mrb[0].mxu0
      %v4461 = vadd.f32 0.0, %v4460
      %v4462 = vpop.f32.mrb[0].mxu0
      %4463 = vmatprep.mubr.bf16.mxu0 0
      %4464 = vmatmul.mubr.bf16.gmra.mrb[0].mxu0 %v4374
      %v4465 = vpop.f32.mrb[0].mxu0
      %v4466 = vadd.f32 0.0, %v4465
      %v4467 = vpop.f32.mrb[0].mxu0
      %v4468 = vpop.f32.mrb[0].mxu0
      %v4469 = vpop.f32.mrb[0].mxu0
      %4470 = vdwg.mxu0
      %v4471 = vadd.f32 %v481, %v4458
      %v4472 = vadd.f32 %v3938, %v4461
      %v4473 = vadd.f32 %v496, %v4466
      %v4474 = vadd.f32 %v4471, %v1290
      %v4475 = vadd.f32 %v4472, %v1290
      %v4476 = vadd.f32 %v4473, %v1290
      %4477 = vadd.xlane.f32.xlu0 %v4474
      %v4478 = vpop.xlane.xlu0 %4477
      %4479 = vadd.xlane.f32.xlu0 %v4475
      %v4480 = vpop.xlane.xlu0 %4479
      %4481 = vadd.xlane.f32.xlu0 %v4476
      %v4482 = vpop.xlane.xlu0 %4481
      %v4483 = vmul.f32 %v4478, %v461
      %v4484 = vmul.f32 %v4480, %v461
      %v4485 = vmul.f32 %v4482, %v461
      %v4486 = vsub.f32 %v4474, %v4483
      %v4487 = vsub.f32 %v4475, %v4484
      %v4488 = vsub.f32 %v4476, %v4485
      %v4489 = vmul.f32 %v4486, %v4486
      %v4490 = vmul.f32 %v4487, %v4487
      %v4491 = vmul.f32 %v4488, %v4488
      %4492 = vadd.xlane.f32.xlu0 %v4489
      %v4493 = vpop.xlane.xlu0 %4492
      %4494 = vadd.xlane.f32.xlu0 %v4490
      %v4495 = vpop.xlane.xlu0 %4494
      %4496 = vadd.xlane.f32.xlu0 %v4491
      %v4497 = vpop.xlane.xlu0 %4496
      %v4498 = vmul.f32 %v4493, %v461
      %v4499 = vmul.f32 %v4495, %v461
      %v4500 = vmul.f32 %v4497, %v461
      %v4501 = vadd.f32 %v4498, 1e-05
      %v4502 = vadd.f32 %v4499, 1e-05
      %v4503 = vadd.f32 %v4500, 1e-05
      %v4504 = vrsqrt.pop %v4501
      %v4505 = vrsqrt.pop %v4502
      %v4506 = vrsqrt.pop %v4503
      %v4507 = vmul.f32 %v4486, %v4504
      %v4508 = vmul.f32 %v4487, %v4505
      %v4509 = vmul.f32 %v4488, %v4506
      %v4510 = vmul.f32 %v4507, %v1330
      %v4511 = vmul.f32 %v4508, %v1330
      %v4512 = vmul.f32 %v4509, %v1330
      %v4513 = vadd.f32 %v4510, %v1337
      %v4514 = vadd.f32 %v4511, %v1337
      %v4515 = vadd.f32 %v4512, %v1337
      %v4516 = vld [vmem:[%s8 + $0x40] sm:$0xf]
      %v4517 = vld [vmem:[%s8 + $0x44] sm:$0xf]
      %v4518 = vld [vmem:[%s8 + $0x48] sm:$0xf]
      %v4519 = vld [vmem:[%s8 + $0x4c] sm:$0xf]
      %v4520 = vld [vmem:[%s8 + $0x50] sm:$0xf]
      %v4521 = vld [vmem:[%s8 + $0x54] sm:$0xf]
      %v4522 = vld [vmem:[%s8 + $0x58] sm:$0xf]
      %v4523 = vld [vmem:[%s8 + $0x5c] sm:$0xf]
      %v4524 = vld [vmem:[%s8 + $0x60] sm:$0xf]
      %v4525 = vld [vmem:[%s8 + $0x64] sm:$0xf]
      %v4526 = vld [vmem:[%s8 + $0x68] sm:$0xf]
      %v4527 = vld [vmem:[%s8 + $0x6c] sm:$0xf]
      %v4528 = vld [vmem:[%s8 + $0x70] sm:$0xf]
      %v4529 = vld [vmem:[%s8 + $0x74] sm:$0xf]
      %v4530 = vld [vmem:[%s8 + $0x78] sm:$0xf]
      %v4531 = vld [vmem:[%s8 + $0x7c] sm:$0xf]
      %v4532 = vpack.c.bf16 %v4514, %v4513
      %v4533 = vpack.c.bf16 %v4515, %v4515
      %v4550 = vunpack.c.l.b16 %v4516
      %v4551 = vunpack.c.l.b16 %v4517
      %v4552 = vunpack.c.l.b16 %v4518
      %v4553 = vunpack.c.l.b16 %v4519
      %v4554 = vunpack.c.l.b16 %v4520
      %v4555 = vunpack.c.l.b16 %v4521
      %v4556 = vunpack.c.l.b16 %v4522
      %v4557 = vunpack.c.l.b16 %v4523
      %v4558 = vunpack.c.l.b16 %v4524
      %v4559 = vunpack.c.l.b16 %v4525
      %v4560 = vunpack.c.l.b16 %v4526
      %v4561 = vunpack.c.l.b16 %v4527
      %v4562 = vunpack.c.l.b16 %v4528
      %v4563 = vunpack.c.l.b16 %v4529
      %v4564 = vunpack.c.l.b16 %v4530
      %v4565 = vunpack.c.l.b16 %v4531
      %v4566 = vpack.c.b16 %v4551, %v4550
      %v4567 = vpack.c.b16 %v4553, %v4552
      %v4568 = vpack.c.b16 %v4555, %v4554
      %v4569 = vpack.c.b16 %v4557, %v4556
      %v4570 = vpack.c.b16 %v4559, %v4558
      %v4571 = vpack.c.b16 %v4561, %v4560
      %v4572 = vpack.c.b16 %v4563, %v4562
      %v4573 = vpack.c.b16 %v4565, %v4564
      %4582 = vmatprep.subr.bf16.mxu0 0
      %4583 = vmatpush1.bf16.msra.mxu0 %v4566
      %4584 = vmatprep.subr.bf16.mxu0 0
      %4585 = vmatpush1.bf16.msra.mxu0 %v4567
      %4586 = vmatprep.subr.bf16.mxu0 0
      %4587 = vmatpush1.bf16.msra.mxu0 %v4568
      %4588 = vmatprep.subr.bf16.mxu0 0
      %4589 = vmatpush1.bf16.msra.mxu0 %v4569
      %4590 = vmatprep.subr.bf16.mxu0 0
      %4591 = vmatpush1.bf16.msra.mxu0 %v4570
      %4592 = vmatprep.subr.bf16.mxu0 0
      %4593 = vmatpush1.bf16.msra.mxu0 %v4571
      %4594 = vmatprep.subr.bf16.mxu0 0
      %4595 = vmatpush1.bf16.msra.mxu0 %v4572
      %4596 = vmatprep.subr.bf16.mxu0 0
      %4597 = vmatpush1.bf16.msra.mxu0 %v4573
      %4598 = vmatprep.subr.bf16.mxu0 0
      %4599 = vmatpush1.bf16.msra.mxu0 0
      %4600 = vmatprep.subr.bf16.mxu0 0
      %4601 = vmatpush1.bf16.msra.mxu0 0
      %4602 = vmatprep.subr.bf16.mxu0 0
      %4603 = vmatpush1.bf16.msra.mxu0 0
      %4604 = vmatprep.subr.bf16.mxu0 0
      %4605 = vmatpush1.bf16.msra.mxu0 0
      %4606 = vmatprep.subr.bf16.mxu0 0
      %4607 = vmatpush1.bf16.msra.mxu0 0
      %4608 = vmatprep.subr.bf16.mxu0 0
      %4609 = vmatpush1.bf16.msra.mxu0 0
      %4610 = vmatprep.subr.bf16.mxu0 0
      %4611 = vmatpush1.bf16.msra.mxu0 0
      %4612 = vmatprep.subr.bf16.mxu0 0
      %4613 = vmatpush1.bf16.msra.mxu0 0
      %4614 = vmatprep.mubr.bf16.mxu0 0
      %4615 = vmatmul.mubr.bf16.gmra.mrb[0].mxu0 %v4532
      %v4616 = vpop.f32.mrb[0].mxu0
      %v4617 = vadd.f32 %v1362, %v4616
      %v4618 = vpop.f32.mrb[0].mxu0
      %v4619 = vpop.f32.mrb[0].mxu0
      %v4620 = vadd.f32 %v1362, %v4619
      %v4621 = vpop.f32.mrb[0].mxu0
      %4622 = vmatprep.mubr.bf16.mxu0 0
      %4623 = vmatmul.mubr.bf16.gmra.mrb[0].mxu0 %v4533
      %v4624 = vpop.f32.mrb[0].mxu0
      %v4625 = vadd.f32 %v1362, %v4624
      %v4626 = vpop.f32.mrb[0].mxu0
      %v4627 = vpop.f32.mrb[0].mxu0
      %v4628 = vpop.f32.mrb[0].mxu0
      %4629 = vdwg.mxu0
      %v4630 = vpack.c.bf16 %v4620, %v4617
      %v4631 = vpack.c.bf16 %v4625, %v4625
      %4632 = vmatprep.subr.bf16.mxu0 0
      %4633 = vmatpush1.bf16.msra.mxu0 %v1493
      %4634 = vmatprep.subr.bf16.mxu0 0
      %4635 = vmatpush1.bf16.msra.mxu0 %v1494
      %4636 = vmatprep.subr.bf16.mxu0 0
      %4637 = vmatpush1.bf16.msra.mxu0 %v1495
      %4638 = vmatprep.subr.bf16.mxu0 0
      %4639 = vmatpush1.bf16.msra.mxu0 %v1496
      %4640 = vmatprep.subr.bf16.mxu0 0
      %4641 = vmatpush1.bf16.msra.mxu0 %v1497
      %4642 = vmatprep.subr.bf16.mxu0 0
      %4643 = vmatpush1.bf16.msra.mxu0 %v1498
      %4644 = vmatprep.subr.bf16.mxu0 0
      %4645 = vmatpush1.bf16.msra.mxu0 %v1499
      %4646 = vmatprep.subr.bf16.mxu0 0
      %4647 = vmatpush1.bf16.msra.mxu0 %v1500
      %4648 = vmatprep.subr.bf16.mxu0 0
      %4649 = vmatpush1.bf16.msra.mxu0 0
      %4650 = vmatprep.subr.bf16.mxu0 0
      %4651 = vmatpush1.bf16.msra.mxu0 0
      %4652 = vmatprep.subr.bf16.mxu0 0
      %4653 = vmatpush1.bf16.msra.mxu0 0
      %4654 = vmatprep.subr.bf16.mxu0 0
      %4655 = vmatpush1.bf16.msra.mxu0 0
      %4656 = vmatprep.subr.bf16.mxu0 0
      %4657 = vmatpush1.bf16.msra.mxu0 0
      %4658 = vmatprep.subr.bf16.mxu0 0
      %4659 = vmatpush1.bf16.msra.mxu0 0
      %4660 = vmatprep.subr.bf16.mxu0 0
      %4661 = vmatpush1.bf16.msra.mxu0 0
      %4662 = vmatprep.subr.bf16.mxu0 0
      %4663 = vmatpush1.bf16.msra.mxu0 0
      %4664 = vmatprep.mubr.bf16.mxu0 0
      %4665 = vmatmul.mubr.bf16.gmra.mrb[0].mxu0 %v4630
      %v4666 = vpop.f32.mrb[0].mxu0
      %v4667 = vadd.f32 0.0, %v4666
      %v4668 = vpop.f32.mrb[0].mxu0
      %v4669 = vpop.f32.mrb[0].mxu0
      %v4670 = vadd.f32 0.0, %v4669
      %v4671 = vpop.f32.mrb[0].mxu0
      %4672 = vmatprep.mubr.bf16.mxu0 0
      %4673 = vmatmul.mubr.bf16.gmra.mrb[0].mxu0 %v4631
      %v4674 = vpop.f32.mrb[0].mxu0
      %v4675 = vadd.f32 0.0, %v4674
      %v4676 = vpop.f32.mrb[0].mxu0
      %v4677 = vpop.f32.mrb[0].mxu0
      %v4678 = vpop.f32.mrb[0].mxu0
      %4679 = vdwg.mxu0
      %v4680 = vmul.f32 %v4667, 0.088388346
      %v4681 = vmul.f32 %v4670, 0.088388346
      %v4682 = vmul.f32 %v4675, 0.088388346
      %v4683 = vsel %vm1560, %v4680, -inf
      %4684 = vmax.xlane.f32.xlu0 %v4683
      %v4685 = vpop.xlane.xlu0 %4684
      %v4686 = vsel %vm1560, %v4681, -inf
      %4687 = vmax.xlane.f32.xlu0 %v4686
      %v4688 = vpop.xlane.xlu0 %4687
      %v4689 = vsel %vm1560, %v4682, -inf
      %4690 = vmax.xlane.f32.xlu0 %v4689
      %v4691 = vpop.xlane.xlu0 %4690
      %v4692 = vsub.f32 %v4680, %v4685
      %v4693 = vsub.f32 %v4681, %v4688
      %v4694 = vsub.f32 %v4682, %v4691
      %v4695 = vmul.f32 %v4692, 1.442695
      %v4696 = vpow.pop %v4695
      %v4697 = vmul.f32 %v4693, 1.442695
      %v4698 = vpow.pop %v4697
      %v4699 = vmul.f32 %v4694, 1.442695
      %v4700 = vpow.pop %v4699
      %v4701 = vsel %vm1560, %v4696, 0.0
      %4702 = vadd.xlane.f32.xlu0 %v4701
      %v4703 = vpop.xlane.xlu0 %4702
      %v4704 = vsel %vm1560, %v4698, 0.0
      %4705 = vadd.xlane.f32.xlu0 %v4704
      %v4706 = vpop.xlane.xlu0 %4705
      %v4707 = vsel %vm1560, %v4700, 0.0
      %4708 = vadd.xlane.f32.xlu0 %v4707
      %v4709 = vpop.xlane.xlu0 %4708
      %v4710 = vrcp.pop %v4703
      %v4711 = vrcp.pop %v4706
      %v4712 = vrcp.pop %v4709
      %v4713 = vmul.f32 %v4696, %v4710
      %v4714 = vmul.f32 %v4698, %v4711
      %v4715 = vmul.f32 %v4700, %v4712
      %v4716 = vpack.c.bf16 %v4714, %v4713
      %v4717 = vpack.c.bf16 %v4715, %v4715
      %v4719 = vsel %vm1560, %v4716, 0
      %v4722 = vsel %vm1560, %v4717, 0
      %4724 = vmatprep.subr.bf16.mxu0 0
      %4725 = vmatpush1.bf16.msra.mxu0 %v1608
      %4726 = vmatprep.subr.bf16.mxu0 0
      %4727 = vmatpush1.bf16.msra.mxu0 %v1609
      %4728 = vmatprep.subr.bf16.mxu0 0
      %4729 = vmatpush1.bf16.msra.mxu0 %v1610
      %4730 = vmatprep.subr.bf16.mxu0 0
      %4731 = vmatpush1.bf16.msra.mxu0 0
      %4732 = vmatprep.subr.bf16.mxu0 0
      %4733 = vmatpush1.bf16.msra.mxu0 0
      %4734 = vmatprep.subr.bf16.mxu0 0
      %4735 = vmatpush1.bf16.msra.mxu0 0
      %4736 = vmatprep.subr.bf16.mxu0 0
      %4737 = vmatpush1.bf16.msra.mxu0 0
      %4738 = vmatprep.subr.bf16.mxu0 0
      %4739 = vmatpush1.bf16.msra.mxu0 0
      %4740 = vmatprep.subr.bf16.mxu0 0
      %4741 = vmatpush1.bf16.msra.mxu0 0
      %4742 = vmatprep.subr.bf16.mxu0 0
      %4743 = vmatpush1.bf16.msra.mxu0 0
      %4744 = vmatprep.subr.bf16.mxu0 0
      %4745 = vmatpush1.bf16.msra.mxu0 0
      %4746 = vmatprep.subr.bf16.mxu0 0
      %4747 = vmatpush1.bf16.msra.mxu0 0
      %4748 = vmatprep.subr.bf16.mxu0 0
      %4749 = vmatpush1.bf16.msra.mxu0 0
      %4750 = vmatprep.subr.bf16.mxu0 0
      %4751 = vmatpush1.bf16.msra.mxu0 0
      %4752 = vmatprep.subr.bf16.mxu0 0
      %4753 = vmatpush1.bf16.msra.mxu0 0
      %4754 = vmatprep.subr.bf16.mxu0 0
      %4755 = vmatpush1.bf16.msra.mxu0 0
      %4756 = vmatprep.mubr.bf16.mxu0 0
      %4757 = vmatmul.mubr.bf16.gmra.mrb[0].mxu0 %v4719
      %v4758 = vpop.f32.mrb[0].mxu0
      %v4759 = vadd.f32 0.0, %v4758
      %v4760 = vpop.f32.mrb[0].mxu0
      %v4761 = vpop.f32.mrb[0].mxu0
      %v4762 = vadd.f32 0.0, %v4761
      %v4763 = vpop.f32.mrb[0].mxu0
      %4764 = vmatprep.mubr.bf16.mxu0 0
      %4765 = vmatmul.mubr.bf16.gmra.mrb[0].mxu0 %v4722
      %v4766 = vpop.f32.mrb[0].mxu0
      %v4767 = vadd.f32 0.0, %v4766
      %v4768 = vpop.f32.mrb[0].mxu0
      %v4769 = vpop.f32.mrb[0].mxu0
      %v4770 = vpop.f32.mrb[0].mxu0
      %4771 = vdwg.mxu0
      %v4772 = vld [vmem:[%s8 + $0x80] sm:$0xf]
      %v4773 = vld [vmem:[%s8 + $0x84] sm:$0xf]
      %v4774 = vld [vmem:[%s8 + $0x88] sm:$0xf]
      %v4775 = vld [vmem:[%s8 + $0x8c] sm:$0xf]
      %v4776 = vld [vmem:[%s8 + $0x90] sm:$0xf]
      %v4777 = vld [vmem:[%s8 + $0x94] sm:$0xf]
      %v4778 = vld [vmem:[%s8 + $0x98] sm:$0xf]
      %v4779 = vld [vmem:[%s8 + $0x9c] sm:$0xf]
      %v4780 = vld [vmem:[%s8 + $0xa0] sm:$0xf]
      %v4781 = vld [vmem:[%s8 + $0xa4] sm:$0xf]
      %v4782 = vld [vmem:[%s8 + $0xa8] sm:$0xf]
      %v4783 = vld [vmem:[%s8 + $0xac] sm:$0xf]
      %v4784 = vld [vmem:[%s8 + $0xb0] sm:$0xf]
      %v4785 = vld [vmem:[%s8 + $0xb4] sm:$0xf]
      %v4786 = vld [vmem:[%s8 + $0xb8] sm:$0xf]
      %v4787 = vld [vmem:[%s8 + $0xbc] sm:$0xf]
      %v4788 = vpack.c.bf16 %v4762, %v4759
      %v4789 = vpack.c.bf16 %v4767, %v4767
      %v4806 = vunpack.c.l.b16 %v4772
      %v4807 = vunpack.c.l.b16 %v4773
      %v4808 = vunpack.c.l.b16 %v4774
      %v4809 = vunpack.c.l.b16 %v4775
      %v4810 = vunpack.c.l.b16 %v4776
      %v4811 = vunpack.c.l.b16 %v4777
      %v4812 = vunpack.c.l.b16 %v4778
      %v4813 = vunpack.c.l.b16 %v4779
      %v4814 = vunpack.c.l.b16 %v4780
      %v4815 = vunpack.c.l.b16 %v4781
      %v4816 = vunpack.c.l.b16 %v4782
      %v4817 = vunpack.c.l.b16 %v4783
      %v4818 = vunpack.c.l.b16 %v4784
      %v4819 = vunpack.c.l.b16 %v4785
      %v4820 = vunpack.c.l.b16 %v4786
      %v4821 = vunpack.c.l.b16 %v4787
      %v4822 = vpack.c.b16 %v4807, %v4806
      %v4823 = vpack.c.b16 %v4809, %v4808
      %v4824 = vpack.c.b16 %v4811, %v4810
      %v4825 = vpack.c.b16 %v4813, %v4812
      %v4826 = vpack.c.b16 %v4815, %v4814
      %v4827 = vpack.c.b16 %v4817, %v4816
      %v4828 = vpack.c.b16 %v4819, %v4818
      %v4829 = vpack.c.b16 %v4821, %v4820
      %4838 = vmatprep.subr.bf16.mxu0 0
      %4839 = vmatpush1.bf16.msra.mxu0 %v4822
      %4840 = vmatprep.subr.bf16.mxu0 0
      %4841 = vmatpush1.bf16.msra.mxu0 %v4823
      %4842 = vmatprep.subr.bf16.mxu0 0
      %4843 = vmatpush1.bf16.msra.mxu0 %v4824
      %4844 = vmatprep.subr.bf16.mxu0 0
      %4845 = vmatpush1.bf16.msra.mxu0 %v4825
      %4846 = vmatprep.subr.bf16.mxu0 0
      %4847 = vmatpush1.bf16.msra.mxu0 %v4826
      %4848 = vmatprep.subr.bf16.mxu0 0
      %4849 = vmatpush1.bf16.msra.mxu0 %v4827
      %4850 = vmatprep.subr.bf16.mxu0 0
      %4851 = vmatpush1.bf16.msra.mxu0 %v4828
      %4852 = vmatprep.subr.bf16.mxu0 0
      %4853 = vmatpush1.bf16.msra.mxu0 %v4829
      %4854 = vmatprep.subr.bf16.mxu0 0
      %4855 = vmatpush1.bf16.msra.mxu0 0
      %4856 = vmatprep.subr.bf16.mxu0 0
      %4857 = vmatpush1.bf16.msra.mxu0 0
      %4858 = vmatprep.subr.bf16.mxu0 0
      %4859 = vmatpush1.bf16.msra.mxu0 0
      %4860 = vmatprep.subr.bf16.mxu0 0
      %4861 = vmatpush1.bf16.msra.mxu0 0
      %4862 = vmatprep.subr.bf16.mxu0 0
      %4863 = vmatpush1.bf16.msra.mxu0 0
      %4864 = vmatprep.subr.bf16.mxu0 0
      %4865 = vmatpush1.bf16.msra.mxu0 0
      %4866 = vmatprep.subr.bf16.mxu0 0
      %4867 = vmatpush1.bf16.msra.mxu0 0
      %4868 = vmatprep.subr.bf16.mxu0 0
      %4869 = vmatpush1.bf16.msra.mxu0 0
      %4870 = vmatprep.mubr.bf16.mxu0 0
      %4871 = vmatmul.mubr.bf16.gmra.mrb[0].mxu0 %v4788
      %v4872 = vpop.f32.mrb[0].mxu0
      %v4873 = vadd.f32 0.0, %v4872
      %v4874 = vpop.f32.mrb[0].mxu0
      %v4875 = vpop.f32.mrb[0].mxu0
      %v4876 = vadd.f32 0.0, %v4875
      %v4877 = vpop.f32.mrb[0].mxu0
      %4878 = vmatprep.mubr.bf16.mxu0 0
      %4879 = vmatmul.mubr.bf16.gmra.mrb[0].mxu0 %v4789
      %v4880 = vpop.f32.mrb[0].mxu0
      %v4881 = vadd.f32 0.0, %v4880
      %v4882 = vpop.f32.mrb[0].mxu0
      %v4883 = vpop.f32.mrb[0].mxu0
      %v4884 = vpop.f32.mrb[0].mxu0
      %4885 = vdwg.mxu0
      %v4886 = vadd.f32 %v4513, %v4873
      %v4887 = vadd.f32 %v4514, %v4876
      %v4888 = vadd.f32 %v4515, %v4881
      %v4889 = vadd.f32 %v4886, %v1788
      %v4890 = vadd.f32 %v4887, %v1788
      %v4891 = vadd.f32 %v4888, %v1788
      %4892 = vadd.xlane.f32.xlu0 %v4889
      %v4893 = vpop.xlane.xlu0 %4892
      %4894 = vadd.xlane.f32.xlu0 %v4890
      %v4895 = vpop.xlane.xlu0 %4894
      %4896 = vadd.xlane.f32.xlu0 %v4891
      %v4897 = vpop.xlane.xlu0 %4896
      %v4898 = vmul.f32 %v4893, %v461
      %v4899 = vmul.f32 %v4895, %v461
      %v4900 = vmul.f32 %v4897, %v461
      %v4901 = vsub.f32 %v4889, %v4898
      %v4902 = vsub.f32 %v4890, %v4899
      %v4903 = vsub.f32 %v4891, %v4900
      %v4904 = vmul.f32 %v4901, %v4901
      %v4905 = vmul.f32 %v4902, %v4902
      %v4906 = vmul.f32 %v4903, %v4903
      %4907 = vadd.xlane.f32.xlu0 %v4904
      %v4908 = vpop.xlane.xlu0 %4907
      %4909 = vadd.xlane.f32.xlu0 %v4905
      %v4910 = vpop.xlane.xlu0 %4909
      %4911 = vadd.xlane.f32.xlu0 %v4906
      %v4912 = vpop.xlane.xlu0 %4911
      %v4913 = vmul.f32 %v4908, %v461
      %v4914 = vmul.f32 %v4910, %v461
      %v4915 = vmul.f32 %v4912, %v461
      %v4916 = vadd.f32 %v4913, 1e-05
      %v4917 = vadd.f32 %v4914, 1e-05
      %v4918 = vadd.f32 %v4915, 1e-05
      %v4919 = vrsqrt.pop %v4916
      %v4920 = vrsqrt.pop %v4917
      %v4921 = vrsqrt.pop %v4918
      %v4922 = vmul.f32 %v4901, %v4919
      %v4923 = vmul.f32 %v4902, %v4920
      %v4924 = vmul.f32 %v4903, %v4921
      %v4925 = vmul.f32 %v4922, %v1828
      %v4926 = vmul.f32 %v4923, %v1828
      %v4927 = vmul.f32 %v4924, %v1828
      %v4928 = vadd.f32 %v4925, %v1835
      %v4929 = vadd.f32 %v4926, %v1835
      %v4930 = vadd.f32 %v4927, %v1835
      %v4931 = vld [vmem:[%s8 + $0xc0] sm:$0xf]
      %v4932 = vld [vmem:[%s8 + $0xc4] sm:$0xf]
      %v4933 = vld [vmem:[%s8 + $0xc8] sm:$0xf]
      %v4934 = vld [vmem:[%s8 + $0xcc] sm:$0xf]
      %v4935 = vld [vmem:[%s8 + $0xd0] sm:$0xf]
      %v4936 = vld [vmem:[%s8 + $0xd4] sm:$0xf]
      %v4937 = vld [vmem:[%s8 + $0xd8] sm:$0xf]
      %v4938 = vld [vmem:[%s8 + $0xdc] sm:$0xf]
      %v4939 = vld [vmem:[%s8 + $0xe0] sm:$0xf]
      %v4940 = vld [vmem:[%s8 + $0xe4] sm:$0xf]
      %v4941 = vld [vmem:[%s8 + $0xe8] sm:$0xf]
      %v4942 = vld [vmem:[%s8 + $0xec] sm:$0xf]
      %v4943 = vld [vmem:[%s8 + $0xf0] sm:$0xf]
      %v4944 = vld [vmem:[%s8 + $0xf4] sm:$0xf]
      %v4945 = vld [vmem:[%s8 + $0xf8] sm:$0xf]
      %v4946 = vld [vmem:[%s8 + $0xfc] sm:$0xf]
      %v4947 = vpack.c.bf16 %v4929, %v4928
      %v4948 = vpack.c.bf16 %v4930, %v4930
      %v4965 = vunpack.c.l.b16 %v4931
      %v4966 = vunpack.c.l.b16 %v4932
      %v4967 = vunpack.c.l.b16 %v4933
      %v4968 = vunpack.c.l.b16 %v4934
      %v4969 = vunpack.c.l.b16 %v4935
      %v4970 = vunpack.c.l.b16 %v4936
      %v4971 = vunpack.c.l.b16 %v4937
      %v4972 = vunpack.c.l.b16 %v4938
      %v4973 = vunpack.c.l.b16 %v4939
      %v4974 = vunpack.c.l.b16 %v4940
      %v4975 = vunpack.c.l.b16 %v4941
      %v4976 = vunpack.c.l.b16 %v4942
      %v4977 = vunpack.c.l.b16 %v4943
      %v4978 = vunpack.c.l.b16 %v4944
      %v4979 = vunpack.c.l.b16 %v4945
      %v4980 = vunpack.c.l.b16 %v4946
      %v4981 = vpack.c.b16 %v4966, %v4965
      %v4982 = vpack.c.b16 %v4968, %v4967
      %v4983 = vpack.c.b16 %v4970, %v4969
      %v4984 = vpack.c.b16 %v4972, %v4971
      %v4985 = vpack.c.b16 %v4974, %v4973
      %v4986 = vpack.c.b16 %v4976, %v4975
      %v4987 = vpack.c.b16 %v4978, %v4977
      %v4988 = vpack.c.b16 %v4980, %v4979
      %4997 = vmatprep.subr.bf16.mxu0 0
      %4998 = vmatpush1.bf16.msra.mxu0 %v4981
      %4999 = vmatprep.subr.bf16.mxu0 0
      %5000 = vmatpush1.bf16.msra.mxu0 %v4982
      %5001 = vmatprep.subr.bf16.mxu0 0
      %5002 = vmatpush1.bf16.msra.mxu0 %v4983
      %5003 = vmatprep.subr.bf16.mxu0 0
      %5004 = vmatpush1.bf16.msra.mxu0 %v4984
      %5005 = vmatprep.subr.bf16.mxu0 0
      %5006 = vmatpush1.bf16.msra.mxu0 %v4985
      %5007 = vmatprep.subr.bf16.mxu0 0
      %5008 = vmatpush1.bf16.msra.mxu0 %v4986
      %5009 = vmatprep.subr.bf16.mxu0 0
      %5010 = vmatpush1.bf16.msra.mxu0 %v4987
      %5011 = vmatprep.subr.bf16.mxu0 0
      %5012 = vmatpush1.bf16.msra.mxu0 %v4988
      %5013 = vmatprep.subr.bf16.mxu0 0
      %5014 = vmatpush1.bf16.msra.mxu0 0
      %5015 = vmatprep.subr.bf16.mxu0 0
      %5016 = vmatpush1.bf16.msra.mxu0 0
      %5017 = vmatprep.subr.bf16.mxu0 0
      %5018 = vmatpush1.bf16.msra.mxu0 0
      %5019 = vmatprep.subr.bf16.mxu0 0
      %5020 = vmatpush1.bf16.msra.mxu0 0
      %5021 = vmatprep.subr.bf16.mxu0 0
      %5022 = vmatpush1.bf16.msra.mxu0 0
      %5023 = vmatprep.subr.bf16.mxu0 0
      %5024 = vmatpush1.bf16.msra.mxu0 0
      %5025 = vmatprep.subr.bf16.mxu0 0
      %5026 = vmatpush1.bf16.msra.mxu0 0
      %5027 = vmatprep.subr.bf16.mxu0 0
      %5028 = vmatpush1.bf16.msra.mxu0 0
      %5029 = vmatprep.mubr.bf16.mxu0 0
      %5030 = vmatmul.mubr.bf16.gmra.mrb[0].mxu0 %v4947
      %v5031 = vpop.f32.mrb[0].mxu0
      %v5032 = vadd.f32 %v1860, %v5031
      %v5033 = vpop.f32.mrb[0].mxu0
      %v5034 = vpop.f32.mrb[0].mxu0
      %v5035 = vadd.f32 %v1860, %v5034
      %v5036 = vpop.f32.mrb[0].mxu0
      %5037 = vmatprep.mubr.bf16.mxu0 0
      %5038 = vmatmul.mubr.bf16.gmra.mrb[0].mxu0 %v4948
      %v5039 = vpop.f32.mrb[0].mxu0
      %v5040 = vadd.f32 %v1860, %v5039
      %v5041 = vpop.f32.mrb[0].mxu0
      %v5042 = vpop.f32.mrb[0].mxu0
      %v5043 = vpop.f32.mrb[0].mxu0
      %5044 = vdwg.mxu0
      %v5045 = vmax.f32 %v5032, 0.0
      %v5046 = vmax.f32 %v5035, 0.0
      %v5047 = vmax.f32 %v5040, 0.0
      %v5048 = vld [vmem:[%s8 + $0x100] sm:$0xf]
      %v5049 = vld [vmem:[%s8 + $0x104] sm:$0xf]
      %v5050 = vld [vmem:[%s8 + $0x108] sm:$0xf]
      %v5051 = vld [vmem:[%s8 + $0x10c] sm:$0xf]
      %v5052 = vld [vmem:[%s8 + $0x110] sm:$0xf]
      %v5053 = vld [vmem:[%s8 + $0x114] sm:$0xf]
      %v5054 = vld [vmem:[%s8 + $0x118] sm:$0xf]
      %v5055 = vld [vmem:[%s8 + $0x11c] sm:$0xf]
      %v5056 = vld [vmem:[%s8 + $0x120] sm:$0xf]
      %v5057 = vld [vmem:[%s8 + $0x124] sm:$0xf]
      %v5058 = vld [vmem:[%s8 + $0x128] sm:$0xf]
      %v5059 = vld [vmem:[%s8 + $0x12c] sm:$0xf]
      %v5060 = vld [vmem:[%s8 + $0x130] sm:$0xf]
      %v5061 = vld [vmem:[%s8 + $0x134] sm:$0xf]
      %v5062 = vld [vmem:[%s8 + $0x138] sm:$0xf]
      %v5063 = vld [vmem:[%s8 + $0x13c] sm:$0xf]
      %v5064 = vpack.c.bf16 %v5046, %v5045
      %v5065 = vpack.c.bf16 %v5047, %v5047
      %v5082 = vunpack.c.l.b16 %v5048
      %v5083 = vunpack.c.l.b16 %v5049
      %v5084 = vunpack.c.l.b16 %v5050
      %v5085 = vunpack.c.l.b16 %v5051
      %v5086 = vunpack.c.l.b16 %v5052
      %v5087 = vunpack.c.l.b16 %v5053
      %v5088 = vunpack.c.l.b16 %v5054
      %v5089 = vunpack.c.l.b16 %v5055
      %v5090 = vunpack.c.l.b16 %v5056
      %v5091 = vunpack.c.l.b16 %v5057
      %v5092 = vunpack.c.l.b16 %v5058
      %v5093 = vunpack.c.l.b16 %v5059
      %v5094 = vunpack.c.l.b16 %v5060
      %v5095 = vunpack.c.l.b16 %v5061
      %v5096 = vunpack.c.l.b16 %v5062
      %v5097 = vunpack.c.l.b16 %v5063
      %v5098 = vpack.c.b16 %v5083, %v5082
      %v5099 = vpack.c.b16 %v5085, %v5084
      %v5100 = vpack.c.b16 %v5087, %v5086
      %v5101 = vpack.c.b16 %v5089, %v5088
      %v5102 = vpack.c.b16 %v5091, %v5090
      %v5103 = vpack.c.b16 %v5093, %v5092
      %v5104 = vpack.c.b16 %v5095, %v5094
      %v5105 = vpack.c.b16 %v5097, %v5096
      %5114 = vmatprep.subr.bf16.mxu0 0
      %5115 = vmatpush1.bf16.msra.mxu0 %v5098
      %5116 = vmatprep.subr.bf16.mxu0 0
      %5117 = vmatpush1.bf16.msra.mxu0 %v5099
      %5118 = vmatprep.subr.bf16.mxu0 0
      %5119 = vmatpush1.bf16.msra.mxu0 %v5100
      %5120 = vmatprep.subr.bf16.mxu0 0
      %5121 = vmatpush1.bf16.msra.mxu0 %v5101
      %5122 = vmatprep.subr.bf16.mxu0 0
      %5123 = vmatpush1.bf16.msra.mxu0 %v5102
      %5124 = vmatprep.subr.bf16.mxu0 0
      %5125 = vmatpush1.bf16.msra.mxu0 %v5103
      %5126 = vmatprep.subr.bf16.mxu0 0
      %5127 = vmatpush1.bf16.msra.mxu0 %v5104
      %5128 = vmatprep.subr.bf16.mxu0 0
      %5129 = vmatpush1.bf16.msra.mxu0 %v5105
      %5130 = vmatprep.subr.bf16.mxu0 0
      %5131 = vmatpush1.bf16.msra.mxu0 0
      %5132 = vmatprep.subr.bf16.mxu0 0
      %5133 = vmatpush1.bf16.msra.mxu0 0
      %5134 = vmatprep.subr.bf16.mxu0 0
      %5135 = vmatpush1.bf16.msra.mxu0 0
      %5136 = vmatprep.subr.bf16.mxu0 0
      %5137 = vmatpush1.bf16.msra.mxu0 0
      %5138 = vmatprep.subr.bf16.mxu0 0
      %5139 = vmatpush1.bf16.msra.mxu0 0
      %5140 = vmatprep.subr.bf16.mxu0 0
      %5141 = vmatpush1.bf16.msra.mxu0 0
      %5142 = vmatprep.subr.bf16.mxu0 0
      %5143 = vmatpush1.bf16.msra.mxu0 0
      %5144 = vmatprep.subr.bf16.mxu0 0
      %5145 = vmatpush1.bf16.msra.mxu0 0
      %5146 = vmatprep.mubr.bf16.mxu0 0
      %5147 = vmatmul.mubr.bf16.gmra.mrb[0].mxu0 %v5064
      %v5148 = vpop.f32.mrb[0].mxu0
      %v5149 = vpop.f32.mrb[0].mxu0
      %v5150 = vpop.f32.mrb[0].mxu0
      %v5151 = vadd.f32 0.0, %v5150
      %v5152 = vpop.f32.mrb[0].mxu0
      %5153 = vmatprep.mubr.bf16.mxu0 0
      %5154 = vmatmul.mubr.bf16.gmra.mrb[0].mxu0 %v5065
      %v5155 = vpop.f32.mrb[0].mxu0
      %v5156 = vpop.f32.mrb[0].mxu0
      %v5157 = vpop.f32.mrb[0].mxu0
      %v5158 = vpop.f32.mrb[0].mxu0
      %5159 = vdwg.mxu0
      %v5160 = vadd.f32 %v4929, %v5151
      %v5161 = vadd.f32 %v5160, %v2076
      %5162 = vadd.xlane.f32.xlu0 %v5161
      %v5163 = vpop.xlane.xlu0 %5162
      %v5164 = vmul.f32 %v5163, %v461
      %v5165 = vsub.f32 %v5161, %v5164
      %v5166 = vmul.f32 %v5165, %v5165
      %5167 = vadd.xlane.f32.xlu0 %v5166
      %v5168 = vpop.xlane.xlu0 %5167
      %v5169 = vmul.f32 %v5168, %v461
      %v5170 = vadd.f32 %v5169, 1e-05
      %v5171 = vrsqrt.pop %v5170
      %v5172 = vmul.f32 %v5165, %v5171
      %v5173 = vmul.f32 %v5172, %v2092
      %v5174 = vadd.f32 %v5173, %v2097
      %v5175 = vld [vmem:[%s8 + $0x140] sm:$0xf]
      %v5176 = vld [vmem:[%s8 + $0x144] sm:$0xf]
      %v5177 = vld [vmem:[%s8 + $0x148] sm:$0xf]
      %v5178 = vld [vmem:[%s8 + $0x14c] sm:$0xf]
      %v5179 = vld [vmem:[%s8 + $0x150] sm:$0xf]
      %v5180 = vld [vmem:[%s8 + $0x154] sm:$0xf]
      %v5181 = vld [vmem:[%s8 + $0x158] sm:$0xf]
      %v5182 = vld [vmem:[%s8 + $0x15c] sm:$0xf]
      %v5183 = vld [vmem:[%s8 + $0x160] sm:$0xf]
      %v5184 = vld [vmem:[%s8 + $0x164] sm:$0xf]
      %v5185 = vld [vmem:[%s8 + $0x168] sm:$0xf]
      %v5186 = vld [vmem:[%s8 + $0x16c] sm:$0xf]
      %v5187 = vld [vmem:[%s8 + $0x170] sm:$0xf]
      %v5188 = vld [vmem:[%s8 + $0x174] sm:$0xf]
      %v5189 = vld [vmem:[%s8 + $0x178] sm:$0xf]
      %v5190 = vld [vmem:[%s8 + $0x17c] sm:$0xf]
      %v5191 = vpack.c.bf16 %v5174, %v5174
      %v5208 = vunpack.c.l.b16 %v5175
      %v5209 = vunpack.c.l.b16 %v5176
      %v5210 = vunpack.c.l.b16 %v5177
      %v5211 = vunpack.c.l.b16 %v5178
      %v5212 = vunpack.c.l.b16 %v5179
      %v5213 = vunpack.c.l.b16 %v5180
      %v5214 = vunpack.c.l.b16 %v5181
      %v5215 = vunpack.c.l.b16 %v5182
      %v5216 = vunpack.c.l.b16 %v5183
      %v5217 = vunpack.c.l.b16 %v5184
      %v5218 = vunpack.c.l.b16 %v5185
      %v5219 = vunpack.c.l.b16 %v5186
      %v5220 = vunpack.c.l.b16 %v5187
      %v5221 = vunpack.c.l.b16 %v5188
      %v5222 = vunpack.c.l.b16 %v5189
      %v5223 = vunpack.c.l.b16 %v5190
      %v5224 = vpack.c.b16 %v5209, %v5208
      %v5225 = vpack.c.b16 %v5211, %v5210
      %v5226 = vpack.c.b16 %v5213, %v5212
      %v5227 = vpack.c.b16 %v5215, %v5214
      %v5228 = vpack.c.b16 %v5217, %v5216
      %v5229 = vpack.c.b16 %v5219, %v5218
      %v5230 = vpack.c.b16 %v5221, %v5220
      %v5231 = vpack.c.b16 %v5223, %v5222
      %5240 = vmatprep.subr.bf16.mxu0 0
      %5241 = vmatpush1.bf16.msra.mxu0 %v5224
      %5242 = vmatprep.subr.bf16.mxu0 0
      %5243 = vmatpush1.bf16.msra.mxu0 %v5225
      %5244 = vmatprep.subr.bf16.mxu0 0
      %5245 = vmatpush1.bf16.msra.mxu0 %v5226
      %5246 = vmatprep.subr.bf16.mxu0 0
      %5247 = vmatpush1.bf16.msra.mxu0 %v5227
      %5248 = vmatprep.subr.bf16.mxu0 0
      %5249 = vmatpush1.bf16.msra.mxu0 %v5228
      %5250 = vmatprep.subr.bf16.mxu0 0
      %5251 = vmatpush1.bf16.msra.mxu0 %v5229
      %5252 = vmatprep.subr.bf16.mxu0 0
      %5253 = vmatpush1.bf16.msra.mxu0 %v5230
      %5254 = vmatprep.subr.bf16.mxu0 0
      %5255 = vmatpush1.bf16.msra.mxu0 %v5231
      %5256 = vmatprep.subr.bf16.mxu0 0
      %5257 = vmatpush1.bf16.msra.mxu0 0
      %5258 = vmatprep.subr.bf16.mxu0 0
      %5259 = vmatpush1.bf16.msra.mxu0 0
      %5260 = vmatprep.subr.bf16.mxu0 0
      %5261 = vmatpush1.bf16.msra.mxu0 0
      %5262 = vmatprep.subr.bf16.mxu0 0
      %5263 = vmatpush1.bf16.msra.mxu0 0
      %5264 = vmatprep.subr.bf16.mxu0 0
      %5265 = vmatpush1.bf16.msra.mxu0 0
      %5266 = vmatprep.subr.bf16.mxu0 0
      %5267 = vmatpush1.bf16.msra.mxu0 0
      %5268 = vmatprep.subr.bf16.mxu0 0
      %5269 = vmatpush1.bf16.msra.mxu0 0
      %5270 = vmatprep.subr.bf16.mxu0 0
      %5271 = vmatpush1.bf16.msra.mxu0 0
      %5272 = vmatprep.mubr.bf16.mxu0 0
      %5273 = vmatmul.mubr.bf16.gmra.mrb[0].mxu0 %v5191
      %v5274 = vpop.f32.mrb[0].mxu0
      %v5275 = vadd.f32 %v2119, %v5274
      %v5276 = vpop.f32.mrb[0].mxu0
      %v5277 = vpop.f32.mrb[0].mxu0
      %v5278 = vpop.f32.mrb[0].mxu0
      %5279 = vdwg.mxu0
      %v5280 = vmax.f32 %v5275, 0.0
      %v5281 = vld [vmem:[%s8 + $0x180] sm:$0xf]
      %v5282 = vld [vmem:[%s8 + $0x184] sm:$0xf]
      %v5283 = vld [vmem:[%s8 + $0x188] sm:$0xf]
      %v5284 = vld [vmem:[%s8 + $0x18c] sm:$0xf]
      %v5285 = vld [vmem:[%s8 + $0x190] sm:$0xf]
      %v5286 = vld [vmem:[%s8 + $0x194] sm:$0xf]
      %v5287 = vld [vmem:[%s8 + $0x198] sm:$0xf]
      %v5288 = vld [vmem:[%s8 + $0x19c] sm:$0xf]
      %v5289 = vld [vmem:[%s8 + $0x1a0] sm:$0xf]
      %v5290 = vld [vmem:[%s8 + $0x1a4] sm:$0xf]
      %v5291 = vld [vmem:[%s8 + $0x1a8] sm:$0xf]
      %v5292 = vld [vmem:[%s8 + $0x1ac] sm:$0xf]
      %v5293 = vld [vmem:[%s8 + $0x1b0] sm:$0xf]
      %v5294 = vld [vmem:[%s8 + $0x1b4] sm:$0xf]
      %v5295 = vld [vmem:[%s8 + $0x1b8] sm:$0xf]
      %v5296 = vld [vmem:[%s8 + $0x1bc] sm:$0xf]
      %v5297 = vpack.c.bf16 %v5280, %v5280
      %v5314 = vunpack.c.l.b16 %v5281
      %v5315 = vunpack.c.l.b16 %v5282
      %v5316 = vunpack.c.l.b16 %v5283
      %v5317 = vunpack.c.l.b16 %v5284
      %v5318 = vunpack.c.l.b16 %v5285
      %v5319 = vunpack.c.l.b16 %v5286
      %v5320 = vunpack.c.l.b16 %v5287
      %v5321 = vunpack.c.l.b16 %v5288
      %v5322 = vunpack.c.l.b16 %v5289
      %v5323 = vunpack.c.l.b16 %v5290
      %v5324 = vunpack.c.l.b16 %v5291
      %v5325 = vunpack.c.l.b16 %v5292
      %v5326 = vunpack.c.l.b16 %v5293
      %v5327 = vunpack.c.l.b16 %v5294
      %v5328 = vunpack.c.l.b16 %v5295
      %v5329 = vunpack.c.l.b16 %v5296
      %v5330 = vpack.c.b16 %v5315, %v5314
      %v5331 = vpack.c.b16 %v5317, %v5316
      %v5332 = vpack.c.b16 %v5319, %v5318
      %v5333 = vpack.c.b16 %v5321, %v5320
      %v5334 = vpack.c.b16 %v5323, %v5322
      %v5335 = vpack.c.b16 %v5325, %v5324
      %v5336 = vpack.c.b16 %v5327, %v5326
      %v5337 = vpack.c.b16 %v5329, %v5328
      %5346 = vmatprep.subr.bf16.mxu0 0
      %5347 = vmatpush1.bf16.msra.mxu0 %v5330
      %5348 = vmatprep.subr.bf16.mxu0 0
      %5349 = vmatpush1.bf16.msra.mxu0 %v5331
      %5350 = vmatprep.subr.bf16.mxu0 0
      %5351 = vmatpush1.bf16.msra.mxu0 %v5332
      %5352 = vmatprep.subr.bf16.mxu0 0
      %5353 = vmatpush1.bf16.msra.mxu0 %v5333
      %5354 = vmatprep.subr.bf16.mxu0 0
      %5355 = vmatpush1.bf16.msra.mxu0 %v5334
      %5356 = vmatprep.subr.bf16.mxu0 0
      %5357 = vmatpush1.bf16.msra.mxu0 %v5335
      %5358 = vmatprep.subr.bf16.mxu0 0
      %5359 = vmatpush1.bf16.msra.mxu0 %v5336
      %5360 = vmatprep.subr.bf16.mxu0 0
      %5361 = vmatpush1.bf16.msra.mxu0 %v5337
      %5362 = vmatprep.subr.bf16.mxu0 0
      %5363 = vmatpush1.bf16.msra.mxu0 0
      %5364 = vmatprep.subr.bf16.mxu0 0
      %5365 = vmatpush1.bf16.msra.mxu0 0
      %5366 = vmatprep.subr.bf16.mxu0 0
      %5367 = vmatpush1.bf16.msra.mxu0 0
      %5368 = vmatprep.subr.bf16.mxu0 0
      %5369 = vmatpush1.bf16.msra.mxu0 0
      %5370 = vmatprep.subr.bf16.mxu0 0
      %5371 = vmatpush1.bf16.msra.mxu0 0
      %5372 = vmatprep.subr.bf16.mxu0 0
      %5373 = vmatpush1.bf16.msra.mxu0 0
      %5374 = vmatprep.subr.bf16.mxu0 0
      %5375 = vmatpush1.bf16.msra.mxu0 0
      %5376 = vmatprep.subr.bf16.mxu0 0
      %5377 = vmatpush1.bf16.msra.mxu0 0
      %5378 = vmatprep.mubr.bf16.mxu0 0
      %5379 = vmatmul.mubr.bf16.gmra.mrb[0].mxu0 %v5297
      %v5380 = vpop.f32.mrb[0].mxu0
      %v5381 = vadd.f32 %v2229, %v5380
      %v5382 = vpop.f32.mrb[0].mxu0
      %v5383 = vpop.f32.mrb[0].mxu0
      %v5384 = vpop.f32.mrb[0].mxu0
      %5385 = vdwg.mxu0
      %v5386 = vsel %vm555, %v5381, 0.0
      %5387 = vadd.xlane.f32.xlu0 %v5386
      %v5388 = vpop.xlane.xlu0 %5387
      %v5389 = vadd.f32 %v3865, %v5388
      %v5390 = vsel %vm559, %v5381, 0.0
      %5391 = vadd.xlane.f32.xlu0 %v5390
      %v5392 = vpop.xlane.xlu0 %5391
      %v5393 = vadd.f32 %v3867, %v5392
      %v5394 = vsel %vm555, %v5389, 0.0
      %v5395 = vsel %vm559, %v5393, 0.0
      %v5396 = vadd.f32 %v5394, %v5395
      %5397 = vst [vmem:[%s450 + $0x10] sm:$0xff] %v5396
      %p5398 = scmp.lt.s32.totalorder %s21, 1
      %s5399 = scalar_select %p5398, %s21, 1
      %s5400 = smul.addr %s5399, 3
      %s5401 = smul.addr %s5400, 8
      %s5402 = scalar_lea.vmem %s10, %s5401
      // Predicated region
      $region61: #{forward.3} parent=59 // pred_check
        %p5403 = pneg %p279
      $region62: #{forward.3} parent=59 // pred_check_branch
        %5405 = sbr.rel (%p5403) target = $region64
      $region63: #{forward.3} parent=59 // pred_region
        _
      $region64: #{forward.3} parent=59 // pred_fallthru
        _
    $region60: #{forward.3} parent=5 // pred_fallthru
      _
    %p5406 = scmp.le.s32.totalorder 2, %s16
    // Predicated region
    $region65: #{forward.3} parent=5 // pred_check
      %p5407 = pneg %p5406
    $region66: #{forward.3} parent=5 // pred_check_branch
      %5409 = sbr.rel (%p5407) target = $region68
    $region67: #{forward.3} parent=5 // pred_region
      %s5410 = ssub.s32 %s16, 2
      // Predicated region
      $region69: #{forward.3} parent=67 // pred_check
        %p5411 = pneg %p285
      $region70: #{forward.3} parent=67 // pred_check_branch
        %5413 = sbr.rel (%p5411) target = $region72
      $region71: #{forward.3} parent=67 // pred_region
        %p5414 = scmp.lt.s32.totalorder %s22, 1
        %s5415 = scalar_select %p5414, %s22, 1
        %s5416 = smul.addr %s5415, 3
        %s5417 = smul.addr %s5416, 8
        %s5418 = scalar_lea.vmem %s10, %s5417
      $region72: #{forward.3} parent=67 // pred_fallthru
        _
    $region68: #{forward.3} parent=5 // pred_fallthru
      _
  $region6: #{forward.3} parent=0 // loop_footer
    %s20 = sadd.s32 1, %s16
  $region7: #{forward.3} parent=0 // loop_footer_branch
    %15 = sbr.rel target = $region3
  $region8: #{forward.3} parent=0 // loop_exit
    _

</llo_original>
